<compile_context>
chip_gen: v6e
topology: v6e:2x2x1
jax: 0.10.0
libtpu: 0.0.40
codegen_flags: <defaults>
</compile_context>

<pallas_src>
import functools

import jax
import jax.numpy as jnp
from jax.experimental import pallas as pl
from jax.experimental.pallas import tpu as pltpu


# ----------------------------------------------------------------------------
# Pallas kernels: out = W @ patches with fused bias / residual / 1x1-shortcut / ReLU
#   w_ref  : (Cout, K)    bf16   (BN scale already folded in)
#   p_ref  : (K, tm)      bf16   im2col patches tile (lane axis = flattened N*Ho*Wo)
#   b_ref  : (Cout, 1)    f32    folded BN bias
#   o_ref  : (Cout, tm)   f32
# ----------------------------------------------------------------------------
def _conv_bias_kernel(w_ref, p_ref, b_ref, o_ref, *, relu):
    acc = jnp.dot(w_ref[...], p_ref[...], preferred_element_type=jnp.float32)
    y = acc + b_ref[...]
    if relu:
        y = jnp.maximum(y, 0.0)
    o_ref[...] = y


def _conv_bias_res_kernel(w_ref, p_ref, b_ref, r_ref, o_ref):
    # identity shortcut: relu(conv+bias + residual)
    acc = jnp.dot(w_ref[...], p_ref[...], preferred_element_type=jnp.float32)
    o_ref[...] = jnp.maximum(acc + b_ref[...] + r_ref[...], 0.0)


def _conv_bias_sc_kernel(w_ref, p_ref, b_ref, ws_ref, xs_ref, bs_ref, o_ref):
    # downsample shortcut fused: relu(conv+bias + (1x1 conv + bias))
    acc = jnp.dot(w_ref[...], p_ref[...], preferred_element_type=jnp.float32)
    sc = jnp.dot(ws_ref[...], xs_ref[...], preferred_element_type=jnp.float32)
    o_ref[...] = jnp.maximum(acc + b_ref[...] + sc + bs_ref[...], 0.0)


def _pick_tm(M):
    # At most 2 grid steps (feeds both v7x TensorCores); keep tiles lane-aligned.
    if M >= 256 and M % 256 == 0:
        return M // 2
    return M


def _run_conv(w, patches, bias, *, relu=True, residual=None, shortcut=None):
    Cout, K = w.shape
    M = patches.shape[1]
    tm = _pick_tm(M)
    grid = (M // tm,)

    in_specs = [
        pl.BlockSpec((Cout, K), lambda i: (0, 0)),     # folded weights (stationary)
        pl.BlockSpec((K, tm), lambda i: (0, i)),       # im2col patches
        pl.BlockSpec((Cout, 1), lambda i: (0, 0)),     # folded BN bias
    ]
    args = [w, patches, bias]

    if residual is not None:
        kernel = _conv_bias_res_kernel
        in_specs.append(pl.BlockSpec((Cout, tm), lambda i: (0, i)))
        args.append(residual)
    elif shortcut is not None:
        ws, xs, bs = shortcut
        Cin = ws.shape[1]
        kernel = _conv_bias_sc_kernel
        in_specs += [
            pl.BlockSpec((Cout, Cin), lambda i: (0, 0)),   # 1x1 shortcut weights
            pl.BlockSpec((Cin, tm), lambda i: (0, i)),     # strided shortcut input
            pl.BlockSpec((Cout, 1), lambda i: (0, 0)),     # shortcut BN bias
        ]
        args += [ws, xs, bs]
    else:
        kernel = functools.partial(_conv_bias_kernel, relu=relu)

    return pl.pallas_call(
        kernel,
        out_shape=jax.ShapeDtypeStruct((Cout, M), jnp.float32),
        grid_spec=pltpu.PrefetchScalarGridSpec(
            num_scalar_prefetch=0,
            grid=grid,
            in_specs=in_specs,
            out_specs=pl.BlockSpec((Cout, tm), lambda i: (0, i)),
        ),
        compiler_params=pltpu.CompilerParams(dimension_semantics=("parallel",)),
    )(*args)


# ----------------------------------------------------------------------------
# JAX glue: channels-major im2col + weight/BN folding
# ----------------------------------------------------------------------------
def _im2col_3x3_cnhw(x, stride):
    # x: (C, N, H, W) f32, padding=1, kernel 3x3; stride is a static Python int.
    C, N, H, W = x.shape
    Ho = (H + 2 - 3) // stride + 1
    Wo = (W + 2 - 3) // stride + 1
    xp = jnp.pad(x, ((0, 0), (0, 0), (1, 1), (1, 1)))
    taps = []
    for di in range(3):
        for dj in range(3):
            sl = xp[:, :, di:di + (Ho - 1) * stride + 1:stride,
                          dj:dj + (Wo - 1) * stride + 1:stride]
            taps.append(sl)                                # (C, N, Ho, Wo)
    patches = jnp.stack(taps, axis=1)                      # (C, 9, N, Ho, Wo)
    patches = patches.reshape(C * 9, N * Ho * Wo)          # rows ordered (cin, di, dj)
    return patches.astype(jnp.bfloat16), (N, Ho, Wo)


def conv3x3_bn(x, w, scale, bias, *, stride=1, relu=True, residual=None, shortcut=None):
    # x: (Cin, N, H, W) f32; w: (Cout, Cin, 3, 3) PyTorch layout.
    Cout = w.shape[0]
    patches, (N, Ho, Wo) = _im2col_3x3_cnhw(x, stride)
    # weight flatten (Cout, Cin*9) matches patch row order (cin, di, dj); fold BN scale.
    w_flat = (w.reshape(Cout, -1) * scale[:, None]).astype(jnp.bfloat16)
    b = bias.reshape(Cout, 1).astype(jnp.float32)
    res = None if residual is None else residual.reshape(Cout, -1)
    out = _run_conv(w_flat, patches, b, relu=relu, residual=res, shortcut=shortcut)
    return out.reshape(Cout, N, Ho, Wo)


def _fold_bn(gamma, beta, mean, var, eps=1e-5):
    scale = gamma / jnp.sqrt(var + eps)
    bias = beta - mean * scale
    return scale, bias


# ----------------------------------------------------------------------------
# Static architecture config (ResNet18: num_blocks=[2,2,2,2]) and parameters
# ----------------------------------------------------------------------------
_BLOCKS = [  # (planes multiplier, stride) -- static, never traced
    (1, 1), (1, 1),
    (2, 2), (2, 1),
    (4, 2), (4, 1),
    (8, 2), (8, 1),
]


def init_params(key, nf=8, in_ch=3):
    keys = iter(jax.random.split(key, 256))

    def conv_w(cout, cin, k):
        return 0.1 * jax.random.normal(next(keys), (cout, cin, k, k), jnp.float32)

    def bn_p(c):
        gamma = 1.0 + 0.1 * jax.random.normal(next(keys), (c,), jnp.float32)
        beta = 0.1 * jax.random.normal(next(keys), (c,), jnp.float32)
        mean = 0.1 * jax.random.normal(next(keys), (c,), jnp.float32)
        var = 1.0 + 0.1 * jax.nn.softplus(jax.random.normal(next(keys), (c,), jnp.float32))
        return _fold_bn(gamma, beta, mean, var)

    params = {"conv1_w": conv_w(nf, in_ch, 3), "bn1": bn_p(nf), "blocks": []}
    in_planes = nf
    for pm, stride in _BLOCKS:
        planes = pm * nf
        blk = {
            "conv1_w": conv_w(planes, in_planes, 3), "bn1": bn_p(planes),
            "conv2_w": conv_w(planes, planes, 3), "bn2": bn_p(planes),
        }
        if stride != 1 or in_planes != planes:
            blk["sc_w"] = conv_w(planes, in_planes, 1)
            blk["sc_bn"] = bn_p(planes)
        params["blocks"].append(blk)
        in_planes = planes
    return params


# ----------------------------------------------------------------------------
# Forward pass: OCMResnet.forward(x) == ResNet18.features(x)
# ----------------------------------------------------------------------------
def ocm_resnet_forward(params, x_nchw):
    x = jnp.transpose(x_nchw, (1, 0, 2, 3)).astype(jnp.float32)  # NCHW -> CNHW
    s0, b0 = params["bn1"]
    out = conv3x3_bn(x, params["conv1_w"], s0, b0, stride=1, relu=True)

    for blk, (_, stride) in zip(params["blocks"], _BLOCKS):
        s1, b1 = blk["bn1"]
        s2, b2 = blk["bn2"]
        h = conv3x3_bn(out, blk["conv1_w"], s1, b1, stride=stride, relu=True)
        if "sc_w" in blk:
            # downsample shortcut: fuse the 1x1 conv + BN into the conv2 kernel epilogue
            ss, sb = blk["sc_bn"]
            Cout, Cin = blk["sc_w"].shape[0], blk["sc_w"].shape[1]
            ws = (blk["sc_w"].reshape(Cout, Cin) * ss[:, None]).astype(jnp.bfloat16)
            xs = out[:, :, ::stride, ::stride].reshape(Cin, -1).astype(jnp.bfloat16)
            bs = sb.reshape(Cout, 1).astype(jnp.float32)
            out = conv3x3_bn(h, blk["conv2_w"], s2, b2, stride=1, relu=True,
                             shortcut=(ws, xs, bs))
        else:
            # identity shortcut: residual add (f32) fused into the conv2 kernel epilogue
            out = conv3x3_bn(h, blk["conv2_w"], s2, b2, stride=1, relu=True,
                             residual=out)

    # avg_pool2d(out, 4) then flatten in PyTorch NCHW order
    C, N, H, W = out.shape
    pooled = out.reshape(C, N, H // 4, 4, W // 4, 4).mean(axis=(3, 5))  # (C, N, H', W')
    pooled = jnp.transpose(pooled, (1, 0, 2, 3))                        # (N, C, H', W')
    return pooled.reshape(N, -1)


if __name__ == "__main__":
    key = jax.random.PRNGKey(0)
    pkey, xkey = jax.random.split(key)
    nf = 8                                   # small-width ResNet18 (feature dim = 8*nf = 64)
    params = init_params(pkey, nf=nf, in_ch=3)
    # 32x32 input (CIFAR-style): spatial /8 through the stride-2 stages, then avg_pool(4)
    x = jax.random.normal(xkey, (2, 3, 32, 32), jnp.float32)  # NCHW, like PyTorch

    fwd = jax.jit(ocm_resnet_forward)
    feats = fwd(params, x)
    jax.block_until_ready(feats)
    assert feats.shape == (2, 8 * nf), feats.shape
    assert bool(jnp.all(jnp.isfinite(feats)))
    print("KERNEL_OK")
</pallas_src>

<mosaic_0001>
module attributes {stable_mosaic.version = 11 : i64} {
  func.func @_conv_bias_kernel(%arg0: i32, %arg1: memref<8x27xbf16, #tpu.memory_space<vmem>>, %arg2: memref<27x1024xbf16, #tpu.memory_space<vmem>>, %arg3: memref<8x1xf32, #tpu.memory_space<vmem>>, %arg4: memref<8x1024xf32, #tpu.memory_space<vmem>>) attributes {dimension_semantics = [#tpu.dimension_semantics<parallel>], iteration_bounds = array<i64: 2>, scalar_prefetch = 0 : i64, scratch_operands = 0 : i64, tpu.core_type = #tpu.core_type<tc>, window_params = [{pipeline_mode = #tpu.pipeline_mode<synchronous>, transform_indices = @transform_0, window_bounds = array<i64: 8, 27>}, {transform_indices = @transform_1, window_bounds = array<i64: 27, 1024>}, {pipeline_mode = #tpu.pipeline_mode<synchronous>, transform_indices = @transform_2, window_bounds = array<i64: 8, 1>}, {transform_indices = @transform_3, window_bounds = array<i64: 8, 1024>}]} {
    %c0 = arith.constant 0 : index
    %c0_0 = arith.constant 0 : index
    %0 = vector.load %arg1[%c0, %c0_0] : memref<8x27xbf16, #tpu.memory_space<vmem>>, vector<8x27xbf16>
    %c0_1 = arith.constant 0 : index
    %c0_2 = arith.constant 0 : index
    %1 = vector.load %arg2[%c0_1, %c0_2] : memref<27x1024xbf16, #tpu.memory_space<vmem>>, vector<27x1024xbf16>
    %cst = arith.constant dense<0.000000e+00> : vector<8x1024xf32>
    %2 = tpu.matmul %0, %1, %cst {dimension_numbers = #tpu.dot_dimension_numbers<[1], [0], [0], [1], [0, 0, 1, 1], [], []>} : vector<8x27xbf16>, vector<27x1024xbf16>, vector<8x1024xf32> -> vector<8x1024xf32>
    %c0_3 = arith.constant 0 : index
    %c0_4 = arith.constant 0 : index
    %3 = vector.load %arg3[%c0_3, %c0_4] : memref<8x1xf32, #tpu.memory_space<vmem>>, vector<8x1xf32>
    %4 = vector.broadcast %3 : vector<8x1xf32> to vector<8x1024xf32>
    %5 = arith.addf %2, %4 : vector<8x1024xf32>
    %cst_5 = arith.constant 0.000000e+00 : f32
    %6 = vector.broadcast %cst_5 : f32 to vector<8x1024xf32>
    %7 = arith.maximumf %5, %6 : vector<8x1024xf32>
    %c0_6 = arith.constant 0 : index
    %c0_7 = arith.constant 0 : index
    %8 = vector.load %arg4[%c0_6, %c0_7] : memref<8x1024xf32, #tpu.memory_space<vmem>>, vector<8x1024xf32>
    tpu.vector_store %arg4[%c0_6, %c0_7], %7 {strides = array<i32>} : memref<8x1024xf32, #tpu.memory_space<vmem>>, vector<8x1024xf32>,
    return
  }
  func.func @transform_0(%arg0: i32) -> (i32, i32) {
    %c0_i32 = arith.constant 0 : i32
    %c0_i32_0 = arith.constant 0 : i32
    %c0_i32_1 = arith.constant 0 : i32
    return %c0_i32, %c0_i32_0 : i32, i32
  }
  func.func @transform_1(%arg0: i32) -> (i32, i32) {
    %c0_i32 = arith.constant 0 : i32
    %c0_i32_0 = arith.constant 0 : i32
    return %c0_i32, %arg0 : i32, i32
  }
  func.func @transform_2(%arg0: i32) -> (i32, i32) {
    %c0_i32 = arith.constant 0 : i32
    %c0_i32_0 = arith.constant 0 : i32
    %c0_i32_1 = arith.constant 0 : i32
    return %c0_i32, %c0_i32_0 : i32, i32
  }
  func.func @transform_3(%arg0: i32) -> (i32, i32) {
    %c0_i32 = arith.constant 0 : i32
    %c0_i32_0 = arith.constant 0 : i32
    return %c0_i32, %arg0 : i32, i32
  }
}

module attributes {stable_mosaic.version = 11 : i64} {
  func.func @_conv_bias_res_kernel(%arg0: i32, %arg1: memref<8x72xbf16, #tpu.memory_space<vmem>>, %arg2: memref<72x1024xbf16, #tpu.memory_space<vmem>>, %arg3: memref<8x1xf32, #tpu.memory_space<vmem>>, %arg4: memref<8x1024xf32, #tpu.memory_space<vmem>>, %arg5: memref<8x1024xf32, #tpu.memory_space<vmem>>) attributes {dimension_semantics = [#tpu.dimension_semantics<parallel>], iteration_bounds = array<i64: 2>, scalar_prefetch = 0 : i64, scratch_operands = 0 : i64, tpu.core_type = #tpu.core_type<tc>, window_params = [{pipeline_mode = #tpu.pipeline_mode<synchronous>, transform_indices = @transform_0, window_bounds = array<i64: 8, 72>}, {transform_indices = @transform_1, window_bounds = array<i64: 72, 1024>}, {pipeline_mode = #tpu.pipeline_mode<synchronous>, transform_indices = @transform_2, window_bounds = array<i64: 8, 1>}, {transform_indices = @transform_3, window_bounds = array<i64: 8, 1024>}, {transform_indices = @transform_4, window_bounds = array<i64: 8, 1024>}]} {
    %c0 = arith.constant 0 : index
    %c0_0 = arith.constant 0 : index
    %0 = vector.load %arg1[%c0, %c0_0] : memref<8x72xbf16, #tpu.memory_space<vmem>>, vector<8x72xbf16>
    %c0_1 = arith.constant 0 : index
    %c0_2 = arith.constant 0 : index
    %1 = vector.load %arg2[%c0_1, %c0_2] : memref<72x1024xbf16, #tpu.memory_space<vmem>>, vector<72x1024xbf16>
    %cst = arith.constant dense<0.000000e+00> : vector<8x1024xf32>
    %2 = tpu.matmul %0, %1, %cst {dimension_numbers = #tpu.dot_dimension_numbers<[1], [0], [0], [1], [0, 0, 1, 1], [], []>} : vector<8x72xbf16>, vector<72x1024xbf16>, vector<8x1024xf32> -> vector<8x1024xf32>
    %c0_3 = arith.constant 0 : index
    %c0_4 = arith.constant 0 : index
    %3 = vector.load %arg3[%c0_3, %c0_4] : memref<8x1xf32, #tpu.memory_space<vmem>>, vector<8x1xf32>
    %4 = vector.broadcast %3 : vector<8x1xf32> to vector<8x1024xf32>
    %5 = arith.addf %2, %4 : vector<8x1024xf32>
    %c0_5 = arith.constant 0 : index
    %c0_6 = arith.constant 0 : index
    %6 = vector.load %arg4[%c0_5, %c0_6] : memref<8x1024xf32, #tpu.memory_space<vmem>>, vector<8x1024xf32>
    %7 = arith.addf %5, %6 : vector<8x1024xf32>
    %cst_7 = arith.constant 0.000000e+00 : f32
    %8 = vector.broadcast %cst_7 : f32 to vector<8x1024xf32>
    %9 = arith.maximumf %7, %8 : vector<8x1024xf32>
    %c0_8 = arith.constant 0 : index
    %c0_9 = arith.constant 0 : index
    %10 = vector.load %arg5[%c0_8, %c0_9] : memref<8x1024xf32, #tpu.memory_space<vmem>>, vector<8x1024xf32>
    tpu.vector_store %arg5[%c0_8, %c0_9], %9 {strides = array<i32>} : memref<8x1024xf32, #tpu.memory_space<vmem>>, vector<8x1024xf32>,
    return
  }
  func.func @transform_0(%arg0: i32) -> (i32, i32) {
    %c0_i32 = arith.constant 0 : i32
    %c0_i32_0 = arith.constant 0 : i32
    %c0_i32_1 = arith.constant 0 : i32
    return %c0_i32, %c0_i32_0 : i32, i32
  }
  func.func @transform_1(%arg0: i32) -> (i32, i32) {
    %c0_i32 = arith.constant 0 : i32
    %c0_i32_0 = arith.constant 0 : i32
    return %c0_i32, %arg0 : i32, i32
  }
  func.func @transform_2(%arg0: i32) -> (i32, i32) {
    %c0_i32 = arith.constant 0 : i32
    %c0_i32_0 = arith.constant 0 : i32
    %c0_i32_1 = arith.constant 0 : i32
    return %c0_i32, %c0_i32_0 : i32, i32
  }
  func.func @transform_3(%arg0: i32) -> (i32, i32) {
    %c0_i32 = arith.constant 0 : i32
    %c0_i32_0 = arith.constant 0 : i32
    return %c0_i32, %arg0 : i32, i32
  }
  func.func @transform_4(%arg0: i32) -> (i32, i32) {
    %c0_i32 = arith.constant 0 : i32
    %c0_i32_0 = arith.constant 0 : i32
    return %c0_i32, %arg0 : i32, i32
  }
}

module attributes {stable_mosaic.version = 11 : i64} {
  func.func @_conv_bias_kernel(%arg0: i32, %arg1: memref<8x72xbf16, #tpu.memory_space<vmem>>, %arg2: memref<72x1024xbf16, #tpu.memory_space<vmem>>, %arg3: memref<8x1xf32, #tpu.memory_space<vmem>>, %arg4: memref<8x1024xf32, #tpu.memory_space<vmem>>) attributes {dimension_semantics = [#tpu.dimension_semantics<parallel>], iteration_bounds = array<i64: 2>, scalar_prefetch = 0 : i64, scratch_operands = 0 : i64, tpu.core_type = #tpu.core_type<tc>, window_params = [{pipeline_mode = #tpu.pipeline_mode<synchronous>, transform_indices = @transform_0, window_bounds = array<i64: 8, 72>}, {transform_indices = @transform_1, window_bounds = array<i64: 72, 1024>}, {pipeline_mode = #tpu.pipeline_mode<synchronous>, transform_indices = @transform_2, window_bounds = array<i64: 8, 1>}, {transform_indices = @transform_3, window_bounds = array<i64: 8, 1024>}]} {
    %c0 = arith.constant 0 : index
    %c0_0 = arith.constant 0 : index
    %0 = vector.load %arg1[%c0, %c0_0] : memref<8x72xbf16, #tpu.memory_space<vmem>>, vector<8x72xbf16>
    %c0_1 = arith.constant 0 : index
    %c0_2 = arith.constant 0 : index
    %1 = vector.load %arg2[%c0_1, %c0_2] : memref<72x1024xbf16, #tpu.memory_space<vmem>>, vector<72x1024xbf16>
    %cst = arith.constant dense<0.000000e+00> : vector<8x1024xf32>
    %2 = tpu.matmul %0, %1, %cst {dimension_numbers = #tpu.dot_dimension_numbers<[1], [0], [0], [1], [0, 0, 1, 1], [], []>} : vector<8x72xbf16>, vector<72x1024xbf16>, vector<8x1024xf32> -> vector<8x1024xf32>
    %c0_3 = arith.constant 0 : index
    %c0_4 = arith.constant 0 : index
    %3 = vector.load %arg3[%c0_3, %c0_4] : memref<8x1xf32, #tpu.memory_space<vmem>>, vector<8x1xf32>
    %4 = vector.broadcast %3 : vector<8x1xf32> to vector<8x1024xf32>
    %5 = arith.addf %2, %4 : vector<8x1024xf32>
    %cst_5 = arith.constant 0.000000e+00 : f32
    %6 = vector.broadcast %cst_5 : f32 to vector<8x1024xf32>
    %7 = arith.maximumf %5, %6 : vector<8x1024xf32>
    %c0_6 = arith.constant 0 : index
    %c0_7 = arith.constant 0 : index
    %8 = vector.load %arg4[%c0_6, %c0_7] : memref<8x1024xf32, #tpu.memory_space<vmem>>, vector<8x1024xf32>
    tpu.vector_store %arg4[%c0_6, %c0_7], %7 {strides = array<i32>} : memref<8x1024xf32, #tpu.memory_space<vmem>>, vector<8x1024xf32>,
    return
  }
  func.func @transform_0(%arg0: i32) -> (i32, i32) {
    %c0_i32 = arith.constant 0 : i32
    %c0_i32_0 = arith.constant 0 : i32
    %c0_i32_1 = arith.constant 0 : i32
    return %c0_i32, %c0_i32_0 : i32, i32
  }
  func.func @transform_1(%arg0: i32) -> (i32, i32) {
    %c0_i32 = arith.constant 0 : i32
    %c0_i32_0 = arith.constant 0 : i32
    return %c0_i32, %arg0 : i32, i32
  }
  func.func @transform_2(%arg0: i32) -> (i32, i32) {
    %c0_i32 = arith.constant 0 : i32
    %c0_i32_0 = arith.constant 0 : i32
    %c0_i32_1 = arith.constant 0 : i32
    return %c0_i32, %c0_i32_0 : i32, i32
  }
  func.func @transform_3(%arg0: i32) -> (i32, i32) {
    %c0_i32 = arith.constant 0 : i32
    %c0_i32_0 = arith.constant 0 : i32
    return %c0_i32, %arg0 : i32, i32
  }
}

module attributes {stable_mosaic.version = 11 : i64} {
  func.func @_conv_bias_kernel(%arg0: i32, %arg1: memref<16x72xbf16, #tpu.memory_space<vmem>>, %arg2: memref<72x256xbf16, #tpu.memory_space<vmem>>, %arg3: memref<16x1xf32, #tpu.memory_space<vmem>>, %arg4: memref<16x256xf32, #tpu.memory_space<vmem>>) attributes {dimension_semantics = [#tpu.dimension_semantics<parallel>], iteration_bounds = array<i64: 2>, scalar_prefetch = 0 : i64, scratch_operands = 0 : i64, tpu.core_type = #tpu.core_type<tc>, window_params = [{pipeline_mode = #tpu.pipeline_mode<synchronous>, transform_indices = @transform_0, window_bounds = array<i64: 16, 72>}, {transform_indices = @transform_1, window_bounds = array<i64: 72, 256>}, {pipeline_mode = #tpu.pipeline_mode<synchronous>, transform_indices = @transform_2, window_bounds = array<i64: 16, 1>}, {transform_indices = @transform_3, window_bounds = array<i64: 16, 256>}]} {
    %c0 = arith.constant 0 : index
    %c0_0 = arith.constant 0 : index
    %0 = vector.load %arg1[%c0, %c0_0] : memref<16x72xbf16, #tpu.memory_space<vmem>>, vector<16x72xbf16>
    %c0_1 = arith.constant 0 : index
    %c0_2 = arith.constant 0 : index
    %1 = vector.load %arg2[%c0_1, %c0_2] : memref<72x256xbf16, #tpu.memory_space<vmem>>, vector<72x256xbf16>
    %cst = arith.constant dense<0.000000e+00> : vector<16x256xf32>
    %2 = tpu.matmul %0, %1, %cst {dimension_numbers = #tpu.dot_dimension_numbers<[1], [0], [0], [1], [0, 0, 1, 1], [], []>} : vector<16x72xbf16>, vector<72x256xbf16>, vector<16x256xf32> -> vector<16x256xf32>
    %c0_3 = arith.constant 0 : index
    %c0_4 = arith.constant 0 : index
    %3 = vector.load %arg3[%c0_3, %c0_4] : memref<16x1xf32, #tpu.memory_space<vmem>>, vector<16x1xf32>
    %4 = vector.broadcast %3 : vector<16x1xf32> to vector<16x256xf32>
    %5 = arith.addf %2, %4 : vector<16x256xf32>
    %cst_5 = arith.constant 0.000000e+00 : f32
    %6 = vector.broadcast %cst_5 : f32 to vector<16x256xf32>
    %7 = arith.maximumf %5, %6 : vector<16x256xf32>
    %c0_6 = arith.constant 0 : index
    %c0_7 = arith.constant 0 : index
    %8 = vector.load %arg4[%c0_6, %c0_7] : memref<16x256xf32, #tpu.memory_space<vmem>>, vector<16x256xf32>
    tpu.vector_store %arg4[%c0_6, %c0_7], %7 {strides = array<i32>} : memref<16x256xf32, #tpu.memory_space<vmem>>, vector<16x256xf32>,
    return
  }
  func.func @transform_0(%arg0: i32) -> (i32, i32) {
    %c0_i32 = arith.constant 0 : i32
    %c0_i32_0 = arith.constant 0 : i32
    %c0_i32_1 = arith.constant 0 : i32
    return %c0_i32, %c0_i32_0 : i32, i32
  }
  func.func @transform_1(%arg0: i32) -> (i32, i32) {
    %c0_i32 = arith.constant 0 : i32
    %c0_i32_0 = arith.constant 0 : i32
    return %c0_i32, %arg0 : i32, i32
  }
  func.func @transform_2(%arg0: i32) -> (i32, i32) {
    %c0_i32 = arith.constant 0 : i32
    %c0_i32_0 = arith.constant 0 : i32
    %c0_i32_1 = arith.constant 0 : i32
    return %c0_i32, %c0_i32_0 : i32, i32
  }
  func.func @transform_3(%arg0: i32) -> (i32, i32) {
    %c0_i32 = arith.constant 0 : i32
    %c0_i32_0 = arith.constant 0 : i32
    return %c0_i32, %arg0 : i32, i32
  }
}

module attributes {stable_mosaic.version = 11 : i64} {
  func.func @_conv_bias_sc_kernel(%arg0: i32, %arg1: memref<16x144xbf16, #tpu.memory_space<vmem>>, %arg2: memref<144x256xbf16, #tpu.memory_space<vmem>>, %arg3: memref<16x1xf32, #tpu.memory_space<vmem>>, %arg4: memref<16x8xbf16, #tpu.memory_space<vmem>>, %arg5: memref<8x256xbf16, #tpu.memory_space<vmem>>, %arg6: memref<16x1xf32, #tpu.memory_space<vmem>>, %arg7: memref<16x256xf32, #tpu.memory_space<vmem>>) attributes {dimension_semantics = [#tpu.dimension_semantics<parallel>], iteration_bounds = array<i64: 2>, scalar_prefetch = 0 : i64, scratch_operands = 0 : i64, tpu.core_type = #tpu.core_type<tc>, window_params = [{pipeline_mode = #tpu.pipeline_mode<synchronous>, transform_indices = @transform_0, window_bounds = array<i64: 16, 144>}, {transform_indices = @transform_1, window_bounds = array<i64: 144, 256>}, {pipeline_mode = #tpu.pipeline_mode<synchronous>, transform_indices = @transform_2, window_bounds = array<i64: 16, 1>}, {pipeline_mode = #tpu.pipeline_mode<synchronous>, transform_indices = @transform_3, window_bounds = array<i64: 16, 8>}, {transform_indices = @transform_4, window_bounds = array<i64: 8, 256>}, {pipeline_mode = #tpu.pipeline_mode<synchronous>, transform_indices = @transform_5, window_bounds = array<i64: 16, 1>}, {transform_indices = @transform_6, window_bounds = array<i64: 16, 256>}]} {
    %c0 = arith.constant 0 : index
    %c0_0 = arith.constant 0 : index
    %0 = vector.load %arg1[%c0, %c0_0] : memref<16x144xbf16, #tpu.memory_space<vmem>>, vector<16x144xbf16>
    %c0_1 = arith.constant 0 : index
    %c0_2 = arith.constant 0 : index
    %1 = vector.load %arg2[%c0_1, %c0_2] : memref<144x256xbf16, #tpu.memory_space<vmem>>, vector<144x256xbf16>
    %cst = arith.constant dense<0.000000e+00> : vector<16x256xf32>
    %2 = tpu.matmul %0, %1, %cst {dimension_numbers = #tpu.dot_dimension_numbers<[1], [0], [0], [1], [0, 0, 1, 1], [], []>} : vector<16x144xbf16>, vector<144x256xbf16>, vector<16x256xf32> -> vector<16x256xf32>
    %c0_3 = arith.constant 0 : index
    %c0_4 = arith.constant 0 : index
    %3 = vector.load %arg4[%c0_3, %c0_4] : memref<16x8xbf16, #tpu.memory_space<vmem>>, vector<16x8xbf16>
    %c0_5 = arith.constant 0 : index
    %c0_6 = arith.constant 0 : index
    %4 = vector.load %arg5[%c0_5, %c0_6] : memref<8x256xbf16, #tpu.memory_space<vmem>>, vector<8x256xbf16>
    %cst_7 = arith.constant dense<0.000000e+00> : vector<16x256xf32>
    %5 = tpu.matmul %3, %4, %cst_7 {dimension_numbers = #tpu.dot_dimension_numbers<[1], [0], [0], [1], [0, 0, 1, 1], [], []>} : vector<16x8xbf16>, vector<8x256xbf16>, vector<16x256xf32> -> vector<16x256xf32>
    %c0_8 = arith.constant 0 : index
    %c0_9 = arith.constant 0 : index
    %6 = vector.load %arg3[%c0_8, %c0_9] : memref<16x1xf32, #tpu.memory_space<vmem>>, vector<16x1xf32>
    %7 = vector.broadcast %6 : vector<16x1xf32> to vector<16x256xf32>
    %8 = arith.addf %2, %7 : vector<16x256xf32>
    %9 = arith.addf %8, %5 : vector<16x256xf32>
    %c0_10 = arith.constant 0 : index
    %c0_11 = arith.constant 0 : index
    %10 = vector.load %arg6[%c0_10, %c0_11] : memref<16x1xf32, #tpu.memory_space<vmem>>, vector<16x1xf32>
    %11 = vector.broadcast %10 : vector<16x1xf32> to vector<16x256xf32>
    %12 = arith.addf %9, %11 : vector<16x256xf32>
    %cst_12 = arith.constant 0.000000e+00 : f32
    %13 = vector.broadcast %cst_12 : f32 to vector<16x256xf32>
    %14 = arith.maximumf %12, %13 : vector<16x256xf32>
    %c0_13 = arith.constant 0 : index
    %c0_14 = arith.constant 0 : index
    %15 = vector.load %arg7[%c0_13, %c0_14] : memref<16x256xf32, #tpu.memory_space<vmem>>, vector<16x256xf32>
    tpu.vector_store %arg7[%c0_13, %c0_14], %14 {strides = array<i32>} : memref<16x256xf32, #tpu.memory_space<vmem>>, vector<16x256xf32>,
    return
  }
  func.func @transform_0(%arg0: i32) -> (i32, i32) {
    %c0_i32 = arith.constant 0 : i32
    %c0_i32_0 = arith.constant 0 : i32
    %c0_i32_1 = arith.constant 0 : i32
    return %c0_i32, %c0_i32_0 : i32, i32
  }
  func.func @transform_1(%arg0: i32) -> (i32, i32) {
    %c0_i32 = arith.constant 0 : i32
    %c0_i32_0 = arith.constant 0 : i32
    return %c0_i32, %arg0 : i32, i32
  }
  func.func @transform_2(%arg0: i32) -> (i32, i32) {
    %c0_i32 = arith.constant 0 : i32
    %c0_i32_0 = arith.constant 0 : i32
    %c0_i32_1 = arith.constant 0 : i32
    return %c0_i32, %c0_i32_0 : i32, i32
  }
  func.func @transform_3(%arg0: i32) -> (i32, i32) {
    %c0_i32 = arith.constant 0 : i32
    %c0_i32_0 = arith.constant 0 : i32
    %c0_i32_1 = arith.constant 0 : i32
    return %c0_i32, %c0_i32_0 : i32, i32
  }
  func.func @transform_4(%arg0: i32) -> (i32, i32) {
    %c0_i32 = arith.constant 0 : i32
    %c0_i32_0 = arith.constant 0 : i32
    return %c0_i32, %arg0 : i32, i32
  }
  func.func @transform_5(%arg0: i32) -> (i32, i32) {
    %c0_i32 = arith.constant 0 : i32
    %c0_i32_0 = arith.constant 0 : i32
    %c0_i32_1 = arith.constant 0 : i32
    return %c0_i32, %c0_i32_0 : i32, i32
  }
  func.func @transform_6(%arg0: i32) -> (i32, i32) {
    %c0_i32 = arith.constant 0 : i32
    %c0_i32_0 = arith.constant 0 : i32
    return %c0_i32, %arg0 : i32, i32
  }
}

module attributes {stable_mosaic.version = 11 : i64} {
  func.func @_conv_bias_kernel(%arg0: i32, %arg1: memref<16x144xbf16, #tpu.memory_space<vmem>>, %arg2: memref<144x256xbf16, #tpu.memory_space<vmem>>, %arg3: memref<16x1xf32, #tpu.memory_space<vmem>>, %arg4: memref<16x256xf32, #tpu.memory_space<vmem>>) attributes {dimension_semantics = [#tpu.dimension_semantics<parallel>], iteration_bounds = array<i64: 2>, scalar_prefetch = 0 : i64, scratch_operands = 0 : i64, tpu.core_type = #tpu.core_type<tc>, window_params = [{pipeline_mode = #tpu.pipeline_mode<synchronous>, transform_indices = @transform_0, window_bounds = array<i64: 16, 144>}, {transform_indices = @transform_1, window_bounds = array<i64: 144, 256>}, {pipeline_mode = #tpu.pipeline_mode<synchronous>, transform_indices = @transform_2, window_bounds = array<i64: 16, 1>}, {transform_indices = @transform_3, window_bounds = array<i64: 16, 256>}]} {
    %c0 = arith.constant 0 : index
    %c0_0 = arith.constant 0 : index
    %0 = vector.load %arg1[%c0, %c0_0] : memref<16x144xbf16, #tpu.memory_space<vmem>>, vector<16x144xbf16>
    %c0_1 = arith.constant 0 : index
    %c0_2 = arith.constant 0 : index
    %1 = vector.load %arg2[%c0_1, %c0_2] : memref<144x256xbf16, #tpu.memory_space<vmem>>, vector<144x256xbf16>
    %cst = arith.constant dense<0.000000e+00> : vector<16x256xf32>
    %2 = tpu.matmul %0, %1, %cst {dimension_numbers = #tpu.dot_dimension_numbers<[1], [0], [0], [1], [0, 0, 1, 1], [], []>} : vector<16x144xbf16>, vector<144x256xbf16>, vector<16x256xf32> -> vector<16x256xf32>
    %c0_3 = arith.constant 0 : index
    %c0_4 = arith.constant 0 : index
    %3 = vector.load %arg3[%c0_3, %c0_4] : memref<16x1xf32, #tpu.memory_space<vmem>>, vector<16x1xf32>
    %4 = vector.broadcast %3 : vector<16x1xf32> to vector<16x256xf32>
    %5 = arith.addf %2, %4 : vector<16x256xf32>
    %cst_5 = arith.constant 0.000000e+00 : f32
    %6 = vector.broadcast %cst_5 : f32 to vector<16x256xf32>
    %7 = arith.maximumf %5, %6 : vector<16x256xf32>
    %c0_6 = arith.constant 0 : index
    %c0_7 = arith.constant 0 : index
    %8 = vector.load %arg4[%c0_6, %c0_7] : memref<16x256xf32, #tpu.memory_space<vmem>>, vector<16x256xf32>
    tpu.vector_store %arg4[%c0_6, %c0_7], %7 {strides = array<i32>} : memref<16x256xf32, #tpu.memory_space<vmem>>, vector<16x256xf32>,
    return
  }
  func.func @transform_0(%arg0: i32) -> (i32, i32) {
    %c0_i32 = arith.constant 0 : i32
    %c0_i32_0 = arith.constant 0 : i32
    %c0_i32_1 = arith.constant 0 : i32
    return %c0_i32, %c0_i32_0 : i32, i32
  }
  func.func @transform_1(%arg0: i32) -> (i32, i32) {
    %c0_i32 = arith.constant 0 : i32
    %c0_i32_0 = arith.constant 0 : i32
    return %c0_i32, %arg0 : i32, i32
  }
  func.func @transform_2(%arg0: i32) -> (i32, i32) {
    %c0_i32 = arith.constant 0 : i32
    %c0_i32_0 = arith.constant 0 : i32
    %c0_i32_1 = arith.constant 0 : i32
    return %c0_i32, %c0_i32_0 : i32, i32
  }
  func.func @transform_3(%arg0: i32) -> (i32, i32) {
    %c0_i32 = arith.constant 0 : i32
    %c0_i32_0 = arith.constant 0 : i32
    return %c0_i32, %arg0 : i32, i32
  }
}

module attributes {stable_mosaic.version = 11 : i64} {
  func.func @_conv_bias_res_kernel(%arg0: i32, %arg1: memref<16x144xbf16, #tpu.memory_space<vmem>>, %arg2: memref<144x256xbf16, #tpu.memory_space<vmem>>, %arg3: memref<16x1xf32, #tpu.memory_space<vmem>>, %arg4: memref<16x256xf32, #tpu.memory_space<vmem>>, %arg5: memref<16x256xf32, #tpu.memory_space<vmem>>) attributes {dimension_semantics = [#tpu.dimension_semantics<parallel>], iteration_bounds = array<i64: 2>, scalar_prefetch = 0 : i64, scratch_operands = 0 : i64, tpu.core_type = #tpu.core_type<tc>, window_params = [{pipeline_mode = #tpu.pipeline_mode<synchronous>, transform_indices = @transform_0, window_bounds = array<i64: 16, 144>}, {transform_indices = @transform_1, window_bounds = array<i64: 144, 256>}, {pipeline_mode = #tpu.pipeline_mode<synchronous>, transform_indices = @transform_2, window_bounds = array<i64: 16, 1>}, {transform_indices = @transform_3, window_bounds = array<i64: 16, 256>}, {transform_indices = @transform_4, window_bounds = array<i64: 16, 256>}]} {
    %c0 = arith.constant 0 : index
    %c0_0 = arith.constant 0 : index
    %0 = vector.load %arg1[%c0, %c0_0] : memref<16x144xbf16, #tpu.memory_space<vmem>>, vector<16x144xbf16>
    %c0_1 = arith.constant 0 : index
    %c0_2 = arith.constant 0 : index
    %1 = vector.load %arg2[%c0_1, %c0_2] : memref<144x256xbf16, #tpu.memory_space<vmem>>, vector<144x256xbf16>
    %cst = arith.constant dense<0.000000e+00> : vector<16x256xf32>
    %2 = tpu.matmul %0, %1, %cst {dimension_numbers = #tpu.dot_dimension_numbers<[1], [0], [0], [1], [0, 0, 1, 1], [], []>} : vector<16x144xbf16>, vector<144x256xbf16>, vector<16x256xf32> -> vector<16x256xf32>
    %c0_3 = arith.constant 0 : index
    %c0_4 = arith.constant 0 : index
    %3 = vector.load %arg3[%c0_3, %c0_4] : memref<16x1xf32, #tpu.memory_space<vmem>>, vector<16x1xf32>
    %4 = vector.broadcast %3 : vector<16x1xf32> to vector<16x256xf32>
    %5 = arith.addf %2, %4 : vector<16x256xf32>
    %c0_5 = arith.constant 0 : index
    %c0_6 = arith.constant 0 : index
    %6 = vector.load %arg4[%c0_5, %c0_6] : memref<16x256xf32, #tpu.memory_space<vmem>>, vector<16x256xf32>
    %7 = arith.addf %5, %6 : vector<16x256xf32>
    %cst_7 = arith.constant 0.000000e+00 : f32
    %8 = vector.broadcast %cst_7 : f32 to vector<16x256xf32>
    %9 = arith.maximumf %7, %8 : vector<16x256xf32>
    %c0_8 = arith.constant 0 : index
    %c0_9 = arith.constant 0 : index
    %10 = vector.load %arg5[%c0_8, %c0_9] : memref<16x256xf32, #tpu.memory_space<vmem>>, vector<16x256xf32>
    tpu.vector_store %arg5[%c0_8, %c0_9], %9 {strides = array<i32>} : memref<16x256xf32, #tpu.memory_space<vmem>>, vector<16x256xf32>,
    return
  }
  func.func @transform_0(%arg0: i32) -> (i32, i32) {
    %c0_i32 = arith.constant 0 : i32
    %c0_i32_0 = arith.constant 0 : i32
    %c0_i32_1 = arith.constant 0 : i32
    return %c0_i32, %c0_i32_0 : i32, i32
  }
  func.func @transform_1(%arg0: i32) -> (i32, i32) {
    %c0_i32 = arith.constant 0 : i32
    %c0_i32_0 = arith.constant 0 : i32
    return %c0_i32, %arg0 : i32, i32
  }
  func.func @transform_2(%arg0: i32) -> (i32, i32) {
    %c0_i32 = arith.constant 0 : i32
    %c0_i32_0 = arith.constant 0 : i32
    %c0_i32_1 = arith.constant 0 : i32
    return %c0_i32, %c0_i32_0 : i32, i32
  }
  func.func @transform_3(%arg0: i32) -> (i32, i32) {
    %c0_i32 = arith.constant 0 : i32
    %c0_i32_0 = arith.constant 0 : i32
    return %c0_i32, %arg0 : i32, i32
  }
  func.func @transform_4(%arg0: i32) -> (i32, i32) {
    %c0_i32 = arith.constant 0 : i32
    %c0_i32_0 = arith.constant 0 : i32
    return %c0_i32, %arg0 : i32, i32
  }
}

module attributes {stable_mosaic.version = 11 : i64} {
  func.func @_conv_bias_kernel(%arg0: i32, %arg1: memref<32x144xbf16, #tpu.memory_space<vmem>>, %arg2: memref<144x128xbf16, #tpu.memory_space<vmem>>, %arg3: memref<32x1xf32, #tpu.memory_space<vmem>>, %arg4: memref<32x128xf32, #tpu.memory_space<vmem>>) attributes {dimension_semantics = [#tpu.dimension_semantics<parallel>], iteration_bounds = array<i64: 1>, scalar_prefetch = 0 : i64, scratch_operands = 0 : i64, tpu.core_type = #tpu.core_type<tc>, window_params = [{pipeline_mode = #tpu.pipeline_mode<synchronous>, transform_indices = @transform_0, window_bounds = array<i64: 32, 144>}, {transform_indices = @transform_1, window_bounds = array<i64: 144, 128>}, {pipeline_mode = #tpu.pipeline_mode<synchronous>, transform_indices = @transform_2, window_bounds = array<i64: 32, 1>}, {transform_indices = @transform_3, window_bounds = array<i64: 32, 128>}]} {
    %c0 = arith.constant 0 : index
    %c0_0 = arith.constant 0 : index
    %0 = vector.load %arg1[%c0, %c0_0] : memref<32x144xbf16, #tpu.memory_space<vmem>>, vector<32x144xbf16>
    %c0_1 = arith.constant 0 : index
    %c0_2 = arith.constant 0 : index
    %1 = vector.load %arg2[%c0_1, %c0_2] : memref<144x128xbf16, #tpu.memory_space<vmem>>, vector<144x128xbf16>
    %cst = arith.constant dense<0.000000e+00> : vector<32x128xf32>
    %2 = tpu.matmul %0, %1, %cst {dimension_numbers = #tpu.dot_dimension_numbers<[1], [0], [0], [1], [0, 0, 1, 1], [], []>} : vector<32x144xbf16>, vector<144x128xbf16>, vector<32x128xf32> -> vector<32x128xf32>
    %c0_3 = arith.constant 0 : index
    %c0_4 = arith.constant 0 : index
    %3 = vector.load %arg3[%c0_3, %c0_4] : memref<32x1xf32, #tpu.memory_space<vmem>>, vector<32x1xf32>
    %4 = vector.broadcast %3 : vector<32x1xf32> to vector<32x128xf32>
    %5 = arith.addf %2, %4 : vector<32x128xf32>
    %cst_5 = arith.constant 0.000000e+00 : f32
    %6 = vector.broadcast %cst_5 : f32 to vector<32x128xf32>
    %7 = arith.maximumf %5, %6 : vector<32x128xf32>
    %c0_6 = arith.constant 0 : index
    %c0_7 = arith.constant 0 : index
    %8 = vector.load %arg4[%c0_6, %c0_7] : memref<32x128xf32, #tpu.memory_space<vmem>>, vector<32x128xf32>
    tpu.vector_store %arg4[%c0_6, %c0_7], %7 {strides = array<i32>} : memref<32x128xf32, #tpu.memory_space<vmem>>, vector<32x128xf32>,
    return
  }
  func.func @transform_0(%arg0: i32) -> (i32, i32) {
    %c0_i32 = arith.constant 0 : i32
    %c0_i32_0 = arith.constant 0 : i32
    %c0_i32_1 = arith.constant 0 : i32
    return %c0_i32, %c0_i32_0 : i32, i32
  }
  func.func @transform_1(%arg0: i32) -> (i32, i32) {
    %c0_i32 = arith.constant 0 : i32
    %c0_i32_0 = arith.constant 0 : i32
    return %c0_i32, %arg0 : i32, i32
  }
  func.func @transform_2(%arg0: i32) -> (i32, i32) {
    %c0_i32 = arith.constant 0 : i32
    %c0_i32_0 = arith.constant 0 : i32
    %c0_i32_1 = arith.constant 0 : i32
    return %c0_i32, %c0_i32_0 : i32, i32
  }
  func.func @transform_3(%arg0: i32) -> (i32, i32) {
    %c0_i32 = arith.constant 0 : i32
    %c0_i32_0 = arith.constant 0 : i32
    return %c0_i32, %arg0 : i32, i32
  }
}

module attributes {stable_mosaic.version = 11 : i64} {
  func.func @_conv_bias_sc_kernel(%arg0: i32, %arg1: memref<32x288xbf16, #tpu.memory_space<vmem>>, %arg2: memref<288x128xbf16, #tpu.memory_space<vmem>>, %arg3: memref<32x1xf32, #tpu.memory_space<vmem>>, %arg4: memref<32x16xbf16, #tpu.memory_space<vmem>>, %arg5: memref<16x128xbf16, #tpu.memory_space<vmem>>, %arg6: memref<32x1xf32, #tpu.memory_space<vmem>>, %arg7: memref<32x128xf32, #tpu.memory_space<vmem>>) attributes {dimension_semantics = [#tpu.dimension_semantics<parallel>], iteration_bounds = array<i64: 1>, scalar_prefetch = 0 : i64, scratch_operands = 0 : i64, tpu.core_type = #tpu.core_type<tc>, window_params = [{pipeline_mode = #tpu.pipeline_mode<synchronous>, transform_indices = @transform_0, window_bounds = array<i64: 32, 288>}, {transform_indices = @transform_1, window_bounds = array<i64: 288, 128>}, {pipeline_mode = #tpu.pipeline_mode<synchronous>, transform_indices = @transform_2, window_bounds = array<i64: 32, 1>}, {pipeline_mode = #tpu.pipeline_mode<synchronous>, transform_indices = @transform_3, window_bounds = array<i64: 32, 16>}, {transform_indices = @transform_4, window_bounds = array<i64: 16, 128>}, {pipeline_mode = #tpu.pipeline_mode<synchronous>, transform_indices = @transform_5, window_bounds = array<i64: 32, 1>}, {transform_indices = @transform_6, window_bounds = array<i64: 32, 128>}]} {
    %c0 = arith.constant 0 : index
    %c0_0 = arith.constant 0 : index
    %0 = vector.load %arg1[%c0, %c0_0] : memref<32x288xbf16, #tpu.memory_space<vmem>>, vector<32x288xbf16>
    %c0_1 = arith.constant 0 : index
    %c0_2 = arith.constant 0 : index
    %1 = vector.load %arg2[%c0_1, %c0_2] : memref<288x128xbf16, #tpu.memory_space<vmem>>, vector<288x128xbf16>
    %cst = arith.constant dense<0.000000e+00> : vector<32x128xf32>
    %2 = tpu.matmul %0, %1, %cst {dimension_numbers = #tpu.dot_dimension_numbers<[1], [0], [0], [1], [0, 0, 1, 1], [], []>} : vector<32x288xbf16>, vector<288x128xbf16>, vector<32x128xf32> -> vector<32x128xf32>
    %c0_3 = arith.constant 0 : index
    %c0_4 = arith.constant 0 : index
    %3 = vector.load %arg4[%c0_3, %c0_4] : memref<32x16xbf16, #tpu.memory_space<vmem>>, vector<32x16xbf16>
    %c0_5 = arith.constant 0 : index
    %c0_6 = arith.constant 0 : index
    %4 = vector.load %arg5[%c0_5, %c0_6] : memref<16x128xbf16, #tpu.memory_space<vmem>>, vector<16x128xbf16>
    %cst_7 = arith.constant dense<0.000000e+00> : vector<32x128xf32>
    %5 = tpu.matmul %3, %4, %cst_7 {dimension_numbers = #tpu.dot_dimension_numbers<[1], [0], [0], [1], [0, 0, 1, 1], [], []>} : vector<32x16xbf16>, vector<16x128xbf16>, vector<32x128xf32> -> vector<32x128xf32>
    %c0_8 = arith.constant 0 : index
    %c0_9 = arith.constant 0 : index
    %6 = vector.load %arg3[%c0_8, %c0_9] : memref<32x1xf32, #tpu.memory_space<vmem>>, vector<32x1xf32>
    %7 = vector.broadcast %6 : vector<32x1xf32> to vector<32x128xf32>
    %8 = arith.addf %2, %7 : vector<32x128xf32>
    %9 = arith.addf %8, %5 : vector<32x128xf32>
    %c0_10 = arith.constant 0 : index
    %c0_11 = arith.constant 0 : index
    %10 = vector.load %arg6[%c0_10, %c0_11] : memref<32x1xf32, #tpu.memory_space<vmem>>, vector<32x1xf32>
    %11 = vector.broadcast %10 : vector<32x1xf32> to vector<32x128xf32>
    %12 = arith.addf %9, %11 : vector<32x128xf32>
    %cst_12 = arith.constant 0.000000e+00 : f32
    %13 = vector.broadcast %cst_12 : f32 to vector<32x128xf32>
    %14 = arith.maximumf %12, %13 : vector<32x128xf32>
    %c0_13 = arith.constant 0 : index
    %c0_14 = arith.constant 0 : index
    %15 = vector.load %arg7[%c0_13, %c0_14] : memref<32x128xf32, #tpu.memory_space<vmem>>, vector<32x128xf32>
    tpu.vector_store %arg7[%c0_13, %c0_14], %14 {strides = array<i32>} : memref<32x128xf32, #tpu.memory_space<vmem>>, vector<32x128xf32>,
    return
  }
  func.func @transform_0(%arg0: i32) -> (i32, i32) {
    %c0_i32 = arith.constant 0 : i32
    %c0_i32_0 = arith.constant 0 : i32
    %c0_i32_1 = arith.constant 0 : i32
    return %c0_i32, %c0_i32_0 : i32, i32
  }
  func.func @transform_1(%arg0: i32) -> (i32, i32) {
    %c0_i32 = arith.constant 0 : i32
    %c0_i32_0 = arith.constant 0 : i32
    return %c0_i32, %arg0 : i32, i32
  }
  func.func @transform_2(%arg0: i32) -> (i32, i32) {
    %c0_i32 = arith.constant 0 : i32
    %c0_i32_0 = arith.constant 0 : i32
    %c0_i32_1 = arith.constant 0 : i32
    return %c0_i32, %c0_i32_0 : i32, i32
  }
  func.func @transform_3(%arg0: i32) -> (i32, i32) {
    %c0_i32 = arith.constant 0 : i32
    %c0_i32_0 = arith.constant 0 : i32
    %c0_i32_1 = arith.constant 0 : i32
    return %c0_i32, %c0_i32_0 : i32, i32
  }
  func.func @transform_4(%arg0: i32) -> (i32, i32) {
    %c0_i32 = arith.constant 0 : i32
    %c0_i32_0 = arith.constant 0 : i32
    return %c0_i32, %arg0 : i32, i32
  }
  func.func @transform_5(%arg0: i32) -> (i32, i32) {
    %c0_i32 = arith.constant 0 : i32
    %c0_i32_0 = arith.constant 0 : i32
    %c0_i32_1 = arith.constant 0 : i32
    return %c0_i32, %c0_i32_0 : i32, i32
  }
  func.func @transform_6(%arg0: i32) -> (i32, i32) {
    %c0_i32 = arith.constant 0 : i32
    %c0_i32_0 = arith.constant 0 : i32
    return %c0_i32, %arg0 : i32, i32
  }
}

module attributes {stable_mosaic.version = 11 : i64} {
  func.func @_conv_bias_kernel(%arg0: i32, %arg1: memref<32x288xbf16, #tpu.memory_space<vmem>>, %arg2: memref<288x128xbf16, #tpu.memory_space<vmem>>, %arg3: memref<32x1xf32, #tpu.memory_space<vmem>>, %arg4: memref<32x128xf32, #tpu.memory_space<vmem>>) attributes {dimension_semantics = [#tpu.dimension_semantics<parallel>], iteration_bounds = array<i64: 1>, scalar_prefetch = 0 : i64, scratch_operands = 0 : i64, tpu.core_type = #tpu.core_type<tc>, window_params = [{pipeline_mode = #tpu.pipeline_mode<synchronous>, transform_indices = @transform_0, window_bounds = array<i64: 32, 288>}, {transform_indices = @transform_1, window_bounds = array<i64: 288, 128>}, {pipeline_mode = #tpu.pipeline_mode<synchronous>, transform_indices = @transform_2, window_bounds = array<i64: 32, 1>}, {transform_indices = @transform_3, window_bounds = array<i64: 32, 128>}]} {
    %c0 = arith.constant 0 : index
    %c0_0 = arith.constant 0 : index
    %0 = vector.load %arg1[%c0, %c0_0] : memref<32x288xbf16, #tpu.memory_space<vmem>>, vector<32x288xbf16>
    %c0_1 = arith.constant 0 : index
    %c0_2 = arith.constant 0 : index
    %1 = vector.load %arg2[%c0_1, %c0_2] : memref<288x128xbf16, #tpu.memory_space<vmem>>, vector<288x128xbf16>
    %cst = arith.constant dense<0.000000e+00> : vector<32x128xf32>
    %2 = tpu.matmul %0, %1, %cst {dimension_numbers = #tpu.dot_dimension_numbers<[1], [0], [0], [1], [0, 0, 1, 1], [], []>} : vector<32x288xbf16>, vector<288x128xbf16>, vector<32x128xf32> -> vector<32x128xf32>
    %c0_3 = arith.constant 0 : index
    %c0_4 = arith.constant 0 : index
    %3 = vector.load %arg3[%c0_3, %c0_4] : memref<32x1xf32, #tpu.memory_space<vmem>>, vector<32x1xf32>
    %4 = vector.broadcast %3 : vector<32x1xf32> to vector<32x128xf32>
    %5 = arith.addf %2, %4 : vector<32x128xf32>
    %cst_5 = arith.constant 0.000000e+00 : f32
    %6 = vector.broadcast %cst_5 : f32 to vector<32x128xf32>
    %7 = arith.maximumf %5, %6 : vector<32x128xf32>
    %c0_6 = arith.constant 0 : index
    %c0_7 = arith.constant 0 : index
    %8 = vector.load %arg4[%c0_6, %c0_7] : memref<32x128xf32, #tpu.memory_space<vmem>>, vector<32x128xf32>
    tpu.vector_store %arg4[%c0_6, %c0_7], %7 {strides = array<i32>} : memref<32x128xf32, #tpu.memory_space<vmem>>, vector<32x128xf32>,
    return
  }
  func.func @transform_0(%arg0: i32) -> (i32, i32) {
    %c0_i32 = arith.constant 0 : i32
    %c0_i32_0 = arith.constant 0 : i32
    %c0_i32_1 = arith.constant 0 : i32
    return %c0_i32, %c0_i32_0 : i32, i32
  }
  func.func @transform_1(%arg0: i32) -> (i32, i32) {
    %c0_i32 = arith.constant 0 : i32
    %c0_i32_0 = arith.constant 0 : i32
    return %c0_i32, %arg0 : i32, i32
  }
  func.func @transform_2(%arg0: i32) -> (i32, i32) {
    %c0_i32 = arith.constant 0 : i32
    %c0_i32_0 = arith.constant 0 : i32
    %c0_i32_1 = arith.constant 0 : i32
    return %c0_i32, %c0_i32_0 : i32, i32
  }
  func.func @transform_3(%arg0: i32) -> (i32, i32) {
    %c0_i32 = arith.constant 0 : i32
    %c0_i32_0 = arith.constant 0 : i32
    return %c0_i32, %arg0 : i32, i32
  }
}

module attributes {stable_mosaic.version = 11 : i64} {
  func.func @_conv_bias_res_kernel(%arg0: i32, %arg1: memref<32x288xbf16, #tpu.memory_space<vmem>>, %arg2: memref<288x128xbf16, #tpu.memory_space<vmem>>, %arg3: memref<32x1xf32, #tpu.memory_space<vmem>>, %arg4: memref<32x128xf32, #tpu.memory_space<vmem>>, %arg5: memref<32x128xf32, #tpu.memory_space<vmem>>) attributes {dimension_semantics = [#tpu.dimension_semantics<parallel>], iteration_bounds = array<i64: 1>, scalar_prefetch = 0 : i64, scratch_operands = 0 : i64, tpu.core_type = #tpu.core_type<tc>, window_params = [{pipeline_mode = #tpu.pipeline_mode<synchronous>, transform_indices = @transform_0, window_bounds = array<i64: 32, 288>}, {transform_indices = @transform_1, window_bounds = array<i64: 288, 128>}, {pipeline_mode = #tpu.pipeline_mode<synchronous>, transform_indices = @transform_2, window_bounds = array<i64: 32, 1>}, {transform_indices = @transform_3, window_bounds = array<i64: 32, 128>}, {transform_indices = @transform_4, window_bounds = array<i64: 32, 128>}]} {
    %c0 = arith.constant 0 : index
    %c0_0 = arith.constant 0 : index
    %0 = vector.load %arg1[%c0, %c0_0] : memref<32x288xbf16, #tpu.memory_space<vmem>>, vector<32x288xbf16>
    %c0_1 = arith.constant 0 : index
    %c0_2 = arith.constant 0 : index
    %1 = vector.load %arg2[%c0_1, %c0_2] : memref<288x128xbf16, #tpu.memory_space<vmem>>, vector<288x128xbf16>
    %cst = arith.constant dense<0.000000e+00> : vector<32x128xf32>
    %2 = tpu.matmul %0, %1, %cst {dimension_numbers = #tpu.dot_dimension_numbers<[1], [0], [0], [1], [0, 0, 1, 1], [], []>} : vector<32x288xbf16>, vector<288x128xbf16>, vector<32x128xf32> -> vector<32x128xf32>
    %c0_3 = arith.constant 0 : index
    %c0_4 = arith.constant 0 : index
    %3 = vector.load %arg3[%c0_3, %c0_4] : memref<32x1xf32, #tpu.memory_space<vmem>>, vector<32x1xf32>
    %4 = vector.broadcast %3 : vector<32x1xf32> to vector<32x128xf32>
    %5 = arith.addf %2, %4 : vector<32x128xf32>
    %c0_5 = arith.constant 0 : index
    %c0_6 = arith.constant 0 : index
    %6 = vector.load %arg4[%c0_5, %c0_6] : memref<32x128xf32, #tpu.memory_space<vmem>>, vector<32x128xf32>
    %7 = arith.addf %5, %6 : vector<32x128xf32>
    %cst_7 = arith.constant 0.000000e+00 : f32
    %8 = vector.broadcast %cst_7 : f32 to vector<32x128xf32>
    %9 = arith.maximumf %7, %8 : vector<32x128xf32>
    %c0_8 = arith.constant 0 : index
    %c0_9 = arith.constant 0 : index
    %10 = vector.load %arg5[%c0_8, %c0_9] : memref<32x128xf32, #tpu.memory_space<vmem>>, vector<32x128xf32>
    tpu.vector_store %arg5[%c0_8, %c0_9], %9 {strides = array<i32>} : memref<32x128xf32, #tpu.memory_space<vmem>>, vector<32x128xf32>,
    return
  }
  func.func @transform_0(%arg0: i32) -> (i32, i32) {
    %c0_i32 = arith.constant 0 : i32
    %c0_i32_0 = arith.constant 0 : i32
    %c0_i32_1 = arith.constant 0 : i32
    return %c0_i32, %c0_i32_0 : i32, i32
  }
  func.func @transform_1(%arg0: i32) -> (i32, i32) {
    %c0_i32 = arith.constant 0 : i32
    %c0_i32_0 = arith.constant 0 : i32
    return %c0_i32, %arg0 : i32, i32
  }
  func.func @transform_2(%arg0: i32) -> (i32, i32) {
    %c0_i32 = arith.constant 0 : i32
    %c0_i32_0 = arith.constant 0 : i32
    %c0_i32_1 = arith.constant 0 : i32
    return %c0_i32, %c0_i32_0 : i32, i32
  }
  func.func @transform_3(%arg0: i32) -> (i32, i32) {
    %c0_i32 = arith.constant 0 : i32
    %c0_i32_0 = arith.constant 0 : i32
    return %c0_i32, %arg0 : i32, i32
  }
  func.func @transform_4(%arg0: i32) -> (i32, i32) {
    %c0_i32 = arith.constant 0 : i32
    %c0_i32_0 = arith.constant 0 : i32
    return %c0_i32, %arg0 : i32, i32
  }
}

module attributes {stable_mosaic.version = 11 : i64} {
  func.func @_conv_bias_kernel(%arg0: i32, %arg1: memref<64x288xbf16, #tpu.memory_space<vmem>>, %arg2: memref<288x32xbf16, #tpu.memory_space<vmem>>, %arg3: memref<64x1xf32, #tpu.memory_space<vmem>>, %arg4: memref<64x32xf32, #tpu.memory_space<vmem>>) attributes {dimension_semantics = [#tpu.dimension_semantics<parallel>], iteration_bounds = array<i64: 1>, scalar_prefetch = 0 : i64, scratch_operands = 0 : i64, tpu.core_type = #tpu.core_type<tc>, window_params = [{pipeline_mode = #tpu.pipeline_mode<synchronous>, transform_indices = @transform_0, window_bounds = array<i64: 64, 288>}, {transform_indices = @transform_1, window_bounds = array<i64: 288, 32>}, {pipeline_mode = #tpu.pipeline_mode<synchronous>, transform_indices = @transform_2, window_bounds = array<i64: 64, 1>}, {transform_indices = @transform_3, window_bounds = array<i64: 64, 32>}]} {
    %c0 = arith.constant 0 : index
    %c0_0 = arith.constant 0 : index
    %0 = vector.load %arg1[%c0, %c0_0] : memref<64x288xbf16, #tpu.memory_space<vmem>>, vector<64x288xbf16>
    %c0_1 = arith.constant 0 : index
    %c0_2 = arith.constant 0 : index
    %1 = vector.load %arg2[%c0_1, %c0_2] : memref<288x32xbf16, #tpu.memory_space<vmem>>, vector<288x32xbf16>
    %cst = arith.constant dense<0.000000e+00> : vector<64x32xf32>
    %2 = tpu.matmul %0, %1, %cst {dimension_numbers = #tpu.dot_dimension_numbers<[1], [0], [0], [1], [0, 0, 1, 1], [], []>} : vector<64x288xbf16>, vector<288x32xbf16>, vector<64x32xf32> -> vector<64x32xf32>
    %c0_3 = arith.constant 0 : index
    %c0_4 = arith.constant 0 : index
    %3 = vector.load %arg3[%c0_3, %c0_4] : memref<64x1xf32, #tpu.memory_space<vmem>>, vector<64x1xf32>
    %4 = vector.broadcast %3 : vector<64x1xf32> to vector<64x32xf32>
    %5 = arith.addf %2, %4 : vector<64x32xf32>
    %cst_5 = arith.constant 0.000000e+00 : f32
    %6 = vector.broadcast %cst_5 : f32 to vector<64x32xf32>
    %7 = arith.maximumf %5, %6 : vector<64x32xf32>
    %c0_6 = arith.constant 0 : index
    %c0_7 = arith.constant 0 : index
    %8 = vector.load %arg4[%c0_6, %c0_7] : memref<64x32xf32, #tpu.memory_space<vmem>>, vector<64x32xf32>
    tpu.vector_store %arg4[%c0_6, %c0_7], %7 {strides = array<i32>} : memref<64x32xf32, #tpu.memory_space<vmem>>, vector<64x32xf32>,
    return
  }
  func.func @transform_0(%arg0: i32) -> (i32, i32) {
    %c0_i32 = arith.constant 0 : i32
    %c0_i32_0 = arith.constant 0 : i32
    %c0_i32_1 = arith.constant 0 : i32
    return %c0_i32, %c0_i32_0 : i32, i32
  }
  func.func @transform_1(%arg0: i32) -> (i32, i32) {
    %c0_i32 = arith.constant 0 : i32
    %c0_i32_0 = arith.constant 0 : i32
    return %c0_i32, %arg0 : i32, i32
  }
  func.func @transform_2(%arg0: i32) -> (i32, i32) {
    %c0_i32 = arith.constant 0 : i32
    %c0_i32_0 = arith.constant 0 : i32
    %c0_i32_1 = arith.constant 0 : i32
    return %c0_i32, %c0_i32_0 : i32, i32
  }
  func.func @transform_3(%arg0: i32) -> (i32, i32) {
    %c0_i32 = arith.constant 0 : i32
    %c0_i32_0 = arith.constant 0 : i32
    return %c0_i32, %arg0 : i32, i32
  }
}

module attributes {stable_mosaic.version = 11 : i64} {
  func.func @_conv_bias_sc_kernel(%arg0: i32, %arg1: memref<64x576xbf16, #tpu.memory_space<vmem>>, %arg2: memref<576x32xbf16, #tpu.memory_space<vmem>>, %arg3: memref<64x1xf32, #tpu.memory_space<vmem>>, %arg4: memref<64x32xbf16, #tpu.memory_space<vmem>>, %arg5: memref<32x32xbf16, #tpu.memory_space<vmem>>, %arg6: memref<64x1xf32, #tpu.memory_space<vmem>>, %arg7: memref<64x32xf32, #tpu.memory_space<vmem>>) attributes {dimension_semantics = [#tpu.dimension_semantics<parallel>], iteration_bounds = array<i64: 1>, scalar_prefetch = 0 : i64, scratch_operands = 0 : i64, tpu.core_type = #tpu.core_type<tc>, window_params = [{pipeline_mode = #tpu.pipeline_mode<synchronous>, transform_indices = @transform_0, window_bounds = array<i64: 64, 576>}, {transform_indices = @transform_1, window_bounds = array<i64: 576, 32>}, {pipeline_mode = #tpu.pipeline_mode<synchronous>, transform_indices = @transform_2, window_bounds = array<i64: 64, 1>}, {pipeline_mode = #tpu.pipeline_mode<synchronous>, transform_indices = @transform_3, window_bounds = array<i64: 64, 32>}, {transform_indices = @transform_4, window_bounds = array<i64: 32, 32>}, {pipeline_mode = #tpu.pipeline_mode<synchronous>, transform_indices = @transform_5, window_bounds = array<i64: 64, 1>}, {transform_indices = @transform_6, window_bounds = array<i64: 64, 32>}]} {
    %c0 = arith.constant 0 : index
    %c0_0 = arith.constant 0 : index
    %0 = vector.load %arg1[%c0, %c0_0] : memref<64x576xbf16, #tpu.memory_space<vmem>>, vector<64x576xbf16>
    %c0_1 = arith.constant 0 : index
    %c0_2 = arith.constant 0 : index
    %1 = vector.load %arg2[%c0_1, %c0_2] : memref<576x32xbf16, #tpu.memory_space<vmem>>, vector<576x32xbf16>
    %cst = arith.constant dense<0.000000e+00> : vector<64x32xf32>
    %2 = tpu.matmul %0, %1, %cst {dimension_numbers = #tpu.dot_dimension_numbers<[1], [0], [0], [1], [0, 0, 1, 1], [], []>} : vector<64x576xbf16>, vector<576x32xbf16>, vector<64x32xf32> -> vector<64x32xf32>
    %c0_3 = arith.constant 0 : index
    %c0_4 = arith.constant 0 : index
    %3 = vector.load %arg4[%c0_3, %c0_4] : memref<64x32xbf16, #tpu.memory_space<vmem>>, vector<64x32xbf16>
    %c0_5 = arith.constant 0 : index
    %c0_6 = arith.constant 0 : index
    %4 = vector.load %arg5[%c0_5, %c0_6] : memref<32x32xbf16, #tpu.memory_space<vmem>>, vector<32x32xbf16>
    %cst_7 = arith.constant dense<0.000000e+00> : vector<64x32xf32>
    %5 = tpu.matmul %3, %4, %cst_7 {dimension_numbers = #tpu.dot_dimension_numbers<[1], [0], [0], [1], [0, 0, 1, 1], [], []>} : vector<64x32xbf16>, vector<32x32xbf16>, vector<64x32xf32> -> vector<64x32xf32>
    %c0_8 = arith.constant 0 : index
    %c0_9 = arith.constant 0 : index
    %6 = vector.load %arg3[%c0_8, %c0_9] : memref<64x1xf32, #tpu.memory_space<vmem>>, vector<64x1xf32>
    %7 = vector.broadcast %6 : vector<64x1xf32> to vector<64x32xf32>
    %8 = arith.addf %2, %7 : vector<64x32xf32>
    %9 = arith.addf %8, %5 : vector<64x32xf32>
    %c0_10 = arith.constant 0 : index
    %c0_11 = arith.constant 0 : index
    %10 = vector.load %arg6[%c0_10, %c0_11] : memref<64x1xf32, #tpu.memory_space<vmem>>, vector<64x1xf32>
    %11 = vector.broadcast %10 : vector<64x1xf32> to vector<64x32xf32>
    %12 = arith.addf %9, %11 : vector<64x32xf32>
    %cst_12 = arith.constant 0.000000e+00 : f32
    %13 = vector.broadcast %cst_12 : f32 to vector<64x32xf32>
    %14 = arith.maximumf %12, %13 : vector<64x32xf32>
    %c0_13 = arith.constant 0 : index
    %c0_14 = arith.constant 0 : index
    %15 = vector.load %arg7[%c0_13, %c0_14] : memref<64x32xf32, #tpu.memory_space<vmem>>, vector<64x32xf32>
    tpu.vector_store %arg7[%c0_13, %c0_14], %14 {strides = array<i32>} : memref<64x32xf32, #tpu.memory_space<vmem>>, vector<64x32xf32>,
    return
  }
  func.func @transform_0(%arg0: i32) -> (i32, i32) {
    %c0_i32 = arith.constant 0 : i32
    %c0_i32_0 = arith.constant 0 : i32
    %c0_i32_1 = arith.constant 0 : i32
    return %c0_i32, %c0_i32_0 : i32, i32
  }
  func.func @transform_1(%arg0: i32) -> (i32, i32) {
    %c0_i32 = arith.constant 0 : i32
    %c0_i32_0 = arith.constant 0 : i32
    return %c0_i32, %arg0 : i32, i32
  }
  func.func @transform_2(%arg0: i32) -> (i32, i32) {
    %c0_i32 = arith.constant 0 : i32
    %c0_i32_0 = arith.constant 0 : i32
    %c0_i32_1 = arith.constant 0 : i32
    return %c0_i32, %c0_i32_0 : i32, i32
  }
  func.func @transform_3(%arg0: i32) -> (i32, i32) {
    %c0_i32 = arith.constant 0 : i32
    %c0_i32_0 = arith.constant 0 : i32
    %c0_i32_1 = arith.constant 0 : i32
    return %c0_i32, %c0_i32_0 : i32, i32
  }
  func.func @transform_4(%arg0: i32) -> (i32, i32) {
    %c0_i32 = arith.constant 0 : i32
    %c0_i32_0 = arith.constant 0 : i32
    return %c0_i32, %arg0 : i32, i32
  }
  func.func @transform_5(%arg0: i32) -> (i32, i32) {
    %c0_i32 = arith.constant 0 : i32
    %c0_i32_0 = arith.constant 0 : i32
    %c0_i32_1 = arith.constant 0 : i32
    return %c0_i32, %c0_i32_0 : i32, i32
  }
  func.func @transform_6(%arg0: i32) -> (i32, i32) {
    %c0_i32 = arith.constant 0 : i32
    %c0_i32_0 = arith.constant 0 : i32
    return %c0_i32, %arg0 : i32, i32
  }
}

module attributes {stable_mosaic.version = 11 : i64} {
  func.func @_conv_bias_kernel(%arg0: i32, %arg1: memref<64x576xbf16, #tpu.memory_space<vmem>>, %arg2: memref<576x32xbf16, #tpu.memory_space<vmem>>, %arg3: memref<64x1xf32, #tpu.memory_space<vmem>>, %arg4: memref<64x32xf32, #tpu.memory_space<vmem>>) attributes {dimension_semantics = [#tpu.dimension_semantics<parallel>], iteration_bounds = array<i64: 1>, scalar_prefetch = 0 : i64, scratch_operands = 0 : i64, tpu.core_type = #tpu.core_type<tc>, window_params = [{pipeline_mode = #tpu.pipeline_mode<synchronous>, transform_indices = @transform_0, window_bounds = array<i64: 64, 576>}, {transform_indices = @transform_1, window_bounds = array<i64: 576, 32>}, {pipeline_mode = #tpu.pipeline_mode<synchronous>, transform_indices = @transform_2, window_bounds = array<i64: 64, 1>}, {transform_indices = @transform_3, window_bounds = array<i64: 64, 32>}]} {
    %c0 = arith.constant 0 : index
    %c0_0 = arith.constant 0 : index
    %0 = vector.load %arg1[%c0, %c0_0] : memref<64x576xbf16, #tpu.memory_space<vmem>>, vector<64x576xbf16>
    %c0_1 = arith.constant 0 : index
    %c0_2 = arith.constant 0 : index
    %1 = vector.load %arg2[%c0_1, %c0_2] : memref<576x32xbf16, #tpu.memory_space<vmem>>, vector<576x32xbf16>
    %cst = arith.constant dense<0.000000e+00> : vector<64x32xf32>
    %2 = tpu.matmul %0, %1, %cst {dimension_numbers = #tpu.dot_dimension_numbers<[1], [0], [0], [1], [0, 0, 1, 1], [], []>} : vector<64x576xbf16>, vector<576x32xbf16>, vector<64x32xf32> -> vector<64x32xf32>
    %c0_3 = arith.constant 0 : index
    %c0_4 = arith.constant 0 : index
    %3 = vector.load %arg3[%c0_3, %c0_4] : memref<64x1xf32, #tpu.memory_space<vmem>>, vector<64x1xf32>
    %4 = vector.broadcast %3 : vector<64x1xf32> to vector<64x32xf32>
    %5 = arith.addf %2, %4 : vector<64x32xf32>
    %cst_5 = arith.constant 0.000000e+00 : f32
    %6 = vector.broadcast %cst_5 : f32 to vector<64x32xf32>
    %7 = arith.maximumf %5, %6 : vector<64x32xf32>
    %c0_6 = arith.constant 0 : index
    %c0_7 = arith.constant 0 : index
    %8 = vector.load %arg4[%c0_6, %c0_7] : memref<64x32xf32, #tpu.memory_space<vmem>>, vector<64x32xf32>
    tpu.vector_store %arg4[%c0_6, %c0_7], %7 {strides = array<i32>} : memref<64x32xf32, #tpu.memory_space<vmem>>, vector<64x32xf32>,
    return
  }
  func.func @transform_0(%arg0: i32) -> (i32, i32) {
    %c0_i32 = arith.constant 0 : i32
    %c0_i32_0 = arith.constant 0 : i32
    %c0_i32_1 = arith.constant 0 : i32
    return %c0_i32, %c0_i32_0 : i32, i32
  }
  func.func @transform_1(%arg0: i32) -> (i32, i32) {
    %c0_i32 = arith.constant 0 : i32
    %c0_i32_0 = arith.constant 0 : i32
    return %c0_i32, %arg0 : i32, i32
  }
  func.func @transform_2(%arg0: i32) -> (i32, i32) {
    %c0_i32 = arith.constant 0 : i32
    %c0_i32_0 = arith.constant 0 : i32
    %c0_i32_1 = arith.constant 0 : i32
    return %c0_i32, %c0_i32_0 : i32, i32
  }
  func.func @transform_3(%arg0: i32) -> (i32, i32) {
    %c0_i32 = arith.constant 0 : i32
    %c0_i32_0 = arith.constant 0 : i32
    return %c0_i32, %arg0 : i32, i32
  }
}

module attributes {stable_mosaic.version = 11 : i64} {
  func.func @_conv_bias_res_kernel(%arg0: i32, %arg1: memref<64x576xbf16, #tpu.memory_space<vmem>>, %arg2: memref<576x32xbf16, #tpu.memory_space<vmem>>, %arg3: memref<64x1xf32, #tpu.memory_space<vmem>>, %arg4: memref<64x32xf32, #tpu.memory_space<vmem>>, %arg5: memref<64x32xf32, #tpu.memory_space<vmem>>) attributes {dimension_semantics = [#tpu.dimension_semantics<parallel>], iteration_bounds = array<i64: 1>, scalar_prefetch = 0 : i64, scratch_operands = 0 : i64, tpu.core_type = #tpu.core_type<tc>, window_params = [{pipeline_mode = #tpu.pipeline_mode<synchronous>, transform_indices = @transform_0, window_bounds = array<i64: 64, 576>}, {transform_indices = @transform_1, window_bounds = array<i64: 576, 32>}, {pipeline_mode = #tpu.pipeline_mode<synchronous>, transform_indices = @transform_2, window_bounds = array<i64: 64, 1>}, {transform_indices = @transform_3, window_bounds = array<i64: 64, 32>}, {transform_indices = @transform_4, window_bounds = array<i64: 64, 32>}]} {
    %c0 = arith.constant 0 : index
    %c0_0 = arith.constant 0 : index
    %0 = vector.load %arg1[%c0, %c0_0] : memref<64x576xbf16, #tpu.memory_space<vmem>>, vector<64x576xbf16>
    %c0_1 = arith.constant 0 : index
    %c0_2 = arith.constant 0 : index
    %1 = vector.load %arg2[%c0_1, %c0_2] : memref<576x32xbf16, #tpu.memory_space<vmem>>, vector<576x32xbf16>
    %cst = arith.constant dense<0.000000e+00> : vector<64x32xf32>
    %2 = tpu.matmul %0, %1, %cst {dimension_numbers = #tpu.dot_dimension_numbers<[1], [0], [0], [1], [0, 0, 1, 1], [], []>} : vector<64x576xbf16>, vector<576x32xbf16>, vector<64x32xf32> -> vector<64x32xf32>
    %c0_3 = arith.constant 0 : index
    %c0_4 = arith.constant 0 : index
    %3 = vector.load %arg3[%c0_3, %c0_4] : memref<64x1xf32, #tpu.memory_space<vmem>>, vector<64x1xf32>
    %4 = vector.broadcast %3 : vector<64x1xf32> to vector<64x32xf32>
    %5 = arith.addf %2, %4 : vector<64x32xf32>
    %c0_5 = arith.constant 0 : index
    %c0_6 = arith.constant 0 : index
    %6 = vector.load %arg4[%c0_5, %c0_6] : memref<64x32xf32, #tpu.memory_space<vmem>>, vector<64x32xf32>
    %7 = arith.addf %5, %6 : vector<64x32xf32>
    %cst_7 = arith.constant 0.000000e+00 : f32
    %8 = vector.broadcast %cst_7 : f32 to vector<64x32xf32>
    %9 = arith.maximumf %7, %8 : vector<64x32xf32>
    %c0_8 = arith.constant 0 : index
    %c0_9 = arith.constant 0 : index
    %10 = vector.load %arg5[%c0_8, %c0_9] : memref<64x32xf32, #tpu.memory_space<vmem>>, vector<64x32xf32>
    tpu.vector_store %arg5[%c0_8, %c0_9], %9 {strides = array<i32>} : memref<64x32xf32, #tpu.memory_space<vmem>>, vector<64x32xf32>,
    return
  }
  func.func @transform_0(%arg0: i32) -> (i32, i32) {
    %c0_i32 = arith.constant 0 : i32
    %c0_i32_0 = arith.constant 0 : i32
    %c0_i32_1 = arith.constant 0 : i32
    return %c0_i32, %c0_i32_0 : i32, i32
  }
  func.func @transform_1(%arg0: i32) -> (i32, i32) {
    %c0_i32 = arith.constant 0 : i32
    %c0_i32_0 = arith.constant 0 : i32
    return %c0_i32, %arg0 : i32, i32
  }
  func.func @transform_2(%arg0: i32) -> (i32, i32) {
    %c0_i32 = arith.constant 0 : i32
    %c0_i32_0 = arith.constant 0 : i32
    %c0_i32_1 = arith.constant 0 : i32
    return %c0_i32, %c0_i32_0 : i32, i32
  }
  func.func @transform_3(%arg0: i32) -> (i32, i32) {
    %c0_i32 = arith.constant 0 : i32
    %c0_i32_0 = arith.constant 0 : i32
    return %c0_i32, %arg0 : i32, i32
  }
  func.func @transform_4(%arg0: i32) -> (i32, i32) {
    %c0_i32 = arith.constant 0 : i32
    %c0_i32_0 = arith.constant 0 : i32
    return %c0_i32, %arg0 : i32, i32
  }
}

</mosaic_0001>

<llo_original>
// kernel: ocm_resnet_forward.17
$region0: #{ocm_resnet_forward.17}
  #allocation0 [shape = 'u32[]', space=smem, size = 0x4, offset = 0x4, fixed_abs, tag = 'smem constant byte address 0x4 - core index']
  #allocation1 [shape = 'u32[144,128]{1,0:T(1,128)}', space=vmem, size = 0x12000, scoped, tag = 'internal scratch']
  %s0 = inlined_call_operand.vmem [shape: bf16[8,27], index: 0, kind: input, shape index: {}]
  %s1 = inlined_call_operand.vmem [shape: bf16[27,2048], index: 1, kind: input, shape index: {}]
  %s2 = inlined_call_operand.vmem [shape: f32[8,1], index: 2, kind: input, shape index: {}]
  %s3 = inlined_call_operand.vmem [shape: f32[8,2048], index: 3, kind: output, shape index: {}]
  %s4 = sld [smem:[#allocation0]]
  $region68: #{ocm_resnet_forward.17} parent=0
    _
  %s6 = ssub.s32 1, %s4
  %s7 = scalar_select 0, %s6, %s4
  $region1: #{ocm_resnet_forward.17} parent=0
    #allocation2 [shape = 'u8[131072]{0}', space=vmem, size = 0x20000, scoped, tag = 'input window, operand 1']
    loop: start=0, step=1, limit=4
    $region2: #{ocm_resnet_forward.17} parent=1 // loop_pre_header
      _
    $region3: #{ocm_resnet_forward.17} parent=1 // loop_header
      %s9 = sphi 0, %s13
      %p10 = scmp.ge.s32.totalorder %s9, 4
      %s17 = sphi 0, %s17
      %s19 = sphi 0, %s17
      %s20 = sphi 0, %s19
      %s34 = sphi 0, %s20
      %s40 = sphi 0, %s42
      %s43 = sphi 0, %s40
      %s44 = sphi 0, %s43
      %s60 = sphi 0, %s44
      %s64 = sphi 0, %s64
      %s66 = sphi 0, %s64
      %s67 = sphi 0, %s66
      %s81 = sphi 0, %s67
      %s87 = sphi 0, %s89
      %s90 = sphi 0, %s87
      %s91 = sphi 0, %s90
      %s107 = sphi 0, %s91
    $region4: #{ocm_resnet_forward.17} parent=1 // loop_header_branch
      %12 = sbr.rel (%p10) target = $region8
    $region5: #{ocm_resnet_forward.17} parent=1 // loop_body
      %s14 = ssub.s32 %s9, 1
      %s15 = ssub.s32 %s9, 2
      %s16 = sadd.s32 %s9, 1
      %s18 = sadd.s32 %s17, 1
      %p21 = scmp.eq.s32.totalorder %s9, 1
      %p22 = scmp.ne.s32.totalorder %s17, %s19
      %p23 = scmp.eq.s32.totalorder %s9, 0
      %p24 = por %p22, %p23
      %p25 = scmp.ne.s32.totalorder %s17, %s19
      %p26 = scmp.eq.s32.totalorder %s14, 1
      %p27 = por %p25, %p26
      %p28 = scmp.ne.s32.totalorder %s19, %s20
      %p29 = scmp.eq.s32.totalorder %s14, 0
      %p30 = por %p28, %p29
      %p31 = scmp.ne.s32.totalorder %s19, %s20
      %p32 = scmp.eq.s32.totalorder %s15, 1
      %p33 = por %p31, %p32
      %p35 = scmp.ne.s32.totalorder %s20, %s34
      %p36 = scmp.eq.s32.totalorder %s15, 0
      %p37 = por %p35, %p36
      %s38 = ssub.s32 %s9, %s16
      %p39 = scmp.eq.s32.totalorder %s38, 0
      %s41 = sadd.s32 %s40, 1
      %s42 = scalar_select %p39, %s40, %s41
      %p45 = pneg %p39
      %p46 = scmp.eq.s32.totalorder %s9, 1
      %p47 = por %p45, %p46
      %p48 = scmp.ne.s32.totalorder %s40, %s43
      %p49 = scmp.eq.s32.totalorder %s9, 0
      %p50 = por %p48, %p49
      %p51 = scmp.ne.s32.totalorder %s40, %s43
      %p52 = scmp.eq.s32.totalorder %s14, 1
      %p53 = por %p51, %p52
      %p54 = scmp.ne.s32.totalorder %s43, %s44
      %p55 = scmp.eq.s32.totalorder %s14, 0
      %p56 = por %p54, %p55
      %p57 = scmp.ne.s32.totalorder %s43, %s44
      %p58 = scmp.eq.s32.totalorder %s15, 1
      %p59 = por %p57, %p58
      %p61 = scmp.ne.s32.totalorder %s44, %s60
      %p62 = scmp.eq.s32.totalorder %s15, 0
      %p63 = por %p61, %p62
      %s65 = sadd.s32 %s64, 1
      %p68 = scmp.eq.s32.totalorder %s9, 1
      %p69 = scmp.ne.s32.totalorder %s64, %s66
      %p70 = scmp.eq.s32.totalorder %s9, 0
      %p71 = por %p69, %p70
      %p72 = scmp.ne.s32.totalorder %s64, %s66
      %p73 = scmp.eq.s32.totalorder %s14, 1
      %p74 = por %p72, %p73
      %p75 = scmp.ne.s32.totalorder %s66, %s67
      %p76 = scmp.eq.s32.totalorder %s14, 0
      %p77 = por %p75, %p76
      %p78 = scmp.ne.s32.totalorder %s66, %s67
      %p79 = scmp.eq.s32.totalorder %s15, 1
      %p80 = por %p78, %p79
      %p82 = scmp.ne.s32.totalorder %s67, %s81
      %p83 = scmp.eq.s32.totalorder %s15, 0
      %p84 = por %p82, %p83
      %s85 = ssub.s32 %s9, %s16
      %p86 = scmp.eq.s32.totalorder %s85, 0
      %s88 = sadd.s32 %s87, 1
      %s89 = scalar_select %p86, %s87, %s88
      %p92 = pneg %p86
      %p93 = scmp.eq.s32.totalorder %s9, 1
      %p94 = por %p92, %p93
      %p95 = scmp.ne.s32.totalorder %s87, %s90
      %p96 = scmp.eq.s32.totalorder %s9, 0
      %p97 = por %p95, %p96
      %p98 = scmp.ne.s32.totalorder %s87, %s90
      %p99 = scmp.eq.s32.totalorder %s14, 1
      %p100 = por %p98, %p99
      %p101 = scmp.ne.s32.totalorder %s90, %s91
      %p102 = scmp.eq.s32.totalorder %s14, 0
      %p103 = por %p101, %p102
      %p104 = scmp.ne.s32.totalorder %s90, %s91
      %p105 = scmp.eq.s32.totalorder %s15, 1
      %p106 = por %p104, %p105
      %p108 = scmp.ne.s32.totalorder %s91, %s107
      %p109 = scmp.eq.s32.totalorder %s15, 0
      %p110 = por %p108, %p109
      %p111 = scmp.le.s32.totalorder 1, %s9
      %p112 = scmp.lt.s32.totalorder %s9, 3
      %p113 = pnand %p111, %p112
      %p114 = pneg %p113
      // Predicated region
      $region9: #{ocm_resnet_forward.17} parent=5 // pred_check
        _
      $region10: #{ocm_resnet_forward.17} parent=5 // pred_check_branch
        %116 = sbr.rel (%p113) target = $region12
      $region11: #{ocm_resnet_forward.17} parent=5 // pred_region
        %s117 = ssub.s32 %s9, 1
        // Predicated region
        $region13: #{ocm_resnet_forward.17} parent=11 // pred_check
          %p118 = pneg %p30
        $region14: #{ocm_resnet_forward.17} parent=11 // pred_check_branch
          %120 = sbr.rel (%p118) target = $region16
        $region15: #{ocm_resnet_forward.17} parent=11 // pred_region
          _
        $region16: #{ocm_resnet_forward.17} parent=11 // pred_fallthru
          _
        // Predicated region
        $region17: #{ocm_resnet_forward.17} parent=11 // pred_check
          %p121 = pneg %p77
        $region18: #{ocm_resnet_forward.17} parent=11 // pred_check_branch
          %123 = sbr.rel (%p121) target = $region20
        $region19: #{ocm_resnet_forward.17} parent=11 // pred_region
          _
        $region20: #{ocm_resnet_forward.17} parent=11 // pred_fallthru
          _
      $region12: #{ocm_resnet_forward.17} parent=5 // pred_fallthru
        _
      %p124 = scmp.lt.s32.totalorder %s9, 2
      // Predicated region
      $region21: #{ocm_resnet_forward.17} parent=5 // pred_check
        %p125 = pneg %p124
      $region22: #{ocm_resnet_forward.17} parent=5 // pred_check_branch
        %127 = sbr.rel (%p125) target = $region24
      $region23: #{ocm_resnet_forward.17} parent=5 // pred_region
        // Predicated region
        $region25: #{ocm_resnet_forward.17} parent=23 // pred_check
          %p128 = pneg %p50
        $region26: #{ocm_resnet_forward.17} parent=23 // pred_check_branch
          %130 = sbr.rel (%p128) target = $region28
        $region27: #{ocm_resnet_forward.17} parent=23 // pred_region
          %s131 = sand.u32 %s40, 1
          %s132 = sand.u32 %s40, 1
          %s133 = smul.addr %s132, 128
          %s134 = scalar_lea.vmem [#allocation2], %s133
          %s135 = smul.u32 8, %s9
          %s136 = smul.addr %s135, 4
          %s137 = scalar_lea.vmem %s1, %s136
          // Predicated region
          $region29: #{ocm_resnet_forward.17} parent=27 // pred_check
            _
          $region30: #{ocm_resnet_forward.17} parent=27 // pred_check_branch
            %139 = sbr.rel (0) target = $region32
          $region31: #{ocm_resnet_forward.17} parent=27 // pred_region
            // Predicated region
            $region33: #{ocm_resnet_forward.17} parent=31 // pred_check
              _
            $region34: #{ocm_resnet_forward.17} parent=31 // pred_check_branch
              %141 = sbr.rel (0) target = $region36
            $region35: #{ocm_resnet_forward.17} parent=31 // pred_region
              loop: start=0, step=1, limit=1
              $region37: #{ocm_resnet_forward.17} parent=35 // loop_pre_header
                _
              $region38: #{ocm_resnet_forward.17} parent=35 // loop_header
                %s143 = sphi 0, %s147
                %p144 = scmp.ge.s32.totalorder %s143, 1
                %s148 = sphi %s137, %s137
                %s149 = sphi %s134, %s134
              $region39: #{ocm_resnet_forward.17} parent=35 // loop_header_branch
                %146 = sbr.rel (%p144) target = $region43
              $region40: #{ocm_resnet_forward.17} parent=35 // loop_body
                %v150 = vld [vmem:[%s148] sm:$0xff]
                %151 = vst [vmem:[%s149] sm:$0xff] %v150
                %v152 = vld [vmem:[%s148 + $0x8] sm:$0xff]
                %153 = vst [vmem:[%s149 + $0x8] sm:$0xff] %v152
                %v154 = vld [vmem:[%s148 + $0x10] sm:$0xff]
                %155 = vst [vmem:[%s149 + $0x10] sm:$0xff] %v154
                %v156 = vld [vmem:[%s148 + $0x18] sm:$0xff]
                %157 = vst [vmem:[%s149 + $0x18] sm:$0xff] %v156
                %v158 = vld [vmem:[%s148 + $0x40] sm:$0xff]
                %159 = vst [vmem:[%s149 + $0x20] sm:$0xff] %v158
                %v160 = vld [vmem:[%s148 + $0x48] sm:$0xff]
                %161 = vst [vmem:[%s149 + $0x28] sm:$0xff] %v160
                %v162 = vld [vmem:[%s148 + $0x50] sm:$0xff]
                %163 = vst [vmem:[%s149 + $0x30] sm:$0xff] %v162
                %v164 = vld [vmem:[%s148 + $0x58] sm:$0xff]
                %165 = vst [vmem:[%s149 + $0x38] sm:$0xff] %v164
                %v166 = vld [vmem:[%s148 + $0x80] sm:$0xff]
                %167 = vst [vmem:[%s149 + $0x40] sm:$0xff] %v166
                %v168 = vld [vmem:[%s148 + $0x88] sm:$0xff]
                %169 = vst [vmem:[%s149 + $0x48] sm:$0xff] %v168
                %v170 = vld [vmem:[%s148 + $0x90] sm:$0xff]
                %171 = vst [vmem:[%s149 + $0x50] sm:$0xff] %v170
                %v172 = vld [vmem:[%s148 + $0x98] sm:$0xff]
                %173 = vst [vmem:[%s149 + $0x58] sm:$0xff] %v172
                %v174 = vld [vmem:[%s148 + $0xc0] sm:$0xff]
                %175 = vst [vmem:[%s149 + $0x60] sm:$0xff] %v174
                %v176 = vld [vmem:[%s148 + $0xc8] sm:$0xff]
                %177 = vst [vmem:[%s149 + $0x68] sm:$0xff] %v176
                %v178 = vld [vmem:[%s148 + $0xd0] sm:$0xff]
                %179 = vst [vmem:[%s149 + $0x70] sm:$0xff] %v178
                %v180 = vld [vmem:[%s148 + $0xd8] sm:$0xff]
                %181 = vst [vmem:[%s149 + $0x78] sm:$0xff] %v180
              $region41: #{ocm_resnet_forward.17} parent=35 // loop_footer
                %s147 = sadd.s32 1, %s143
              $region42: #{ocm_resnet_forward.17} parent=35 // loop_footer_branch
                %142 = sbr.rel target = $region38
              $region43: #{ocm_resnet_forward.17} parent=35 // loop_exit
                _
            $region36: #{ocm_resnet_forward.17} parent=31 // pred_fallthru
              _
            // Predicated region
            $region44: #{ocm_resnet_forward.17} parent=31 // pred_check
              _
            $region45: #{ocm_resnet_forward.17} parent=31 // pred_check_branch
              %183 = sbr.rel target = $region47
            $region46: #{ocm_resnet_forward.17} parent=31 // pred_region
              _
            $region47: #{ocm_resnet_forward.17} parent=31 // pred_fallthru
              _
          $region32: #{ocm_resnet_forward.17} parent=27 // pred_fallthru
            _
          %184 = vnop
        $region28: #{ocm_resnet_forward.17} parent=23 // pred_fallthru
          _
      $region24: #{ocm_resnet_forward.17} parent=5 // pred_fallthru
        _
      %p185 = scmp.le.s32.totalorder 1, %s9
      %p186 = scmp.lt.s32.totalorder %s9, 3
      %p187 = pnand %p185, %p186
      %p188 = pneg %p187
      // Predicated region
      $region48: #{ocm_resnet_forward.17} parent=5 // pred_check
        _
      $region49: #{ocm_resnet_forward.17} parent=5 // pred_check_branch
        %190 = sbr.rel (%p187) target = $region51
      $region50: #{ocm_resnet_forward.17} parent=5 // pred_region
        %s191 = ssub.s32 %s9, 1
        %s192 = sand.u32 %s43, 1
        %s193 = sand.u32 %s43, 1
        %s194 = smul.addr %s193, 128
        %s195 = scalar_lea.vmem [#allocation2], %s194
        // Predicated region
        $region52: #{ocm_resnet_forward.17} parent=50 // pred_check
          %p196 = pneg %p56
        $region53: #{ocm_resnet_forward.17} parent=50 // pred_check_branch
          %198 = sbr.rel (%p196) target = $region55
        $region54: #{ocm_resnet_forward.17} parent=50 // pred_region
          _
        $region55: #{ocm_resnet_forward.17} parent=50 // pred_fallthru
          _
        %p199 = pneg %p30
        %p200 = pneg %p27
        %s201 = sand.u32 %s43, 1
        %s202 = sand.u32 %s43, 1
        %s203 = smul.addr %s202, 128
        %s204 = scalar_lea.vmem [#allocation2], %s203
        %p205 = pneg %p56
        %p206 = pneg %p53
        %p207 = pneg %p77
        %p208 = pneg %p74
        %p209 = pneg %p103
        %p210 = pneg %p100
        %s211 = smul.u32 8, %s14
        %p212 = scmp.lt.s32.totalorder %s211, 15
        %s213 = scalar_select %p212, %s211, 15
        %s214 = smul.addr %s213, 8
        %s215 = scalar_lea.vmem %s3, %s214
        %s216 = smul.u32 8, %s14
        %s217 = smul.u32 8, %s14
        %p218 = scmp.lt.s32.totalorder %s217, 15
        %s219 = scalar_select %p218, %s217, 15
        %s220 = smul.addr %s219, 8
        %s221 = scalar_lea.vmem %s3, %s220
        %s222 = smul.u32 8, %s14
        %v224 = vld [vmem:[%s0] sm:$0xf]
        %v225 = vld [vmem:[%s195] sm:$0xff]
        %v226 = vld [vmem:[%s195 + $0x8] sm:$0xff]
        %v227 = vld [vmem:[%s195 + $0x10] sm:$0xff]
        %v228 = vld [vmem:[%s195 + $0x18] sm:$0xff]
        %v229 = vld [vmem:[%s195 + $0x20] sm:$0xff]
        %v230 = vld [vmem:[%s195 + $0x28] sm:$0xff]
        %v231 = vld [vmem:[%s195 + $0x30] sm:$0xff]
        %v232 = vld [vmem:[%s195 + $0x38] sm:$0xff]
        %v233 = vld [vmem:[%s195 + $0x40] sm:$0xff]
        %v234 = vld [vmem:[%s195 + $0x48] sm:$0xff]
        %v235 = vld [vmem:[%s195 + $0x50] sm:$0xff]
        %v236 = vld [vmem:[%s195 + $0x58] sm:$0xff]
        %v237 = vld [vmem:[%s195 + $0x60] sm:$0x33]
        %v238 = vld [vmem:[%s195 + $0x68] sm:$0x33]
        %v239 = vld [vmem:[%s195 + $0x70] sm:$0x33]
        %v240 = vld [vmem:[%s195 + $0x78] sm:$0x33]
        %v241 = vld [vmem:[%s2] sm:$0xff]
        %243 = vset.pattern.permute.xlu0 0
        %244 = vperm.xlu0 %243, %v241
        %v245 = vpop.permute.xlu0 %244
        %v263 = vunpack.c.l.b16 %v225
        %v264 = vunpack.c.h.b16 %v225
        %v265 = vunpack.c.l.b16 %v226
        %v266 = vunpack.c.h.b16 %v226
        %v267 = vunpack.c.l.b16 %v227
        %v268 = vunpack.c.h.b16 %v227
        %v269 = vunpack.c.l.b16 %v228
        %v270 = vunpack.c.h.b16 %v228
        %v271 = vunpack.c.l.b16 %v229
        %v272 = vunpack.c.h.b16 %v229
        %v273 = vunpack.c.l.b16 %v230
        %v274 = vunpack.c.h.b16 %v230
        %v275 = vunpack.c.l.b16 %v231
        %v276 = vunpack.c.h.b16 %v231
        %v277 = vunpack.c.l.b16 %v232
        %v278 = vunpack.c.h.b16 %v232
        %v279 = vunpack.c.l.b16 %v233
        %v280 = vunpack.c.h.b16 %v233
        %v281 = vunpack.c.l.b16 %v234
        %v282 = vunpack.c.h.b16 %v234
        %v283 = vunpack.c.l.b16 %v235
        %v284 = vunpack.c.h.b16 %v235
        %v285 = vunpack.c.l.b16 %v236
        %v286 = vunpack.c.h.b16 %v236
        %v287 = vunpack.c.l.b16 %v237
        %v288 = vunpack.c.h.b16 %v237
        %v289 = vunpack.c.l.b16 %v238
        %v290 = vunpack.c.h.b16 %v238
        %v291 = vunpack.c.l.b16 %v239
        %v292 = vunpack.c.h.b16 %v239
        %v293 = vunpack.c.l.b16 %v240
        %v294 = vunpack.c.h.b16 %v240
        %v295 = vpack.c.b16 %v271, %v263
        %v296 = vpack.c.b16 %v272, %v264
        %v297 = vpack.c.b16 %v273, %v265
        %v298 = vpack.c.b16 %v274, %v266
        %v299 = vpack.c.b16 %v275, %v267
        %v300 = vpack.c.b16 %v276, %v268
        %v301 = vpack.c.b16 %v277, %v269
        %v302 = vpack.c.b16 %v278, %v270
        %v303 = vpack.c.b16 %v287, %v279
        %v304 = vpack.c.b16 %v288, %v280
        %v305 = vpack.c.b16 %v289, %v281
        %v306 = vpack.c.b16 %v290, %v282
        %v307 = vpack.c.b16 %v291, %v283
        %v308 = vpack.c.b16 %v292, %v284
        %v309 = vpack.c.b16 %v293, %v285
        %v310 = vpack.c.b16 %v294, %v286
        %vm319 = vcmask 220160
        %v321 = vsel %vm319, %v224, 0
        %vm323 = vcmask 1044480
        %vm324 = vcmask 1045504
        %v325 = vsel %vm323, 4294967295, 65535
        %v326 = vsel %vm324, %v325, 0
        %v328 = vand.u32 %v303, %v326
        %v331 = vand.u32 %v304, %v326
        %v334 = vand.u32 %v305, %v326
        %v337 = vand.u32 %v306, %v326
        %v340 = vand.u32 %v307, %v326
        %v343 = vand.u32 %v308, %v326
        %v346 = vand.u32 %v309, %v326
        %v349 = vand.u32 %v310, %v326
        %351 = vmatprep.subr.bf16.mxu0 0
        %352 = vmatpush1.bf16.msra.mxu0 0
        %353 = vmatprep.subr.bf16.mxu0 0
        %354 = vmatpush1.bf16.msra.mxu0 0
        %355 = vmatprep.subr.bf16.mxu0 0
        %356 = vmatpush1.bf16.msra.mxu0 0
        %357 = vmatprep.subr.bf16.mxu0 0
        %358 = vmatpush1.bf16.msra.mxu0 0
        %359 = vmatprep.subr.bf16.mxu0 0
        %360 = vmatpush1.bf16.msra.mxu0 0
        %361 = vmatprep.subr.bf16.mxu0 0
        %362 = vmatpush1.bf16.msra.mxu0 0
        %363 = vmatprep.subr.bf16.mxu0 %v331
        %364 = vmatpush1.bf16.msra.mxu0 %v328
        %365 = vmatprep.subr.bf16.mxu0 %v296
        %366 = vmatpush1.bf16.msra.mxu0 %v295
        %367 = vmatprep.subr.bf16.mxu0 0
        %368 = vmatpush2.bf16.msra.mxu0 0
        %369 = vmatprep.subr.bf16.mxu0 0
        %370 = vmatpush2.bf16.msra.mxu0 0
        %371 = vmatprep.subr.bf16.mxu0 0
        %372 = vmatpush2.bf16.msra.mxu0 0
        %373 = vmatprep.subr.bf16.mxu0 0
        %374 = vmatpush2.bf16.msra.mxu0 0
        %375 = vmatprep.subr.bf16.mxu0 0
        %376 = vmatpush2.bf16.msra.mxu0 0
        %377 = vmatprep.subr.bf16.mxu0 0
        %378 = vmatpush2.bf16.msra.mxu0 0
        %379 = vmatprep.subr.bf16.mxu0 0
        %380 = vmatpush2.bf16.msra.mxu0 0
        %381 = vmatprep.subr.bf16.mxu0 0
        %382 = vmatpush2.bf16.msra.mxu0 0
        %383 = vmatprep.mubr.bf16.mxu0 0
        %384 = vmatmul.mubr.bf16.gmra.mxu0 %v321
        %v385 = vpop.f32.mrf.mxu0
        %v386 = vadd.f32 %v245, %v385
        %v387 = vpop.f32.mrf.mxu0
        %v388 = vadd.f32 %v245, %v387
        %v389 = vpop.f32.mrf.mxu0
        %v390 = vpop.f32.mrf.mxu0
        %391 = vdwg.mxu0
        %392 = vmatprep.subr.bf16.mxu0 0
        %393 = vmatpush1.bf16.msra.mxu0 0
        %394 = vmatprep.subr.bf16.mxu0 0
        %395 = vmatpush1.bf16.msra.mxu0 0
        %396 = vmatprep.subr.bf16.mxu0 0
        %397 = vmatpush1.bf16.msra.mxu0 0
        %398 = vmatprep.subr.bf16.mxu0 0
        %399 = vmatpush1.bf16.msra.mxu0 0
        %400 = vmatprep.subr.bf16.mxu0 0
        %401 = vmatpush1.bf16.msra.mxu0 0
        %402 = vmatprep.subr.bf16.mxu0 0
        %403 = vmatpush1.bf16.msra.mxu0 0
        %404 = vmatprep.subr.bf16.mxu0 %v337
        %405 = vmatpush1.bf16.msra.mxu0 %v334
        %406 = vmatprep.subr.bf16.mxu0 %v298
        %407 = vmatpush1.bf16.msra.mxu0 %v297
        %408 = vmatprep.subr.bf16.mxu0 0
        %409 = vmatpush2.bf16.msra.mxu0 0
        %410 = vmatprep.subr.bf16.mxu0 0
        %411 = vmatpush2.bf16.msra.mxu0 0
        %412 = vmatprep.subr.bf16.mxu0 0
        %413 = vmatpush2.bf16.msra.mxu0 0
        %414 = vmatprep.subr.bf16.mxu0 0
        %415 = vmatpush2.bf16.msra.mxu0 0
        %416 = vmatprep.subr.bf16.mxu0 0
        %417 = vmatpush2.bf16.msra.mxu0 0
        %418 = vmatprep.subr.bf16.mxu0 0
        %419 = vmatpush2.bf16.msra.mxu0 0
        %420 = vmatprep.subr.bf16.mxu0 0
        %421 = vmatpush2.bf16.msra.mxu0 0
        %422 = vmatprep.subr.bf16.mxu0 0
        %423 = vmatpush2.bf16.msra.mxu0 0
        %424 = vmatprep.mubr.bf16.mxu0 0
        %425 = vmatmul.mubr.bf16.gmra.mxu0 %v321
        %v426 = vpop.f32.mrf.mxu0
        %v427 = vadd.f32 %v245, %v426
        %v428 = vpop.f32.mrf.mxu0
        %v429 = vadd.f32 %v245, %v428
        %v430 = vpop.f32.mrf.mxu0
        %v431 = vpop.f32.mrf.mxu0
        %432 = vdwg.mxu0
        %433 = vmatprep.subr.bf16.mxu0 0
        %434 = vmatpush1.bf16.msra.mxu0 0
        %435 = vmatprep.subr.bf16.mxu0 0
        %436 = vmatpush1.bf16.msra.mxu0 0
        %437 = vmatprep.subr.bf16.mxu0 0
        %438 = vmatpush1.bf16.msra.mxu0 0
        %439 = vmatprep.subr.bf16.mxu0 0
        %440 = vmatpush1.bf16.msra.mxu0 0
        %441 = vmatprep.subr.bf16.mxu0 0
        %442 = vmatpush1.bf16.msra.mxu0 0
        %443 = vmatprep.subr.bf16.mxu0 0
        %444 = vmatpush1.bf16.msra.mxu0 0
        %445 = vmatprep.subr.bf16.mxu0 %v343
        %446 = vmatpush1.bf16.msra.mxu0 %v340
        %447 = vmatprep.subr.bf16.mxu0 %v300
        %448 = vmatpush1.bf16.msra.mxu0 %v299
        %449 = vmatprep.subr.bf16.mxu0 0
        %450 = vmatpush2.bf16.msra.mxu0 0
        %451 = vmatprep.subr.bf16.mxu0 0
        %452 = vmatpush2.bf16.msra.mxu0 0
        %453 = vmatprep.subr.bf16.mxu0 0
        %454 = vmatpush2.bf16.msra.mxu0 0
        %455 = vmatprep.subr.bf16.mxu0 0
        %456 = vmatpush2.bf16.msra.mxu0 0
        %457 = vmatprep.subr.bf16.mxu0 0
        %458 = vmatpush2.bf16.msra.mxu0 0
        %459 = vmatprep.subr.bf16.mxu0 0
        %460 = vmatpush2.bf16.msra.mxu0 0
        %461 = vmatprep.subr.bf16.mxu0 0
        %462 = vmatpush2.bf16.msra.mxu0 0
        %463 = vmatprep.subr.bf16.mxu0 0
        %464 = vmatpush2.bf16.msra.mxu0 0
        %465 = vmatprep.mubr.bf16.mxu0 0
        %466 = vmatmul.mubr.bf16.gmra.mxu0 %v321
        %v467 = vpop.f32.mrf.mxu0
        %v468 = vadd.f32 %v245, %v467
        %v469 = vpop.f32.mrf.mxu0
        %v470 = vadd.f32 %v245, %v469
        %v471 = vpop.f32.mrf.mxu0
        %v472 = vpop.f32.mrf.mxu0
        %473 = vdwg.mxu0
        %474 = vmatprep.subr.bf16.mxu0 0
        %475 = vmatpush1.bf16.msra.mxu0 0
        %476 = vmatprep.subr.bf16.mxu0 0
        %477 = vmatpush1.bf16.msra.mxu0 0
        %478 = vmatprep.subr.bf16.mxu0 0
        %479 = vmatpush1.bf16.msra.mxu0 0
        %480 = vmatprep.subr.bf16.mxu0 0
        %481 = vmatpush1.bf16.msra.mxu0 0
        %482 = vmatprep.subr.bf16.mxu0 0
        %483 = vmatpush1.bf16.msra.mxu0 0
        %484 = vmatprep.subr.bf16.mxu0 0
        %485 = vmatpush1.bf16.msra.mxu0 0
        %486 = vmatprep.subr.bf16.mxu0 %v349
        %487 = vmatpush1.bf16.msra.mxu0 %v346
        %488 = vmatprep.subr.bf16.mxu0 %v302
        %489 = vmatpush1.bf16.msra.mxu0 %v301
        %490 = vmatprep.subr.bf16.mxu0 0
        %491 = vmatpush2.bf16.msra.mxu0 0
        %492 = vmatprep.subr.bf16.mxu0 0
        %493 = vmatpush2.bf16.msra.mxu0 0
        %494 = vmatprep.subr.bf16.mxu0 0
        %495 = vmatpush2.bf16.msra.mxu0 0
        %496 = vmatprep.subr.bf16.mxu0 0
        %497 = vmatpush2.bf16.msra.mxu0 0
        %498 = vmatprep.subr.bf16.mxu0 0
        %499 = vmatpush2.bf16.msra.mxu0 0
        %500 = vmatprep.subr.bf16.mxu0 0
        %501 = vmatpush2.bf16.msra.mxu0 0
        %502 = vmatprep.subr.bf16.mxu0 0
        %503 = vmatpush2.bf16.msra.mxu0 0
        %504 = vmatprep.subr.bf16.mxu0 0
        %505 = vmatpush2.bf16.msra.mxu0 0
        %506 = vmatprep.mubr.bf16.mxu0 0
        %507 = vmatmul.mubr.bf16.gmra.mxu0 %v321
        %v508 = vpop.f32.mrf.mxu0
        %v509 = vadd.f32 %v245, %v508
        %v510 = vpop.f32.mrf.mxu0
        %v511 = vadd.f32 %v245, %v510
        %v512 = vpop.f32.mrf.mxu0
        %v513 = vpop.f32.mrf.mxu0
        %514 = vdwg.mxu0
        %v515 = vmax.f32 %v386, 0.0
        %v516 = vmax.f32 %v388, 0.0
        %v517 = vmax.f32 %v427, 0.0
        %v518 = vmax.f32 %v429, 0.0
        %v519 = vmax.f32 %v468, 0.0
        %v520 = vmax.f32 %v470, 0.0
        %v521 = vmax.f32 %v509, 0.0
        %v522 = vmax.f32 %v511, 0.0
        %523 = vst [vmem:[%s221] sm:$0xff] %v515
        %524 = vst [vmem:[%s221 + $0x8] sm:$0xff] %v516
        %525 = vst [vmem:[%s221 + $0x10] sm:$0xff] %v517
        %526 = vst [vmem:[%s221 + $0x18] sm:$0xff] %v518
        %527 = vst [vmem:[%s221 + $0x20] sm:$0xff] %v519
        %528 = vst [vmem:[%s221 + $0x28] sm:$0xff] %v520
        %529 = vst [vmem:[%s221 + $0x30] sm:$0xff] %v521
        %530 = vst [vmem:[%s221 + $0x38] sm:$0xff] %v522
        %s531 = smul.u32 8, %s14
        %p532 = scmp.lt.s32.totalorder %s531, 15
        %s533 = scalar_select %p532, %s531, 15
        %s534 = smul.addr %s533, 8
        %s535 = scalar_lea.vmem %s3, %s534
        // Predicated region
        $region56: #{ocm_resnet_forward.17} parent=50 // pred_check
          %p536 = pneg %p100
        $region57: #{ocm_resnet_forward.17} parent=50 // pred_check_branch
          %538 = sbr.rel (%p536) target = $region59
        $region58: #{ocm_resnet_forward.17} parent=50 // pred_region
          %s539 = smul.u32 8, %s14
        $region59: #{ocm_resnet_forward.17} parent=50 // pred_fallthru
          _
      $region51: #{ocm_resnet_forward.17} parent=5 // pred_fallthru
        _
      %p540 = scmp.le.s32.totalorder 2, %s9
      // Predicated region
      $region60: #{ocm_resnet_forward.17} parent=5 // pred_check
        %p541 = pneg %p540
      $region61: #{ocm_resnet_forward.17} parent=5 // pred_check_branch
        %543 = sbr.rel (%p541) target = $region63
      $region62: #{ocm_resnet_forward.17} parent=5 // pred_region
        %s544 = ssub.s32 %s9, 2
        // Predicated region
        $region64: #{ocm_resnet_forward.17} parent=62 // pred_check
          %p545 = pneg %p106
        $region65: #{ocm_resnet_forward.17} parent=62 // pred_check_branch
          %547 = sbr.rel (%p545) target = $region67
        $region66: #{ocm_resnet_forward.17} parent=62 // pred_region
          %s548 = smul.u32 8, %s15
          %p549 = scmp.lt.s32.totalorder %s548, 15
          %s550 = scalar_select %p549, %s548, 15
          %s551 = smul.addr %s550, 8
          %s552 = scalar_lea.vmem %s3, %s551
        $region67: #{ocm_resnet_forward.17} parent=62 // pred_fallthru
          _
      $region63: #{ocm_resnet_forward.17} parent=5 // pred_fallthru
        _
    $region6: #{ocm_resnet_forward.17} parent=1 // loop_footer
      %s13 = sadd.s32 1, %s9
    $region7: #{ocm_resnet_forward.17} parent=1 // loop_footer_branch
      %8 = sbr.rel target = $region3
    $region8: #{ocm_resnet_forward.17} parent=1 // loop_exit
      _

// kernel: ocm_resnet_forward.19
$region0: #{ocm_resnet_forward.19}
  #allocation0 [shape = 'u32[]', space=smem, size = 0x4, offset = 0x4, fixed_abs, tag = 'smem constant byte address 0x4 - core index']
  #allocation1 [shape = 'u32[144,128]{1,0:T(1,128)}', space=vmem, size = 0x12000, scoped, tag = 'internal scratch']
  %s0 = inlined_call_operand.vmem [shape: bf16[8,72], index: 0, kind: input, shape index: {}]
  %s1 = inlined_call_operand.vmem [shape: bf16[72,2048], index: 1, kind: input, shape index: {}]
  %s2 = inlined_call_operand.vmem [shape: f32[8,1], index: 2, kind: input, shape index: {}]
  %s3 = inlined_call_operand.vmem [shape: f32[8,2048], index: 3, kind: input, shape index: {}]
  %s4 = inlined_call_operand.vmem [shape: f32[8,2048], index: 4, kind: output, shape index: {}]
  %s5 = sld [smem:[#allocation0]]
  $region72: #{ocm_resnet_forward.19} parent=0
    _
  %s7 = ssub.s32 1, %s5
  %s8 = scalar_select 0, %s7, %s5
  $region1: #{ocm_resnet_forward.19} parent=0
    #allocation2 [shape = 'u8[294912]{0}', space=vmem, size = 0x48000, scoped, tag = 'input window, operand 1']
    loop: start=0, step=1, limit=4
    $region2: #{ocm_resnet_forward.19} parent=1 // loop_pre_header
      _
    $region3: #{ocm_resnet_forward.19} parent=1 // loop_header
      %s10 = sphi 0, %s14
      %p11 = scmp.ge.s32.totalorder %s10, 4
      %s18 = sphi 0, %s18
      %s20 = sphi 0, %s18
      %s21 = sphi 0, %s20
      %s35 = sphi 0, %s21
      %s41 = sphi 0, %s43
      %s44 = sphi 0, %s41
      %s45 = sphi 0, %s44
      %s61 = sphi 0, %s45
      %s65 = sphi 0, %s65
      %s67 = sphi 0, %s65
      %s68 = sphi 0, %s67
      %s82 = sphi 0, %s68
      %s88 = sphi 0, %s90
      %s91 = sphi 0, %s88
      %s92 = sphi 0, %s91
      %s108 = sphi 0, %s92
      %s114 = sphi 0, %s116
      %s117 = sphi 0, %s114
      %s118 = sphi 0, %s117
      %s134 = sphi 0, %s118
    $region4: #{ocm_resnet_forward.19} parent=1 // loop_header_branch
      %13 = sbr.rel (%p11) target = $region8
    $region5: #{ocm_resnet_forward.19} parent=1 // loop_body
      %s15 = ssub.s32 %s10, 1
      %s16 = ssub.s32 %s10, 2
      %s17 = sadd.s32 %s10, 1
      %s19 = sadd.s32 %s18, 1
      %p22 = scmp.eq.s32.totalorder %s10, 1
      %p23 = scmp.ne.s32.totalorder %s18, %s20
      %p24 = scmp.eq.s32.totalorder %s10, 0
      %p25 = por %p23, %p24
      %p26 = scmp.ne.s32.totalorder %s18, %s20
      %p27 = scmp.eq.s32.totalorder %s15, 1
      %p28 = por %p26, %p27
      %p29 = scmp.ne.s32.totalorder %s20, %s21
      %p30 = scmp.eq.s32.totalorder %s15, 0
      %p31 = por %p29, %p30
      %p32 = scmp.ne.s32.totalorder %s20, %s21
      %p33 = scmp.eq.s32.totalorder %s16, 1
      %p34 = por %p32, %p33
      %p36 = scmp.ne.s32.totalorder %s21, %s35
      %p37 = scmp.eq.s32.totalorder %s16, 0
      %p38 = por %p36, %p37
      %s39 = ssub.s32 %s10, %s17
      %p40 = scmp.eq.s32.totalorder %s39, 0
      %s42 = sadd.s32 %s41, 1
      %s43 = scalar_select %p40, %s41, %s42
      %p46 = pneg %p40
      %p47 = scmp.eq.s32.totalorder %s10, 1
      %p48 = por %p46, %p47
      %p49 = scmp.ne.s32.totalorder %s41, %s44
      %p50 = scmp.eq.s32.totalorder %s10, 0
      %p51 = por %p49, %p50
      %p52 = scmp.ne.s32.totalorder %s41, %s44
      %p53 = scmp.eq.s32.totalorder %s15, 1
      %p54 = por %p52, %p53
      %p55 = scmp.ne.s32.totalorder %s44, %s45
      %p56 = scmp.eq.s32.totalorder %s15, 0
      %p57 = por %p55, %p56
      %p58 = scmp.ne.s32.totalorder %s44, %s45
      %p59 = scmp.eq.s32.totalorder %s16, 1
      %p60 = por %p58, %p59
      %p62 = scmp.ne.s32.totalorder %s45, %s61
      %p63 = scmp.eq.s32.totalorder %s16, 0
      %p64 = por %p62, %p63
      %s66 = sadd.s32 %s65, 1
      %p69 = scmp.eq.s32.totalorder %s10, 1
      %p70 = scmp.ne.s32.totalorder %s65, %s67
      %p71 = scmp.eq.s32.totalorder %s10, 0
      %p72 = por %p70, %p71
      %p73 = scmp.ne.s32.totalorder %s65, %s67
      %p74 = scmp.eq.s32.totalorder %s15, 1
      %p75 = por %p73, %p74
      %p76 = scmp.ne.s32.totalorder %s67, %s68
      %p77 = scmp.eq.s32.totalorder %s15, 0
      %p78 = por %p76, %p77
      %p79 = scmp.ne.s32.totalorder %s67, %s68
      %p80 = scmp.eq.s32.totalorder %s16, 1
      %p81 = por %p79, %p80
      %p83 = scmp.ne.s32.totalorder %s68, %s82
      %p84 = scmp.eq.s32.totalorder %s16, 0
      %p85 = por %p83, %p84
      %s86 = ssub.s32 %s10, %s17
      %p87 = scmp.eq.s32.totalorder %s86, 0
      %s89 = sadd.s32 %s88, 1
      %s90 = scalar_select %p87, %s88, %s89
      %p93 = pneg %p87
      %p94 = scmp.eq.s32.totalorder %s10, 1
      %p95 = por %p93, %p94
      %p96 = scmp.ne.s32.totalorder %s88, %s91
      %p97 = scmp.eq.s32.totalorder %s10, 0
      %p98 = por %p96, %p97
      %p99 = scmp.ne.s32.totalorder %s88, %s91
      %p100 = scmp.eq.s32.totalorder %s15, 1
      %p101 = por %p99, %p100
      %p102 = scmp.ne.s32.totalorder %s91, %s92
      %p103 = scmp.eq.s32.totalorder %s15, 0
      %p104 = por %p102, %p103
      %p105 = scmp.ne.s32.totalorder %s91, %s92
      %p106 = scmp.eq.s32.totalorder %s16, 1
      %p107 = por %p105, %p106
      %p109 = scmp.ne.s32.totalorder %s92, %s108
      %p110 = scmp.eq.s32.totalorder %s16, 0
      %p111 = por %p109, %p110
      %s112 = ssub.s32 %s10, %s17
      %p113 = scmp.eq.s32.totalorder %s112, 0
      %s115 = sadd.s32 %s114, 1
      %s116 = scalar_select %p113, %s114, %s115
      %p119 = pneg %p113
      %p120 = scmp.eq.s32.totalorder %s10, 1
      %p121 = por %p119, %p120
      %p122 = scmp.ne.s32.totalorder %s114, %s117
      %p123 = scmp.eq.s32.totalorder %s10, 0
      %p124 = por %p122, %p123
      %p125 = scmp.ne.s32.totalorder %s114, %s117
      %p126 = scmp.eq.s32.totalorder %s15, 1
      %p127 = por %p125, %p126
      %p128 = scmp.ne.s32.totalorder %s117, %s118
      %p129 = scmp.eq.s32.totalorder %s15, 0
      %p130 = por %p128, %p129
      %p131 = scmp.ne.s32.totalorder %s117, %s118
      %p132 = scmp.eq.s32.totalorder %s16, 1
      %p133 = por %p131, %p132
      %p135 = scmp.ne.s32.totalorder %s118, %s134
      %p136 = scmp.eq.s32.totalorder %s16, 0
      %p137 = por %p135, %p136
      %p138 = scmp.le.s32.totalorder 1, %s10
      %p139 = scmp.lt.s32.totalorder %s10, 3
      %p140 = pnand %p138, %p139
      %p141 = pneg %p140
      // Predicated region
      $region9: #{ocm_resnet_forward.19} parent=5 // pred_check
        _
      $region10: #{ocm_resnet_forward.19} parent=5 // pred_check_branch
        %143 = sbr.rel (%p140) target = $region12
      $region11: #{ocm_resnet_forward.19} parent=5 // pred_region
        %s144 = ssub.s32 %s10, 1
        // Predicated region
        $region13: #{ocm_resnet_forward.19} parent=11 // pred_check
          %p145 = pneg %p31
        $region14: #{ocm_resnet_forward.19} parent=11 // pred_check_branch
          %147 = sbr.rel (%p145) target = $region16
        $region15: #{ocm_resnet_forward.19} parent=11 // pred_region
          _
        $region16: #{ocm_resnet_forward.19} parent=11 // pred_fallthru
          _
        // Predicated region
        $region17: #{ocm_resnet_forward.19} parent=11 // pred_check
          %p148 = pneg %p78
        $region18: #{ocm_resnet_forward.19} parent=11 // pred_check_branch
          %150 = sbr.rel (%p148) target = $region20
        $region19: #{ocm_resnet_forward.19} parent=11 // pred_region
          _
        $region20: #{ocm_resnet_forward.19} parent=11 // pred_fallthru
          _
      $region12: #{ocm_resnet_forward.19} parent=5 // pred_fallthru
        _
      %p151 = scmp.lt.s32.totalorder %s10, 2
      // Predicated region
      $region21: #{ocm_resnet_forward.19} parent=5 // pred_check
        %p152 = pneg %p151
      $region22: #{ocm_resnet_forward.19} parent=5 // pred_check_branch
        %154 = sbr.rel (%p152) target = $region24
      $region23: #{ocm_resnet_forward.19} parent=5 // pred_region
        // Predicated region
        $region25: #{ocm_resnet_forward.19} parent=23 // pred_check
          %p155 = pneg %p51
        $region26: #{ocm_resnet_forward.19} parent=23 // pred_check_branch
          %157 = sbr.rel (%p155) target = $region28
        $region27: #{ocm_resnet_forward.19} parent=23 // pred_region
          %s158 = sand.u32 %s41, 1
          %s159 = sand.u32 %s41, 1
          %s160 = smul.addr %s159, 288
          %s161 = scalar_lea.vmem [#allocation2], %s160
          %s162 = smul.u32 8, %s10
          %s163 = smul.addr %s162, 4
          %s164 = scalar_lea.vmem %s1, %s163
          // Predicated region
          $region29: #{ocm_resnet_forward.19} parent=27 // pred_check
            _
          $region30: #{ocm_resnet_forward.19} parent=27 // pred_check_branch
            %166 = sbr.rel (0) target = $region32
          $region31: #{ocm_resnet_forward.19} parent=27 // pred_region
            // Predicated region
            $region33: #{ocm_resnet_forward.19} parent=31 // pred_check
              _
            $region34: #{ocm_resnet_forward.19} parent=31 // pred_check_branch
              %168 = sbr.rel (0) target = $region36
            $region35: #{ocm_resnet_forward.19} parent=31 // pred_region
              loop: start=0, step=1, limit=1
              $region37: #{ocm_resnet_forward.19} parent=35 // loop_pre_header
                _
              $region38: #{ocm_resnet_forward.19} parent=35 // loop_header
                %s170 = sphi 0, %s174
                %p171 = scmp.ge.s32.totalorder %s170, 1
                %s175 = sphi %s164, %s164
                %s176 = sphi %s161, %s161
              $region39: #{ocm_resnet_forward.19} parent=35 // loop_header_branch
                %173 = sbr.rel (%p171) target = $region43
              $region40: #{ocm_resnet_forward.19} parent=35 // loop_body
                %v177 = vld [vmem:[%s175] sm:$0xff]
                %178 = vst [vmem:[%s176] sm:$0xff] %v177
                %v179 = vld [vmem:[%s175 + $0x8] sm:$0xff]
                %180 = vst [vmem:[%s176 + $0x8] sm:$0xff] %v179
                %v181 = vld [vmem:[%s175 + $0x10] sm:$0xff]
                %182 = vst [vmem:[%s176 + $0x10] sm:$0xff] %v181
                %v183 = vld [vmem:[%s175 + $0x18] sm:$0xff]
                %184 = vst [vmem:[%s176 + $0x18] sm:$0xff] %v183
                %v185 = vld [vmem:[%s175 + $0x40] sm:$0xff]
                %186 = vst [vmem:[%s176 + $0x20] sm:$0xff] %v185
                %v187 = vld [vmem:[%s175 + $0x48] sm:$0xff]
                %188 = vst [vmem:[%s176 + $0x28] sm:$0xff] %v187
                %v189 = vld [vmem:[%s175 + $0x50] sm:$0xff]
                %190 = vst [vmem:[%s176 + $0x30] sm:$0xff] %v189
                %v191 = vld [vmem:[%s175 + $0x58] sm:$0xff]
                %192 = vst [vmem:[%s176 + $0x38] sm:$0xff] %v191
                %v193 = vld [vmem:[%s175 + $0x80] sm:$0xff]
                %194 = vst [vmem:[%s176 + $0x40] sm:$0xff] %v193
                %v195 = vld [vmem:[%s175 + $0x88] sm:$0xff]
                %196 = vst [vmem:[%s176 + $0x48] sm:$0xff] %v195
                %v197 = vld [vmem:[%s175 + $0x90] sm:$0xff]
                %198 = vst [vmem:[%s176 + $0x50] sm:$0xff] %v197
                %v199 = vld [vmem:[%s175 + $0x98] sm:$0xff]
                %200 = vst [vmem:[%s176 + $0x58] sm:$0xff] %v199
                %v201 = vld [vmem:[%s175 + $0xc0] sm:$0xff]
                %202 = vst [vmem:[%s176 + $0x60] sm:$0xff] %v201
                %v203 = vld [vmem:[%s175 + $0xc8] sm:$0xff]
                %204 = vst [vmem:[%s176 + $0x68] sm:$0xff] %v203
                %v205 = vld [vmem:[%s175 + $0xd0] sm:$0xff]
                %206 = vst [vmem:[%s176 + $0x70] sm:$0xff] %v205
                %v207 = vld [vmem:[%s175 + $0xd8] sm:$0xff]
                %208 = vst [vmem:[%s176 + $0x78] sm:$0xff] %v207
                %v209 = vld [vmem:[%s175 + $0x100] sm:$0xff]
                %210 = vst [vmem:[%s176 + $0x80] sm:$0xff] %v209
                %v211 = vld [vmem:[%s175 + $0x108] sm:$0xff]
                %212 = vst [vmem:[%s176 + $0x88] sm:$0xff] %v211
                %v213 = vld [vmem:[%s175 + $0x110] sm:$0xff]
                %214 = vst [vmem:[%s176 + $0x90] sm:$0xff] %v213
                %v215 = vld [vmem:[%s175 + $0x118] sm:$0xff]
                %216 = vst [vmem:[%s176 + $0x98] sm:$0xff] %v215
                %v217 = vld [vmem:[%s175 + $0x140] sm:$0xff]
                %218 = vst [vmem:[%s176 + $0xa0] sm:$0xff] %v217
                %v219 = vld [vmem:[%s175 + $0x148] sm:$0xff]
                %220 = vst [vmem:[%s176 + $0xa8] sm:$0xff] %v219
                %v221 = vld [vmem:[%s175 + $0x150] sm:$0xff]
                %222 = vst [vmem:[%s176 + $0xb0] sm:$0xff] %v221
                %v223 = vld [vmem:[%s175 + $0x158] sm:$0xff]
                %224 = vst [vmem:[%s176 + $0xb8] sm:$0xff] %v223
                %v225 = vld [vmem:[%s175 + $0x180] sm:$0xff]
                %226 = vst [vmem:[%s176 + $0xc0] sm:$0xff] %v225
                %v227 = vld [vmem:[%s175 + $0x188] sm:$0xff]
                %228 = vst [vmem:[%s176 + $0xc8] sm:$0xff] %v227
                %v229 = vld [vmem:[%s175 + $0x190] sm:$0xff]
                %230 = vst [vmem:[%s176 + $0xd0] sm:$0xff] %v229
                %v231 = vld [vmem:[%s175 + $0x198] sm:$0xff]
                %232 = vst [vmem:[%s176 + $0xd8] sm:$0xff] %v231
                %v233 = vld [vmem:[%s175 + $0x1c0] sm:$0xff]
                %234 = vst [vmem:[%s176 + $0xe0] sm:$0xff] %v233
                %v235 = vld [vmem:[%s175 + $0x1c8] sm:$0xff]
                %236 = vst [vmem:[%s176 + $0xe8] sm:$0xff] %v235
                %v237 = vld [vmem:[%s175 + $0x1d0] sm:$0xff]
                %238 = vst [vmem:[%s176 + $0xf0] sm:$0xff] %v237
                %v239 = vld [vmem:[%s175 + $0x1d8] sm:$0xff]
                %240 = vst [vmem:[%s176 + $0xf8] sm:$0xff] %v239
                %v241 = vld [vmem:[%s175 + $0x200] sm:$0xff]
                %242 = vst [vmem:[%s176 + $0x100] sm:$0xff] %v241
                %v243 = vld [vmem:[%s175 + $0x208] sm:$0xff]
                %244 = vst [vmem:[%s176 + $0x108] sm:$0xff] %v243
                %v245 = vld [vmem:[%s175 + $0x210] sm:$0xff]
                %246 = vst [vmem:[%s176 + $0x110] sm:$0xff] %v245
                %v247 = vld [vmem:[%s175 + $0x218] sm:$0xff]
                %248 = vst [vmem:[%s176 + $0x118] sm:$0xff] %v247
              $region41: #{ocm_resnet_forward.19} parent=35 // loop_footer
                %s174 = sadd.s32 1, %s170
              $region42: #{ocm_resnet_forward.19} parent=35 // loop_footer_branch
                %169 = sbr.rel target = $region38
              $region43: #{ocm_resnet_forward.19} parent=35 // loop_exit
                _
            $region36: #{ocm_resnet_forward.19} parent=31 // pred_fallthru
              _
            // Predicated region
            $region44: #{ocm_resnet_forward.19} parent=31 // pred_check
              _
            $region45: #{ocm_resnet_forward.19} parent=31 // pred_check_branch
              %250 = sbr.rel target = $region47
            $region46: #{ocm_resnet_forward.19} parent=31 // pred_region
              _
            $region47: #{ocm_resnet_forward.19} parent=31 // pred_fallthru
              _
          $region32: #{ocm_resnet_forward.19} parent=27 // pred_fallthru
            _
          %251 = vnop
        $region28: #{ocm_resnet_forward.19} parent=23 // pred_fallthru
          _
        // Predicated region
        $region48: #{ocm_resnet_forward.19} parent=23 // pred_check
          %p252 = pneg %p98
        $region49: #{ocm_resnet_forward.19} parent=23 // pred_check_branch
          %254 = sbr.rel (%p252) target = $region51
        $region50: #{ocm_resnet_forward.19} parent=23 // pred_region
          %s255 = smul.u32 8, %s10
          %p256 = scmp.lt.s32.totalorder %s255, 15
          %s257 = scalar_select %p256, %s255, 15
          %s258 = smul.addr %s257, 8
          %s259 = scalar_lea.vmem %s3, %s258
          %s260 = smul.u32 8, %s10
        $region51: #{ocm_resnet_forward.19} parent=23 // pred_fallthru
          _
      $region24: #{ocm_resnet_forward.19} parent=5 // pred_fallthru
        _
      %p261 = scmp.le.s32.totalorder 1, %s10
      %p262 = scmp.lt.s32.totalorder %s10, 3
      %p263 = pnand %p261, %p262
      %p264 = pneg %p263
      // Predicated region
      $region52: #{ocm_resnet_forward.19} parent=5 // pred_check
        _
      $region53: #{ocm_resnet_forward.19} parent=5 // pred_check_branch
        %266 = sbr.rel (%p263) target = $region55
      $region54: #{ocm_resnet_forward.19} parent=5 // pred_region
        %s267 = ssub.s32 %s10, 1
        %s268 = sand.u32 %s44, 1
        %s269 = sand.u32 %s44, 1
        %s270 = smul.addr %s269, 288
        %s271 = scalar_lea.vmem [#allocation2], %s270
        // Predicated region
        $region56: #{ocm_resnet_forward.19} parent=54 // pred_check
          %p272 = pneg %p57
        $region57: #{ocm_resnet_forward.19} parent=54 // pred_check_branch
          %274 = sbr.rel (%p272) target = $region59
        $region58: #{ocm_resnet_forward.19} parent=54 // pred_region
          _
        $region59: #{ocm_resnet_forward.19} parent=54 // pred_fallthru
          _
        %p275 = pneg %p31
        %p276 = pneg %p28
        %s277 = sand.u32 %s44, 1
        %s278 = sand.u32 %s44, 1
        %s279 = smul.addr %s278, 288
        %s280 = scalar_lea.vmem [#allocation2], %s279
        %p281 = pneg %p57
        %p282 = pneg %p54
        %p283 = pneg %p78
        %p284 = pneg %p75
        %s285 = smul.u32 8, %s15
        %p286 = scmp.lt.s32.totalorder %s285, 15
        %s287 = scalar_select %p286, %s285, 15
        %s288 = smul.addr %s287, 8
        %s289 = scalar_lea.vmem %s3, %s288
        %p290 = pneg %p104
        %p291 = pneg %p101
        %p292 = pneg %p130
        %p293 = pneg %p127
        %s294 = smul.u32 8, %s15
        %p295 = scmp.lt.s32.totalorder %s294, 15
        %s296 = scalar_select %p295, %s294, 15
        %s297 = smul.addr %s296, 8
        %s298 = scalar_lea.vmem %s4, %s297
        %s299 = smul.u32 8, %s15
        %s300 = smul.u32 8, %s15
        %p301 = scmp.lt.s32.totalorder %s300, 15
        %s302 = scalar_select %p301, %s300, 15
        %s303 = smul.addr %s302, 8
        %s304 = scalar_lea.vmem %s3, %s303
        %s305 = smul.u32 8, %s15
        %s306 = smul.u32 8, %s15
        %p307 = scmp.lt.s32.totalorder %s306, 15
        %s308 = scalar_select %p307, %s306, 15
        %s309 = smul.addr %s308, 8
        %s310 = scalar_lea.vmem %s4, %s309
        %s311 = smul.u32 8, %s15
        %v313 = vld [vmem:[%s0] sm:$0xf]
        %v314 = vld [vmem:[%s271] sm:$0xff]
        %v315 = vld [vmem:[%s271 + $0x8] sm:$0xff]
        %v316 = vld [vmem:[%s271 + $0x10] sm:$0xff]
        %v317 = vld [vmem:[%s271 + $0x18] sm:$0xff]
        %v318 = vld [vmem:[%s271 + $0x20] sm:$0xff]
        %v319 = vld [vmem:[%s271 + $0x28] sm:$0xff]
        %v320 = vld [vmem:[%s271 + $0x30] sm:$0xff]
        %v321 = vld [vmem:[%s271 + $0x38] sm:$0xff]
        %v322 = vld [vmem:[%s271 + $0x40] sm:$0xff]
        %v323 = vld [vmem:[%s271 + $0x48] sm:$0xff]
        %v324 = vld [vmem:[%s271 + $0x50] sm:$0xff]
        %v325 = vld [vmem:[%s271 + $0x58] sm:$0xff]
        %v326 = vld [vmem:[%s271 + $0x60] sm:$0xff]
        %v327 = vld [vmem:[%s271 + $0x68] sm:$0xff]
        %v328 = vld [vmem:[%s271 + $0x70] sm:$0xff]
        %v329 = vld [vmem:[%s271 + $0x78] sm:$0xff]
        %v330 = vld [vmem:[%s271 + $0x80] sm:$0xff]
        %v331 = vld [vmem:[%s271 + $0x88] sm:$0xff]
        %v332 = vld [vmem:[%s271 + $0x90] sm:$0xff]
        %v333 = vld [vmem:[%s271 + $0x98] sm:$0xff]
        %v334 = vld [vmem:[%s271 + $0xa0] sm:$0xff]
        %v335 = vld [vmem:[%s271 + $0xa8] sm:$0xff]
        %v336 = vld [vmem:[%s271 + $0xb0] sm:$0xff]
        %v337 = vld [vmem:[%s271 + $0xb8] sm:$0xff]
        %v338 = vld [vmem:[%s271 + $0xc0] sm:$0xff]
        %v339 = vld [vmem:[%s271 + $0xc8] sm:$0xff]
        %v340 = vld [vmem:[%s271 + $0xd0] sm:$0xff]
        %v341 = vld [vmem:[%s271 + $0xd8] sm:$0xff]
        %v342 = vld [vmem:[%s271 + $0xe0] sm:$0xff]
        %v343 = vld [vmem:[%s271 + $0xe8] sm:$0xff]
        %v344 = vld [vmem:[%s271 + $0xf0] sm:$0xff]
        %v345 = vld [vmem:[%s271 + $0xf8] sm:$0xff]
        %v346 = vld [vmem:[%s271 + $0x100] sm:$0xff]
        %v347 = vld [vmem:[%s271 + $0x108] sm:$0xff]
        %v348 = vld [vmem:[%s271 + $0x110] sm:$0xff]
        %v349 = vld [vmem:[%s271 + $0x118] sm:$0xff]
        %v350 = vld [vmem:[%s2] sm:$0xff]
        %352 = vset.pattern.permute.xlu0 0
        %353 = vperm.xlu0 %352, %v350
        %v354 = vpop.permute.xlu0 %353
        %v392 = vunpack.c.l.b16 %v314
        %v393 = vunpack.c.h.b16 %v314
        %v394 = vunpack.c.l.b16 %v315
        %v395 = vunpack.c.h.b16 %v315
        %v396 = vunpack.c.l.b16 %v316
        %v397 = vunpack.c.h.b16 %v316
        %v398 = vunpack.c.l.b16 %v317
        %v399 = vunpack.c.h.b16 %v317
        %v400 = vunpack.c.l.b16 %v318
        %v401 = vunpack.c.h.b16 %v318
        %v402 = vunpack.c.l.b16 %v319
        %v403 = vunpack.c.h.b16 %v319
        %v404 = vunpack.c.l.b16 %v320
        %v405 = vunpack.c.h.b16 %v320
        %v406 = vunpack.c.l.b16 %v321
        %v407 = vunpack.c.h.b16 %v321
        %v408 = vunpack.c.l.b16 %v322
        %v409 = vunpack.c.h.b16 %v322
        %v410 = vunpack.c.l.b16 %v323
        %v411 = vunpack.c.h.b16 %v323
        %v412 = vunpack.c.l.b16 %v324
        %v413 = vunpack.c.h.b16 %v324
        %v414 = vunpack.c.l.b16 %v325
        %v415 = vunpack.c.h.b16 %v325
        %v416 = vunpack.c.l.b16 %v326
        %v417 = vunpack.c.h.b16 %v326
        %v418 = vunpack.c.l.b16 %v327
        %v419 = vunpack.c.h.b16 %v327
        %v420 = vunpack.c.l.b16 %v328
        %v421 = vunpack.c.h.b16 %v328
        %v422 = vunpack.c.l.b16 %v329
        %v423 = vunpack.c.h.b16 %v329
        %v424 = vunpack.c.l.b16 %v330
        %v425 = vunpack.c.h.b16 %v330
        %v426 = vunpack.c.l.b16 %v331
        %v427 = vunpack.c.h.b16 %v331
        %v428 = vunpack.c.l.b16 %v332
        %v429 = vunpack.c.h.b16 %v332
        %v430 = vunpack.c.l.b16 %v333
        %v431 = vunpack.c.h.b16 %v333
        %v432 = vunpack.c.l.b16 %v334
        %v433 = vunpack.c.h.b16 %v334
        %v434 = vunpack.c.l.b16 %v335
        %v435 = vunpack.c.h.b16 %v335
        %v436 = vunpack.c.l.b16 %v336
        %v437 = vunpack.c.h.b16 %v336
        %v438 = vunpack.c.l.b16 %v337
        %v439 = vunpack.c.h.b16 %v337
        %v440 = vunpack.c.l.b16 %v338
        %v441 = vunpack.c.h.b16 %v338
        %v442 = vunpack.c.l.b16 %v339
        %v443 = vunpack.c.h.b16 %v339
        %v444 = vunpack.c.l.b16 %v340
        %v445 = vunpack.c.h.b16 %v340
        %v446 = vunpack.c.l.b16 %v341
        %v447 = vunpack.c.h.b16 %v341
        %v448 = vunpack.c.l.b16 %v342
        %v449 = vunpack.c.h.b16 %v342
        %v450 = vunpack.c.l.b16 %v343
        %v451 = vunpack.c.h.b16 %v343
        %v452 = vunpack.c.l.b16 %v344
        %v453 = vunpack.c.h.b16 %v344
        %v454 = vunpack.c.l.b16 %v345
        %v455 = vunpack.c.h.b16 %v345
        %v456 = vunpack.c.l.b16 %v346
        %v457 = vunpack.c.h.b16 %v346
        %v458 = vunpack.c.l.b16 %v347
        %v459 = vunpack.c.h.b16 %v347
        %v460 = vunpack.c.l.b16 %v348
        %v461 = vunpack.c.h.b16 %v348
        %v462 = vunpack.c.l.b16 %v349
        %v463 = vunpack.c.h.b16 %v349
        %v464 = vpack.c.b16 %v400, %v392
        %v465 = vpack.c.b16 %v401, %v393
        %v466 = vpack.c.b16 %v402, %v394
        %v467 = vpack.c.b16 %v403, %v395
        %v468 = vpack.c.b16 %v404, %v396
        %v469 = vpack.c.b16 %v405, %v397
        %v470 = vpack.c.b16 %v406, %v398
        %v471 = vpack.c.b16 %v407, %v399
        %v472 = vpack.c.b16 %v416, %v408
        %v473 = vpack.c.b16 %v417, %v409
        %v474 = vpack.c.b16 %v418, %v410
        %v475 = vpack.c.b16 %v419, %v411
        %v476 = vpack.c.b16 %v420, %v412
        %v477 = vpack.c.b16 %v421, %v413
        %v478 = vpack.c.b16 %v422, %v414
        %v479 = vpack.c.b16 %v423, %v415
        %v480 = vpack.c.b16 %v432, %v424
        %v481 = vpack.c.b16 %v433, %v425
        %v482 = vpack.c.b16 %v434, %v426
        %v483 = vpack.c.b16 %v435, %v427
        %v484 = vpack.c.b16 %v436, %v428
        %v485 = vpack.c.b16 %v437, %v429
        %v486 = vpack.c.b16 %v438, %v430
        %v487 = vpack.c.b16 %v439, %v431
        %v488 = vpack.c.b16 %v448, %v440
        %v489 = vpack.c.b16 %v449, %v441
        %v490 = vpack.c.b16 %v450, %v442
        %v491 = vpack.c.b16 %v451, %v443
        %v492 = vpack.c.b16 %v452, %v444
        %v493 = vpack.c.b16 %v453, %v445
        %v494 = vpack.c.b16 %v454, %v446
        %v495 = vpack.c.b16 %v455, %v447
        %v496 = vpack.c.b16 %v456, %v456
        %v497 = vpack.c.b16 %v457, %v457
        %v498 = vpack.c.b16 %v458, %v458
        %v499 = vpack.c.b16 %v459, %v459
        %v500 = vpack.c.b16 %v460, %v460
        %v501 = vpack.c.b16 %v461, %v461
        %v502 = vpack.c.b16 %v462, %v462
        %v503 = vpack.c.b16 %v463, %v463
        %vm536 = vcmask 588800
        %v538 = vsel %vm536, %v313, 0
        %vm540 = vcmask 1043456
        %v542 = vsel %vm540, %v496, 0
        %v545 = vsel %vm540, %v497, 0
        %v548 = vsel %vm540, %v498, 0
        %v551 = vsel %vm540, %v499, 0
        %v554 = vsel %vm540, %v500, 0
        %v557 = vsel %vm540, %v501, 0
        %v560 = vsel %vm540, %v502, 0
        %v563 = vsel %vm540, %v503, 0
        %565 = vmatprep.subr.bf16.mxu0 0
        %566 = vmatpush1.bf16.msra.mxu0 0
        %567 = vmatprep.subr.bf16.mxu0 0
        %568 = vmatpush1.bf16.msra.mxu0 0
        %569 = vmatprep.subr.bf16.mxu0 0
        %570 = vmatpush1.bf16.msra.mxu0 0
        %571 = vmatprep.subr.bf16.mxu0 %v545
        %572 = vmatpush1.bf16.msra.mxu0 %v542
        %573 = vmatprep.subr.bf16.mxu0 %v489
        %574 = vmatpush1.bf16.msra.mxu0 %v488
        %575 = vmatprep.subr.bf16.mxu0 %v481
        %576 = vmatpush1.bf16.msra.mxu0 %v480
        %577 = vmatprep.subr.bf16.mxu0 %v473
        %578 = vmatpush1.bf16.msra.mxu0 %v472
        %579 = vmatprep.subr.bf16.mxu0 %v465
        %580 = vmatpush1.bf16.msra.mxu0 %v464
        %581 = vmatprep.subr.bf16.mxu0 0
        %582 = vmatpush2.bf16.msra.mxu0 0
        %583 = vmatprep.subr.bf16.mxu0 0
        %584 = vmatpush2.bf16.msra.mxu0 0
        %585 = vmatprep.subr.bf16.mxu0 0
        %586 = vmatpush2.bf16.msra.mxu0 0
        %587 = vmatprep.subr.bf16.mxu0 0
        %588 = vmatpush2.bf16.msra.mxu0 0
        %589 = vmatprep.subr.bf16.mxu0 0
        %590 = vmatpush2.bf16.msra.mxu0 0
        %591 = vmatprep.subr.bf16.mxu0 0
        %592 = vmatpush2.bf16.msra.mxu0 0
        %593 = vmatprep.subr.bf16.mxu0 0
        %594 = vmatpush2.bf16.msra.mxu0 0
        %595 = vmatprep.subr.bf16.mxu0 0
        %596 = vmatpush2.bf16.msra.mxu0 0
        %597 = vmatprep.mubr.bf16.mxu0 0
        %598 = vmatmul.mubr.bf16.gmra.mxu0 %v538
        %v599 = vpop.f32.mrf.mxu0
        %v600 = vadd.f32 %v354, %v599
        %v601 = vpop.f32.mrf.mxu0
        %v602 = vadd.f32 %v354, %v601
        %v603 = vpop.f32.mrf.mxu0
        %v604 = vpop.f32.mrf.mxu0
        %605 = vdwg.mxu0
        %606 = vmatprep.subr.bf16.mxu0 0
        %607 = vmatpush1.bf16.msra.mxu0 0
        %608 = vmatprep.subr.bf16.mxu0 0
        %609 = vmatpush1.bf16.msra.mxu0 0
        %610 = vmatprep.subr.bf16.mxu0 0
        %611 = vmatpush1.bf16.msra.mxu0 0
        %612 = vmatprep.subr.bf16.mxu0 %v551
        %613 = vmatpush1.bf16.msra.mxu0 %v548
        %614 = vmatprep.subr.bf16.mxu0 %v491
        %615 = vmatpush1.bf16.msra.mxu0 %v490
        %616 = vmatprep.subr.bf16.mxu0 %v483
        %617 = vmatpush1.bf16.msra.mxu0 %v482
        %618 = vmatprep.subr.bf16.mxu0 %v475
        %619 = vmatpush1.bf16.msra.mxu0 %v474
        %620 = vmatprep.subr.bf16.mxu0 %v467
        %621 = vmatpush1.bf16.msra.mxu0 %v466
        %622 = vmatprep.subr.bf16.mxu0 0
        %623 = vmatpush2.bf16.msra.mxu0 0
        %624 = vmatprep.subr.bf16.mxu0 0
        %625 = vmatpush2.bf16.msra.mxu0 0
        %626 = vmatprep.subr.bf16.mxu0 0
        %627 = vmatpush2.bf16.msra.mxu0 0
        %628 = vmatprep.subr.bf16.mxu0 0
        %629 = vmatpush2.bf16.msra.mxu0 0
        %630 = vmatprep.subr.bf16.mxu0 0
        %631 = vmatpush2.bf16.msra.mxu0 0
        %632 = vmatprep.subr.bf16.mxu0 0
        %633 = vmatpush2.bf16.msra.mxu0 0
        %634 = vmatprep.subr.bf16.mxu0 0
        %635 = vmatpush2.bf16.msra.mxu0 0
        %636 = vmatprep.subr.bf16.mxu0 0
        %637 = vmatpush2.bf16.msra.mxu0 0
        %638 = vmatprep.mubr.bf16.mxu0 0
        %639 = vmatmul.mubr.bf16.gmra.mxu0 %v538
        %v640 = vpop.f32.mrf.mxu0
        %v641 = vadd.f32 %v354, %v640
        %v642 = vpop.f32.mrf.mxu0
        %v643 = vadd.f32 %v354, %v642
        %v644 = vpop.f32.mrf.mxu0
        %v645 = vpop.f32.mrf.mxu0
        %646 = vdwg.mxu0
        %647 = vmatprep.subr.bf16.mxu0 0
        %648 = vmatpush1.bf16.msra.mxu0 0
        %649 = vmatprep.subr.bf16.mxu0 0
        %650 = vmatpush1.bf16.msra.mxu0 0
        %651 = vmatprep.subr.bf16.mxu0 0
        %652 = vmatpush1.bf16.msra.mxu0 0
        %653 = vmatprep.subr.bf16.mxu0 %v557
        %654 = vmatpush1.bf16.msra.mxu0 %v554
        %655 = vmatprep.subr.bf16.mxu0 %v493
        %656 = vmatpush1.bf16.msra.mxu0 %v492
        %657 = vmatprep.subr.bf16.mxu0 %v485
        %658 = vmatpush1.bf16.msra.mxu0 %v484
        %659 = vmatprep.subr.bf16.mxu0 %v477
        %660 = vmatpush1.bf16.msra.mxu0 %v476
        %661 = vmatprep.subr.bf16.mxu0 %v469
        %662 = vmatpush1.bf16.msra.mxu0 %v468
        %663 = vmatprep.subr.bf16.mxu0 0
        %664 = vmatpush2.bf16.msra.mxu0 0
        %665 = vmatprep.subr.bf16.mxu0 0
        %666 = vmatpush2.bf16.msra.mxu0 0
        %667 = vmatprep.subr.bf16.mxu0 0
        %668 = vmatpush2.bf16.msra.mxu0 0
        %669 = vmatprep.subr.bf16.mxu0 0
        %670 = vmatpush2.bf16.msra.mxu0 0
        %671 = vmatprep.subr.bf16.mxu0 0
        %672 = vmatpush2.bf16.msra.mxu0 0
        %673 = vmatprep.subr.bf16.mxu0 0
        %674 = vmatpush2.bf16.msra.mxu0 0
        %675 = vmatprep.subr.bf16.mxu0 0
        %676 = vmatpush2.bf16.msra.mxu0 0
        %677 = vmatprep.subr.bf16.mxu0 0
        %678 = vmatpush2.bf16.msra.mxu0 0
        %679 = vmatprep.mubr.bf16.mxu0 0
        %680 = vmatmul.mubr.bf16.gmra.mxu0 %v538
        %v681 = vpop.f32.mrf.mxu0
        %v682 = vadd.f32 %v354, %v681
        %v683 = vpop.f32.mrf.mxu0
        %v684 = vadd.f32 %v354, %v683
        %v685 = vpop.f32.mrf.mxu0
        %v686 = vpop.f32.mrf.mxu0
        %687 = vdwg.mxu0
        %688 = vmatprep.subr.bf16.mxu0 0
        %689 = vmatpush1.bf16.msra.mxu0 0
        %690 = vmatprep.subr.bf16.mxu0 0
        %691 = vmatpush1.bf16.msra.mxu0 0
        %692 = vmatprep.subr.bf16.mxu0 0
        %693 = vmatpush1.bf16.msra.mxu0 0
        %694 = vmatprep.subr.bf16.mxu0 %v563
        %695 = vmatpush1.bf16.msra.mxu0 %v560
        %696 = vmatprep.subr.bf16.mxu0 %v495
        %697 = vmatpush1.bf16.msra.mxu0 %v494
        %698 = vmatprep.subr.bf16.mxu0 %v487
        %699 = vmatpush1.bf16.msra.mxu0 %v486
        %700 = vmatprep.subr.bf16.mxu0 %v479
        %701 = vmatpush1.bf16.msra.mxu0 %v478
        %702 = vmatprep.subr.bf16.mxu0 %v471
        %703 = vmatpush1.bf16.msra.mxu0 %v470
        %704 = vmatprep.subr.bf16.mxu0 0
        %705 = vmatpush2.bf16.msra.mxu0 0
        %706 = vmatprep.subr.bf16.mxu0 0
        %707 = vmatpush2.bf16.msra.mxu0 0
        %708 = vmatprep.subr.bf16.mxu0 0
        %709 = vmatpush2.bf16.msra.mxu0 0
        %710 = vmatprep.subr.bf16.mxu0 0
        %711 = vmatpush2.bf16.msra.mxu0 0
        %712 = vmatprep.subr.bf16.mxu0 0
        %713 = vmatpush2.bf16.msra.mxu0 0
        %714 = vmatprep.subr.bf16.mxu0 0
        %715 = vmatpush2.bf16.msra.mxu0 0
        %716 = vmatprep.subr.bf16.mxu0 0
        %717 = vmatpush2.bf16.msra.mxu0 0
        %718 = vmatprep.subr.bf16.mxu0 0
        %719 = vmatpush2.bf16.msra.mxu0 0
        %720 = vmatprep.mubr.bf16.mxu0 0
        %721 = vmatmul.mubr.bf16.gmra.mxu0 %v538
        %v722 = vpop.f32.mrf.mxu0
        %v723 = vadd.f32 %v354, %v722
        %v724 = vpop.f32.mrf.mxu0
        %v725 = vadd.f32 %v354, %v724
        %v726 = vpop.f32.mrf.mxu0
        %v727 = vpop.f32.mrf.mxu0
        %728 = vdwg.mxu0
        %v729 = vld [vmem:[%s304] sm:$0xff]
        %v730 = vld [vmem:[%s304 + $0x8] sm:$0xff]
        %v731 = vld [vmem:[%s304 + $0x10] sm:$0xff]
        %v732 = vld [vmem:[%s304 + $0x18] sm:$0xff]
        %v733 = vld [vmem:[%s304 + $0x20] sm:$0xff]
        %v734 = vld [vmem:[%s304 + $0x28] sm:$0xff]
        %v735 = vld [vmem:[%s304 + $0x30] sm:$0xff]
        %v736 = vld [vmem:[%s304 + $0x38] sm:$0xff]
        %v737 = vadd.f32 %v600, %v729
        %v738 = vadd.f32 %v602, %v730
        %v739 = vadd.f32 %v641, %v731
        %v740 = vadd.f32 %v643, %v732
        %v741 = vadd.f32 %v682, %v733
        %v742 = vadd.f32 %v684, %v734
        %v743 = vadd.f32 %v723, %v735
        %v744 = vadd.f32 %v725, %v736
        %v745 = vmax.f32 %v737, 0.0
        %v746 = vmax.f32 %v738, 0.0
        %v747 = vmax.f32 %v739, 0.0
        %v748 = vmax.f32 %v740, 0.0
        %v749 = vmax.f32 %v741, 0.0
        %v750 = vmax.f32 %v742, 0.0
        %v751 = vmax.f32 %v743, 0.0
        %v752 = vmax.f32 %v744, 0.0
        %753 = vst [vmem:[%s310] sm:$0xff] %v745
        %754 = vst [vmem:[%s310 + $0x8] sm:$0xff] %v746
        %755 = vst [vmem:[%s310 + $0x10] sm:$0xff] %v747
        %756 = vst [vmem:[%s310 + $0x18] sm:$0xff] %v748
        %757 = vst [vmem:[%s310 + $0x20] sm:$0xff] %v749
        %758 = vst [vmem:[%s310 + $0x28] sm:$0xff] %v750
        %759 = vst [vmem:[%s310 + $0x30] sm:$0xff] %v751
        %760 = vst [vmem:[%s310 + $0x38] sm:$0xff] %v752
        %s761 = smul.u32 8, %s15
        %p762 = scmp.lt.s32.totalorder %s761, 15
        %s763 = scalar_select %p762, %s761, 15
        %s764 = smul.addr %s763, 8
        %s765 = scalar_lea.vmem %s4, %s764
        // Predicated region
        $region60: #{ocm_resnet_forward.19} parent=54 // pred_check
          %p766 = pneg %p127
        $region61: #{ocm_resnet_forward.19} parent=54 // pred_check_branch
          %768 = sbr.rel (%p766) target = $region63
        $region62: #{ocm_resnet_forward.19} parent=54 // pred_region
          %s769 = smul.u32 8, %s15
        $region63: #{ocm_resnet_forward.19} parent=54 // pred_fallthru
          _
      $region55: #{ocm_resnet_forward.19} parent=5 // pred_fallthru
        _
      %p770 = scmp.le.s32.totalorder 2, %s10
      // Predicated region
      $region64: #{ocm_resnet_forward.19} parent=5 // pred_check
        %p771 = pneg %p770
      $region65: #{ocm_resnet_forward.19} parent=5 // pred_check_branch
        %773 = sbr.rel (%p771) target = $region67
      $region66: #{ocm_resnet_forward.19} parent=5 // pred_region
        %s774 = ssub.s32 %s10, 2
        // Predicated region
        $region68: #{ocm_resnet_forward.19} parent=66 // pred_check
          %p775 = pneg %p133
        $region69: #{ocm_resnet_forward.19} parent=66 // pred_check_branch
          %777 = sbr.rel (%p775) target = $region71
        $region70: #{ocm_resnet_forward.19} parent=66 // pred_region
          %s778 = smul.u32 8, %s16
          %p779 = scmp.lt.s32.totalorder %s778, 15
          %s780 = scalar_select %p779, %s778, 15
          %s781 = smul.addr %s780, 8
          %s782 = scalar_lea.vmem %s4, %s781
        $region71: #{ocm_resnet_forward.19} parent=66 // pred_fallthru
          _
      $region67: #{ocm_resnet_forward.19} parent=5 // pred_fallthru
        _
    $region6: #{ocm_resnet_forward.19} parent=1 // loop_footer
      %s14 = sadd.s32 1, %s10
    $region7: #{ocm_resnet_forward.19} parent=1 // loop_footer_branch
      %9 = sbr.rel target = $region3
    $region8: #{ocm_resnet_forward.19} parent=1 // loop_exit
      _

// kernel: ocm_resnet_forward.18
$region0: #{ocm_resnet_forward.18}
  #allocation0 [shape = 'u32[]', space=smem, size = 0x4, offset = 0x4, fixed_abs, tag = 'smem constant byte address 0x4 - core index']
  #allocation1 [shape = 'u32[144,128]{1,0:T(1,128)}', space=vmem, size = 0x12000, scoped, tag = 'internal scratch']
  %s0 = inlined_call_operand.vmem [shape: bf16[8,72], index: 0, kind: input, shape index: {}]
  %s1 = inlined_call_operand.vmem [shape: bf16[72,2048], index: 1, kind: input, shape index: {}]
  %s2 = inlined_call_operand.vmem [shape: f32[8,1], index: 2, kind: input, shape index: {}]
  %s3 = inlined_call_operand.vmem [shape: f32[8,2048], index: 3, kind: output, shape index: {}]
  %s4 = sld [smem:[#allocation0]]
  $region68: #{ocm_resnet_forward.18} parent=0
    _
  %s6 = ssub.s32 1, %s4
  %s7 = scalar_select 0, %s6, %s4
  $region1: #{ocm_resnet_forward.18} parent=0
    #allocation2 [shape = 'u8[294912]{0}', space=vmem, size = 0x48000, scoped, tag = 'input window, operand 1']
    loop: start=0, step=1, limit=4
    $region2: #{ocm_resnet_forward.18} parent=1 // loop_pre_header
      _
    $region3: #{ocm_resnet_forward.18} parent=1 // loop_header
      %s9 = sphi 0, %s13
      %p10 = scmp.ge.s32.totalorder %s9, 4
      %s17 = sphi 0, %s17
      %s19 = sphi 0, %s17
      %s20 = sphi 0, %s19
      %s34 = sphi 0, %s20
      %s40 = sphi 0, %s42
      %s43 = sphi 0, %s40
      %s44 = sphi 0, %s43
      %s60 = sphi 0, %s44
      %s64 = sphi 0, %s64
      %s66 = sphi 0, %s64
      %s67 = sphi 0, %s66
      %s81 = sphi 0, %s67
      %s87 = sphi 0, %s89
      %s90 = sphi 0, %s87
      %s91 = sphi 0, %s90
      %s107 = sphi 0, %s91
    $region4: #{ocm_resnet_forward.18} parent=1 // loop_header_branch
      %12 = sbr.rel (%p10) target = $region8
    $region5: #{ocm_resnet_forward.18} parent=1 // loop_body
      %s14 = ssub.s32 %s9, 1
      %s15 = ssub.s32 %s9, 2
      %s16 = sadd.s32 %s9, 1
      %s18 = sadd.s32 %s17, 1
      %p21 = scmp.eq.s32.totalorder %s9, 1
      %p22 = scmp.ne.s32.totalorder %s17, %s19
      %p23 = scmp.eq.s32.totalorder %s9, 0
      %p24 = por %p22, %p23
      %p25 = scmp.ne.s32.totalorder %s17, %s19
      %p26 = scmp.eq.s32.totalorder %s14, 1
      %p27 = por %p25, %p26
      %p28 = scmp.ne.s32.totalorder %s19, %s20
      %p29 = scmp.eq.s32.totalorder %s14, 0
      %p30 = por %p28, %p29
      %p31 = scmp.ne.s32.totalorder %s19, %s20
      %p32 = scmp.eq.s32.totalorder %s15, 1
      %p33 = por %p31, %p32
      %p35 = scmp.ne.s32.totalorder %s20, %s34
      %p36 = scmp.eq.s32.totalorder %s15, 0
      %p37 = por %p35, %p36
      %s38 = ssub.s32 %s9, %s16
      %p39 = scmp.eq.s32.totalorder %s38, 0
      %s41 = sadd.s32 %s40, 1
      %s42 = scalar_select %p39, %s40, %s41
      %p45 = pneg %p39
      %p46 = scmp.eq.s32.totalorder %s9, 1
      %p47 = por %p45, %p46
      %p48 = scmp.ne.s32.totalorder %s40, %s43
      %p49 = scmp.eq.s32.totalorder %s9, 0
      %p50 = por %p48, %p49
      %p51 = scmp.ne.s32.totalorder %s40, %s43
      %p52 = scmp.eq.s32.totalorder %s14, 1
      %p53 = por %p51, %p52
      %p54 = scmp.ne.s32.totalorder %s43, %s44
      %p55 = scmp.eq.s32.totalorder %s14, 0
      %p56 = por %p54, %p55
      %p57 = scmp.ne.s32.totalorder %s43, %s44
      %p58 = scmp.eq.s32.totalorder %s15, 1
      %p59 = por %p57, %p58
      %p61 = scmp.ne.s32.totalorder %s44, %s60
      %p62 = scmp.eq.s32.totalorder %s15, 0
      %p63 = por %p61, %p62
      %s65 = sadd.s32 %s64, 1
      %p68 = scmp.eq.s32.totalorder %s9, 1
      %p69 = scmp.ne.s32.totalorder %s64, %s66
      %p70 = scmp.eq.s32.totalorder %s9, 0
      %p71 = por %p69, %p70
      %p72 = scmp.ne.s32.totalorder %s64, %s66
      %p73 = scmp.eq.s32.totalorder %s14, 1
      %p74 = por %p72, %p73
      %p75 = scmp.ne.s32.totalorder %s66, %s67
      %p76 = scmp.eq.s32.totalorder %s14, 0
      %p77 = por %p75, %p76
      %p78 = scmp.ne.s32.totalorder %s66, %s67
      %p79 = scmp.eq.s32.totalorder %s15, 1
      %p80 = por %p78, %p79
      %p82 = scmp.ne.s32.totalorder %s67, %s81
      %p83 = scmp.eq.s32.totalorder %s15, 0
      %p84 = por %p82, %p83
      %s85 = ssub.s32 %s9, %s16
      %p86 = scmp.eq.s32.totalorder %s85, 0
      %s88 = sadd.s32 %s87, 1
      %s89 = scalar_select %p86, %s87, %s88
      %p92 = pneg %p86
      %p93 = scmp.eq.s32.totalorder %s9, 1
      %p94 = por %p92, %p93
      %p95 = scmp.ne.s32.totalorder %s87, %s90
      %p96 = scmp.eq.s32.totalorder %s9, 0
      %p97 = por %p95, %p96
      %p98 = scmp.ne.s32.totalorder %s87, %s90
      %p99 = scmp.eq.s32.totalorder %s14, 1
      %p100 = por %p98, %p99
      %p101 = scmp.ne.s32.totalorder %s90, %s91
      %p102 = scmp.eq.s32.totalorder %s14, 0
      %p103 = por %p101, %p102
      %p104 = scmp.ne.s32.totalorder %s90, %s91
      %p105 = scmp.eq.s32.totalorder %s15, 1
      %p106 = por %p104, %p105
      %p108 = scmp.ne.s32.totalorder %s91, %s107
      %p109 = scmp.eq.s32.totalorder %s15, 0
      %p110 = por %p108, %p109
      %p111 = scmp.le.s32.totalorder 1, %s9
      %p112 = scmp.lt.s32.totalorder %s9, 3
      %p113 = pnand %p111, %p112
      %p114 = pneg %p113
      // Predicated region
      $region9: #{ocm_resnet_forward.18} parent=5 // pred_check
        _
      $region10: #{ocm_resnet_forward.18} parent=5 // pred_check_branch
        %116 = sbr.rel (%p113) target = $region12
      $region11: #{ocm_resnet_forward.18} parent=5 // pred_region
        %s117 = ssub.s32 %s9, 1
        // Predicated region
        $region13: #{ocm_resnet_forward.18} parent=11 // pred_check
          %p118 = pneg %p30
        $region14: #{ocm_resnet_forward.18} parent=11 // pred_check_branch
          %120 = sbr.rel (%p118) target = $region16
        $region15: #{ocm_resnet_forward.18} parent=11 // pred_region
          _
        $region16: #{ocm_resnet_forward.18} parent=11 // pred_fallthru
          _
        // Predicated region
        $region17: #{ocm_resnet_forward.18} parent=11 // pred_check
          %p121 = pneg %p77
        $region18: #{ocm_resnet_forward.18} parent=11 // pred_check_branch
          %123 = sbr.rel (%p121) target = $region20
        $region19: #{ocm_resnet_forward.18} parent=11 // pred_region
          _
        $region20: #{ocm_resnet_forward.18} parent=11 // pred_fallthru
          _
      $region12: #{ocm_resnet_forward.18} parent=5 // pred_fallthru
        _
      %p124 = scmp.lt.s32.totalorder %s9, 2
      // Predicated region
      $region21: #{ocm_resnet_forward.18} parent=5 // pred_check
        %p125 = pneg %p124
      $region22: #{ocm_resnet_forward.18} parent=5 // pred_check_branch
        %127 = sbr.rel (%p125) target = $region24
      $region23: #{ocm_resnet_forward.18} parent=5 // pred_region
        // Predicated region
        $region25: #{ocm_resnet_forward.18} parent=23 // pred_check
          %p128 = pneg %p50
        $region26: #{ocm_resnet_forward.18} parent=23 // pred_check_branch
          %130 = sbr.rel (%p128) target = $region28
        $region27: #{ocm_resnet_forward.18} parent=23 // pred_region
          %s131 = sand.u32 %s40, 1
          %s132 = sand.u32 %s40, 1
          %s133 = smul.addr %s132, 288
          %s134 = scalar_lea.vmem [#allocation2], %s133
          %s135 = smul.u32 8, %s9
          %s136 = smul.addr %s135, 4
          %s137 = scalar_lea.vmem %s1, %s136
          // Predicated region
          $region29: #{ocm_resnet_forward.18} parent=27 // pred_check
            _
          $region30: #{ocm_resnet_forward.18} parent=27 // pred_check_branch
            %139 = sbr.rel (0) target = $region32
          $region31: #{ocm_resnet_forward.18} parent=27 // pred_region
            // Predicated region
            $region33: #{ocm_resnet_forward.18} parent=31 // pred_check
              _
            $region34: #{ocm_resnet_forward.18} parent=31 // pred_check_branch
              %141 = sbr.rel (0) target = $region36
            $region35: #{ocm_resnet_forward.18} parent=31 // pred_region
              loop: start=0, step=1, limit=1
              $region37: #{ocm_resnet_forward.18} parent=35 // loop_pre_header
                _
              $region38: #{ocm_resnet_forward.18} parent=35 // loop_header
                %s143 = sphi 0, %s147
                %p144 = scmp.ge.s32.totalorder %s143, 1
                %s148 = sphi %s137, %s137
                %s149 = sphi %s134, %s134
              $region39: #{ocm_resnet_forward.18} parent=35 // loop_header_branch
                %146 = sbr.rel (%p144) target = $region43
              $region40: #{ocm_resnet_forward.18} parent=35 // loop_body
                %v150 = vld [vmem:[%s148] sm:$0xff]
                %151 = vst [vmem:[%s149] sm:$0xff] %v150
                %v152 = vld [vmem:[%s148 + $0x8] sm:$0xff]
                %153 = vst [vmem:[%s149 + $0x8] sm:$0xff] %v152
                %v154 = vld [vmem:[%s148 + $0x10] sm:$0xff]
                %155 = vst [vmem:[%s149 + $0x10] sm:$0xff] %v154
                %v156 = vld [vmem:[%s148 + $0x18] sm:$0xff]
                %157 = vst [vmem:[%s149 + $0x18] sm:$0xff] %v156
                %v158 = vld [vmem:[%s148 + $0x40] sm:$0xff]
                %159 = vst [vmem:[%s149 + $0x20] sm:$0xff] %v158
                %v160 = vld [vmem:[%s148 + $0x48] sm:$0xff]
                %161 = vst [vmem:[%s149 + $0x28] sm:$0xff] %v160
                %v162 = vld [vmem:[%s148 + $0x50] sm:$0xff]
                %163 = vst [vmem:[%s149 + $0x30] sm:$0xff] %v162
                %v164 = vld [vmem:[%s148 + $0x58] sm:$0xff]
                %165 = vst [vmem:[%s149 + $0x38] sm:$0xff] %v164
                %v166 = vld [vmem:[%s148 + $0x80] sm:$0xff]
                %167 = vst [vmem:[%s149 + $0x40] sm:$0xff] %v166
                %v168 = vld [vmem:[%s148 + $0x88] sm:$0xff]
                %169 = vst [vmem:[%s149 + $0x48] sm:$0xff] %v168
                %v170 = vld [vmem:[%s148 + $0x90] sm:$0xff]
                %171 = vst [vmem:[%s149 + $0x50] sm:$0xff] %v170
                %v172 = vld [vmem:[%s148 + $0x98] sm:$0xff]
                %173 = vst [vmem:[%s149 + $0x58] sm:$0xff] %v172
                %v174 = vld [vmem:[%s148 + $0xc0] sm:$0xff]
                %175 = vst [vmem:[%s149 + $0x60] sm:$0xff] %v174
                %v176 = vld [vmem:[%s148 + $0xc8] sm:$0xff]
                %177 = vst [vmem:[%s149 + $0x68] sm:$0xff] %v176
                %v178 = vld [vmem:[%s148 + $0xd0] sm:$0xff]
                %179 = vst [vmem:[%s149 + $0x70] sm:$0xff] %v178
                %v180 = vld [vmem:[%s148 + $0xd8] sm:$0xff]
                %181 = vst [vmem:[%s149 + $0x78] sm:$0xff] %v180
                %v182 = vld [vmem:[%s148 + $0x100] sm:$0xff]
                %183 = vst [vmem:[%s149 + $0x80] sm:$0xff] %v182
                %v184 = vld [vmem:[%s148 + $0x108] sm:$0xff]
                %185 = vst [vmem:[%s149 + $0x88] sm:$0xff] %v184
                %v186 = vld [vmem:[%s148 + $0x110] sm:$0xff]
                %187 = vst [vmem:[%s149 + $0x90] sm:$0xff] %v186
                %v188 = vld [vmem:[%s148 + $0x118] sm:$0xff]
                %189 = vst [vmem:[%s149 + $0x98] sm:$0xff] %v188
                %v190 = vld [vmem:[%s148 + $0x140] sm:$0xff]
                %191 = vst [vmem:[%s149 + $0xa0] sm:$0xff] %v190
                %v192 = vld [vmem:[%s148 + $0x148] sm:$0xff]
                %193 = vst [vmem:[%s149 + $0xa8] sm:$0xff] %v192
                %v194 = vld [vmem:[%s148 + $0x150] sm:$0xff]
                %195 = vst [vmem:[%s149 + $0xb0] sm:$0xff] %v194
                %v196 = vld [vmem:[%s148 + $0x158] sm:$0xff]
                %197 = vst [vmem:[%s149 + $0xb8] sm:$0xff] %v196
                %v198 = vld [vmem:[%s148 + $0x180] sm:$0xff]
                %199 = vst [vmem:[%s149 + $0xc0] sm:$0xff] %v198
                %v200 = vld [vmem:[%s148 + $0x188] sm:$0xff]
                %201 = vst [vmem:[%s149 + $0xc8] sm:$0xff] %v200
                %v202 = vld [vmem:[%s148 + $0x190] sm:$0xff]
                %203 = vst [vmem:[%s149 + $0xd0] sm:$0xff] %v202
                %v204 = vld [vmem:[%s148 + $0x198] sm:$0xff]
                %205 = vst [vmem:[%s149 + $0xd8] sm:$0xff] %v204
                %v206 = vld [vmem:[%s148 + $0x1c0] sm:$0xff]
                %207 = vst [vmem:[%s149 + $0xe0] sm:$0xff] %v206
                %v208 = vld [vmem:[%s148 + $0x1c8] sm:$0xff]
                %209 = vst [vmem:[%s149 + $0xe8] sm:$0xff] %v208
                %v210 = vld [vmem:[%s148 + $0x1d0] sm:$0xff]
                %211 = vst [vmem:[%s149 + $0xf0] sm:$0xff] %v210
                %v212 = vld [vmem:[%s148 + $0x1d8] sm:$0xff]
                %213 = vst [vmem:[%s149 + $0xf8] sm:$0xff] %v212
                %v214 = vld [vmem:[%s148 + $0x200] sm:$0xff]
                %215 = vst [vmem:[%s149 + $0x100] sm:$0xff] %v214
                %v216 = vld [vmem:[%s148 + $0x208] sm:$0xff]
                %217 = vst [vmem:[%s149 + $0x108] sm:$0xff] %v216
                %v218 = vld [vmem:[%s148 + $0x210] sm:$0xff]
                %219 = vst [vmem:[%s149 + $0x110] sm:$0xff] %v218
                %v220 = vld [vmem:[%s148 + $0x218] sm:$0xff]
                %221 = vst [vmem:[%s149 + $0x118] sm:$0xff] %v220
              $region41: #{ocm_resnet_forward.18} parent=35 // loop_footer
                %s147 = sadd.s32 1, %s143
              $region42: #{ocm_resnet_forward.18} parent=35 // loop_footer_branch
                %142 = sbr.rel target = $region38
              $region43: #{ocm_resnet_forward.18} parent=35 // loop_exit
                _
            $region36: #{ocm_resnet_forward.18} parent=31 // pred_fallthru
              _
            // Predicated region
            $region44: #{ocm_resnet_forward.18} parent=31 // pred_check
              _
            $region45: #{ocm_resnet_forward.18} parent=31 // pred_check_branch
              %223 = sbr.rel target = $region47
            $region46: #{ocm_resnet_forward.18} parent=31 // pred_region
              _
            $region47: #{ocm_resnet_forward.18} parent=31 // pred_fallthru
              _
          $region32: #{ocm_resnet_forward.18} parent=27 // pred_fallthru
            _
          %224 = vnop
        $region28: #{ocm_resnet_forward.18} parent=23 // pred_fallthru
          _
      $region24: #{ocm_resnet_forward.18} parent=5 // pred_fallthru
        _
      %p225 = scmp.le.s32.totalorder 1, %s9
      %p226 = scmp.lt.s32.totalorder %s9, 3
      %p227 = pnand %p225, %p226
      %p228 = pneg %p227
      // Predicated region
      $region48: #{ocm_resnet_forward.18} parent=5 // pred_check
        _
      $region49: #{ocm_resnet_forward.18} parent=5 // pred_check_branch
        %230 = sbr.rel (%p227) target = $region51
      $region50: #{ocm_resnet_forward.18} parent=5 // pred_region
        %s231 = ssub.s32 %s9, 1
        %s232 = sand.u32 %s43, 1
        %s233 = sand.u32 %s43, 1
        %s234 = smul.addr %s233, 288
        %s235 = scalar_lea.vmem [#allocation2], %s234
        // Predicated region
        $region52: #{ocm_resnet_forward.18} parent=50 // pred_check
          %p236 = pneg %p56
        $region53: #{ocm_resnet_forward.18} parent=50 // pred_check_branch
          %238 = sbr.rel (%p236) target = $region55
        $region54: #{ocm_resnet_forward.18} parent=50 // pred_region
          _
        $region55: #{ocm_resnet_forward.18} parent=50 // pred_fallthru
          _
        %p239 = pneg %p30
        %p240 = pneg %p27
        %s241 = sand.u32 %s43, 1
        %s242 = sand.u32 %s43, 1
        %s243 = smul.addr %s242, 288
        %s244 = scalar_lea.vmem [#allocation2], %s243
        %p245 = pneg %p56
        %p246 = pneg %p53
        %p247 = pneg %p77
        %p248 = pneg %p74
        %p249 = pneg %p103
        %p250 = pneg %p100
        %s251 = smul.u32 8, %s14
        %p252 = scmp.lt.s32.totalorder %s251, 15
        %s253 = scalar_select %p252, %s251, 15
        %s254 = smul.addr %s253, 8
        %s255 = scalar_lea.vmem %s3, %s254
        %s256 = smul.u32 8, %s14
        %s257 = smul.u32 8, %s14
        %p258 = scmp.lt.s32.totalorder %s257, 15
        %s259 = scalar_select %p258, %s257, 15
        %s260 = smul.addr %s259, 8
        %s261 = scalar_lea.vmem %s3, %s260
        %s262 = smul.u32 8, %s14
        %v264 = vld [vmem:[%s0] sm:$0xf]
        %v265 = vld [vmem:[%s235] sm:$0xff]
        %v266 = vld [vmem:[%s235 + $0x8] sm:$0xff]
        %v267 = vld [vmem:[%s235 + $0x10] sm:$0xff]
        %v268 = vld [vmem:[%s235 + $0x18] sm:$0xff]
        %v269 = vld [vmem:[%s235 + $0x20] sm:$0xff]
        %v270 = vld [vmem:[%s235 + $0x28] sm:$0xff]
        %v271 = vld [vmem:[%s235 + $0x30] sm:$0xff]
        %v272 = vld [vmem:[%s235 + $0x38] sm:$0xff]
        %v273 = vld [vmem:[%s235 + $0x40] sm:$0xff]
        %v274 = vld [vmem:[%s235 + $0x48] sm:$0xff]
        %v275 = vld [vmem:[%s235 + $0x50] sm:$0xff]
        %v276 = vld [vmem:[%s235 + $0x58] sm:$0xff]
        %v277 = vld [vmem:[%s235 + $0x60] sm:$0xff]
        %v278 = vld [vmem:[%s235 + $0x68] sm:$0xff]
        %v279 = vld [vmem:[%s235 + $0x70] sm:$0xff]
        %v280 = vld [vmem:[%s235 + $0x78] sm:$0xff]
        %v281 = vld [vmem:[%s235 + $0x80] sm:$0xff]
        %v282 = vld [vmem:[%s235 + $0x88] sm:$0xff]
        %v283 = vld [vmem:[%s235 + $0x90] sm:$0xff]
        %v284 = vld [vmem:[%s235 + $0x98] sm:$0xff]
        %v285 = vld [vmem:[%s235 + $0xa0] sm:$0xff]
        %v286 = vld [vmem:[%s235 + $0xa8] sm:$0xff]
        %v287 = vld [vmem:[%s235 + $0xb0] sm:$0xff]
        %v288 = vld [vmem:[%s235 + $0xb8] sm:$0xff]
        %v289 = vld [vmem:[%s235 + $0xc0] sm:$0xff]
        %v290 = vld [vmem:[%s235 + $0xc8] sm:$0xff]
        %v291 = vld [vmem:[%s235 + $0xd0] sm:$0xff]
        %v292 = vld [vmem:[%s235 + $0xd8] sm:$0xff]
        %v293 = vld [vmem:[%s235 + $0xe0] sm:$0xff]
        %v294 = vld [vmem:[%s235 + $0xe8] sm:$0xff]
        %v295 = vld [vmem:[%s235 + $0xf0] sm:$0xff]
        %v296 = vld [vmem:[%s235 + $0xf8] sm:$0xff]
        %v297 = vld [vmem:[%s235 + $0x100] sm:$0xff]
        %v298 = vld [vmem:[%s235 + $0x108] sm:$0xff]
        %v299 = vld [vmem:[%s235 + $0x110] sm:$0xff]
        %v300 = vld [vmem:[%s235 + $0x118] sm:$0xff]
        %v301 = vld [vmem:[%s2] sm:$0xff]
        %303 = vset.pattern.permute.xlu0 0
        %304 = vperm.xlu0 %303, %v301
        %v305 = vpop.permute.xlu0 %304
        %v343 = vunpack.c.l.b16 %v265
        %v344 = vunpack.c.h.b16 %v265
        %v345 = vunpack.c.l.b16 %v266
        %v346 = vunpack.c.h.b16 %v266
        %v347 = vunpack.c.l.b16 %v267
        %v348 = vunpack.c.h.b16 %v267
        %v349 = vunpack.c.l.b16 %v268
        %v350 = vunpack.c.h.b16 %v268
        %v351 = vunpack.c.l.b16 %v269
        %v352 = vunpack.c.h.b16 %v269
        %v353 = vunpack.c.l.b16 %v270
        %v354 = vunpack.c.h.b16 %v270
        %v355 = vunpack.c.l.b16 %v271
        %v356 = vunpack.c.h.b16 %v271
        %v357 = vunpack.c.l.b16 %v272
        %v358 = vunpack.c.h.b16 %v272
        %v359 = vunpack.c.l.b16 %v273
        %v360 = vunpack.c.h.b16 %v273
        %v361 = vunpack.c.l.b16 %v274
        %v362 = vunpack.c.h.b16 %v274
        %v363 = vunpack.c.l.b16 %v275
        %v364 = vunpack.c.h.b16 %v275
        %v365 = vunpack.c.l.b16 %v276
        %v366 = vunpack.c.h.b16 %v276
        %v367 = vunpack.c.l.b16 %v277
        %v368 = vunpack.c.h.b16 %v277
        %v369 = vunpack.c.l.b16 %v278
        %v370 = vunpack.c.h.b16 %v278
        %v371 = vunpack.c.l.b16 %v279
        %v372 = vunpack.c.h.b16 %v279
        %v373 = vunpack.c.l.b16 %v280
        %v374 = vunpack.c.h.b16 %v280
        %v375 = vunpack.c.l.b16 %v281
        %v376 = vunpack.c.h.b16 %v281
        %v377 = vunpack.c.l.b16 %v282
        %v378 = vunpack.c.h.b16 %v282
        %v379 = vunpack.c.l.b16 %v283
        %v380 = vunpack.c.h.b16 %v283
        %v381 = vunpack.c.l.b16 %v284
        %v382 = vunpack.c.h.b16 %v284
        %v383 = vunpack.c.l.b16 %v285
        %v384 = vunpack.c.h.b16 %v285
        %v385 = vunpack.c.l.b16 %v286
        %v386 = vunpack.c.h.b16 %v286
        %v387 = vunpack.c.l.b16 %v287
        %v388 = vunpack.c.h.b16 %v287
        %v389 = vunpack.c.l.b16 %v288
        %v390 = vunpack.c.h.b16 %v288
        %v391 = vunpack.c.l.b16 %v289
        %v392 = vunpack.c.h.b16 %v289
        %v393 = vunpack.c.l.b16 %v290
        %v394 = vunpack.c.h.b16 %v290
        %v395 = vunpack.c.l.b16 %v291
        %v396 = vunpack.c.h.b16 %v291
        %v397 = vunpack.c.l.b16 %v292
        %v398 = vunpack.c.h.b16 %v292
        %v399 = vunpack.c.l.b16 %v293
        %v400 = vunpack.c.h.b16 %v293
        %v401 = vunpack.c.l.b16 %v294
        %v402 = vunpack.c.h.b16 %v294
        %v403 = vunpack.c.l.b16 %v295
        %v404 = vunpack.c.h.b16 %v295
        %v405 = vunpack.c.l.b16 %v296
        %v406 = vunpack.c.h.b16 %v296
        %v407 = vunpack.c.l.b16 %v297
        %v408 = vunpack.c.h.b16 %v297
        %v409 = vunpack.c.l.b16 %v298
        %v410 = vunpack.c.h.b16 %v298
        %v411 = vunpack.c.l.b16 %v299
        %v412 = vunpack.c.h.b16 %v299
        %v413 = vunpack.c.l.b16 %v300
        %v414 = vunpack.c.h.b16 %v300
        %v415 = vpack.c.b16 %v351, %v343
        %v416 = vpack.c.b16 %v352, %v344
        %v417 = vpack.c.b16 %v353, %v345
        %v418 = vpack.c.b16 %v354, %v346
        %v419 = vpack.c.b16 %v355, %v347
        %v420 = vpack.c.b16 %v356, %v348
        %v421 = vpack.c.b16 %v357, %v349
        %v422 = vpack.c.b16 %v358, %v350
        %v423 = vpack.c.b16 %v367, %v359
        %v424 = vpack.c.b16 %v368, %v360
        %v425 = vpack.c.b16 %v369, %v361
        %v426 = vpack.c.b16 %v370, %v362
        %v427 = vpack.c.b16 %v371, %v363
        %v428 = vpack.c.b16 %v372, %v364
        %v429 = vpack.c.b16 %v373, %v365
        %v430 = vpack.c.b16 %v374, %v366
        %v431 = vpack.c.b16 %v383, %v375
        %v432 = vpack.c.b16 %v384, %v376
        %v433 = vpack.c.b16 %v385, %v377
        %v434 = vpack.c.b16 %v386, %v378
        %v435 = vpack.c.b16 %v387, %v379
        %v436 = vpack.c.b16 %v388, %v380
        %v437 = vpack.c.b16 %v389, %v381
        %v438 = vpack.c.b16 %v390, %v382
        %v439 = vpack.c.b16 %v399, %v391
        %v440 = vpack.c.b16 %v400, %v392
        %v441 = vpack.c.b16 %v401, %v393
        %v442 = vpack.c.b16 %v402, %v394
        %v443 = vpack.c.b16 %v403, %v395
        %v444 = vpack.c.b16 %v404, %v396
        %v445 = vpack.c.b16 %v405, %v397
        %v446 = vpack.c.b16 %v406, %v398
        %v447 = vpack.c.b16 %v407, %v407
        %v448 = vpack.c.b16 %v408, %v408
        %v449 = vpack.c.b16 %v409, %v409
        %v450 = vpack.c.b16 %v410, %v410
        %v451 = vpack.c.b16 %v411, %v411
        %v452 = vpack.c.b16 %v412, %v412
        %v453 = vpack.c.b16 %v413, %v413
        %v454 = vpack.c.b16 %v414, %v414
        %vm487 = vcmask 588800
        %v489 = vsel %vm487, %v264, 0
        %vm491 = vcmask 1043456
        %v493 = vsel %vm491, %v447, 0
        %v496 = vsel %vm491, %v448, 0
        %v499 = vsel %vm491, %v449, 0
        %v502 = vsel %vm491, %v450, 0
        %v505 = vsel %vm491, %v451, 0
        %v508 = vsel %vm491, %v452, 0
        %v511 = vsel %vm491, %v453, 0
        %v514 = vsel %vm491, %v454, 0
        %516 = vmatprep.subr.bf16.mxu0 0
        %517 = vmatpush1.bf16.msra.mxu0 0
        %518 = vmatprep.subr.bf16.mxu0 0
        %519 = vmatpush1.bf16.msra.mxu0 0
        %520 = vmatprep.subr.bf16.mxu0 0
        %521 = vmatpush1.bf16.msra.mxu0 0
        %522 = vmatprep.subr.bf16.mxu0 %v496
        %523 = vmatpush1.bf16.msra.mxu0 %v493
        %524 = vmatprep.subr.bf16.mxu0 %v440
        %525 = vmatpush1.bf16.msra.mxu0 %v439
        %526 = vmatprep.subr.bf16.mxu0 %v432
        %527 = vmatpush1.bf16.msra.mxu0 %v431
        %528 = vmatprep.subr.bf16.mxu0 %v424
        %529 = vmatpush1.bf16.msra.mxu0 %v423
        %530 = vmatprep.subr.bf16.mxu0 %v416
        %531 = vmatpush1.bf16.msra.mxu0 %v415
        %532 = vmatprep.subr.bf16.mxu0 0
        %533 = vmatpush2.bf16.msra.mxu0 0
        %534 = vmatprep.subr.bf16.mxu0 0
        %535 = vmatpush2.bf16.msra.mxu0 0
        %536 = vmatprep.subr.bf16.mxu0 0
        %537 = vmatpush2.bf16.msra.mxu0 0
        %538 = vmatprep.subr.bf16.mxu0 0
        %539 = vmatpush2.bf16.msra.mxu0 0
        %540 = vmatprep.subr.bf16.mxu0 0
        %541 = vmatpush2.bf16.msra.mxu0 0
        %542 = vmatprep.subr.bf16.mxu0 0
        %543 = vmatpush2.bf16.msra.mxu0 0
        %544 = vmatprep.subr.bf16.mxu0 0
        %545 = vmatpush2.bf16.msra.mxu0 0
        %546 = vmatprep.subr.bf16.mxu0 0
        %547 = vmatpush2.bf16.msra.mxu0 0
        %548 = vmatprep.mubr.bf16.mxu0 0
        %549 = vmatmul.mubr.bf16.gmra.mxu0 %v489
        %v550 = vpop.f32.mrf.mxu0
        %v551 = vadd.f32 %v305, %v550
        %v552 = vpop.f32.mrf.mxu0
        %v553 = vadd.f32 %v305, %v552
        %v554 = vpop.f32.mrf.mxu0
        %v555 = vpop.f32.mrf.mxu0
        %556 = vdwg.mxu0
        %557 = vmatprep.subr.bf16.mxu0 0
        %558 = vmatpush1.bf16.msra.mxu0 0
        %559 = vmatprep.subr.bf16.mxu0 0
        %560 = vmatpush1.bf16.msra.mxu0 0
        %561 = vmatprep.subr.bf16.mxu0 0
        %562 = vmatpush1.bf16.msra.mxu0 0
        %563 = vmatprep.subr.bf16.mxu0 %v502
        %564 = vmatpush1.bf16.msra.mxu0 %v499
        %565 = vmatprep.subr.bf16.mxu0 %v442
        %566 = vmatpush1.bf16.msra.mxu0 %v441
        %567 = vmatprep.subr.bf16.mxu0 %v434
        %568 = vmatpush1.bf16.msra.mxu0 %v433
        %569 = vmatprep.subr.bf16.mxu0 %v426
        %570 = vmatpush1.bf16.msra.mxu0 %v425
        %571 = vmatprep.subr.bf16.mxu0 %v418
        %572 = vmatpush1.bf16.msra.mxu0 %v417
        %573 = vmatprep.subr.bf16.mxu0 0
        %574 = vmatpush2.bf16.msra.mxu0 0
        %575 = vmatprep.subr.bf16.mxu0 0
        %576 = vmatpush2.bf16.msra.mxu0 0
        %577 = vmatprep.subr.bf16.mxu0 0
        %578 = vmatpush2.bf16.msra.mxu0 0
        %579 = vmatprep.subr.bf16.mxu0 0
        %580 = vmatpush2.bf16.msra.mxu0 0
        %581 = vmatprep.subr.bf16.mxu0 0
        %582 = vmatpush2.bf16.msra.mxu0 0
        %583 = vmatprep.subr.bf16.mxu0 0
        %584 = vmatpush2.bf16.msra.mxu0 0
        %585 = vmatprep.subr.bf16.mxu0 0
        %586 = vmatpush2.bf16.msra.mxu0 0
        %587 = vmatprep.subr.bf16.mxu0 0
        %588 = vmatpush2.bf16.msra.mxu0 0
        %589 = vmatprep.mubr.bf16.mxu0 0
        %590 = vmatmul.mubr.bf16.gmra.mxu0 %v489
        %v591 = vpop.f32.mrf.mxu0
        %v592 = vadd.f32 %v305, %v591
        %v593 = vpop.f32.mrf.mxu0
        %v594 = vadd.f32 %v305, %v593
        %v595 = vpop.f32.mrf.mxu0
        %v596 = vpop.f32.mrf.mxu0
        %597 = vdwg.mxu0
        %598 = vmatprep.subr.bf16.mxu0 0
        %599 = vmatpush1.bf16.msra.mxu0 0
        %600 = vmatprep.subr.bf16.mxu0 0
        %601 = vmatpush1.bf16.msra.mxu0 0
        %602 = vmatprep.subr.bf16.mxu0 0
        %603 = vmatpush1.bf16.msra.mxu0 0
        %604 = vmatprep.subr.bf16.mxu0 %v508
        %605 = vmatpush1.bf16.msra.mxu0 %v505
        %606 = vmatprep.subr.bf16.mxu0 %v444
        %607 = vmatpush1.bf16.msra.mxu0 %v443
        %608 = vmatprep.subr.bf16.mxu0 %v436
        %609 = vmatpush1.bf16.msra.mxu0 %v435
        %610 = vmatprep.subr.bf16.mxu0 %v428
        %611 = vmatpush1.bf16.msra.mxu0 %v427
        %612 = vmatprep.subr.bf16.mxu0 %v420
        %613 = vmatpush1.bf16.msra.mxu0 %v419
        %614 = vmatprep.subr.bf16.mxu0 0
        %615 = vmatpush2.bf16.msra.mxu0 0
        %616 = vmatprep.subr.bf16.mxu0 0
        %617 = vmatpush2.bf16.msra.mxu0 0
        %618 = vmatprep.subr.bf16.mxu0 0
        %619 = vmatpush2.bf16.msra.mxu0 0
        %620 = vmatprep.subr.bf16.mxu0 0
        %621 = vmatpush2.bf16.msra.mxu0 0
        %622 = vmatprep.subr.bf16.mxu0 0
        %623 = vmatpush2.bf16.msra.mxu0 0
        %624 = vmatprep.subr.bf16.mxu0 0
        %625 = vmatpush2.bf16.msra.mxu0 0
        %626 = vmatprep.subr.bf16.mxu0 0
        %627 = vmatpush2.bf16.msra.mxu0 0
        %628 = vmatprep.subr.bf16.mxu0 0
        %629 = vmatpush2.bf16.msra.mxu0 0
        %630 = vmatprep.mubr.bf16.mxu0 0
        %631 = vmatmul.mubr.bf16.gmra.mxu0 %v489
        %v632 = vpop.f32.mrf.mxu0
        %v633 = vadd.f32 %v305, %v632
        %v634 = vpop.f32.mrf.mxu0
        %v635 = vadd.f32 %v305, %v634
        %v636 = vpop.f32.mrf.mxu0
        %v637 = vpop.f32.mrf.mxu0
        %638 = vdwg.mxu0
        %639 = vmatprep.subr.bf16.mxu0 0
        %640 = vmatpush1.bf16.msra.mxu0 0
        %641 = vmatprep.subr.bf16.mxu0 0
        %642 = vmatpush1.bf16.msra.mxu0 0
        %643 = vmatprep.subr.bf16.mxu0 0
        %644 = vmatpush1.bf16.msra.mxu0 0
        %645 = vmatprep.subr.bf16.mxu0 %v514
        %646 = vmatpush1.bf16.msra.mxu0 %v511
        %647 = vmatprep.subr.bf16.mxu0 %v446
        %648 = vmatpush1.bf16.msra.mxu0 %v445
        %649 = vmatprep.subr.bf16.mxu0 %v438
        %650 = vmatpush1.bf16.msra.mxu0 %v437
        %651 = vmatprep.subr.bf16.mxu0 %v430
        %652 = vmatpush1.bf16.msra.mxu0 %v429
        %653 = vmatprep.subr.bf16.mxu0 %v422
        %654 = vmatpush1.bf16.msra.mxu0 %v421
        %655 = vmatprep.subr.bf16.mxu0 0
        %656 = vmatpush2.bf16.msra.mxu0 0
        %657 = vmatprep.subr.bf16.mxu0 0
        %658 = vmatpush2.bf16.msra.mxu0 0
        %659 = vmatprep.subr.bf16.mxu0 0
        %660 = vmatpush2.bf16.msra.mxu0 0
        %661 = vmatprep.subr.bf16.mxu0 0
        %662 = vmatpush2.bf16.msra.mxu0 0
        %663 = vmatprep.subr.bf16.mxu0 0
        %664 = vmatpush2.bf16.msra.mxu0 0
        %665 = vmatprep.subr.bf16.mxu0 0
        %666 = vmatpush2.bf16.msra.mxu0 0
        %667 = vmatprep.subr.bf16.mxu0 0
        %668 = vmatpush2.bf16.msra.mxu0 0
        %669 = vmatprep.subr.bf16.mxu0 0
        %670 = vmatpush2.bf16.msra.mxu0 0
        %671 = vmatprep.mubr.bf16.mxu0 0
        %672 = vmatmul.mubr.bf16.gmra.mxu0 %v489
        %v673 = vpop.f32.mrf.mxu0
        %v674 = vadd.f32 %v305, %v673
        %v675 = vpop.f32.mrf.mxu0
        %v676 = vadd.f32 %v305, %v675
        %v677 = vpop.f32.mrf.mxu0
        %v678 = vpop.f32.mrf.mxu0
        %679 = vdwg.mxu0
        %v680 = vmax.f32 %v551, 0.0
        %v681 = vmax.f32 %v553, 0.0
        %v682 = vmax.f32 %v592, 0.0
        %v683 = vmax.f32 %v594, 0.0
        %v684 = vmax.f32 %v633, 0.0
        %v685 = vmax.f32 %v635, 0.0
        %v686 = vmax.f32 %v674, 0.0
        %v687 = vmax.f32 %v676, 0.0
        %688 = vst [vmem:[%s261] sm:$0xff] %v680
        %689 = vst [vmem:[%s261 + $0x8] sm:$0xff] %v681
        %690 = vst [vmem:[%s261 + $0x10] sm:$0xff] %v682
        %691 = vst [vmem:[%s261 + $0x18] sm:$0xff] %v683
        %692 = vst [vmem:[%s261 + $0x20] sm:$0xff] %v684
        %693 = vst [vmem:[%s261 + $0x28] sm:$0xff] %v685
        %694 = vst [vmem:[%s261 + $0x30] sm:$0xff] %v686
        %695 = vst [vmem:[%s261 + $0x38] sm:$0xff] %v687
        %s696 = smul.u32 8, %s14
        %p697 = scmp.lt.s32.totalorder %s696, 15
        %s698 = scalar_select %p697, %s696, 15
        %s699 = smul.addr %s698, 8
        %s700 = scalar_lea.vmem %s3, %s699
        // Predicated region
        $region56: #{ocm_resnet_forward.18} parent=50 // pred_check
          %p701 = pneg %p100
        $region57: #{ocm_resnet_forward.18} parent=50 // pred_check_branch
          %703 = sbr.rel (%p701) target = $region59
        $region58: #{ocm_resnet_forward.18} parent=50 // pred_region
          %s704 = smul.u32 8, %s14
        $region59: #{ocm_resnet_forward.18} parent=50 // pred_fallthru
          _
      $region51: #{ocm_resnet_forward.18} parent=5 // pred_fallthru
        _
      %p705 = scmp.le.s32.totalorder 2, %s9
      // Predicated region
      $region60: #{ocm_resnet_forward.18} parent=5 // pred_check
        %p706 = pneg %p705
      $region61: #{ocm_resnet_forward.18} parent=5 // pred_check_branch
        %708 = sbr.rel (%p706) target = $region63
      $region62: #{ocm_resnet_forward.18} parent=5 // pred_region
        %s709 = ssub.s32 %s9, 2
        // Predicated region
        $region64: #{ocm_resnet_forward.18} parent=62 // pred_check
          %p710 = pneg %p106
        $region65: #{ocm_resnet_forward.18} parent=62 // pred_check_branch
          %712 = sbr.rel (%p710) target = $region67
        $region66: #{ocm_resnet_forward.18} parent=62 // pred_region
          %s713 = smul.u32 8, %s15
          %p714 = scmp.lt.s32.totalorder %s713, 15
          %s715 = scalar_select %p714, %s713, 15
          %s716 = smul.addr %s715, 8
          %s717 = scalar_lea.vmem %s3, %s716
        $region67: #{ocm_resnet_forward.18} parent=62 // pred_fallthru
          _
      $region63: #{ocm_resnet_forward.18} parent=5 // pred_fallthru
        _
    $region6: #{ocm_resnet_forward.18} parent=1 // loop_footer
      %s13 = sadd.s32 1, %s9
    $region7: #{ocm_resnet_forward.18} parent=1 // loop_footer_branch
      %8 = sbr.rel target = $region3
    $region8: #{ocm_resnet_forward.18} parent=1 // loop_exit
      _

// kernel: ocm_resnet_forward.22
$region0: #{ocm_resnet_forward.22}
  #allocation0 [shape = 'u32[]', space=smem, size = 0x4, offset = 0x4, fixed_abs, tag = 'smem constant byte address 0x4 - core index']
  #allocation1 [shape = 'u32[144,128]{1,0:T(1,128)}', space=vmem, size = 0x12000, scoped, tag = 'internal scratch']
  %s0 = inlined_call_operand.vmem [shape: bf16[16,72], index: 0, kind: input, shape index: {}]
  %s1 = inlined_call_operand.vmem [shape: bf16[72,512], index: 1, kind: input, shape index: {}]
  %s2 = inlined_call_operand.vmem [shape: f32[16,1], index: 2, kind: input, shape index: {}]
  %s3 = inlined_call_operand.vmem [shape: f32[16,512], index: 3, kind: output, shape index: {}]
  %s4 = sld [smem:[#allocation0]]
  $region102: #{ocm_resnet_forward.22} parent=0
    _
  %s6 = ssub.s32 1, %s4
  %s7 = scalar_select 0, %s6, %s4
  $region1: #{ocm_resnet_forward.22} parent=0
    #allocation2 [shape = 'u8[73728]{0}', space=vmem, size = 0x12000, scoped, tag = 'input window, operand 1']
    #allocation3 [shape = 'u8[32768]{0}', space=vmem, size = 0x8000, scoped, tag = 'output window, operand 0']
    loop: start=0, step=1, limit=4
    $region2: #{ocm_resnet_forward.22} parent=1 // loop_pre_header
      _
    $region3: #{ocm_resnet_forward.22} parent=1 // loop_header
      %s9 = sphi 0, %s13
      %p10 = scmp.ge.s32.totalorder %s9, 4
      %s17 = sphi 0, %s17
      %s19 = sphi 0, %s17
      %s20 = sphi 0, %s19
      %s34 = sphi 0, %s20
      %s40 = sphi 0, %s42
      %s43 = sphi 0, %s40
      %s44 = sphi 0, %s43
      %s60 = sphi 0, %s44
      %s64 = sphi 0, %s64
      %s66 = sphi 0, %s64
      %s67 = sphi 0, %s66
      %s81 = sphi 0, %s67
      %s87 = sphi 0, %s89
      %s90 = sphi 0, %s87
      %s91 = sphi 0, %s90
      %s107 = sphi 0, %s91
    $region4: #{ocm_resnet_forward.22} parent=1 // loop_header_branch
      %12 = sbr.rel (%p10) target = $region8
    $region5: #{ocm_resnet_forward.22} parent=1 // loop_body
      %s14 = ssub.s32 %s9, 1
      %s15 = ssub.s32 %s9, 2
      %s16 = sadd.s32 %s9, 1
      %s18 = sadd.s32 %s17, 1
      %p21 = scmp.eq.s32.totalorder %s9, 1
      %p22 = scmp.ne.s32.totalorder %s17, %s19
      %p23 = scmp.eq.s32.totalorder %s9, 0
      %p24 = por %p22, %p23
      %p25 = scmp.ne.s32.totalorder %s17, %s19
      %p26 = scmp.eq.s32.totalorder %s14, 1
      %p27 = por %p25, %p26
      %p28 = scmp.ne.s32.totalorder %s19, %s20
      %p29 = scmp.eq.s32.totalorder %s14, 0
      %p30 = por %p28, %p29
      %p31 = scmp.ne.s32.totalorder %s19, %s20
      %p32 = scmp.eq.s32.totalorder %s15, 1
      %p33 = por %p31, %p32
      %p35 = scmp.ne.s32.totalorder %s20, %s34
      %p36 = scmp.eq.s32.totalorder %s15, 0
      %p37 = por %p35, %p36
      %s38 = ssub.s32 %s9, %s16
      %p39 = scmp.eq.s32.totalorder %s38, 0
      %s41 = sadd.s32 %s40, 1
      %s42 = scalar_select %p39, %s40, %s41
      %p45 = pneg %p39
      %p46 = scmp.eq.s32.totalorder %s9, 1
      %p47 = por %p45, %p46
      %p48 = scmp.ne.s32.totalorder %s40, %s43
      %p49 = scmp.eq.s32.totalorder %s9, 0
      %p50 = por %p48, %p49
      %p51 = scmp.ne.s32.totalorder %s40, %s43
      %p52 = scmp.eq.s32.totalorder %s14, 1
      %p53 = por %p51, %p52
      %p54 = scmp.ne.s32.totalorder %s43, %s44
      %p55 = scmp.eq.s32.totalorder %s14, 0
      %p56 = por %p54, %p55
      %p57 = scmp.ne.s32.totalorder %s43, %s44
      %p58 = scmp.eq.s32.totalorder %s15, 1
      %p59 = por %p57, %p58
      %p61 = scmp.ne.s32.totalorder %s44, %s60
      %p62 = scmp.eq.s32.totalorder %s15, 0
      %p63 = por %p61, %p62
      %s65 = sadd.s32 %s64, 1
      %p68 = scmp.eq.s32.totalorder %s9, 1
      %p69 = scmp.ne.s32.totalorder %s64, %s66
      %p70 = scmp.eq.s32.totalorder %s9, 0
      %p71 = por %p69, %p70
      %p72 = scmp.ne.s32.totalorder %s64, %s66
      %p73 = scmp.eq.s32.totalorder %s14, 1
      %p74 = por %p72, %p73
      %p75 = scmp.ne.s32.totalorder %s66, %s67
      %p76 = scmp.eq.s32.totalorder %s14, 0
      %p77 = por %p75, %p76
      %p78 = scmp.ne.s32.totalorder %s66, %s67
      %p79 = scmp.eq.s32.totalorder %s15, 1
      %p80 = por %p78, %p79
      %p82 = scmp.ne.s32.totalorder %s67, %s81
      %p83 = scmp.eq.s32.totalorder %s15, 0
      %p84 = por %p82, %p83
      %s85 = ssub.s32 %s9, %s16
      %p86 = scmp.eq.s32.totalorder %s85, 0
      %s88 = sadd.s32 %s87, 1
      %s89 = scalar_select %p86, %s87, %s88
      %p92 = pneg %p86
      %p93 = scmp.eq.s32.totalorder %s9, 1
      %p94 = por %p92, %p93
      %p95 = scmp.ne.s32.totalorder %s87, %s90
      %p96 = scmp.eq.s32.totalorder %s9, 0
      %p97 = por %p95, %p96
      %p98 = scmp.ne.s32.totalorder %s87, %s90
      %p99 = scmp.eq.s32.totalorder %s14, 1
      %p100 = por %p98, %p99
      %p101 = scmp.ne.s32.totalorder %s90, %s91
      %p102 = scmp.eq.s32.totalorder %s14, 0
      %p103 = por %p101, %p102
      %p104 = scmp.ne.s32.totalorder %s90, %s91
      %p105 = scmp.eq.s32.totalorder %s15, 1
      %p106 = por %p104, %p105
      %p108 = scmp.ne.s32.totalorder %s91, %s107
      %p109 = scmp.eq.s32.totalorder %s15, 0
      %p110 = por %p108, %p109
      %p111 = scmp.le.s32.totalorder 1, %s9
      %p112 = scmp.lt.s32.totalorder %s9, 3
      %p113 = pnand %p111, %p112
      %p114 = pneg %p113
      // Predicated region
      $region9: #{ocm_resnet_forward.22} parent=5 // pred_check
        _
      $region10: #{ocm_resnet_forward.22} parent=5 // pred_check_branch
        %116 = sbr.rel (%p113) target = $region12
      $region11: #{ocm_resnet_forward.22} parent=5 // pred_region
        %s117 = ssub.s32 %s9, 1
        // Predicated region
        $region13: #{ocm_resnet_forward.22} parent=11 // pred_check
          %p118 = pneg %p30
        $region14: #{ocm_resnet_forward.22} parent=11 // pred_check_branch
          %120 = sbr.rel (%p118) target = $region16
        $region15: #{ocm_resnet_forward.22} parent=11 // pred_region
          _
        $region16: #{ocm_resnet_forward.22} parent=11 // pred_fallthru
          _
        // Predicated region
        $region17: #{ocm_resnet_forward.22} parent=11 // pred_check
          %p121 = pneg %p77
        $region18: #{ocm_resnet_forward.22} parent=11 // pred_check_branch
          %123 = sbr.rel (%p121) target = $region20
        $region19: #{ocm_resnet_forward.22} parent=11 // pred_region
          _
        $region20: #{ocm_resnet_forward.22} parent=11 // pred_fallthru
          _
      $region12: #{ocm_resnet_forward.22} parent=5 // pred_fallthru
        _
      %p124 = scmp.lt.s32.totalorder %s9, 2
      // Predicated region
      $region21: #{ocm_resnet_forward.22} parent=5 // pred_check
        %p125 = pneg %p124
      $region22: #{ocm_resnet_forward.22} parent=5 // pred_check_branch
        %127 = sbr.rel (%p125) target = $region24
      $region23: #{ocm_resnet_forward.22} parent=5 // pred_region
        // Predicated region
        $region25: #{ocm_resnet_forward.22} parent=23 // pred_check
          %p128 = pneg %p50
        $region26: #{ocm_resnet_forward.22} parent=23 // pred_check_branch
          %130 = sbr.rel (%p128) target = $region28
        $region27: #{ocm_resnet_forward.22} parent=23 // pred_region
          %s131 = sand.u32 %s40, 1
          %s132 = sand.u32 %s40, 1
          %s133 = smul.addr %s132, 72
          %s134 = scalar_lea.vmem [#allocation2], %s133
          %s135 = smul.u32 2, %s9
          %s136 = smul.addr %s135, 4
          %s137 = scalar_lea.vmem %s1, %s136
          // Predicated region
          $region29: #{ocm_resnet_forward.22} parent=27 // pred_check
            _
          $region30: #{ocm_resnet_forward.22} parent=27 // pred_check_branch
            %139 = sbr.rel (0) target = $region32
          $region31: #{ocm_resnet_forward.22} parent=27 // pred_region
            // Predicated region
            $region33: #{ocm_resnet_forward.22} parent=31 // pred_check
              _
            $region34: #{ocm_resnet_forward.22} parent=31 // pred_check_branch
              %141 = sbr.rel (0) target = $region36
            $region35: #{ocm_resnet_forward.22} parent=31 // pred_region
              // Predicated region
              $region48: #{ocm_resnet_forward.22} parent=35 // pred_check
                _
              $region49: #{ocm_resnet_forward.22} parent=35 // pred_check_branch
                %173 = sbr.rel (0) target = $region51
              $region50: #{ocm_resnet_forward.22} parent=35 // pred_region
                loop: start=0, step=1, limit=1
                $region52: #{ocm_resnet_forward.22} parent=50 // loop_pre_header
                  _
                $region53: #{ocm_resnet_forward.22} parent=50 // loop_header
                  %s175 = sphi 0, %s179
                  %p176 = scmp.ge.s32.totalorder %s175, 1
                  %s180 = sphi %s137, %s137
                  %s181 = sphi %s134, %s134
                $region54: #{ocm_resnet_forward.22} parent=50 // loop_header_branch
                  %178 = sbr.rel (%p176) target = $region58
                $region55: #{ocm_resnet_forward.22} parent=50 // loop_body
                  %v182 = vld [vmem:[%s180] sm:$0xff]
                  %183 = vst [vmem:[%s181] sm:$0xff] %v182
                  %v184 = vld [vmem:[%s180 + $0x10] sm:$0xff]
                  %185 = vst [vmem:[%s181 + $0x8] sm:$0xff] %v184
                  %v186 = vld [vmem:[%s180 + $0x20] sm:$0xff]
                  %187 = vst [vmem:[%s181 + $0x10] sm:$0xff] %v186
                  %v188 = vld [vmem:[%s180 + $0x30] sm:$0xff]
                  %189 = vst [vmem:[%s181 + $0x18] sm:$0xff] %v188
                  %v190 = vld [vmem:[%s180 + $0x40] sm:$0xff]
                  %191 = vst [vmem:[%s181 + $0x20] sm:$0xff] %v190
                  %v192 = vld [vmem:[%s180 + $0x50] sm:$0xff]
                  %193 = vst [vmem:[%s181 + $0x28] sm:$0xff] %v192
                  %v194 = vld [vmem:[%s180 + $0x60] sm:$0xff]
                  %195 = vst [vmem:[%s181 + $0x30] sm:$0xff] %v194
                  %v196 = vld [vmem:[%s180 + $0x70] sm:$0xff]
                  %197 = vst [vmem:[%s181 + $0x38] sm:$0xff] %v196
                  %v198 = vld [vmem:[%s180 + $0x80] sm:$0xff]
                  %199 = vst [vmem:[%s181 + $0x40] sm:$0xff] %v198
                $region56: #{ocm_resnet_forward.22} parent=50 // loop_footer
                  %s179 = sadd.s32 1, %s175
                $region57: #{ocm_resnet_forward.22} parent=50 // loop_footer_branch
                  %174 = sbr.rel target = $region53
                $region58: #{ocm_resnet_forward.22} parent=50 // loop_exit
                  _
              $region51: #{ocm_resnet_forward.22} parent=35 // pred_fallthru
                _
              // Predicated region
              $region59: #{ocm_resnet_forward.22} parent=35 // pred_check
                _
              $region60: #{ocm_resnet_forward.22} parent=35 // pred_check_branch
                %201 = sbr.rel target = $region62
              $region61: #{ocm_resnet_forward.22} parent=35 // pred_region
                _
              $region62: #{ocm_resnet_forward.22} parent=35 // pred_fallthru
                _
            $region36: #{ocm_resnet_forward.22} parent=31 // pred_fallthru
              _
            // Predicated region
            $region37: #{ocm_resnet_forward.22} parent=31 // pred_check
              _
            $region38: #{ocm_resnet_forward.22} parent=31 // pred_check_branch
              %143 = sbr.rel target = $region40
            $region39: #{ocm_resnet_forward.22} parent=31 // pred_region
              %s145 = ssub.s32 256, 1
              loop: start=0, step=1, limit=1
              $region41: #{ocm_resnet_forward.22} parent=39 // loop_pre_header
                _
              $region42: #{ocm_resnet_forward.22} parent=39 // loop_header
                %s147 = sphi 0, %s151
                %p148 = scmp.ge.s32.totalorder %s147, 1
                %s152 = sphi %s137, %s137
                %s153 = sphi %s134, %s134
              $region43: #{ocm_resnet_forward.22} parent=39 // loop_header_branch
                %150 = sbr.rel (%p148) target = $region47
              $region44: #{ocm_resnet_forward.22} parent=39 // loop_body
                %v154 = vld [vmem:[%s152] sm:%s145]
                %155 = vst [vmem:[%s153] sm:%s145] %v154
                %v156 = vld [vmem:[%s152 + $0x10] sm:%s145]
                %157 = vst [vmem:[%s153 + $0x8] sm:%s145] %v156
                %v158 = vld [vmem:[%s152 + $0x20] sm:%s145]
                %159 = vst [vmem:[%s153 + $0x10] sm:%s145] %v158
                %v160 = vld [vmem:[%s152 + $0x30] sm:%s145]
                %161 = vst [vmem:[%s153 + $0x18] sm:%s145] %v160
                %v162 = vld [vmem:[%s152 + $0x40] sm:%s145]
                %163 = vst [vmem:[%s153 + $0x20] sm:%s145] %v162
                %v164 = vld [vmem:[%s152 + $0x50] sm:%s145]
                %165 = vst [vmem:[%s153 + $0x28] sm:%s145] %v164
                %v166 = vld [vmem:[%s152 + $0x60] sm:%s145]
                %167 = vst [vmem:[%s153 + $0x30] sm:%s145] %v166
                %v168 = vld [vmem:[%s152 + $0x70] sm:%s145]
                %169 = vst [vmem:[%s153 + $0x38] sm:%s145] %v168
                %v170 = vld [vmem:[%s152 + $0x80] sm:%s145]
                %171 = vst [vmem:[%s153 + $0x40] sm:%s145] %v170
              $region45: #{ocm_resnet_forward.22} parent=39 // loop_footer
                %s151 = sadd.s32 1, %s147
              $region46: #{ocm_resnet_forward.22} parent=39 // loop_footer_branch
                %146 = sbr.rel target = $region42
              $region47: #{ocm_resnet_forward.22} parent=39 // loop_exit
                _
            $region40: #{ocm_resnet_forward.22} parent=31 // pred_fallthru
              _
          $region32: #{ocm_resnet_forward.22} parent=27 // pred_fallthru
            _
          %202 = vnop
        $region28: #{ocm_resnet_forward.22} parent=23 // pred_fallthru
          _
      $region24: #{ocm_resnet_forward.22} parent=5 // pred_fallthru
        _
      %p203 = scmp.le.s32.totalorder 1, %s9
      %p204 = scmp.lt.s32.totalorder %s9, 3
      %p205 = pnand %p203, %p204
      %p206 = pneg %p205
      // Predicated region
      $region63: #{ocm_resnet_forward.22} parent=5 // pred_check
        _
      $region64: #{ocm_resnet_forward.22} parent=5 // pred_check_branch
        %208 = sbr.rel (%p205) target = $region66
      $region65: #{ocm_resnet_forward.22} parent=5 // pred_region
        %s209 = ssub.s32 %s9, 1
        %s210 = sand.u32 %s43, 1
        %s211 = sand.u32 %s43, 1
        %s212 = smul.addr %s211, 72
        %s213 = scalar_lea.vmem [#allocation2], %s212
        // Predicated region
        $region67: #{ocm_resnet_forward.22} parent=65 // pred_check
          %p214 = pneg %p56
        $region68: #{ocm_resnet_forward.22} parent=65 // pred_check_branch
          %216 = sbr.rel (%p214) target = $region70
        $region69: #{ocm_resnet_forward.22} parent=65 // pred_region
          _
        $region70: #{ocm_resnet_forward.22} parent=65 // pred_fallthru
          _
        %p217 = pneg %p30
        %p218 = pneg %p27
        %s219 = sand.u32 %s43, 1
        %s220 = sand.u32 %s43, 1
        %s221 = smul.addr %s220, 72
        %s222 = scalar_lea.vmem [#allocation2], %s221
        %p223 = pneg %p56
        %p224 = pneg %p53
        %p225 = pneg %p77
        %p226 = pneg %p74
        %p227 = pneg %p103
        %p228 = pneg %p100
        %s229 = sand.u32 %s90, 1
        %s230 = sand.u32 %s90, 1
        %s231 = smul.addr %s230, 32
        %s232 = scalar_lea.vmem [#allocation3], %s231
        %s233 = smul.u32 2, %s14
        %s234 = smul.u32 2, %s14
        %v236 = vld [vmem:[%s0] sm:$0xf]
        %v237 = vld [vmem:[%s0 + $0x4] sm:$0xf]
        %v238 = vld [vmem:[%s213] sm:$0xff]
        %v239 = vld [vmem:[%s213 + $0x8] sm:$0xff]
        %v240 = vld [vmem:[%s213 + $0x10] sm:$0xff]
        %v241 = vld [vmem:[%s213 + $0x18] sm:$0xff]
        %v242 = vld [vmem:[%s213 + $0x20] sm:$0xff]
        %v243 = vld [vmem:[%s213 + $0x28] sm:$0xff]
        %v244 = vld [vmem:[%s213 + $0x30] sm:$0xff]
        %v245 = vld [vmem:[%s213 + $0x38] sm:$0xff]
        %v246 = vld [vmem:[%s213 + $0x40] sm:$0xff]
        %v247 = vld [vmem:[%s2] sm:$0xff]
        %v248 = vld [vmem:[%s2 + $0x8] sm:$0xff]
        %250 = vset.pattern.permute.xlu0 0
        %251 = vperm.xlu0 %250, %v247
        %v252 = vpop.permute.xlu0 %251
        %255 = vset.pattern.permute.xlu0 0
        %256 = vperm.xlu0 %255, %v248
        %v257 = vpop.permute.xlu0 %256
        %v261 = vunpack.c.l.b16 %v236
        %v262 = vunpack.c.l.b16 %v237
        %v263 = vpack.c.b16 %v262, %v261
        %v273 = vunpack.c.l.b16 %v238
        %v274 = vunpack.c.h.b16 %v238
        %v275 = vunpack.c.l.b16 %v239
        %v276 = vunpack.c.h.b16 %v239
        %v277 = vunpack.c.l.b16 %v240
        %v278 = vunpack.c.h.b16 %v240
        %v279 = vunpack.c.l.b16 %v241
        %v280 = vunpack.c.h.b16 %v241
        %v281 = vunpack.c.l.b16 %v242
        %v282 = vunpack.c.h.b16 %v242
        %v283 = vunpack.c.l.b16 %v243
        %v284 = vunpack.c.h.b16 %v243
        %v285 = vunpack.c.l.b16 %v244
        %v286 = vunpack.c.h.b16 %v244
        %v287 = vunpack.c.l.b16 %v245
        %v288 = vunpack.c.h.b16 %v245
        %v289 = vunpack.c.l.b16 %v246
        %v290 = vunpack.c.h.b16 %v246
        %v291 = vpack.c.b16 %v275, %v273
        %v292 = vpack.c.b16 %v276, %v274
        %v293 = vpack.c.b16 %v279, %v277
        %v294 = vpack.c.b16 %v280, %v278
        %v295 = vpack.c.b16 %v283, %v281
        %v296 = vpack.c.b16 %v284, %v282
        %v297 = vpack.c.b16 %v287, %v285
        %v298 = vpack.c.b16 %v288, %v286
        %v299 = vpack.c.b16 %v289, %v289
        %v300 = vpack.c.b16 %v290, %v290
        %vm309 = vcmask 588800
        %v311 = vsel %vm309, %v263, 0
        %vm313 = vcmask 1043456
        %v315 = vsel %vm313, %v299, 0
        %v318 = vsel %vm313, %v300, 0
        %320 = vmatprep.subr.bf16.mxu0 0
        %321 = vmatpush1.bf16.msra.mxu0 0
        %322 = vmatprep.subr.bf16.mxu0 0
        %323 = vmatpush1.bf16.msra.mxu0 0
        %324 = vmatprep.subr.bf16.mxu0 0
        %325 = vmatpush1.bf16.msra.mxu0 0
        %326 = vmatprep.subr.bf16.mxu0 %v318
        %327 = vmatpush1.bf16.msra.mxu0 %v315
        %328 = vmatprep.subr.bf16.mxu0 %v298
        %329 = vmatpush1.bf16.msra.mxu0 %v297
        %330 = vmatprep.subr.bf16.mxu0 %v296
        %331 = vmatpush1.bf16.msra.mxu0 %v295
        %332 = vmatprep.subr.bf16.mxu0 %v294
        %333 = vmatpush1.bf16.msra.mxu0 %v293
        %334 = vmatprep.subr.bf16.mxu0 %v292
        %335 = vmatpush1.bf16.msra.mxu0 %v291
        %336 = vmatprep.subr.bf16.mxu0 0
        %337 = vmatpush2.bf16.msra.mxu0 0
        %338 = vmatprep.subr.bf16.mxu0 0
        %339 = vmatpush2.bf16.msra.mxu0 0
        %340 = vmatprep.subr.bf16.mxu0 0
        %341 = vmatpush2.bf16.msra.mxu0 0
        %342 = vmatprep.subr.bf16.mxu0 0
        %343 = vmatpush2.bf16.msra.mxu0 0
        %344 = vmatprep.subr.bf16.mxu0 0
        %345 = vmatpush2.bf16.msra.mxu0 0
        %346 = vmatprep.subr.bf16.mxu0 0
        %347 = vmatpush2.bf16.msra.mxu0 0
        %348 = vmatprep.subr.bf16.mxu0 0
        %349 = vmatpush2.bf16.msra.mxu0 0
        %350 = vmatprep.subr.bf16.mxu0 0
        %351 = vmatpush2.bf16.msra.mxu0 0
        %352 = vmatprep.mubr.bf16.mxu0 0
        %353 = vmatmul.mubr.bf16.gmra.mxu0 %v311
        %v354 = vpop.f32.mrf.mxu0
        %v355 = vadd.f32 %v252, %v354
        %v356 = vpop.f32.mrf.mxu0
        %v357 = vadd.f32 %v252, %v356
        %v358 = vpop.f32.mrf.mxu0
        %v359 = vadd.f32 %v257, %v358
        %v360 = vpop.f32.mrf.mxu0
        %v361 = vadd.f32 %v257, %v360
        %362 = vdwg.mxu0
        %v363 = vmax.f32 %v355, 0.0
        %v364 = vmax.f32 %v357, 0.0
        %v365 = vmax.f32 %v359, 0.0
        %v366 = vmax.f32 %v361, 0.0
        %367 = vst [vmem:[%s232] sm:$0xff] %v363
        %368 = vst [vmem:[%s232 + $0x8] sm:$0xff] %v364
        %369 = vst [vmem:[%s232 + $0x10] sm:$0xff] %v365
        %370 = vst [vmem:[%s232 + $0x18] sm:$0xff] %v366
        %s371 = sand.u32 %s90, 1
        %s372 = sand.u32 %s90, 1
        %s373 = smul.addr %s372, 32
        %s374 = scalar_lea.vmem [#allocation3], %s373
        // Predicated region
        $region71: #{ocm_resnet_forward.22} parent=65 // pred_check
          %p375 = pneg %p100
        $region72: #{ocm_resnet_forward.22} parent=65 // pred_check_branch
          %377 = sbr.rel (%p375) target = $region74
        $region73: #{ocm_resnet_forward.22} parent=65 // pred_region
          %s378 = smul.u32 2, %s14
          %s379 = smul.addr %s378, 8
          %s380 = scalar_lea.vmem %s3, %s379
          // Predicated region
          $region75: #{ocm_resnet_forward.22} parent=73 // pred_check
            _
          $region76: #{ocm_resnet_forward.22} parent=73 // pred_check_branch
            %382 = sbr.rel (0) target = $region78
          $region77: #{ocm_resnet_forward.22} parent=73 // pred_region
            // Predicated region
            $region79: #{ocm_resnet_forward.22} parent=77 // pred_check
              _
            $region80: #{ocm_resnet_forward.22} parent=77 // pred_check_branch
              %384 = sbr.rel (0) target = $region82
            $region81: #{ocm_resnet_forward.22} parent=77 // pred_region
              loop: start=0, step=1, limit=1
              $region83: #{ocm_resnet_forward.22} parent=81 // loop_pre_header
                _
              $region84: #{ocm_resnet_forward.22} parent=81 // loop_header
                %s386 = sphi 0, %s390
                %p387 = scmp.ge.s32.totalorder %s386, 1
                %s391 = sphi %s374, %s374
                %s392 = sphi %s380, %s380
              $region85: #{ocm_resnet_forward.22} parent=81 // loop_header_branch
                %389 = sbr.rel (%p387) target = $region89
              $region86: #{ocm_resnet_forward.22} parent=81 // loop_body
                %v393 = vld [vmem:[%s391] sm:$0xff]
                %394 = vst [vmem:[%s392] sm:$0xff] %v393
                %v395 = vld [vmem:[%s391 + $0x8] sm:$0xff]
                %396 = vst [vmem:[%s392 + $0x8] sm:$0xff] %v395
                %v397 = vld [vmem:[%s391 + $0x10] sm:$0xff]
                %398 = vst [vmem:[%s392 + $0x20] sm:$0xff] %v397
                %v399 = vld [vmem:[%s391 + $0x18] sm:$0xff]
                %400 = vst [vmem:[%s392 + $0x28] sm:$0xff] %v399
              $region87: #{ocm_resnet_forward.22} parent=81 // loop_footer
                %s390 = sadd.s32 1, %s386
              $region88: #{ocm_resnet_forward.22} parent=81 // loop_footer_branch
                %385 = sbr.rel target = $region84
              $region89: #{ocm_resnet_forward.22} parent=81 // loop_exit
                _
            $region82: #{ocm_resnet_forward.22} parent=77 // pred_fallthru
              _
            // Predicated region
            $region90: #{ocm_resnet_forward.22} parent=77 // pred_check
              _
            $region91: #{ocm_resnet_forward.22} parent=77 // pred_check_branch
              %402 = sbr.rel target = $region93
            $region92: #{ocm_resnet_forward.22} parent=77 // pred_region
              _
            $region93: #{ocm_resnet_forward.22} parent=77 // pred_fallthru
              _
          $region78: #{ocm_resnet_forward.22} parent=73 // pred_fallthru
            _
          %403 = vnop
        $region74: #{ocm_resnet_forward.22} parent=65 // pred_fallthru
          _
      $region66: #{ocm_resnet_forward.22} parent=5 // pred_fallthru
        _
      %p404 = scmp.le.s32.totalorder 2, %s9
      // Predicated region
      $region94: #{ocm_resnet_forward.22} parent=5 // pred_check
        %p405 = pneg %p404
      $region95: #{ocm_resnet_forward.22} parent=5 // pred_check_branch
        %407 = sbr.rel (%p405) target = $region97
      $region96: #{ocm_resnet_forward.22} parent=5 // pred_region
        %s408 = ssub.s32 %s9, 2
        // Predicated region
        $region98: #{ocm_resnet_forward.22} parent=96 // pred_check
          %p409 = pneg %p106
        $region99: #{ocm_resnet_forward.22} parent=96 // pred_check_branch
          %411 = sbr.rel (%p409) target = $region101
        $region100: #{ocm_resnet_forward.22} parent=96 // pred_region
          %s412 = sand.u32 %s91, 1
          %s413 = sand.u32 %s91, 1
          %s414 = smul.addr %s413, 32
          %s415 = scalar_lea.vmem [#allocation3], %s414
        $region101: #{ocm_resnet_forward.22} parent=96 // pred_fallthru
          _
      $region97: #{ocm_resnet_forward.22} parent=5 // pred_fallthru
        _
    $region6: #{ocm_resnet_forward.22} parent=1 // loop_footer
      %s13 = sadd.s32 1, %s9
    $region7: #{ocm_resnet_forward.22} parent=1 // loop_footer_branch
      %8 = sbr.rel target = $region3
    $region8: #{ocm_resnet_forward.22} parent=1 // loop_exit
      _

// kernel: ocm_resnet_forward.23
$region0: #{ocm_resnet_forward.23}
  #allocation0 [shape = 'u32[]', space=smem, size = 0x4, offset = 0x4, fixed_abs, tag = 'smem constant byte address 0x4 - core index']
  #allocation1 [shape = 'u32[144,128]{1,0:T(1,128)}', space=vmem, size = 0x12000, scoped, tag = 'internal scratch']
  %s0 = inlined_call_operand.vmem [shape: bf16[16,144], index: 0, kind: input, shape index: {}]
  %s1 = inlined_call_operand.vmem [shape: bf16[144,512], index: 1, kind: input, shape index: {}]
  %s2 = inlined_call_operand.vmem [shape: f32[16,1], index: 2, kind: input, shape index: {}]
  %s3 = inlined_call_operand.vmem [shape: bf16[16,8], index: 3, kind: input, shape index: {}]
  %s4 = inlined_call_operand.vmem [shape: bf16[8,512], index: 4, kind: input, shape index: {}]
  %s5 = inlined_call_operand.vmem [shape: f32[16,1], index: 5, kind: input, shape index: {}]
  %s6 = inlined_call_operand.vmem [shape: f32[16,512], index: 6, kind: output, shape index: {}]
  %s7 = sld [smem:[#allocation0]]
  $region114: #{ocm_resnet_forward.23} parent=0
    _
  %s9 = ssub.s32 1, %s7
  %s10 = scalar_select 0, %s9, %s7
  $region1: #{ocm_resnet_forward.23} parent=0
    #allocation2 [shape = 'u8[147456]{0}', space=vmem, size = 0x24000, scoped, tag = 'input window, operand 1']
    #allocation3 [shape = 'u8[32768]{0}', space=vmem, size = 0x8000, scoped, tag = 'output window, operand 0']
    loop: start=0, step=1, limit=4
    $region2: #{ocm_resnet_forward.23} parent=1 // loop_pre_header
      _
    $region3: #{ocm_resnet_forward.23} parent=1 // loop_header
      %s12 = sphi 0, %s16
      %p13 = scmp.ge.s32.totalorder %s12, 4
      %s20 = sphi 0, %s20
      %s22 = sphi 0, %s20
      %s23 = sphi 0, %s22
      %s37 = sphi 0, %s23
      %s43 = sphi 0, %s45
      %s46 = sphi 0, %s43
      %s47 = sphi 0, %s46
      %s63 = sphi 0, %s47
      %s67 = sphi 0, %s67
      %s69 = sphi 0, %s67
      %s70 = sphi 0, %s69
      %s84 = sphi 0, %s70
      %s88 = sphi 0, %s88
      %s90 = sphi 0, %s88
      %s91 = sphi 0, %s90
      %s105 = sphi 0, %s91
      %s111 = sphi 0, %s113
      %s114 = sphi 0, %s111
      %s115 = sphi 0, %s114
      %s131 = sphi 0, %s115
      %s135 = sphi 0, %s135
      %s137 = sphi 0, %s135
      %s138 = sphi 0, %s137
      %s152 = sphi 0, %s138
      %s158 = sphi 0, %s160
      %s161 = sphi 0, %s158
      %s162 = sphi 0, %s161
      %s178 = sphi 0, %s162
    $region4: #{ocm_resnet_forward.23} parent=1 // loop_header_branch
      %15 = sbr.rel (%p13) target = $region8
    $region5: #{ocm_resnet_forward.23} parent=1 // loop_body
      %s17 = ssub.s32 %s12, 1
      %s18 = ssub.s32 %s12, 2
      %s19 = sadd.s32 %s12, 1
      %s21 = sadd.s32 %s20, 1
      %p24 = scmp.eq.s32.totalorder %s12, 1
      %p25 = scmp.ne.s32.totalorder %s20, %s22
      %p26 = scmp.eq.s32.totalorder %s12, 0
      %p27 = por %p25, %p26
      %p28 = scmp.ne.s32.totalorder %s20, %s22
      %p29 = scmp.eq.s32.totalorder %s17, 1
      %p30 = por %p28, %p29
      %p31 = scmp.ne.s32.totalorder %s22, %s23
      %p32 = scmp.eq.s32.totalorder %s17, 0
      %p33 = por %p31, %p32
      %p34 = scmp.ne.s32.totalorder %s22, %s23
      %p35 = scmp.eq.s32.totalorder %s18, 1
      %p36 = por %p34, %p35
      %p38 = scmp.ne.s32.totalorder %s23, %s37
      %p39 = scmp.eq.s32.totalorder %s18, 0
      %p40 = por %p38, %p39
      %s41 = ssub.s32 %s12, %s19
      %p42 = scmp.eq.s32.totalorder %s41, 0
      %s44 = sadd.s32 %s43, 1
      %s45 = scalar_select %p42, %s43, %s44
      %p48 = pneg %p42
      %p49 = scmp.eq.s32.totalorder %s12, 1
      %p50 = por %p48, %p49
      %p51 = scmp.ne.s32.totalorder %s43, %s46
      %p52 = scmp.eq.s32.totalorder %s12, 0
      %p53 = por %p51, %p52
      %p54 = scmp.ne.s32.totalorder %s43, %s46
      %p55 = scmp.eq.s32.totalorder %s17, 1
      %p56 = por %p54, %p55
      %p57 = scmp.ne.s32.totalorder %s46, %s47
      %p58 = scmp.eq.s32.totalorder %s17, 0
      %p59 = por %p57, %p58
      %p60 = scmp.ne.s32.totalorder %s46, %s47
      %p61 = scmp.eq.s32.totalorder %s18, 1
      %p62 = por %p60, %p61
      %p64 = scmp.ne.s32.totalorder %s47, %s63
      %p65 = scmp.eq.s32.totalorder %s18, 0
      %p66 = por %p64, %p65
      %s68 = sadd.s32 %s67, 1
      %p71 = scmp.eq.s32.totalorder %s12, 1
      %p72 = scmp.ne.s32.totalorder %s67, %s69
      %p73 = scmp.eq.s32.totalorder %s12, 0
      %p74 = por %p72, %p73
      %p75 = scmp.ne.s32.totalorder %s67, %s69
      %p76 = scmp.eq.s32.totalorder %s17, 1
      %p77 = por %p75, %p76
      %p78 = scmp.ne.s32.totalorder %s69, %s70
      %p79 = scmp.eq.s32.totalorder %s17, 0
      %p80 = por %p78, %p79
      %p81 = scmp.ne.s32.totalorder %s69, %s70
      %p82 = scmp.eq.s32.totalorder %s18, 1
      %p83 = por %p81, %p82
      %p85 = scmp.ne.s32.totalorder %s70, %s84
      %p86 = scmp.eq.s32.totalorder %s18, 0
      %p87 = por %p85, %p86
      %s89 = sadd.s32 %s88, 1
      %p92 = scmp.eq.s32.totalorder %s12, 1
      %p93 = scmp.ne.s32.totalorder %s88, %s90
      %p94 = scmp.eq.s32.totalorder %s12, 0
      %p95 = por %p93, %p94
      %p96 = scmp.ne.s32.totalorder %s88, %s90
      %p97 = scmp.eq.s32.totalorder %s17, 1
      %p98 = por %p96, %p97
      %p99 = scmp.ne.s32.totalorder %s90, %s91
      %p100 = scmp.eq.s32.totalorder %s17, 0
      %p101 = por %p99, %p100
      %p102 = scmp.ne.s32.totalorder %s90, %s91
      %p103 = scmp.eq.s32.totalorder %s18, 1
      %p104 = por %p102, %p103
      %p106 = scmp.ne.s32.totalorder %s91, %s105
      %p107 = scmp.eq.s32.totalorder %s18, 0
      %p108 = por %p106, %p107
      %s109 = ssub.s32 %s12, %s19
      %p110 = scmp.eq.s32.totalorder %s109, 0
      %s112 = sadd.s32 %s111, 1
      %s113 = scalar_select %p110, %s111, %s112
      %p116 = pneg %p110
      %p117 = scmp.eq.s32.totalorder %s12, 1
      %p118 = por %p116, %p117
      %p119 = scmp.ne.s32.totalorder %s111, %s114
      %p120 = scmp.eq.s32.totalorder %s12, 0
      %p121 = por %p119, %p120
      %p122 = scmp.ne.s32.totalorder %s111, %s114
      %p123 = scmp.eq.s32.totalorder %s17, 1
      %p124 = por %p122, %p123
      %p125 = scmp.ne.s32.totalorder %s114, %s115
      %p126 = scmp.eq.s32.totalorder %s17, 0
      %p127 = por %p125, %p126
      %p128 = scmp.ne.s32.totalorder %s114, %s115
      %p129 = scmp.eq.s32.totalorder %s18, 1
      %p130 = por %p128, %p129
      %p132 = scmp.ne.s32.totalorder %s115, %s131
      %p133 = scmp.eq.s32.totalorder %s18, 0
      %p134 = por %p132, %p133
      %s136 = sadd.s32 %s135, 1
      %p139 = scmp.eq.s32.totalorder %s12, 1
      %p140 = scmp.ne.s32.totalorder %s135, %s137
      %p141 = scmp.eq.s32.totalorder %s12, 0
      %p142 = por %p140, %p141
      %p143 = scmp.ne.s32.totalorder %s135, %s137
      %p144 = scmp.eq.s32.totalorder %s17, 1
      %p145 = por %p143, %p144
      %p146 = scmp.ne.s32.totalorder %s137, %s138
      %p147 = scmp.eq.s32.totalorder %s17, 0
      %p148 = por %p146, %p147
      %p149 = scmp.ne.s32.totalorder %s137, %s138
      %p150 = scmp.eq.s32.totalorder %s18, 1
      %p151 = por %p149, %p150
      %p153 = scmp.ne.s32.totalorder %s138, %s152
      %p154 = scmp.eq.s32.totalorder %s18, 0
      %p155 = por %p153, %p154
      %s156 = ssub.s32 %s12, %s19
      %p157 = scmp.eq.s32.totalorder %s156, 0
      %s159 = sadd.s32 %s158, 1
      %s160 = scalar_select %p157, %s158, %s159
      %p163 = pneg %p157
      %p164 = scmp.eq.s32.totalorder %s12, 1
      %p165 = por %p163, %p164
      %p166 = scmp.ne.s32.totalorder %s158, %s161
      %p167 = scmp.eq.s32.totalorder %s12, 0
      %p168 = por %p166, %p167
      %p169 = scmp.ne.s32.totalorder %s158, %s161
      %p170 = scmp.eq.s32.totalorder %s17, 1
      %p171 = por %p169, %p170
      %p172 = scmp.ne.s32.totalorder %s161, %s162
      %p173 = scmp.eq.s32.totalorder %s17, 0
      %p174 = por %p172, %p173
      %p175 = scmp.ne.s32.totalorder %s161, %s162
      %p176 = scmp.eq.s32.totalorder %s18, 1
      %p177 = por %p175, %p176
      %p179 = scmp.ne.s32.totalorder %s162, %s178
      %p180 = scmp.eq.s32.totalorder %s18, 0
      %p181 = por %p179, %p180
      %p182 = scmp.le.s32.totalorder 1, %s12
      %p183 = scmp.lt.s32.totalorder %s12, 3
      %p184 = pnand %p182, %p183
      %p185 = pneg %p184
      // Predicated region
      $region9: #{ocm_resnet_forward.23} parent=5 // pred_check
        _
      $region10: #{ocm_resnet_forward.23} parent=5 // pred_check_branch
        %187 = sbr.rel (%p184) target = $region12
      $region11: #{ocm_resnet_forward.23} parent=5 // pred_region
        %s188 = ssub.s32 %s12, 1
        // Predicated region
        $region13: #{ocm_resnet_forward.23} parent=11 // pred_check
          %p189 = pneg %p33
        $region14: #{ocm_resnet_forward.23} parent=11 // pred_check_branch
          %191 = sbr.rel (%p189) target = $region16
        $region15: #{ocm_resnet_forward.23} parent=11 // pred_region
          _
        $region16: #{ocm_resnet_forward.23} parent=11 // pred_fallthru
          _
        // Predicated region
        $region17: #{ocm_resnet_forward.23} parent=11 // pred_check
          %p192 = pneg %p80
        $region18: #{ocm_resnet_forward.23} parent=11 // pred_check_branch
          %194 = sbr.rel (%p192) target = $region20
        $region19: #{ocm_resnet_forward.23} parent=11 // pred_region
          _
        $region20: #{ocm_resnet_forward.23} parent=11 // pred_fallthru
          _
        // Predicated region
        $region21: #{ocm_resnet_forward.23} parent=11 // pred_check
          %p195 = pneg %p101
        $region22: #{ocm_resnet_forward.23} parent=11 // pred_check_branch
          %197 = sbr.rel (%p195) target = $region24
        $region23: #{ocm_resnet_forward.23} parent=11 // pred_region
          _
        $region24: #{ocm_resnet_forward.23} parent=11 // pred_fallthru
          _
        // Predicated region
        $region25: #{ocm_resnet_forward.23} parent=11 // pred_check
          %p198 = pneg %p148
        $region26: #{ocm_resnet_forward.23} parent=11 // pred_check_branch
          %200 = sbr.rel (%p198) target = $region28
        $region27: #{ocm_resnet_forward.23} parent=11 // pred_region
          _
        $region28: #{ocm_resnet_forward.23} parent=11 // pred_fallthru
          _
      $region12: #{ocm_resnet_forward.23} parent=5 // pred_fallthru
        _
      %p201 = scmp.lt.s32.totalorder %s12, 2
      // Predicated region
      $region29: #{ocm_resnet_forward.23} parent=5 // pred_check
        %p202 = pneg %p201
      $region30: #{ocm_resnet_forward.23} parent=5 // pred_check_branch
        %204 = sbr.rel (%p202) target = $region32
      $region31: #{ocm_resnet_forward.23} parent=5 // pred_region
        // Predicated region
        $region33: #{ocm_resnet_forward.23} parent=31 // pred_check
          %p205 = pneg %p53
        $region34: #{ocm_resnet_forward.23} parent=31 // pred_check_branch
          %207 = sbr.rel (%p205) target = $region36
        $region35: #{ocm_resnet_forward.23} parent=31 // pred_region
          %s208 = sand.u32 %s43, 1
          %s209 = sand.u32 %s43, 1
          %s210 = smul.addr %s209, 144
          %s211 = scalar_lea.vmem [#allocation2], %s210
          %s212 = smul.u32 2, %s12
          %s213 = smul.addr %s212, 4
          %s214 = scalar_lea.vmem %s1, %s213
          // Predicated region
          $region37: #{ocm_resnet_forward.23} parent=35 // pred_check
            _
          $region38: #{ocm_resnet_forward.23} parent=35 // pred_check_branch
            %216 = sbr.rel (0) target = $region40
          $region39: #{ocm_resnet_forward.23} parent=35 // pred_region
            // Predicated region
            $region41: #{ocm_resnet_forward.23} parent=39 // pred_check
              _
            $region42: #{ocm_resnet_forward.23} parent=39 // pred_check_branch
              %218 = sbr.rel (0) target = $region44
            $region43: #{ocm_resnet_forward.23} parent=39 // pred_region
              // Predicated region
              $region56: #{ocm_resnet_forward.23} parent=43 // pred_check
                _
              $region57: #{ocm_resnet_forward.23} parent=43 // pred_check_branch
                %268 = sbr.rel (0) target = $region59
              $region58: #{ocm_resnet_forward.23} parent=43 // pred_region
                loop: start=0, step=1, limit=1
                $region60: #{ocm_resnet_forward.23} parent=58 // loop_pre_header
                  _
                $region61: #{ocm_resnet_forward.23} parent=58 // loop_header
                  %s270 = sphi 0, %s274
                  %p271 = scmp.ge.s32.totalorder %s270, 1
                  %s275 = sphi %s214, %s214
                  %s276 = sphi %s211, %s211
                $region62: #{ocm_resnet_forward.23} parent=58 // loop_header_branch
                  %273 = sbr.rel (%p271) target = $region66
                $region63: #{ocm_resnet_forward.23} parent=58 // loop_body
                  %v277 = vld [vmem:[%s275] sm:$0xff]
                  %278 = vst [vmem:[%s276] sm:$0xff] %v277
                  %v279 = vld [vmem:[%s275 + $0x10] sm:$0xff]
                  %280 = vst [vmem:[%s276 + $0x8] sm:$0xff] %v279
                  %v281 = vld [vmem:[%s275 + $0x20] sm:$0xff]
                  %282 = vst [vmem:[%s276 + $0x10] sm:$0xff] %v281
                  %v283 = vld [vmem:[%s275 + $0x30] sm:$0xff]
                  %284 = vst [vmem:[%s276 + $0x18] sm:$0xff] %v283
                  %v285 = vld [vmem:[%s275 + $0x40] sm:$0xff]
                  %286 = vst [vmem:[%s276 + $0x20] sm:$0xff] %v285
                  %v287 = vld [vmem:[%s275 + $0x50] sm:$0xff]
                  %288 = vst [vmem:[%s276 + $0x28] sm:$0xff] %v287
                  %v289 = vld [vmem:[%s275 + $0x60] sm:$0xff]
                  %290 = vst [vmem:[%s276 + $0x30] sm:$0xff] %v289
                  %v291 = vld [vmem:[%s275 + $0x70] sm:$0xff]
                  %292 = vst [vmem:[%s276 + $0x38] sm:$0xff] %v291
                  %v293 = vld [vmem:[%s275 + $0x80] sm:$0xff]
                  %294 = vst [vmem:[%s276 + $0x40] sm:$0xff] %v293
                  %v295 = vld [vmem:[%s275 + $0x90] sm:$0xff]
                  %296 = vst [vmem:[%s276 + $0x48] sm:$0xff] %v295
                  %v297 = vld [vmem:[%s275 + $0xa0] sm:$0xff]
                  %298 = vst [vmem:[%s276 + $0x50] sm:$0xff] %v297
                  %v299 = vld [vmem:[%s275 + $0xb0] sm:$0xff]
                  %300 = vst [vmem:[%s276 + $0x58] sm:$0xff] %v299
                  %v301 = vld [vmem:[%s275 + $0xc0] sm:$0xff]
                  %302 = vst [vmem:[%s276 + $0x60] sm:$0xff] %v301
                  %v303 = vld [vmem:[%s275 + $0xd0] sm:$0xff]
                  %304 = vst [vmem:[%s276 + $0x68] sm:$0xff] %v303
                  %v305 = vld [vmem:[%s275 + $0xe0] sm:$0xff]
                  %306 = vst [vmem:[%s276 + $0x70] sm:$0xff] %v305
                  %v307 = vld [vmem:[%s275 + $0xf0] sm:$0xff]
                  %308 = vst [vmem:[%s276 + $0x78] sm:$0xff] %v307
                  %v309 = vld [vmem:[%s275 + $0x100] sm:$0xff]
                  %310 = vst [vmem:[%s276 + $0x80] sm:$0xff] %v309
                  %v311 = vld [vmem:[%s275 + $0x110] sm:$0xff]
                  %312 = vst [vmem:[%s276 + $0x88] sm:$0xff] %v311
                $region64: #{ocm_resnet_forward.23} parent=58 // loop_footer
                  %s274 = sadd.s32 1, %s270
                $region65: #{ocm_resnet_forward.23} parent=58 // loop_footer_branch
                  %269 = sbr.rel target = $region61
                $region66: #{ocm_resnet_forward.23} parent=58 // loop_exit
                  _
              $region59: #{ocm_resnet_forward.23} parent=43 // pred_fallthru
                _
              // Predicated region
              $region67: #{ocm_resnet_forward.23} parent=43 // pred_check
                _
              $region68: #{ocm_resnet_forward.23} parent=43 // pred_check_branch
                %314 = sbr.rel target = $region70
              $region69: #{ocm_resnet_forward.23} parent=43 // pred_region
                _
              $region70: #{ocm_resnet_forward.23} parent=43 // pred_fallthru
                _
            $region44: #{ocm_resnet_forward.23} parent=39 // pred_fallthru
              _
            // Predicated region
            $region45: #{ocm_resnet_forward.23} parent=39 // pred_check
              _
            $region46: #{ocm_resnet_forward.23} parent=39 // pred_check_branch
              %220 = sbr.rel target = $region48
            $region47: #{ocm_resnet_forward.23} parent=39 // pred_region
              %s222 = ssub.s32 256, 1
              loop: start=0, step=1, limit=1
              $region49: #{ocm_resnet_forward.23} parent=47 // loop_pre_header
                _
              $region50: #{ocm_resnet_forward.23} parent=47 // loop_header
                %s224 = sphi 0, %s228
                %p225 = scmp.ge.s32.totalorder %s224, 1
                %s229 = sphi %s214, %s214
                %s230 = sphi %s211, %s211
              $region51: #{ocm_resnet_forward.23} parent=47 // loop_header_branch
                %227 = sbr.rel (%p225) target = $region55
              $region52: #{ocm_resnet_forward.23} parent=47 // loop_body
                %v231 = vld [vmem:[%s229] sm:%s222]
                %232 = vst [vmem:[%s230] sm:%s222] %v231
                %v233 = vld [vmem:[%s229 + $0x10] sm:%s222]
                %234 = vst [vmem:[%s230 + $0x8] sm:%s222] %v233
                %v235 = vld [vmem:[%s229 + $0x20] sm:%s222]
                %236 = vst [vmem:[%s230 + $0x10] sm:%s222] %v235
                %v237 = vld [vmem:[%s229 + $0x30] sm:%s222]
                %238 = vst [vmem:[%s230 + $0x18] sm:%s222] %v237
                %v239 = vld [vmem:[%s229 + $0x40] sm:%s222]
                %240 = vst [vmem:[%s230 + $0x20] sm:%s222] %v239
                %v241 = vld [vmem:[%s229 + $0x50] sm:%s222]
                %242 = vst [vmem:[%s230 + $0x28] sm:%s222] %v241
                %v243 = vld [vmem:[%s229 + $0x60] sm:%s222]
                %244 = vst [vmem:[%s230 + $0x30] sm:%s222] %v243
                %v245 = vld [vmem:[%s229 + $0x70] sm:%s222]
                %246 = vst [vmem:[%s230 + $0x38] sm:%s222] %v245
                %v247 = vld [vmem:[%s229 + $0x80] sm:%s222]
                %248 = vst [vmem:[%s230 + $0x40] sm:%s222] %v247
                %v249 = vld [vmem:[%s229 + $0x90] sm:%s222]
                %250 = vst [vmem:[%s230 + $0x48] sm:%s222] %v249
                %v251 = vld [vmem:[%s229 + $0xa0] sm:%s222]
                %252 = vst [vmem:[%s230 + $0x50] sm:%s222] %v251
                %v253 = vld [vmem:[%s229 + $0xb0] sm:%s222]
                %254 = vst [vmem:[%s230 + $0x58] sm:%s222] %v253
                %v255 = vld [vmem:[%s229 + $0xc0] sm:%s222]
                %256 = vst [vmem:[%s230 + $0x60] sm:%s222] %v255
                %v257 = vld [vmem:[%s229 + $0xd0] sm:%s222]
                %258 = vst [vmem:[%s230 + $0x68] sm:%s222] %v257
                %v259 = vld [vmem:[%s229 + $0xe0] sm:%s222]
                %260 = vst [vmem:[%s230 + $0x70] sm:%s222] %v259
                %v261 = vld [vmem:[%s229 + $0xf0] sm:%s222]
                %262 = vst [vmem:[%s230 + $0x78] sm:%s222] %v261
                %v263 = vld [vmem:[%s229 + $0x100] sm:%s222]
                %264 = vst [vmem:[%s230 + $0x80] sm:%s222] %v263
                %v265 = vld [vmem:[%s229 + $0x110] sm:%s222]
                %266 = vst [vmem:[%s230 + $0x88] sm:%s222] %v265
              $region53: #{ocm_resnet_forward.23} parent=47 // loop_footer
                %s228 = sadd.s32 1, %s224
              $region54: #{ocm_resnet_forward.23} parent=47 // loop_footer_branch
                %223 = sbr.rel target = $region50
              $region55: #{ocm_resnet_forward.23} parent=47 // loop_exit
                _
            $region48: #{ocm_resnet_forward.23} parent=39 // pred_fallthru
              _
          $region40: #{ocm_resnet_forward.23} parent=35 // pred_fallthru
            _
          %315 = vnop
        $region36: #{ocm_resnet_forward.23} parent=31 // pred_fallthru
          _
        // Predicated region
        $region71: #{ocm_resnet_forward.23} parent=31 // pred_check
          %p316 = pneg %p121
        $region72: #{ocm_resnet_forward.23} parent=31 // pred_check_branch
          %318 = sbr.rel (%p316) target = $region74
        $region73: #{ocm_resnet_forward.23} parent=31 // pred_region
          %s319 = smul.u32 2, %s12
          %p320 = scmp.lt.s32.totalorder %s319, 3
          %s321 = scalar_select %p320, %s319, 3
          %s322 = smul.addr %s321, 4
          %s323 = scalar_lea.vmem %s4, %s322
          %s324 = smul.u32 2, %s12
        $region74: #{ocm_resnet_forward.23} parent=31 // pred_fallthru
          _
      $region32: #{ocm_resnet_forward.23} parent=5 // pred_fallthru
        _
      %p325 = scmp.le.s32.totalorder 1, %s12
      %p326 = scmp.lt.s32.totalorder %s12, 3
      %p327 = pnand %p325, %p326
      %p328 = pneg %p327
      // Predicated region
      $region75: #{ocm_resnet_forward.23} parent=5 // pred_check
        _
      $region76: #{ocm_resnet_forward.23} parent=5 // pred_check_branch
        %330 = sbr.rel (%p327) target = $region78
      $region77: #{ocm_resnet_forward.23} parent=5 // pred_region
        %s331 = ssub.s32 %s12, 1
        %s332 = sand.u32 %s46, 1
        %s333 = sand.u32 %s46, 1
        %s334 = smul.addr %s333, 144
        %s335 = scalar_lea.vmem [#allocation2], %s334
        // Predicated region
        $region79: #{ocm_resnet_forward.23} parent=77 // pred_check
          %p336 = pneg %p59
        $region80: #{ocm_resnet_forward.23} parent=77 // pred_check_branch
          %338 = sbr.rel (%p336) target = $region82
        $region81: #{ocm_resnet_forward.23} parent=77 // pred_region
          _
        $region82: #{ocm_resnet_forward.23} parent=77 // pred_fallthru
          _
        %p339 = pneg %p33
        %p340 = pneg %p30
        %s341 = sand.u32 %s46, 1
        %s342 = sand.u32 %s46, 1
        %s343 = smul.addr %s342, 144
        %s344 = scalar_lea.vmem [#allocation2], %s343
        %p345 = pneg %p59
        %p346 = pneg %p56
        %p347 = pneg %p80
        %p348 = pneg %p77
        %p349 = pneg %p101
        %p350 = pneg %p98
        %s351 = smul.u32 2, %s17
        %p352 = scmp.lt.s32.totalorder %s351, 3
        %s353 = scalar_select %p352, %s351, 3
        %s354 = smul.addr %s353, 4
        %s355 = scalar_lea.vmem %s4, %s354
        %p356 = pneg %p127
        %p357 = pneg %p124
        %p358 = pneg %p148
        %p359 = pneg %p145
        %p360 = pneg %p174
        %p361 = pneg %p171
        %s362 = sand.u32 %s161, 1
        %s363 = sand.u32 %s161, 1
        %s364 = smul.addr %s363, 32
        %s365 = scalar_lea.vmem [#allocation3], %s364
        %s366 = smul.u32 2, %s17
        %s367 = smul.u32 2, %s17
        %p368 = scmp.lt.s32.totalorder %s367, 3
        %s369 = scalar_select %p368, %s367, 3
        %s370 = smul.addr %s369, 4
        %s371 = scalar_lea.vmem %s4, %s370
        %s372 = smul.u32 2, %s17
        %s373 = smul.u32 2, %s17
        %v375 = vld [vmem:[%s0] sm:$0xff]
        %v376 = vld [vmem:[%s0 + $0x8] sm:$0xff]
        %v377 = vld [vmem:[%s335] sm:$0xff]
        %v378 = vld [vmem:[%s335 + $0x8] sm:$0xff]
        %v379 = vld [vmem:[%s335 + $0x10] sm:$0xff]
        %v380 = vld [vmem:[%s335 + $0x18] sm:$0xff]
        %v381 = vld [vmem:[%s335 + $0x20] sm:$0xff]
        %v382 = vld [vmem:[%s335 + $0x28] sm:$0xff]
        %v383 = vld [vmem:[%s335 + $0x30] sm:$0xff]
        %v384 = vld [vmem:[%s335 + $0x38] sm:$0xff]
        %v385 = vld [vmem:[%s335 + $0x40] sm:$0xff]
        %v386 = vld [vmem:[%s335 + $0x48] sm:$0xff]
        %v387 = vld [vmem:[%s335 + $0x50] sm:$0xff]
        %v388 = vld [vmem:[%s335 + $0x58] sm:$0xff]
        %v389 = vld [vmem:[%s335 + $0x60] sm:$0xff]
        %v390 = vld [vmem:[%s335 + $0x68] sm:$0xff]
        %v391 = vld [vmem:[%s335 + $0x70] sm:$0xff]
        %v392 = vld [vmem:[%s335 + $0x78] sm:$0xff]
        %v393 = vld [vmem:[%s335 + $0x80] sm:$0xff]
        %v394 = vld [vmem:[%s335 + $0x88] sm:$0xff]
        %v395 = vld [vmem:[%s3] sm:$0xf]
        %v396 = vld [vmem:[%s3 + $0x4] sm:$0xf]
        %v397 = vld [vmem:[%s371] sm:$0xff]
        %v400 = vunpack.c.l.b16 %v395
        %v401 = vunpack.c.l.b16 %v396
        %v402 = vpack.c.b16 %v401, %v400
        %v404 = vunpack.c.l.b16 %v397
        %v405 = vunpack.c.h.b16 %v397
        %v406 = vpack.c.b16 %v404, %v404
        %v407 = vpack.c.b16 %v405, %v405
        %vm408 = vcmask 64512
        %v410 = vsel %vm408, %v402, 0
        %vm412 = vcmask 1043456
        %v414 = vsel %vm412, %v406, 0
        %v417 = vsel %vm412, %v407, 0
        %419 = vmatprep.subr.bf16.mxu0 0
        %420 = vmatpush1.bf16.msra.mxu0 0
        %421 = vmatprep.subr.bf16.mxu0 0
        %422 = vmatpush1.bf16.msra.mxu0 0
        %423 = vmatprep.subr.bf16.mxu0 0
        %424 = vmatpush1.bf16.msra.mxu0 0
        %425 = vmatprep.subr.bf16.mxu0 0
        %426 = vmatpush1.bf16.msra.mxu0 0
        %427 = vmatprep.subr.bf16.mxu0 0
        %428 = vmatpush1.bf16.msra.mxu0 0
        %429 = vmatprep.subr.bf16.mxu0 0
        %430 = vmatpush1.bf16.msra.mxu0 0
        %431 = vmatprep.subr.bf16.mxu0 0
        %432 = vmatpush1.bf16.msra.mxu0 0
        %433 = vmatprep.subr.bf16.mxu0 %v417
        %434 = vmatpush1.bf16.msra.mxu0 %v414
        %435 = vmatprep.subr.bf16.mxu0 0
        %436 = vmatpush2.bf16.msra.mxu0 0
        %437 = vmatprep.subr.bf16.mxu0 0
        %438 = vmatpush2.bf16.msra.mxu0 0
        %439 = vmatprep.subr.bf16.mxu0 0
        %440 = vmatpush2.bf16.msra.mxu0 0
        %441 = vmatprep.subr.bf16.mxu0 0
        %442 = vmatpush2.bf16.msra.mxu0 0
        %443 = vmatprep.subr.bf16.mxu0 0
        %444 = vmatpush2.bf16.msra.mxu0 0
        %445 = vmatprep.subr.bf16.mxu0 0
        %446 = vmatpush2.bf16.msra.mxu0 0
        %447 = vmatprep.subr.bf16.mxu0 0
        %448 = vmatpush2.bf16.msra.mxu0 0
        %449 = vmatprep.subr.bf16.mxu0 0
        %450 = vmatpush2.bf16.msra.mxu0 0
        %451 = vmatprep.mubr.bf16.mxu0 0
        %452 = vmatmul.mubr.bf16.gmra.mxu0 %v410
        %v453 = vpop.f32.mrf.mxu0
        %v454 = vadd.f32 0.0, %v453
        %v455 = vpop.f32.mrf.mxu0
        %v456 = vadd.f32 0.0, %v455
        %v457 = vpop.f32.mrf.mxu0
        %v458 = vadd.f32 0.0, %v457
        %v459 = vpop.f32.mrf.mxu0
        %v460 = vadd.f32 0.0, %v459
        %461 = vdwg.mxu0
        %v462 = vld [vmem:[%s2] sm:$0xff]
        %v463 = vld [vmem:[%s2 + $0x8] sm:$0xff]
        %465 = vset.pattern.permute.xlu0 0
        %466 = vperm.xlu0 %465, %v462
        %v467 = vpop.permute.xlu0 %466
        %470 = vset.pattern.permute.xlu0 0
        %471 = vperm.xlu0 %470, %v463
        %v472 = vpop.permute.xlu0 %471
        %v476 = vunpack.c.l.b16 %v375
        %v477 = vunpack.c.h.b16 %v375
        %v478 = vunpack.c.l.b16 %v376
        %v479 = vunpack.c.h.b16 %v376
        %v480 = vpack.c.b16 %v478, %v476
        %v481 = vpack.c.b16 %v479, %v477
        %v501 = vunpack.c.l.b16 %v377
        %v502 = vunpack.c.h.b16 %v377
        %v503 = vunpack.c.l.b16 %v378
        %v504 = vunpack.c.h.b16 %v378
        %v505 = vunpack.c.l.b16 %v379
        %v506 = vunpack.c.h.b16 %v379
        %v507 = vunpack.c.l.b16 %v380
        %v508 = vunpack.c.h.b16 %v380
        %v509 = vunpack.c.l.b16 %v381
        %v510 = vunpack.c.h.b16 %v381
        %v511 = vunpack.c.l.b16 %v382
        %v512 = vunpack.c.h.b16 %v382
        %v513 = vunpack.c.l.b16 %v383
        %v514 = vunpack.c.h.b16 %v383
        %v515 = vunpack.c.l.b16 %v384
        %v516 = vunpack.c.h.b16 %v384
        %v517 = vunpack.c.l.b16 %v385
        %v518 = vunpack.c.h.b16 %v385
        %v519 = vunpack.c.l.b16 %v386
        %v520 = vunpack.c.h.b16 %v386
        %v521 = vunpack.c.l.b16 %v387
        %v522 = vunpack.c.h.b16 %v387
        %v523 = vunpack.c.l.b16 %v388
        %v524 = vunpack.c.h.b16 %v388
        %v525 = vunpack.c.l.b16 %v389
        %v526 = vunpack.c.h.b16 %v389
        %v527 = vunpack.c.l.b16 %v390
        %v528 = vunpack.c.h.b16 %v390
        %v529 = vunpack.c.l.b16 %v391
        %v530 = vunpack.c.h.b16 %v391
        %v531 = vunpack.c.l.b16 %v392
        %v532 = vunpack.c.h.b16 %v392
        %v533 = vunpack.c.l.b16 %v393
        %v534 = vunpack.c.h.b16 %v393
        %v535 = vunpack.c.l.b16 %v394
        %v536 = vunpack.c.h.b16 %v394
        %v537 = vpack.c.b16 %v503, %v501
        %v538 = vpack.c.b16 %v504, %v502
        %v539 = vpack.c.b16 %v507, %v505
        %v540 = vpack.c.b16 %v508, %v506
        %v541 = vpack.c.b16 %v511, %v509
        %v542 = vpack.c.b16 %v512, %v510
        %v543 = vpack.c.b16 %v515, %v513
        %v544 = vpack.c.b16 %v516, %v514
        %v545 = vpack.c.b16 %v519, %v517
        %v546 = vpack.c.b16 %v520, %v518
        %v547 = vpack.c.b16 %v523, %v521
        %v548 = vpack.c.b16 %v524, %v522
        %v549 = vpack.c.b16 %v527, %v525
        %v550 = vpack.c.b16 %v528, %v526
        %v551 = vpack.c.b16 %v531, %v529
        %v552 = vpack.c.b16 %v532, %v530
        %v553 = vpack.c.b16 %v535, %v533
        %v554 = vpack.c.b16 %v536, %v534
        %vm573 = vcmask 130048
        %v575 = vsel %vm573, %v481, 0
        %577 = vmatprep.subr.bf16.mxu0 %v552
        %578 = vmatpush1.bf16.msra.mxu0 %v551
        %579 = vmatprep.subr.bf16.mxu0 %v550
        %580 = vmatpush1.bf16.msra.mxu0 %v549
        %581 = vmatprep.subr.bf16.mxu0 %v548
        %582 = vmatpush1.bf16.msra.mxu0 %v547
        %583 = vmatprep.subr.bf16.mxu0 %v546
        %584 = vmatpush1.bf16.msra.mxu0 %v545
        %585 = vmatprep.subr.bf16.mxu0 %v544
        %586 = vmatpush1.bf16.msra.mxu0 %v543
        %587 = vmatprep.subr.bf16.mxu0 %v542
        %588 = vmatpush1.bf16.msra.mxu0 %v541
        %589 = vmatprep.subr.bf16.mxu0 %v540
        %590 = vmatpush1.bf16.msra.mxu0 %v539
        %591 = vmatprep.subr.bf16.mxu0 %v538
        %592 = vmatpush1.bf16.msra.mxu0 %v537
        %593 = vmatprep.subr.bf16.mxu0 0
        %594 = vmatpush2.bf16.msra.mxu0 0
        %595 = vmatprep.subr.bf16.mxu0 0
        %596 = vmatpush2.bf16.msra.mxu0 0
        %597 = vmatprep.subr.bf16.mxu0 0
        %598 = vmatpush2.bf16.msra.mxu0 0
        %599 = vmatprep.subr.bf16.mxu0 0
        %600 = vmatpush2.bf16.msra.mxu0 0
        %601 = vmatprep.subr.bf16.mxu0 0
        %602 = vmatpush2.bf16.msra.mxu0 0
        %603 = vmatprep.subr.bf16.mxu0 0
        %604 = vmatpush2.bf16.msra.mxu0 0
        %605 = vmatprep.subr.bf16.mxu0 0
        %606 = vmatpush2.bf16.msra.mxu0 0
        %607 = vmatprep.subr.bf16.mxu0 %v554
        %608 = vmatpush2.bf16.msra.mxu0 %v553
        %609 = vmatprep.mubr.bf16.mxu0 %v575
        %610 = vmatmul.mubr.bf16.gmra.mxu0 %v480
        %v611 = vpop.f32.mrf.mxu0
        %v612 = vadd.f32 %v467, %v611
        %v613 = vpop.f32.mrf.mxu0
        %v614 = vadd.f32 %v467, %v613
        %v615 = vpop.f32.mrf.mxu0
        %v616 = vadd.f32 %v472, %v615
        %v617 = vpop.f32.mrf.mxu0
        %v618 = vadd.f32 %v472, %v617
        %619 = vdwg.mxu0
        %v620 = vadd.f32 %v612, %v454
        %v621 = vadd.f32 %v614, %v456
        %v622 = vadd.f32 %v616, %v458
        %v623 = vadd.f32 %v618, %v460
        %v624 = vld [vmem:[%s5] sm:$0xff]
        %v625 = vld [vmem:[%s5 + $0x8] sm:$0xff]
        %627 = vset.pattern.permute.xlu0 0
        %628 = vperm.xlu0 %627, %v624
        %v629 = vpop.permute.xlu0 %628
        %632 = vset.pattern.permute.xlu0 0
        %633 = vperm.xlu0 %632, %v625
        %v634 = vpop.permute.xlu0 %633
        %v636 = vadd.f32 %v620, %v629
        %v637 = vadd.f32 %v621, %v629
        %v638 = vadd.f32 %v622, %v634
        %v639 = vadd.f32 %v623, %v634
        %v640 = vmax.f32 %v636, 0.0
        %v641 = vmax.f32 %v637, 0.0
        %v642 = vmax.f32 %v638, 0.0
        %v643 = vmax.f32 %v639, 0.0
        %644 = vst [vmem:[%s365] sm:$0xff] %v640
        %645 = vst [vmem:[%s365 + $0x8] sm:$0xff] %v641
        %646 = vst [vmem:[%s365 + $0x10] sm:$0xff] %v642
        %647 = vst [vmem:[%s365 + $0x18] sm:$0xff] %v643
        %s648 = sand.u32 %s161, 1
        %s649 = sand.u32 %s161, 1
        %s650 = smul.addr %s649, 32
        %s651 = scalar_lea.vmem [#allocation3], %s650
        // Predicated region
        $region83: #{ocm_resnet_forward.23} parent=77 // pred_check
          %p652 = pneg %p171
        $region84: #{ocm_resnet_forward.23} parent=77 // pred_check_branch
          %654 = sbr.rel (%p652) target = $region86
        $region85: #{ocm_resnet_forward.23} parent=77 // pred_region
          %s655 = smul.u32 2, %s17
          %s656 = smul.addr %s655, 8
          %s657 = scalar_lea.vmem %s6, %s656
          // Predicated region
          $region87: #{ocm_resnet_forward.23} parent=85 // pred_check
            _
          $region88: #{ocm_resnet_forward.23} parent=85 // pred_check_branch
            %659 = sbr.rel (0) target = $region90
          $region89: #{ocm_resnet_forward.23} parent=85 // pred_region
            // Predicated region
            $region91: #{ocm_resnet_forward.23} parent=89 // pred_check
              _
            $region92: #{ocm_resnet_forward.23} parent=89 // pred_check_branch
              %661 = sbr.rel (0) target = $region94
            $region93: #{ocm_resnet_forward.23} parent=89 // pred_region
              loop: start=0, step=1, limit=1
              $region95: #{ocm_resnet_forward.23} parent=93 // loop_pre_header
                _
              $region96: #{ocm_resnet_forward.23} parent=93 // loop_header
                %s663 = sphi 0, %s667
                %p664 = scmp.ge.s32.totalorder %s663, 1
                %s668 = sphi %s651, %s651
                %s669 = sphi %s657, %s657
              $region97: #{ocm_resnet_forward.23} parent=93 // loop_header_branch
                %666 = sbr.rel (%p664) target = $region101
              $region98: #{ocm_resnet_forward.23} parent=93 // loop_body
                %v670 = vld [vmem:[%s668] sm:$0xff]
                %671 = vst [vmem:[%s669] sm:$0xff] %v670
                %v672 = vld [vmem:[%s668 + $0x8] sm:$0xff]
                %673 = vst [vmem:[%s669 + $0x8] sm:$0xff] %v672
                %v674 = vld [vmem:[%s668 + $0x10] sm:$0xff]
                %675 = vst [vmem:[%s669 + $0x20] sm:$0xff] %v674
                %v676 = vld [vmem:[%s668 + $0x18] sm:$0xff]
                %677 = vst [vmem:[%s669 + $0x28] sm:$0xff] %v676
              $region99: #{ocm_resnet_forward.23} parent=93 // loop_footer
                %s667 = sadd.s32 1, %s663
              $region100: #{ocm_resnet_forward.23} parent=93 // loop_footer_branch
                %662 = sbr.rel target = $region96
              $region101: #{ocm_resnet_forward.23} parent=93 // loop_exit
                _
            $region94: #{ocm_resnet_forward.23} parent=89 // pred_fallthru
              _
            // Predicated region
            $region102: #{ocm_resnet_forward.23} parent=89 // pred_check
              _
            $region103: #{ocm_resnet_forward.23} parent=89 // pred_check_branch
              %679 = sbr.rel target = $region105
            $region104: #{ocm_resnet_forward.23} parent=89 // pred_region
              _
            $region105: #{ocm_resnet_forward.23} parent=89 // pred_fallthru
              _
          $region90: #{ocm_resnet_forward.23} parent=85 // pred_fallthru
            _
          %680 = vnop
        $region86: #{ocm_resnet_forward.23} parent=77 // pred_fallthru
          _
      $region78: #{ocm_resnet_forward.23} parent=5 // pred_fallthru
        _
      %p681 = scmp.le.s32.totalorder 2, %s12
      // Predicated region
      $region106: #{ocm_resnet_forward.23} parent=5 // pred_check
        %p682 = pneg %p681
      $region107: #{ocm_resnet_forward.23} parent=5 // pred_check_branch
        %684 = sbr.rel (%p682) target = $region109
      $region108: #{ocm_resnet_forward.23} parent=5 // pred_region
        %s685 = ssub.s32 %s12, 2
        // Predicated region
        $region110: #{ocm_resnet_forward.23} parent=108 // pred_check
          %p686 = pneg %p177
        $region111: #{ocm_resnet_forward.23} parent=108 // pred_check_branch
          %688 = sbr.rel (%p686) target = $region113
        $region112: #{ocm_resnet_forward.23} parent=108 // pred_region
          %s689 = sand.u32 %s162, 1
          %s690 = sand.u32 %s162, 1
          %s691 = smul.addr %s690, 32
          %s692 = scalar_lea.vmem [#allocation3], %s691
        $region113: #{ocm_resnet_forward.23} parent=108 // pred_fallthru
          _
      $region109: #{ocm_resnet_forward.23} parent=5 // pred_fallthru
        _
    $region6: #{ocm_resnet_forward.23} parent=1 // loop_footer
      %s16 = sadd.s32 1, %s12
    $region7: #{ocm_resnet_forward.23} parent=1 // loop_footer_branch
      %11 = sbr.rel target = $region3
    $region8: #{ocm_resnet_forward.23} parent=1 // loop_exit
      _

// kernel: ocm_resnet_forward.24
$region0: #{ocm_resnet_forward.24}
  #allocation0 [shape = 'u32[]', space=smem, size = 0x4, offset = 0x4, fixed_abs, tag = 'smem constant byte address 0x4 - core index']
  #allocation1 [shape = 'u32[144,128]{1,0:T(1,128)}', space=vmem, size = 0x12000, scoped, tag = 'internal scratch']
  %s0 = inlined_call_operand.vmem [shape: bf16[16,144], index: 0, kind: input, shape index: {}]
  %s1 = inlined_call_operand.vmem [shape: bf16[144,512], index: 1, kind: input, shape index: {}]
  %s2 = inlined_call_operand.vmem [shape: f32[16,1], index: 2, kind: input, shape index: {}]
  %s3 = inlined_call_operand.vmem [shape: f32[16,512], index: 3, kind: output, shape index: {}]
  %s4 = sld [smem:[#allocation0]]
  $region102: #{ocm_resnet_forward.24} parent=0
    _
  %s6 = ssub.s32 1, %s4
  %s7 = scalar_select 0, %s6, %s4
  $region1: #{ocm_resnet_forward.24} parent=0
    #allocation2 [shape = 'u8[147456]{0}', space=vmem, size = 0x24000, scoped, tag = 'input window, operand 1']
    #allocation3 [shape = 'u8[32768]{0}', space=vmem, size = 0x8000, scoped, tag = 'output window, operand 0']
    loop: start=0, step=1, limit=4
    $region2: #{ocm_resnet_forward.24} parent=1 // loop_pre_header
      _
    $region3: #{ocm_resnet_forward.24} parent=1 // loop_header
      %s9 = sphi 0, %s13
      %p10 = scmp.ge.s32.totalorder %s9, 4
      %s17 = sphi 0, %s17
      %s19 = sphi 0, %s17
      %s20 = sphi 0, %s19
      %s34 = sphi 0, %s20
      %s40 = sphi 0, %s42
      %s43 = sphi 0, %s40
      %s44 = sphi 0, %s43
      %s60 = sphi 0, %s44
      %s64 = sphi 0, %s64
      %s66 = sphi 0, %s64
      %s67 = sphi 0, %s66
      %s81 = sphi 0, %s67
      %s87 = sphi 0, %s89
      %s90 = sphi 0, %s87
      %s91 = sphi 0, %s90
      %s107 = sphi 0, %s91
    $region4: #{ocm_resnet_forward.24} parent=1 // loop_header_branch
      %12 = sbr.rel (%p10) target = $region8
    $region5: #{ocm_resnet_forward.24} parent=1 // loop_body
      %s14 = ssub.s32 %s9, 1
      %s15 = ssub.s32 %s9, 2
      %s16 = sadd.s32 %s9, 1
      %s18 = sadd.s32 %s17, 1
      %p21 = scmp.eq.s32.totalorder %s9, 1
      %p22 = scmp.ne.s32.totalorder %s17, %s19
      %p23 = scmp.eq.s32.totalorder %s9, 0
      %p24 = por %p22, %p23
      %p25 = scmp.ne.s32.totalorder %s17, %s19
      %p26 = scmp.eq.s32.totalorder %s14, 1
      %p27 = por %p25, %p26
      %p28 = scmp.ne.s32.totalorder %s19, %s20
      %p29 = scmp.eq.s32.totalorder %s14, 0
      %p30 = por %p28, %p29
      %p31 = scmp.ne.s32.totalorder %s19, %s20
      %p32 = scmp.eq.s32.totalorder %s15, 1
      %p33 = por %p31, %p32
      %p35 = scmp.ne.s32.totalorder %s20, %s34
      %p36 = scmp.eq.s32.totalorder %s15, 0
      %p37 = por %p35, %p36
      %s38 = ssub.s32 %s9, %s16
      %p39 = scmp.eq.s32.totalorder %s38, 0
      %s41 = sadd.s32 %s40, 1
      %s42 = scalar_select %p39, %s40, %s41
      %p45 = pneg %p39
      %p46 = scmp.eq.s32.totalorder %s9, 1
      %p47 = por %p45, %p46
      %p48 = scmp.ne.s32.totalorder %s40, %s43
      %p49 = scmp.eq.s32.totalorder %s9, 0
      %p50 = por %p48, %p49
      %p51 = scmp.ne.s32.totalorder %s40, %s43
      %p52 = scmp.eq.s32.totalorder %s14, 1
      %p53 = por %p51, %p52
      %p54 = scmp.ne.s32.totalorder %s43, %s44
      %p55 = scmp.eq.s32.totalorder %s14, 0
      %p56 = por %p54, %p55
      %p57 = scmp.ne.s32.totalorder %s43, %s44
      %p58 = scmp.eq.s32.totalorder %s15, 1
      %p59 = por %p57, %p58
      %p61 = scmp.ne.s32.totalorder %s44, %s60
      %p62 = scmp.eq.s32.totalorder %s15, 0
      %p63 = por %p61, %p62
      %s65 = sadd.s32 %s64, 1
      %p68 = scmp.eq.s32.totalorder %s9, 1
      %p69 = scmp.ne.s32.totalorder %s64, %s66
      %p70 = scmp.eq.s32.totalorder %s9, 0
      %p71 = por %p69, %p70
      %p72 = scmp.ne.s32.totalorder %s64, %s66
      %p73 = scmp.eq.s32.totalorder %s14, 1
      %p74 = por %p72, %p73
      %p75 = scmp.ne.s32.totalorder %s66, %s67
      %p76 = scmp.eq.s32.totalorder %s14, 0
      %p77 = por %p75, %p76
      %p78 = scmp.ne.s32.totalorder %s66, %s67
      %p79 = scmp.eq.s32.totalorder %s15, 1
      %p80 = por %p78, %p79
      %p82 = scmp.ne.s32.totalorder %s67, %s81
      %p83 = scmp.eq.s32.totalorder %s15, 0
      %p84 = por %p82, %p83
      %s85 = ssub.s32 %s9, %s16
      %p86 = scmp.eq.s32.totalorder %s85, 0
      %s88 = sadd.s32 %s87, 1
      %s89 = scalar_select %p86, %s87, %s88
      %p92 = pneg %p86
      %p93 = scmp.eq.s32.totalorder %s9, 1
      %p94 = por %p92, %p93
      %p95 = scmp.ne.s32.totalorder %s87, %s90
      %p96 = scmp.eq.s32.totalorder %s9, 0
      %p97 = por %p95, %p96
      %p98 = scmp.ne.s32.totalorder %s87, %s90
      %p99 = scmp.eq.s32.totalorder %s14, 1
      %p100 = por %p98, %p99
      %p101 = scmp.ne.s32.totalorder %s90, %s91
      %p102 = scmp.eq.s32.totalorder %s14, 0
      %p103 = por %p101, %p102
      %p104 = scmp.ne.s32.totalorder %s90, %s91
      %p105 = scmp.eq.s32.totalorder %s15, 1
      %p106 = por %p104, %p105
      %p108 = scmp.ne.s32.totalorder %s91, %s107
      %p109 = scmp.eq.s32.totalorder %s15, 0
      %p110 = por %p108, %p109
      %p111 = scmp.le.s32.totalorder 1, %s9
      %p112 = scmp.lt.s32.totalorder %s9, 3
      %p113 = pnand %p111, %p112
      %p114 = pneg %p113
      // Predicated region
      $region9: #{ocm_resnet_forward.24} parent=5 // pred_check
        _
      $region10: #{ocm_resnet_forward.24} parent=5 // pred_check_branch
        %116 = sbr.rel (%p113) target = $region12
      $region11: #{ocm_resnet_forward.24} parent=5 // pred_region
        %s117 = ssub.s32 %s9, 1
        // Predicated region
        $region13: #{ocm_resnet_forward.24} parent=11 // pred_check
          %p118 = pneg %p30
        $region14: #{ocm_resnet_forward.24} parent=11 // pred_check_branch
          %120 = sbr.rel (%p118) target = $region16
        $region15: #{ocm_resnet_forward.24} parent=11 // pred_region
          _
        $region16: #{ocm_resnet_forward.24} parent=11 // pred_fallthru
          _
        // Predicated region
        $region17: #{ocm_resnet_forward.24} parent=11 // pred_check
          %p121 = pneg %p77
        $region18: #{ocm_resnet_forward.24} parent=11 // pred_check_branch
          %123 = sbr.rel (%p121) target = $region20
        $region19: #{ocm_resnet_forward.24} parent=11 // pred_region
          _
        $region20: #{ocm_resnet_forward.24} parent=11 // pred_fallthru
          _
      $region12: #{ocm_resnet_forward.24} parent=5 // pred_fallthru
        _
      %p124 = scmp.lt.s32.totalorder %s9, 2
      // Predicated region
      $region21: #{ocm_resnet_forward.24} parent=5 // pred_check
        %p125 = pneg %p124
      $region22: #{ocm_resnet_forward.24} parent=5 // pred_check_branch
        %127 = sbr.rel (%p125) target = $region24
      $region23: #{ocm_resnet_forward.24} parent=5 // pred_region
        // Predicated region
        $region25: #{ocm_resnet_forward.24} parent=23 // pred_check
          %p128 = pneg %p50
        $region26: #{ocm_resnet_forward.24} parent=23 // pred_check_branch
          %130 = sbr.rel (%p128) target = $region28
        $region27: #{ocm_resnet_forward.24} parent=23 // pred_region
          %s131 = sand.u32 %s40, 1
          %s132 = sand.u32 %s40, 1
          %s133 = smul.addr %s132, 144
          %s134 = scalar_lea.vmem [#allocation2], %s133
          %s135 = smul.u32 2, %s9
          %s136 = smul.addr %s135, 4
          %s137 = scalar_lea.vmem %s1, %s136
          // Predicated region
          $region29: #{ocm_resnet_forward.24} parent=27 // pred_check
            _
          $region30: #{ocm_resnet_forward.24} parent=27 // pred_check_branch
            %139 = sbr.rel (0) target = $region32
          $region31: #{ocm_resnet_forward.24} parent=27 // pred_region
            // Predicated region
            $region33: #{ocm_resnet_forward.24} parent=31 // pred_check
              _
            $region34: #{ocm_resnet_forward.24} parent=31 // pred_check_branch
              %141 = sbr.rel (0) target = $region36
            $region35: #{ocm_resnet_forward.24} parent=31 // pred_region
              // Predicated region
              $region48: #{ocm_resnet_forward.24} parent=35 // pred_check
                _
              $region49: #{ocm_resnet_forward.24} parent=35 // pred_check_branch
                %191 = sbr.rel (0) target = $region51
              $region50: #{ocm_resnet_forward.24} parent=35 // pred_region
                loop: start=0, step=1, limit=1
                $region52: #{ocm_resnet_forward.24} parent=50 // loop_pre_header
                  _
                $region53: #{ocm_resnet_forward.24} parent=50 // loop_header
                  %s193 = sphi 0, %s197
                  %p194 = scmp.ge.s32.totalorder %s193, 1
                  %s198 = sphi %s137, %s137
                  %s199 = sphi %s134, %s134
                $region54: #{ocm_resnet_forward.24} parent=50 // loop_header_branch
                  %196 = sbr.rel (%p194) target = $region58
                $region55: #{ocm_resnet_forward.24} parent=50 // loop_body
                  %v200 = vld [vmem:[%s198] sm:$0xff]
                  %201 = vst [vmem:[%s199] sm:$0xff] %v200
                  %v202 = vld [vmem:[%s198 + $0x10] sm:$0xff]
                  %203 = vst [vmem:[%s199 + $0x8] sm:$0xff] %v202
                  %v204 = vld [vmem:[%s198 + $0x20] sm:$0xff]
                  %205 = vst [vmem:[%s199 + $0x10] sm:$0xff] %v204
                  %v206 = vld [vmem:[%s198 + $0x30] sm:$0xff]
                  %207 = vst [vmem:[%s199 + $0x18] sm:$0xff] %v206
                  %v208 = vld [vmem:[%s198 + $0x40] sm:$0xff]
                  %209 = vst [vmem:[%s199 + $0x20] sm:$0xff] %v208
                  %v210 = vld [vmem:[%s198 + $0x50] sm:$0xff]
                  %211 = vst [vmem:[%s199 + $0x28] sm:$0xff] %v210
                  %v212 = vld [vmem:[%s198 + $0x60] sm:$0xff]
                  %213 = vst [vmem:[%s199 + $0x30] sm:$0xff] %v212
                  %v214 = vld [vmem:[%s198 + $0x70] sm:$0xff]
                  %215 = vst [vmem:[%s199 + $0x38] sm:$0xff] %v214
                  %v216 = vld [vmem:[%s198 + $0x80] sm:$0xff]
                  %217 = vst [vmem:[%s199 + $0x40] sm:$0xff] %v216
                  %v218 = vld [vmem:[%s198 + $0x90] sm:$0xff]
                  %219 = vst [vmem:[%s199 + $0x48] sm:$0xff] %v218
                  %v220 = vld [vmem:[%s198 + $0xa0] sm:$0xff]
                  %221 = vst [vmem:[%s199 + $0x50] sm:$0xff] %v220
                  %v222 = vld [vmem:[%s198 + $0xb0] sm:$0xff]
                  %223 = vst [vmem:[%s199 + $0x58] sm:$0xff] %v222
                  %v224 = vld [vmem:[%s198 + $0xc0] sm:$0xff]
                  %225 = vst [vmem:[%s199 + $0x60] sm:$0xff] %v224
                  %v226 = vld [vmem:[%s198 + $0xd0] sm:$0xff]
                  %227 = vst [vmem:[%s199 + $0x68] sm:$0xff] %v226
                  %v228 = vld [vmem:[%s198 + $0xe0] sm:$0xff]
                  %229 = vst [vmem:[%s199 + $0x70] sm:$0xff] %v228
                  %v230 = vld [vmem:[%s198 + $0xf0] sm:$0xff]
                  %231 = vst [vmem:[%s199 + $0x78] sm:$0xff] %v230
                  %v232 = vld [vmem:[%s198 + $0x100] sm:$0xff]
                  %233 = vst [vmem:[%s199 + $0x80] sm:$0xff] %v232
                  %v234 = vld [vmem:[%s198 + $0x110] sm:$0xff]
                  %235 = vst [vmem:[%s199 + $0x88] sm:$0xff] %v234
                $region56: #{ocm_resnet_forward.24} parent=50 // loop_footer
                  %s197 = sadd.s32 1, %s193
                $region57: #{ocm_resnet_forward.24} parent=50 // loop_footer_branch
                  %192 = sbr.rel target = $region53
                $region58: #{ocm_resnet_forward.24} parent=50 // loop_exit
                  _
              $region51: #{ocm_resnet_forward.24} parent=35 // pred_fallthru
                _
              // Predicated region
              $region59: #{ocm_resnet_forward.24} parent=35 // pred_check
                _
              $region60: #{ocm_resnet_forward.24} parent=35 // pred_check_branch
                %237 = sbr.rel target = $region62
              $region61: #{ocm_resnet_forward.24} parent=35 // pred_region
                _
              $region62: #{ocm_resnet_forward.24} parent=35 // pred_fallthru
                _
            $region36: #{ocm_resnet_forward.24} parent=31 // pred_fallthru
              _
            // Predicated region
            $region37: #{ocm_resnet_forward.24} parent=31 // pred_check
              _
            $region38: #{ocm_resnet_forward.24} parent=31 // pred_check_branch
              %143 = sbr.rel target = $region40
            $region39: #{ocm_resnet_forward.24} parent=31 // pred_region
              %s145 = ssub.s32 256, 1
              loop: start=0, step=1, limit=1
              $region41: #{ocm_resnet_forward.24} parent=39 // loop_pre_header
                _
              $region42: #{ocm_resnet_forward.24} parent=39 // loop_header
                %s147 = sphi 0, %s151
                %p148 = scmp.ge.s32.totalorder %s147, 1
                %s152 = sphi %s137, %s137
                %s153 = sphi %s134, %s134
              $region43: #{ocm_resnet_forward.24} parent=39 // loop_header_branch
                %150 = sbr.rel (%p148) target = $region47
              $region44: #{ocm_resnet_forward.24} parent=39 // loop_body
                %v154 = vld [vmem:[%s152] sm:%s145]
                %155 = vst [vmem:[%s153] sm:%s145] %v154
                %v156 = vld [vmem:[%s152 + $0x10] sm:%s145]
                %157 = vst [vmem:[%s153 + $0x8] sm:%s145] %v156
                %v158 = vld [vmem:[%s152 + $0x20] sm:%s145]
                %159 = vst [vmem:[%s153 + $0x10] sm:%s145] %v158
                %v160 = vld [vmem:[%s152 + $0x30] sm:%s145]
                %161 = vst [vmem:[%s153 + $0x18] sm:%s145] %v160
                %v162 = vld [vmem:[%s152 + $0x40] sm:%s145]
                %163 = vst [vmem:[%s153 + $0x20] sm:%s145] %v162
                %v164 = vld [vmem:[%s152 + $0x50] sm:%s145]
                %165 = vst [vmem:[%s153 + $0x28] sm:%s145] %v164
                %v166 = vld [vmem:[%s152 + $0x60] sm:%s145]
                %167 = vst [vmem:[%s153 + $0x30] sm:%s145] %v166
                %v168 = vld [vmem:[%s152 + $0x70] sm:%s145]
                %169 = vst [vmem:[%s153 + $0x38] sm:%s145] %v168
                %v170 = vld [vmem:[%s152 + $0x80] sm:%s145]
                %171 = vst [vmem:[%s153 + $0x40] sm:%s145] %v170
                %v172 = vld [vmem:[%s152 + $0x90] sm:%s145]
                %173 = vst [vmem:[%s153 + $0x48] sm:%s145] %v172
                %v174 = vld [vmem:[%s152 + $0xa0] sm:%s145]
                %175 = vst [vmem:[%s153 + $0x50] sm:%s145] %v174
                %v176 = vld [vmem:[%s152 + $0xb0] sm:%s145]
                %177 = vst [vmem:[%s153 + $0x58] sm:%s145] %v176
                %v178 = vld [vmem:[%s152 + $0xc0] sm:%s145]
                %179 = vst [vmem:[%s153 + $0x60] sm:%s145] %v178
                %v180 = vld [vmem:[%s152 + $0xd0] sm:%s145]
                %181 = vst [vmem:[%s153 + $0x68] sm:%s145] %v180
                %v182 = vld [vmem:[%s152 + $0xe0] sm:%s145]
                %183 = vst [vmem:[%s153 + $0x70] sm:%s145] %v182
                %v184 = vld [vmem:[%s152 + $0xf0] sm:%s145]
                %185 = vst [vmem:[%s153 + $0x78] sm:%s145] %v184
                %v186 = vld [vmem:[%s152 + $0x100] sm:%s145]
                %187 = vst [vmem:[%s153 + $0x80] sm:%s145] %v186
                %v188 = vld [vmem:[%s152 + $0x110] sm:%s145]
                %189 = vst [vmem:[%s153 + $0x88] sm:%s145] %v188
              $region45: #{ocm_resnet_forward.24} parent=39 // loop_footer
                %s151 = sadd.s32 1, %s147
              $region46: #{ocm_resnet_forward.24} parent=39 // loop_footer_branch
                %146 = sbr.rel target = $region42
              $region47: #{ocm_resnet_forward.24} parent=39 // loop_exit
                _
            $region40: #{ocm_resnet_forward.24} parent=31 // pred_fallthru
              _
          $region32: #{ocm_resnet_forward.24} parent=27 // pred_fallthru
            _
          %238 = vnop
        $region28: #{ocm_resnet_forward.24} parent=23 // pred_fallthru
          _
      $region24: #{ocm_resnet_forward.24} parent=5 // pred_fallthru
        _
      %p239 = scmp.le.s32.totalorder 1, %s9
      %p240 = scmp.lt.s32.totalorder %s9, 3
      %p241 = pnand %p239, %p240
      %p242 = pneg %p241
      // Predicated region
      $region63: #{ocm_resnet_forward.24} parent=5 // pred_check
        _
      $region64: #{ocm_resnet_forward.24} parent=5 // pred_check_branch
        %244 = sbr.rel (%p241) target = $region66
      $region65: #{ocm_resnet_forward.24} parent=5 // pred_region
        %s245 = ssub.s32 %s9, 1
        %s246 = sand.u32 %s43, 1
        %s247 = sand.u32 %s43, 1
        %s248 = smul.addr %s247, 144
        %s249 = scalar_lea.vmem [#allocation2], %s248
        // Predicated region
        $region67: #{ocm_resnet_forward.24} parent=65 // pred_check
          %p250 = pneg %p56
        $region68: #{ocm_resnet_forward.24} parent=65 // pred_check_branch
          %252 = sbr.rel (%p250) target = $region70
        $region69: #{ocm_resnet_forward.24} parent=65 // pred_region
          _
        $region70: #{ocm_resnet_forward.24} parent=65 // pred_fallthru
          _
        %p253 = pneg %p30
        %p254 = pneg %p27
        %s255 = sand.u32 %s43, 1
        %s256 = sand.u32 %s43, 1
        %s257 = smul.addr %s256, 144
        %s258 = scalar_lea.vmem [#allocation2], %s257
        %p259 = pneg %p56
        %p260 = pneg %p53
        %p261 = pneg %p77
        %p262 = pneg %p74
        %p263 = pneg %p103
        %p264 = pneg %p100
        %s265 = sand.u32 %s90, 1
        %s266 = sand.u32 %s90, 1
        %s267 = smul.addr %s266, 32
        %s268 = scalar_lea.vmem [#allocation3], %s267
        %s269 = smul.u32 2, %s14
        %s270 = smul.u32 2, %s14
        %v272 = vld [vmem:[%s0] sm:$0xff]
        %v273 = vld [vmem:[%s0 + $0x8] sm:$0xff]
        %v274 = vld [vmem:[%s249] sm:$0xff]
        %v275 = vld [vmem:[%s249 + $0x8] sm:$0xff]
        %v276 = vld [vmem:[%s249 + $0x10] sm:$0xff]
        %v277 = vld [vmem:[%s249 + $0x18] sm:$0xff]
        %v278 = vld [vmem:[%s249 + $0x20] sm:$0xff]
        %v279 = vld [vmem:[%s249 + $0x28] sm:$0xff]
        %v280 = vld [vmem:[%s249 + $0x30] sm:$0xff]
        %v281 = vld [vmem:[%s249 + $0x38] sm:$0xff]
        %v282 = vld [vmem:[%s249 + $0x40] sm:$0xff]
        %v283 = vld [vmem:[%s249 + $0x48] sm:$0xff]
        %v284 = vld [vmem:[%s249 + $0x50] sm:$0xff]
        %v285 = vld [vmem:[%s249 + $0x58] sm:$0xff]
        %v286 = vld [vmem:[%s249 + $0x60] sm:$0xff]
        %v287 = vld [vmem:[%s249 + $0x68] sm:$0xff]
        %v288 = vld [vmem:[%s249 + $0x70] sm:$0xff]
        %v289 = vld [vmem:[%s249 + $0x78] sm:$0xff]
        %v290 = vld [vmem:[%s249 + $0x80] sm:$0xff]
        %v291 = vld [vmem:[%s249 + $0x88] sm:$0xff]
        %v292 = vld [vmem:[%s2] sm:$0xff]
        %v293 = vld [vmem:[%s2 + $0x8] sm:$0xff]
        %295 = vset.pattern.permute.xlu0 0
        %296 = vperm.xlu0 %295, %v292
        %v297 = vpop.permute.xlu0 %296
        %300 = vset.pattern.permute.xlu0 0
        %301 = vperm.xlu0 %300, %v293
        %v302 = vpop.permute.xlu0 %301
        %v306 = vunpack.c.l.b16 %v272
        %v307 = vunpack.c.h.b16 %v272
        %v308 = vunpack.c.l.b16 %v273
        %v309 = vunpack.c.h.b16 %v273
        %v310 = vpack.c.b16 %v308, %v306
        %v311 = vpack.c.b16 %v309, %v307
        %v331 = vunpack.c.l.b16 %v274
        %v332 = vunpack.c.h.b16 %v274
        %v333 = vunpack.c.l.b16 %v275
        %v334 = vunpack.c.h.b16 %v275
        %v335 = vunpack.c.l.b16 %v276
        %v336 = vunpack.c.h.b16 %v276
        %v337 = vunpack.c.l.b16 %v277
        %v338 = vunpack.c.h.b16 %v277
        %v339 = vunpack.c.l.b16 %v278
        %v340 = vunpack.c.h.b16 %v278
        %v341 = vunpack.c.l.b16 %v279
        %v342 = vunpack.c.h.b16 %v279
        %v343 = vunpack.c.l.b16 %v280
        %v344 = vunpack.c.h.b16 %v280
        %v345 = vunpack.c.l.b16 %v281
        %v346 = vunpack.c.h.b16 %v281
        %v347 = vunpack.c.l.b16 %v282
        %v348 = vunpack.c.h.b16 %v282
        %v349 = vunpack.c.l.b16 %v283
        %v350 = vunpack.c.h.b16 %v283
        %v351 = vunpack.c.l.b16 %v284
        %v352 = vunpack.c.h.b16 %v284
        %v353 = vunpack.c.l.b16 %v285
        %v354 = vunpack.c.h.b16 %v285
        %v355 = vunpack.c.l.b16 %v286
        %v356 = vunpack.c.h.b16 %v286
        %v357 = vunpack.c.l.b16 %v287
        %v358 = vunpack.c.h.b16 %v287
        %v359 = vunpack.c.l.b16 %v288
        %v360 = vunpack.c.h.b16 %v288
        %v361 = vunpack.c.l.b16 %v289
        %v362 = vunpack.c.h.b16 %v289
        %v363 = vunpack.c.l.b16 %v290
        %v364 = vunpack.c.h.b16 %v290
        %v365 = vunpack.c.l.b16 %v291
        %v366 = vunpack.c.h.b16 %v291
        %v367 = vpack.c.b16 %v333, %v331
        %v368 = vpack.c.b16 %v334, %v332
        %v369 = vpack.c.b16 %v337, %v335
        %v370 = vpack.c.b16 %v338, %v336
        %v371 = vpack.c.b16 %v341, %v339
        %v372 = vpack.c.b16 %v342, %v340
        %v373 = vpack.c.b16 %v345, %v343
        %v374 = vpack.c.b16 %v346, %v344
        %v375 = vpack.c.b16 %v349, %v347
        %v376 = vpack.c.b16 %v350, %v348
        %v377 = vpack.c.b16 %v353, %v351
        %v378 = vpack.c.b16 %v354, %v352
        %v379 = vpack.c.b16 %v357, %v355
        %v380 = vpack.c.b16 %v358, %v356
        %v381 = vpack.c.b16 %v361, %v359
        %v382 = vpack.c.b16 %v362, %v360
        %v383 = vpack.c.b16 %v365, %v363
        %v384 = vpack.c.b16 %v366, %v364
        %vm403 = vcmask 130048
        %v405 = vsel %vm403, %v311, 0
        %407 = vmatprep.subr.bf16.mxu0 %v382
        %408 = vmatpush1.bf16.msra.mxu0 %v381
        %409 = vmatprep.subr.bf16.mxu0 %v380
        %410 = vmatpush1.bf16.msra.mxu0 %v379
        %411 = vmatprep.subr.bf16.mxu0 %v378
        %412 = vmatpush1.bf16.msra.mxu0 %v377
        %413 = vmatprep.subr.bf16.mxu0 %v376
        %414 = vmatpush1.bf16.msra.mxu0 %v375
        %415 = vmatprep.subr.bf16.mxu0 %v374
        %416 = vmatpush1.bf16.msra.mxu0 %v373
        %417 = vmatprep.subr.bf16.mxu0 %v372
        %418 = vmatpush1.bf16.msra.mxu0 %v371
        %419 = vmatprep.subr.bf16.mxu0 %v370
        %420 = vmatpush1.bf16.msra.mxu0 %v369
        %421 = vmatprep.subr.bf16.mxu0 %v368
        %422 = vmatpush1.bf16.msra.mxu0 %v367
        %423 = vmatprep.subr.bf16.mxu0 0
        %424 = vmatpush2.bf16.msra.mxu0 0
        %425 = vmatprep.subr.bf16.mxu0 0
        %426 = vmatpush2.bf16.msra.mxu0 0
        %427 = vmatprep.subr.bf16.mxu0 0
        %428 = vmatpush2.bf16.msra.mxu0 0
        %429 = vmatprep.subr.bf16.mxu0 0
        %430 = vmatpush2.bf16.msra.mxu0 0
        %431 = vmatprep.subr.bf16.mxu0 0
        %432 = vmatpush2.bf16.msra.mxu0 0
        %433 = vmatprep.subr.bf16.mxu0 0
        %434 = vmatpush2.bf16.msra.mxu0 0
        %435 = vmatprep.subr.bf16.mxu0 0
        %436 = vmatpush2.bf16.msra.mxu0 0
        %437 = vmatprep.subr.bf16.mxu0 %v384
        %438 = vmatpush2.bf16.msra.mxu0 %v383
        %439 = vmatprep.mubr.bf16.mxu0 %v405
        %440 = vmatmul.mubr.bf16.gmra.mxu0 %v310
        %v441 = vpop.f32.mrf.mxu0
        %v442 = vadd.f32 %v297, %v441
        %v443 = vpop.f32.mrf.mxu0
        %v444 = vadd.f32 %v297, %v443
        %v445 = vpop.f32.mrf.mxu0
        %v446 = vadd.f32 %v302, %v445
        %v447 = vpop.f32.mrf.mxu0
        %v448 = vadd.f32 %v302, %v447
        %449 = vdwg.mxu0
        %v450 = vmax.f32 %v442, 0.0
        %v451 = vmax.f32 %v444, 0.0
        %v452 = vmax.f32 %v446, 0.0
        %v453 = vmax.f32 %v448, 0.0
        %454 = vst [vmem:[%s268] sm:$0xff] %v450
        %455 = vst [vmem:[%s268 + $0x8] sm:$0xff] %v451
        %456 = vst [vmem:[%s268 + $0x10] sm:$0xff] %v452
        %457 = vst [vmem:[%s268 + $0x18] sm:$0xff] %v453
        %s458 = sand.u32 %s90, 1
        %s459 = sand.u32 %s90, 1
        %s460 = smul.addr %s459, 32
        %s461 = scalar_lea.vmem [#allocation3], %s460
        // Predicated region
        $region71: #{ocm_resnet_forward.24} parent=65 // pred_check
          %p462 = pneg %p100
        $region72: #{ocm_resnet_forward.24} parent=65 // pred_check_branch
          %464 = sbr.rel (%p462) target = $region74
        $region73: #{ocm_resnet_forward.24} parent=65 // pred_region
          %s465 = smul.u32 2, %s14
          %s466 = smul.addr %s465, 8
          %s467 = scalar_lea.vmem %s3, %s466
          // Predicated region
          $region75: #{ocm_resnet_forward.24} parent=73 // pred_check
            _
          $region76: #{ocm_resnet_forward.24} parent=73 // pred_check_branch
            %469 = sbr.rel (0) target = $region78
          $region77: #{ocm_resnet_forward.24} parent=73 // pred_region
            // Predicated region
            $region79: #{ocm_resnet_forward.24} parent=77 // pred_check
              _
            $region80: #{ocm_resnet_forward.24} parent=77 // pred_check_branch
              %471 = sbr.rel (0) target = $region82
            $region81: #{ocm_resnet_forward.24} parent=77 // pred_region
              loop: start=0, step=1, limit=1
              $region83: #{ocm_resnet_forward.24} parent=81 // loop_pre_header
                _
              $region84: #{ocm_resnet_forward.24} parent=81 // loop_header
                %s473 = sphi 0, %s477
                %p474 = scmp.ge.s32.totalorder %s473, 1
                %s478 = sphi %s461, %s461
                %s479 = sphi %s467, %s467
              $region85: #{ocm_resnet_forward.24} parent=81 // loop_header_branch
                %476 = sbr.rel (%p474) target = $region89
              $region86: #{ocm_resnet_forward.24} parent=81 // loop_body
                %v480 = vld [vmem:[%s478] sm:$0xff]
                %481 = vst [vmem:[%s479] sm:$0xff] %v480
                %v482 = vld [vmem:[%s478 + $0x8] sm:$0xff]
                %483 = vst [vmem:[%s479 + $0x8] sm:$0xff] %v482
                %v484 = vld [vmem:[%s478 + $0x10] sm:$0xff]
                %485 = vst [vmem:[%s479 + $0x20] sm:$0xff] %v484
                %v486 = vld [vmem:[%s478 + $0x18] sm:$0xff]
                %487 = vst [vmem:[%s479 + $0x28] sm:$0xff] %v486
              $region87: #{ocm_resnet_forward.24} parent=81 // loop_footer
                %s477 = sadd.s32 1, %s473
              $region88: #{ocm_resnet_forward.24} parent=81 // loop_footer_branch
                %472 = sbr.rel target = $region84
              $region89: #{ocm_resnet_forward.24} parent=81 // loop_exit
                _
            $region82: #{ocm_resnet_forward.24} parent=77 // pred_fallthru
              _
            // Predicated region
            $region90: #{ocm_resnet_forward.24} parent=77 // pred_check
              _
            $region91: #{ocm_resnet_forward.24} parent=77 // pred_check_branch
              %489 = sbr.rel target = $region93
            $region92: #{ocm_resnet_forward.24} parent=77 // pred_region
              _
            $region93: #{ocm_resnet_forward.24} parent=77 // pred_fallthru
              _
          $region78: #{ocm_resnet_forward.24} parent=73 // pred_fallthru
            _
          %490 = vnop
        $region74: #{ocm_resnet_forward.24} parent=65 // pred_fallthru
          _
      $region66: #{ocm_resnet_forward.24} parent=5 // pred_fallthru
        _
      %p491 = scmp.le.s32.totalorder 2, %s9
      // Predicated region
      $region94: #{ocm_resnet_forward.24} parent=5 // pred_check
        %p492 = pneg %p491
      $region95: #{ocm_resnet_forward.24} parent=5 // pred_check_branch
        %494 = sbr.rel (%p492) target = $region97
      $region96: #{ocm_resnet_forward.24} parent=5 // pred_region
        %s495 = ssub.s32 %s9, 2
        // Predicated region
        $region98: #{ocm_resnet_forward.24} parent=96 // pred_check
          %p496 = pneg %p106
        $region99: #{ocm_resnet_forward.24} parent=96 // pred_check_branch
          %498 = sbr.rel (%p496) target = $region101
        $region100: #{ocm_resnet_forward.24} parent=96 // pred_region
          %s499 = sand.u32 %s91, 1
          %s500 = sand.u32 %s91, 1
          %s501 = smul.addr %s500, 32
          %s502 = scalar_lea.vmem [#allocation3], %s501
        $region101: #{ocm_resnet_forward.24} parent=96 // pred_fallthru
          _
      $region97: #{ocm_resnet_forward.24} parent=5 // pred_fallthru
        _
    $region6: #{ocm_resnet_forward.24} parent=1 // loop_footer
      %s13 = sadd.s32 1, %s9
    $region7: #{ocm_resnet_forward.24} parent=1 // loop_footer_branch
      %8 = sbr.rel target = $region3
    $region8: #{ocm_resnet_forward.24} parent=1 // loop_exit
      _

// kernel: ocm_resnet_forward.25
$region0: #{ocm_resnet_forward.25}
  #allocation0 [shape = 'u32[]', space=smem, size = 0x4, offset = 0x4, fixed_abs, tag = 'smem constant byte address 0x4 - core index']
  #allocation1 [shape = 'u32[144,128]{1,0:T(1,128)}', space=vmem, size = 0x12000, scoped, tag = 'internal scratch']
  %s0 = inlined_call_operand.vmem [shape: bf16[16,144], index: 0, kind: input, shape index: {}]
  %s1 = inlined_call_operand.vmem [shape: bf16[144,512], index: 1, kind: input, shape index: {}]
  %s2 = inlined_call_operand.vmem [shape: f32[16,1], index: 2, kind: input, shape index: {}]
  %s3 = inlined_call_operand.vmem [shape: f32[16,512], index: 3, kind: input, shape index: {}]
  %s4 = inlined_call_operand.vmem [shape: f32[16,512], index: 4, kind: output, shape index: {}]
  %s5 = sld [smem:[#allocation0]]
  $region129: #{ocm_resnet_forward.25} parent=0
    _
  %s7 = ssub.s32 1, %s5
  %s8 = scalar_select 0, %s7, %s5
  $region1: #{ocm_resnet_forward.25} parent=0
    #allocation2 [shape = 'u8[147456]{0}', space=vmem, size = 0x24000, scoped, tag = 'input window, operand 1']
    #allocation3 [shape = 'u8[32768]{0}', space=vmem, size = 0x8000, scoped, tag = 'input window, operand 3']
    #allocation4 [shape = 'u8[32768]{0}', space=vmem, size = 0x8000, scoped, tag = 'output window, operand 0']
    loop: start=0, step=1, limit=4
    $region2: #{ocm_resnet_forward.25} parent=1 // loop_pre_header
      _
    $region3: #{ocm_resnet_forward.25} parent=1 // loop_header
      %s10 = sphi 0, %s14
      %p11 = scmp.ge.s32.totalorder %s10, 4
      %s18 = sphi 0, %s18
      %s20 = sphi 0, %s18
      %s21 = sphi 0, %s20
      %s35 = sphi 0, %s21
      %s41 = sphi 0, %s43
      %s44 = sphi 0, %s41
      %s45 = sphi 0, %s44
      %s61 = sphi 0, %s45
      %s65 = sphi 0, %s65
      %s67 = sphi 0, %s65
      %s68 = sphi 0, %s67
      %s82 = sphi 0, %s68
      %s88 = sphi 0, %s90
      %s91 = sphi 0, %s88
      %s92 = sphi 0, %s91
      %s108 = sphi 0, %s92
      %s114 = sphi 0, %s116
      %s117 = sphi 0, %s114
      %s118 = sphi 0, %s117
      %s134 = sphi 0, %s118
    $region4: #{ocm_resnet_forward.25} parent=1 // loop_header_branch
      %13 = sbr.rel (%p11) target = $region8
    $region5: #{ocm_resnet_forward.25} parent=1 // loop_body
      %s15 = ssub.s32 %s10, 1
      %s16 = ssub.s32 %s10, 2
      %s17 = sadd.s32 %s10, 1
      %s19 = sadd.s32 %s18, 1
      %p22 = scmp.eq.s32.totalorder %s10, 1
      %p23 = scmp.ne.s32.totalorder %s18, %s20
      %p24 = scmp.eq.s32.totalorder %s10, 0
      %p25 = por %p23, %p24
      %p26 = scmp.ne.s32.totalorder %s18, %s20
      %p27 = scmp.eq.s32.totalorder %s15, 1
      %p28 = por %p26, %p27
      %p29 = scmp.ne.s32.totalorder %s20, %s21
      %p30 = scmp.eq.s32.totalorder %s15, 0
      %p31 = por %p29, %p30
      %p32 = scmp.ne.s32.totalorder %s20, %s21
      %p33 = scmp.eq.s32.totalorder %s16, 1
      %p34 = por %p32, %p33
      %p36 = scmp.ne.s32.totalorder %s21, %s35
      %p37 = scmp.eq.s32.totalorder %s16, 0
      %p38 = por %p36, %p37
      %s39 = ssub.s32 %s10, %s17
      %p40 = scmp.eq.s32.totalorder %s39, 0
      %s42 = sadd.s32 %s41, 1
      %s43 = scalar_select %p40, %s41, %s42
      %p46 = pneg %p40
      %p47 = scmp.eq.s32.totalorder %s10, 1
      %p48 = por %p46, %p47
      %p49 = scmp.ne.s32.totalorder %s41, %s44
      %p50 = scmp.eq.s32.totalorder %s10, 0
      %p51 = por %p49, %p50
      %p52 = scmp.ne.s32.totalorder %s41, %s44
      %p53 = scmp.eq.s32.totalorder %s15, 1
      %p54 = por %p52, %p53
      %p55 = scmp.ne.s32.totalorder %s44, %s45
      %p56 = scmp.eq.s32.totalorder %s15, 0
      %p57 = por %p55, %p56
      %p58 = scmp.ne.s32.totalorder %s44, %s45
      %p59 = scmp.eq.s32.totalorder %s16, 1
      %p60 = por %p58, %p59
      %p62 = scmp.ne.s32.totalorder %s45, %s61
      %p63 = scmp.eq.s32.totalorder %s16, 0
      %p64 = por %p62, %p63
      %s66 = sadd.s32 %s65, 1
      %p69 = scmp.eq.s32.totalorder %s10, 1
      %p70 = scmp.ne.s32.totalorder %s65, %s67
      %p71 = scmp.eq.s32.totalorder %s10, 0
      %p72 = por %p70, %p71
      %p73 = scmp.ne.s32.totalorder %s65, %s67
      %p74 = scmp.eq.s32.totalorder %s15, 1
      %p75 = por %p73, %p74
      %p76 = scmp.ne.s32.totalorder %s67, %s68
      %p77 = scmp.eq.s32.totalorder %s15, 0
      %p78 = por %p76, %p77
      %p79 = scmp.ne.s32.totalorder %s67, %s68
      %p80 = scmp.eq.s32.totalorder %s16, 1
      %p81 = por %p79, %p80
      %p83 = scmp.ne.s32.totalorder %s68, %s82
      %p84 = scmp.eq.s32.totalorder %s16, 0
      %p85 = por %p83, %p84
      %s86 = ssub.s32 %s10, %s17
      %p87 = scmp.eq.s32.totalorder %s86, 0
      %s89 = sadd.s32 %s88, 1
      %s90 = scalar_select %p87, %s88, %s89
      %p93 = pneg %p87
      %p94 = scmp.eq.s32.totalorder %s10, 1
      %p95 = por %p93, %p94
      %p96 = scmp.ne.s32.totalorder %s88, %s91
      %p97 = scmp.eq.s32.totalorder %s10, 0
      %p98 = por %p96, %p97
      %p99 = scmp.ne.s32.totalorder %s88, %s91
      %p100 = scmp.eq.s32.totalorder %s15, 1
      %p101 = por %p99, %p100
      %p102 = scmp.ne.s32.totalorder %s91, %s92
      %p103 = scmp.eq.s32.totalorder %s15, 0
      %p104 = por %p102, %p103
      %p105 = scmp.ne.s32.totalorder %s91, %s92
      %p106 = scmp.eq.s32.totalorder %s16, 1
      %p107 = por %p105, %p106
      %p109 = scmp.ne.s32.totalorder %s92, %s108
      %p110 = scmp.eq.s32.totalorder %s16, 0
      %p111 = por %p109, %p110
      %s112 = ssub.s32 %s10, %s17
      %p113 = scmp.eq.s32.totalorder %s112, 0
      %s115 = sadd.s32 %s114, 1
      %s116 = scalar_select %p113, %s114, %s115
      %p119 = pneg %p113
      %p120 = scmp.eq.s32.totalorder %s10, 1
      %p121 = por %p119, %p120
      %p122 = scmp.ne.s32.totalorder %s114, %s117
      %p123 = scmp.eq.s32.totalorder %s10, 0
      %p124 = por %p122, %p123
      %p125 = scmp.ne.s32.totalorder %s114, %s117
      %p126 = scmp.eq.s32.totalorder %s15, 1
      %p127 = por %p125, %p126
      %p128 = scmp.ne.s32.totalorder %s117, %s118
      %p129 = scmp.eq.s32.totalorder %s15, 0
      %p130 = por %p128, %p129
      %p131 = scmp.ne.s32.totalorder %s117, %s118
      %p132 = scmp.eq.s32.totalorder %s16, 1
      %p133 = por %p131, %p132
      %p135 = scmp.ne.s32.totalorder %s118, %s134
      %p136 = scmp.eq.s32.totalorder %s16, 0
      %p137 = por %p135, %p136
      %p138 = scmp.le.s32.totalorder 1, %s10
      %p139 = scmp.lt.s32.totalorder %s10, 3
      %p140 = pnand %p138, %p139
      %p141 = pneg %p140
      // Predicated region
      $region9: #{ocm_resnet_forward.25} parent=5 // pred_check
        _
      $region10: #{ocm_resnet_forward.25} parent=5 // pred_check_branch
        %143 = sbr.rel (%p140) target = $region12
      $region11: #{ocm_resnet_forward.25} parent=5 // pred_region
        %s144 = ssub.s32 %s10, 1
        // Predicated region
        $region13: #{ocm_resnet_forward.25} parent=11 // pred_check
          %p145 = pneg %p31
        $region14: #{ocm_resnet_forward.25} parent=11 // pred_check_branch
          %147 = sbr.rel (%p145) target = $region16
        $region15: #{ocm_resnet_forward.25} parent=11 // pred_region
          _
        $region16: #{ocm_resnet_forward.25} parent=11 // pred_fallthru
          _
        // Predicated region
        $region17: #{ocm_resnet_forward.25} parent=11 // pred_check
          %p148 = pneg %p78
        $region18: #{ocm_resnet_forward.25} parent=11 // pred_check_branch
          %150 = sbr.rel (%p148) target = $region20
        $region19: #{ocm_resnet_forward.25} parent=11 // pred_region
          _
        $region20: #{ocm_resnet_forward.25} parent=11 // pred_fallthru
          _
      $region12: #{ocm_resnet_forward.25} parent=5 // pred_fallthru
        _
      %p151 = scmp.lt.s32.totalorder %s10, 2
      // Predicated region
      $region21: #{ocm_resnet_forward.25} parent=5 // pred_check
        %p152 = pneg %p151
      $region22: #{ocm_resnet_forward.25} parent=5 // pred_check_branch
        %154 = sbr.rel (%p152) target = $region24
      $region23: #{ocm_resnet_forward.25} parent=5 // pred_region
        // Predicated region
        $region25: #{ocm_resnet_forward.25} parent=23 // pred_check
          %p155 = pneg %p51
        $region26: #{ocm_resnet_forward.25} parent=23 // pred_check_branch
          %157 = sbr.rel (%p155) target = $region28
        $region27: #{ocm_resnet_forward.25} parent=23 // pred_region
          %s158 = sand.u32 %s41, 1
          %s159 = sand.u32 %s41, 1
          %s160 = smul.addr %s159, 144
          %s161 = scalar_lea.vmem [#allocation2], %s160
          %s162 = smul.u32 2, %s10
          %s163 = smul.addr %s162, 4
          %s164 = scalar_lea.vmem %s1, %s163
          // Predicated region
          $region29: #{ocm_resnet_forward.25} parent=27 // pred_check
            _
          $region30: #{ocm_resnet_forward.25} parent=27 // pred_check_branch
            %166 = sbr.rel (0) target = $region32
          $region31: #{ocm_resnet_forward.25} parent=27 // pred_region
            // Predicated region
            $region33: #{ocm_resnet_forward.25} parent=31 // pred_check
              _
            $region34: #{ocm_resnet_forward.25} parent=31 // pred_check_branch
              %168 = sbr.rel (0) target = $region36
            $region35: #{ocm_resnet_forward.25} parent=31 // pred_region
              // Predicated region
              $region48: #{ocm_resnet_forward.25} parent=35 // pred_check
                _
              $region49: #{ocm_resnet_forward.25} parent=35 // pred_check_branch
                %218 = sbr.rel (0) target = $region51
              $region50: #{ocm_resnet_forward.25} parent=35 // pred_region
                loop: start=0, step=1, limit=1
                $region52: #{ocm_resnet_forward.25} parent=50 // loop_pre_header
                  _
                $region53: #{ocm_resnet_forward.25} parent=50 // loop_header
                  %s220 = sphi 0, %s224
                  %p221 = scmp.ge.s32.totalorder %s220, 1
                  %s225 = sphi %s164, %s164
                  %s226 = sphi %s161, %s161
                $region54: #{ocm_resnet_forward.25} parent=50 // loop_header_branch
                  %223 = sbr.rel (%p221) target = $region58
                $region55: #{ocm_resnet_forward.25} parent=50 // loop_body
                  %v227 = vld [vmem:[%s225] sm:$0xff]
                  %228 = vst [vmem:[%s226] sm:$0xff] %v227
                  %v229 = vld [vmem:[%s225 + $0x10] sm:$0xff]
                  %230 = vst [vmem:[%s226 + $0x8] sm:$0xff] %v229
                  %v231 = vld [vmem:[%s225 + $0x20] sm:$0xff]
                  %232 = vst [vmem:[%s226 + $0x10] sm:$0xff] %v231
                  %v233 = vld [vmem:[%s225 + $0x30] sm:$0xff]
                  %234 = vst [vmem:[%s226 + $0x18] sm:$0xff] %v233
                  %v235 = vld [vmem:[%s225 + $0x40] sm:$0xff]
                  %236 = vst [vmem:[%s226 + $0x20] sm:$0xff] %v235
                  %v237 = vld [vmem:[%s225 + $0x50] sm:$0xff]
                  %238 = vst [vmem:[%s226 + $0x28] sm:$0xff] %v237
                  %v239 = vld [vmem:[%s225 + $0x60] sm:$0xff]
                  %240 = vst [vmem:[%s226 + $0x30] sm:$0xff] %v239
                  %v241 = vld [vmem:[%s225 + $0x70] sm:$0xff]
                  %242 = vst [vmem:[%s226 + $0x38] sm:$0xff] %v241
                  %v243 = vld [vmem:[%s225 + $0x80] sm:$0xff]
                  %244 = vst [vmem:[%s226 + $0x40] sm:$0xff] %v243
                  %v245 = vld [vmem:[%s225 + $0x90] sm:$0xff]
                  %246 = vst [vmem:[%s226 + $0x48] sm:$0xff] %v245
                  %v247 = vld [vmem:[%s225 + $0xa0] sm:$0xff]
                  %248 = vst [vmem:[%s226 + $0x50] sm:$0xff] %v247
                  %v249 = vld [vmem:[%s225 + $0xb0] sm:$0xff]
                  %250 = vst [vmem:[%s226 + $0x58] sm:$0xff] %v249
                  %v251 = vld [vmem:[%s225 + $0xc0] sm:$0xff]
                  %252 = vst [vmem:[%s226 + $0x60] sm:$0xff] %v251
                  %v253 = vld [vmem:[%s225 + $0xd0] sm:$0xff]
                  %254 = vst [vmem:[%s226 + $0x68] sm:$0xff] %v253
                  %v255 = vld [vmem:[%s225 + $0xe0] sm:$0xff]
                  %256 = vst [vmem:[%s226 + $0x70] sm:$0xff] %v255
                  %v257 = vld [vmem:[%s225 + $0xf0] sm:$0xff]
                  %258 = vst [vmem:[%s226 + $0x78] sm:$0xff] %v257
                  %v259 = vld [vmem:[%s225 + $0x100] sm:$0xff]
                  %260 = vst [vmem:[%s226 + $0x80] sm:$0xff] %v259
                  %v261 = vld [vmem:[%s225 + $0x110] sm:$0xff]
                  %262 = vst [vmem:[%s226 + $0x88] sm:$0xff] %v261
                $region56: #{ocm_resnet_forward.25} parent=50 // loop_footer
                  %s224 = sadd.s32 1, %s220
                $region57: #{ocm_resnet_forward.25} parent=50 // loop_footer_branch
                  %219 = sbr.rel target = $region53
                $region58: #{ocm_resnet_forward.25} parent=50 // loop_exit
                  _
              $region51: #{ocm_resnet_forward.25} parent=35 // pred_fallthru
                _
              // Predicated region
              $region59: #{ocm_resnet_forward.25} parent=35 // pred_check
                _
              $region60: #{ocm_resnet_forward.25} parent=35 // pred_check_branch
                %264 = sbr.rel target = $region62
              $region61: #{ocm_resnet_forward.25} parent=35 // pred_region
                _
              $region62: #{ocm_resnet_forward.25} parent=35 // pred_fallthru
                _
            $region36: #{ocm_resnet_forward.25} parent=31 // pred_fallthru
              _
            // Predicated region
            $region37: #{ocm_resnet_forward.25} parent=31 // pred_check
              _
            $region38: #{ocm_resnet_forward.25} parent=31 // pred_check_branch
              %170 = sbr.rel target = $region40
            $region39: #{ocm_resnet_forward.25} parent=31 // pred_region
              %s172 = ssub.s32 256, 1
              loop: start=0, step=1, limit=1
              $region41: #{ocm_resnet_forward.25} parent=39 // loop_pre_header
                _
              $region42: #{ocm_resnet_forward.25} parent=39 // loop_header
                %s174 = sphi 0, %s178
                %p175 = scmp.ge.s32.totalorder %s174, 1
                %s179 = sphi %s164, %s164
                %s180 = sphi %s161, %s161
              $region43: #{ocm_resnet_forward.25} parent=39 // loop_header_branch
                %177 = sbr.rel (%p175) target = $region47
              $region44: #{ocm_resnet_forward.25} parent=39 // loop_body
                %v181 = vld [vmem:[%s179] sm:%s172]
                %182 = vst [vmem:[%s180] sm:%s172] %v181
                %v183 = vld [vmem:[%s179 + $0x10] sm:%s172]
                %184 = vst [vmem:[%s180 + $0x8] sm:%s172] %v183
                %v185 = vld [vmem:[%s179 + $0x20] sm:%s172]
                %186 = vst [vmem:[%s180 + $0x10] sm:%s172] %v185
                %v187 = vld [vmem:[%s179 + $0x30] sm:%s172]
                %188 = vst [vmem:[%s180 + $0x18] sm:%s172] %v187
                %v189 = vld [vmem:[%s179 + $0x40] sm:%s172]
                %190 = vst [vmem:[%s180 + $0x20] sm:%s172] %v189
                %v191 = vld [vmem:[%s179 + $0x50] sm:%s172]
                %192 = vst [vmem:[%s180 + $0x28] sm:%s172] %v191
                %v193 = vld [vmem:[%s179 + $0x60] sm:%s172]
                %194 = vst [vmem:[%s180 + $0x30] sm:%s172] %v193
                %v195 = vld [vmem:[%s179 + $0x70] sm:%s172]
                %196 = vst [vmem:[%s180 + $0x38] sm:%s172] %v195
                %v197 = vld [vmem:[%s179 + $0x80] sm:%s172]
                %198 = vst [vmem:[%s180 + $0x40] sm:%s172] %v197
                %v199 = vld [vmem:[%s179 + $0x90] sm:%s172]
                %200 = vst [vmem:[%s180 + $0x48] sm:%s172] %v199
                %v201 = vld [vmem:[%s179 + $0xa0] sm:%s172]
                %202 = vst [vmem:[%s180 + $0x50] sm:%s172] %v201
                %v203 = vld [vmem:[%s179 + $0xb0] sm:%s172]
                %204 = vst [vmem:[%s180 + $0x58] sm:%s172] %v203
                %v205 = vld [vmem:[%s179 + $0xc0] sm:%s172]
                %206 = vst [vmem:[%s180 + $0x60] sm:%s172] %v205
                %v207 = vld [vmem:[%s179 + $0xd0] sm:%s172]
                %208 = vst [vmem:[%s180 + $0x68] sm:%s172] %v207
                %v209 = vld [vmem:[%s179 + $0xe0] sm:%s172]
                %210 = vst [vmem:[%s180 + $0x70] sm:%s172] %v209
                %v211 = vld [vmem:[%s179 + $0xf0] sm:%s172]
                %212 = vst [vmem:[%s180 + $0x78] sm:%s172] %v211
                %v213 = vld [vmem:[%s179 + $0x100] sm:%s172]
                %214 = vst [vmem:[%s180 + $0x80] sm:%s172] %v213
                %v215 = vld [vmem:[%s179 + $0x110] sm:%s172]
                %216 = vst [vmem:[%s180 + $0x88] sm:%s172] %v215
              $region45: #{ocm_resnet_forward.25} parent=39 // loop_footer
                %s178 = sadd.s32 1, %s174
              $region46: #{ocm_resnet_forward.25} parent=39 // loop_footer_branch
                %173 = sbr.rel target = $region42
              $region47: #{ocm_resnet_forward.25} parent=39 // loop_exit
                _
            $region40: #{ocm_resnet_forward.25} parent=31 // pred_fallthru
              _
          $region32: #{ocm_resnet_forward.25} parent=27 // pred_fallthru
            _
          %265 = vnop
        $region28: #{ocm_resnet_forward.25} parent=23 // pred_fallthru
          _
        // Predicated region
        $region63: #{ocm_resnet_forward.25} parent=23 // pred_check
          %p266 = pneg %p98
        $region64: #{ocm_resnet_forward.25} parent=23 // pred_check_branch
          %268 = sbr.rel (%p266) target = $region66
        $region65: #{ocm_resnet_forward.25} parent=23 // pred_region
          %s269 = sand.u32 %s88, 1
          %s270 = sand.u32 %s88, 1
          %s271 = smul.addr %s270, 32
          %s272 = scalar_lea.vmem [#allocation3], %s271
          %s273 = smul.u32 2, %s10
          %s274 = smul.addr %s273, 8
          %s275 = scalar_lea.vmem %s3, %s274
          // Predicated region
          $region67: #{ocm_resnet_forward.25} parent=65 // pred_check
            _
          $region68: #{ocm_resnet_forward.25} parent=65 // pred_check_branch
            %277 = sbr.rel (0) target = $region70
          $region69: #{ocm_resnet_forward.25} parent=65 // pred_region
            // Predicated region
            $region71: #{ocm_resnet_forward.25} parent=69 // pred_check
              _
            $region72: #{ocm_resnet_forward.25} parent=69 // pred_check_branch
              %279 = sbr.rel (0) target = $region74
            $region73: #{ocm_resnet_forward.25} parent=69 // pred_region
              loop: start=0, step=1, limit=1
              $region75: #{ocm_resnet_forward.25} parent=73 // loop_pre_header
                _
              $region76: #{ocm_resnet_forward.25} parent=73 // loop_header
                %s281 = sphi 0, %s285
                %p282 = scmp.ge.s32.totalorder %s281, 1
                %s286 = sphi %s275, %s275
                %s287 = sphi %s272, %s272
              $region77: #{ocm_resnet_forward.25} parent=73 // loop_header_branch
                %284 = sbr.rel (%p282) target = $region81
              $region78: #{ocm_resnet_forward.25} parent=73 // loop_body
                %v288 = vld [vmem:[%s286] sm:$0xff]
                %289 = vst [vmem:[%s287] sm:$0xff] %v288
                %v290 = vld [vmem:[%s286 + $0x8] sm:$0xff]
                %291 = vst [vmem:[%s287 + $0x8] sm:$0xff] %v290
                %v292 = vld [vmem:[%s286 + $0x20] sm:$0xff]
                %293 = vst [vmem:[%s287 + $0x10] sm:$0xff] %v292
                %v294 = vld [vmem:[%s286 + $0x28] sm:$0xff]
                %295 = vst [vmem:[%s287 + $0x18] sm:$0xff] %v294
              $region79: #{ocm_resnet_forward.25} parent=73 // loop_footer
                %s285 = sadd.s32 1, %s281
              $region80: #{ocm_resnet_forward.25} parent=73 // loop_footer_branch
                %280 = sbr.rel target = $region76
              $region81: #{ocm_resnet_forward.25} parent=73 // loop_exit
                _
            $region74: #{ocm_resnet_forward.25} parent=69 // pred_fallthru
              _
            // Predicated region
            $region82: #{ocm_resnet_forward.25} parent=69 // pred_check
              _
            $region83: #{ocm_resnet_forward.25} parent=69 // pred_check_branch
              %297 = sbr.rel target = $region85
            $region84: #{ocm_resnet_forward.25} parent=69 // pred_region
              _
            $region85: #{ocm_resnet_forward.25} parent=69 // pred_fallthru
              _
          $region70: #{ocm_resnet_forward.25} parent=65 // pred_fallthru
            _
          %298 = vnop
        $region66: #{ocm_resnet_forward.25} parent=23 // pred_fallthru
          _
      $region24: #{ocm_resnet_forward.25} parent=5 // pred_fallthru
        _
      %p299 = scmp.le.s32.totalorder 1, %s10
      %p300 = scmp.lt.s32.totalorder %s10, 3
      %p301 = pnand %p299, %p300
      %p302 = pneg %p301
      // Predicated region
      $region86: #{ocm_resnet_forward.25} parent=5 // pred_check
        _
      $region87: #{ocm_resnet_forward.25} parent=5 // pred_check_branch
        %304 = sbr.rel (%p301) target = $region89
      $region88: #{ocm_resnet_forward.25} parent=5 // pred_region
        %s305 = ssub.s32 %s10, 1
        %s306 = sand.u32 %s44, 1
        %s307 = sand.u32 %s44, 1
        %s308 = smul.addr %s307, 144
        %s309 = scalar_lea.vmem [#allocation2], %s308
        // Predicated region
        $region90: #{ocm_resnet_forward.25} parent=88 // pred_check
          %p310 = pneg %p57
        $region91: #{ocm_resnet_forward.25} parent=88 // pred_check_branch
          %312 = sbr.rel (%p310) target = $region93
        $region92: #{ocm_resnet_forward.25} parent=88 // pred_region
          _
        $region93: #{ocm_resnet_forward.25} parent=88 // pred_fallthru
          _
        %s313 = sand.u32 %s91, 1
        %s314 = sand.u32 %s91, 1
        %s315 = smul.addr %s314, 32
        %s316 = scalar_lea.vmem [#allocation3], %s315
        // Predicated region
        $region94: #{ocm_resnet_forward.25} parent=88 // pred_check
          %p317 = pneg %p104
        $region95: #{ocm_resnet_forward.25} parent=88 // pred_check_branch
          %319 = sbr.rel (%p317) target = $region97
        $region96: #{ocm_resnet_forward.25} parent=88 // pred_region
          _
        $region97: #{ocm_resnet_forward.25} parent=88 // pred_fallthru
          _
        %p320 = pneg %p31
        %p321 = pneg %p28
        %s322 = sand.u32 %s44, 1
        %s323 = sand.u32 %s44, 1
        %s324 = smul.addr %s323, 144
        %s325 = scalar_lea.vmem [#allocation2], %s324
        %p326 = pneg %p57
        %p327 = pneg %p54
        %p328 = pneg %p78
        %p329 = pneg %p75
        %s330 = sand.u32 %s91, 1
        %s331 = sand.u32 %s91, 1
        %s332 = smul.addr %s331, 32
        %s333 = scalar_lea.vmem [#allocation3], %s332
        %p334 = pneg %p104
        %p335 = pneg %p101
        %p336 = pneg %p130
        %p337 = pneg %p127
        %s338 = sand.u32 %s117, 1
        %s339 = sand.u32 %s117, 1
        %s340 = smul.addr %s339, 32
        %s341 = scalar_lea.vmem [#allocation4], %s340
        %s342 = smul.u32 2, %s15
        %s343 = smul.u32 2, %s15
        %s344 = smul.u32 2, %s15
        %v346 = vld [vmem:[%s0] sm:$0xff]
        %v347 = vld [vmem:[%s0 + $0x8] sm:$0xff]
        %v348 = vld [vmem:[%s309] sm:$0xff]
        %v349 = vld [vmem:[%s309 + $0x8] sm:$0xff]
        %v350 = vld [vmem:[%s309 + $0x10] sm:$0xff]
        %v351 = vld [vmem:[%s309 + $0x18] sm:$0xff]
        %v352 = vld [vmem:[%s309 + $0x20] sm:$0xff]
        %v353 = vld [vmem:[%s309 + $0x28] sm:$0xff]
        %v354 = vld [vmem:[%s309 + $0x30] sm:$0xff]
        %v355 = vld [vmem:[%s309 + $0x38] sm:$0xff]
        %v356 = vld [vmem:[%s309 + $0x40] sm:$0xff]
        %v357 = vld [vmem:[%s309 + $0x48] sm:$0xff]
        %v358 = vld [vmem:[%s309 + $0x50] sm:$0xff]
        %v359 = vld [vmem:[%s309 + $0x58] sm:$0xff]
        %v360 = vld [vmem:[%s309 + $0x60] sm:$0xff]
        %v361 = vld [vmem:[%s309 + $0x68] sm:$0xff]
        %v362 = vld [vmem:[%s309 + $0x70] sm:$0xff]
        %v363 = vld [vmem:[%s309 + $0x78] sm:$0xff]
        %v364 = vld [vmem:[%s309 + $0x80] sm:$0xff]
        %v365 = vld [vmem:[%s309 + $0x88] sm:$0xff]
        %v366 = vld [vmem:[%s2] sm:$0xff]
        %v367 = vld [vmem:[%s2 + $0x8] sm:$0xff]
        %369 = vset.pattern.permute.xlu0 0
        %370 = vperm.xlu0 %369, %v366
        %v371 = vpop.permute.xlu0 %370
        %374 = vset.pattern.permute.xlu0 0
        %375 = vperm.xlu0 %374, %v367
        %v376 = vpop.permute.xlu0 %375
        %v380 = vunpack.c.l.b16 %v346
        %v381 = vunpack.c.h.b16 %v346
        %v382 = vunpack.c.l.b16 %v347
        %v383 = vunpack.c.h.b16 %v347
        %v384 = vpack.c.b16 %v382, %v380
        %v385 = vpack.c.b16 %v383, %v381
        %v405 = vunpack.c.l.b16 %v348
        %v406 = vunpack.c.h.b16 %v348
        %v407 = vunpack.c.l.b16 %v349
        %v408 = vunpack.c.h.b16 %v349
        %v409 = vunpack.c.l.b16 %v350
        %v410 = vunpack.c.h.b16 %v350
        %v411 = vunpack.c.l.b16 %v351
        %v412 = vunpack.c.h.b16 %v351
        %v413 = vunpack.c.l.b16 %v352
        %v414 = vunpack.c.h.b16 %v352
        %v415 = vunpack.c.l.b16 %v353
        %v416 = vunpack.c.h.b16 %v353
        %v417 = vunpack.c.l.b16 %v354
        %v418 = vunpack.c.h.b16 %v354
        %v419 = vunpack.c.l.b16 %v355
        %v420 = vunpack.c.h.b16 %v355
        %v421 = vunpack.c.l.b16 %v356
        %v422 = vunpack.c.h.b16 %v356
        %v423 = vunpack.c.l.b16 %v357
        %v424 = vunpack.c.h.b16 %v357
        %v425 = vunpack.c.l.b16 %v358
        %v426 = vunpack.c.h.b16 %v358
        %v427 = vunpack.c.l.b16 %v359
        %v428 = vunpack.c.h.b16 %v359
        %v429 = vunpack.c.l.b16 %v360
        %v430 = vunpack.c.h.b16 %v360
        %v431 = vunpack.c.l.b16 %v361
        %v432 = vunpack.c.h.b16 %v361
        %v433 = vunpack.c.l.b16 %v362
        %v434 = vunpack.c.h.b16 %v362
        %v435 = vunpack.c.l.b16 %v363
        %v436 = vunpack.c.h.b16 %v363
        %v437 = vunpack.c.l.b16 %v364
        %v438 = vunpack.c.h.b16 %v364
        %v439 = vunpack.c.l.b16 %v365
        %v440 = vunpack.c.h.b16 %v365
        %v441 = vpack.c.b16 %v407, %v405
        %v442 = vpack.c.b16 %v408, %v406
        %v443 = vpack.c.b16 %v411, %v409
        %v444 = vpack.c.b16 %v412, %v410
        %v445 = vpack.c.b16 %v415, %v413
        %v446 = vpack.c.b16 %v416, %v414
        %v447 = vpack.c.b16 %v419, %v417
        %v448 = vpack.c.b16 %v420, %v418
        %v449 = vpack.c.b16 %v423, %v421
        %v450 = vpack.c.b16 %v424, %v422
        %v451 = vpack.c.b16 %v427, %v425
        %v452 = vpack.c.b16 %v428, %v426
        %v453 = vpack.c.b16 %v431, %v429
        %v454 = vpack.c.b16 %v432, %v430
        %v455 = vpack.c.b16 %v435, %v433
        %v456 = vpack.c.b16 %v436, %v434
        %v457 = vpack.c.b16 %v439, %v437
        %v458 = vpack.c.b16 %v440, %v438
        %vm477 = vcmask 130048
        %v479 = vsel %vm477, %v385, 0
        %481 = vmatprep.subr.bf16.mxu0 %v456
        %482 = vmatpush1.bf16.msra.mxu0 %v455
        %483 = vmatprep.subr.bf16.mxu0 %v454
        %484 = vmatpush1.bf16.msra.mxu0 %v453
        %485 = vmatprep.subr.bf16.mxu0 %v452
        %486 = vmatpush1.bf16.msra.mxu0 %v451
        %487 = vmatprep.subr.bf16.mxu0 %v450
        %488 = vmatpush1.bf16.msra.mxu0 %v449
        %489 = vmatprep.subr.bf16.mxu0 %v448
        %490 = vmatpush1.bf16.msra.mxu0 %v447
        %491 = vmatprep.subr.bf16.mxu0 %v446
        %492 = vmatpush1.bf16.msra.mxu0 %v445
        %493 = vmatprep.subr.bf16.mxu0 %v444
        %494 = vmatpush1.bf16.msra.mxu0 %v443
        %495 = vmatprep.subr.bf16.mxu0 %v442
        %496 = vmatpush1.bf16.msra.mxu0 %v441
        %497 = vmatprep.subr.bf16.mxu0 0
        %498 = vmatpush2.bf16.msra.mxu0 0
        %499 = vmatprep.subr.bf16.mxu0 0
        %500 = vmatpush2.bf16.msra.mxu0 0
        %501 = vmatprep.subr.bf16.mxu0 0
        %502 = vmatpush2.bf16.msra.mxu0 0
        %503 = vmatprep.subr.bf16.mxu0 0
        %504 = vmatpush2.bf16.msra.mxu0 0
        %505 = vmatprep.subr.bf16.mxu0 0
        %506 = vmatpush2.bf16.msra.mxu0 0
        %507 = vmatprep.subr.bf16.mxu0 0
        %508 = vmatpush2.bf16.msra.mxu0 0
        %509 = vmatprep.subr.bf16.mxu0 0
        %510 = vmatpush2.bf16.msra.mxu0 0
        %511 = vmatprep.subr.bf16.mxu0 %v458
        %512 = vmatpush2.bf16.msra.mxu0 %v457
        %513 = vmatprep.mubr.bf16.mxu0 %v479
        %514 = vmatmul.mubr.bf16.gmra.mxu0 %v384
        %v515 = vpop.f32.mrf.mxu0
        %v516 = vadd.f32 %v371, %v515
        %v517 = vpop.f32.mrf.mxu0
        %v518 = vadd.f32 %v371, %v517
        %v519 = vpop.f32.mrf.mxu0
        %v520 = vadd.f32 %v376, %v519
        %v521 = vpop.f32.mrf.mxu0
        %v522 = vadd.f32 %v376, %v521
        %523 = vdwg.mxu0
        %v524 = vld [vmem:[%s316] sm:$0xff]
        %v525 = vld [vmem:[%s316 + $0x8] sm:$0xff]
        %v526 = vld [vmem:[%s316 + $0x10] sm:$0xff]
        %v527 = vld [vmem:[%s316 + $0x18] sm:$0xff]
        %v528 = vadd.f32 %v516, %v524
        %v529 = vadd.f32 %v518, %v525
        %v530 = vadd.f32 %v520, %v526
        %v531 = vadd.f32 %v522, %v527
        %v532 = vmax.f32 %v528, 0.0
        %v533 = vmax.f32 %v529, 0.0
        %v534 = vmax.f32 %v530, 0.0
        %v535 = vmax.f32 %v531, 0.0
        %536 = vst [vmem:[%s341] sm:$0xff] %v532
        %537 = vst [vmem:[%s341 + $0x8] sm:$0xff] %v533
        %538 = vst [vmem:[%s341 + $0x10] sm:$0xff] %v534
        %539 = vst [vmem:[%s341 + $0x18] sm:$0xff] %v535
        %s540 = sand.u32 %s117, 1
        %s541 = sand.u32 %s117, 1
        %s542 = smul.addr %s541, 32
        %s543 = scalar_lea.vmem [#allocation4], %s542
        // Predicated region
        $region98: #{ocm_resnet_forward.25} parent=88 // pred_check
          %p544 = pneg %p127
        $region99: #{ocm_resnet_forward.25} parent=88 // pred_check_branch
          %546 = sbr.rel (%p544) target = $region101
        $region100: #{ocm_resnet_forward.25} parent=88 // pred_region
          %s547 = smul.u32 2, %s15
          %s548 = smul.addr %s547, 8
          %s549 = scalar_lea.vmem %s4, %s548
          // Predicated region
          $region102: #{ocm_resnet_forward.25} parent=100 // pred_check
            _
          $region103: #{ocm_resnet_forward.25} parent=100 // pred_check_branch
            %551 = sbr.rel (0) target = $region105
          $region104: #{ocm_resnet_forward.25} parent=100 // pred_region
            // Predicated region
            $region106: #{ocm_resnet_forward.25} parent=104 // pred_check
              _
            $region107: #{ocm_resnet_forward.25} parent=104 // pred_check_branch
              %553 = sbr.rel (0) target = $region109
            $region108: #{ocm_resnet_forward.25} parent=104 // pred_region
              loop: start=0, step=1, limit=1
              $region110: #{ocm_resnet_forward.25} parent=108 // loop_pre_header
                _
              $region111: #{ocm_resnet_forward.25} parent=108 // loop_header
                %s555 = sphi 0, %s559
                %p556 = scmp.ge.s32.totalorder %s555, 1
                %s560 = sphi %s543, %s543
                %s561 = sphi %s549, %s549
              $region112: #{ocm_resnet_forward.25} parent=108 // loop_header_branch
                %558 = sbr.rel (%p556) target = $region116
              $region113: #{ocm_resnet_forward.25} parent=108 // loop_body
                %v562 = vld [vmem:[%s560] sm:$0xff]
                %563 = vst [vmem:[%s561] sm:$0xff] %v562
                %v564 = vld [vmem:[%s560 + $0x8] sm:$0xff]
                %565 = vst [vmem:[%s561 + $0x8] sm:$0xff] %v564
                %v566 = vld [vmem:[%s560 + $0x10] sm:$0xff]
                %567 = vst [vmem:[%s561 + $0x20] sm:$0xff] %v566
                %v568 = vld [vmem:[%s560 + $0x18] sm:$0xff]
                %569 = vst [vmem:[%s561 + $0x28] sm:$0xff] %v568
              $region114: #{ocm_resnet_forward.25} parent=108 // loop_footer
                %s559 = sadd.s32 1, %s555
              $region115: #{ocm_resnet_forward.25} parent=108 // loop_footer_branch
                %554 = sbr.rel target = $region111
              $region116: #{ocm_resnet_forward.25} parent=108 // loop_exit
                _
            $region109: #{ocm_resnet_forward.25} parent=104 // pred_fallthru
              _
            // Predicated region
            $region117: #{ocm_resnet_forward.25} parent=104 // pred_check
              _
            $region118: #{ocm_resnet_forward.25} parent=104 // pred_check_branch
              %571 = sbr.rel target = $region120
            $region119: #{ocm_resnet_forward.25} parent=104 // pred_region
              _
            $region120: #{ocm_resnet_forward.25} parent=104 // pred_fallthru
              _
          $region105: #{ocm_resnet_forward.25} parent=100 // pred_fallthru
            _
          %572 = vnop
        $region101: #{ocm_resnet_forward.25} parent=88 // pred_fallthru
          _
      $region89: #{ocm_resnet_forward.25} parent=5 // pred_fallthru
        _
      %p573 = scmp.le.s32.totalorder 2, %s10
      // Predicated region
      $region121: #{ocm_resnet_forward.25} parent=5 // pred_check
        %p574 = pneg %p573
      $region122: #{ocm_resnet_forward.25} parent=5 // pred_check_branch
        %576 = sbr.rel (%p574) target = $region124
      $region123: #{ocm_resnet_forward.25} parent=5 // pred_region
        %s577 = ssub.s32 %s10, 2
        // Predicated region
        $region125: #{ocm_resnet_forward.25} parent=123 // pred_check
          %p578 = pneg %p133
        $region126: #{ocm_resnet_forward.25} parent=123 // pred_check_branch
          %580 = sbr.rel (%p578) target = $region128
        $region127: #{ocm_resnet_forward.25} parent=123 // pred_region
          %s581 = sand.u32 %s118, 1
          %s582 = sand.u32 %s118, 1
          %s583 = smul.addr %s582, 32
          %s584 = scalar_lea.vmem [#allocation4], %s583
        $region128: #{ocm_resnet_forward.25} parent=123 // pred_fallthru
          _
      $region124: #{ocm_resnet_forward.25} parent=5 // pred_fallthru
        _
    $region6: #{ocm_resnet_forward.25} parent=1 // loop_footer
      %s14 = sadd.s32 1, %s10
    $region7: #{ocm_resnet_forward.25} parent=1 // loop_footer_branch
      %9 = sbr.rel target = $region3
    $region8: #{ocm_resnet_forward.25} parent=1 // loop_exit
      _

// kernel: ocm_resnet_forward.26
$region0: #{ocm_resnet_forward.26}
  #allocation0 [shape = 'u32[]', space=smem, size = 0x4, offset = 0x4, fixed_abs, tag = 'smem constant byte address 0x4 - core index']
  #allocation1 [shape = 'u32[144,128]{1,0:T(1,128)}', space=vmem, size = 0x12000, scoped, tag = 'internal scratch']
  %s0 = inlined_call_operand.vmem [shape: bf16[32,144], index: 0, kind: input, shape index: {}]
  %s1 = inlined_call_operand.vmem [shape: bf16[144,128], index: 1, kind: input, shape index: {}]
  %s2 = inlined_call_operand.vmem [shape: f32[32,1], index: 2, kind: input, shape index: {}]
  %s3 = inlined_call_operand.vmem [shape: f32[32,128], index: 3, kind: output, shape index: {}]
  %s4 = sld [smem:[#allocation0]]
  $region22: #{ocm_resnet_forward.26} parent=0
    _
  %s6 = ssub.s32 1, %s4
  %s7 = scalar_select 0, %s6, %s4
  // Predicated region
  $region2: #{ocm_resnet_forward.26} parent=0 // pred_check
    _
  $region3: #{ocm_resnet_forward.26} parent=0 // pred_check_branch
    %9 = sbr.rel (0) target = $region5
  $region4: #{ocm_resnet_forward.26} parent=0 // pred_region
    _
  $region5: #{ocm_resnet_forward.26} parent=0 // pred_fallthru
    _
  // Predicated region
  $region6: #{ocm_resnet_forward.26} parent=0 // pred_check
    _
  $region7: #{ocm_resnet_forward.26} parent=0 // pred_check_branch
    %11 = sbr.rel (0) target = $region9
  $region8: #{ocm_resnet_forward.26} parent=0 // pred_region
    _
  $region9: #{ocm_resnet_forward.26} parent=0 // pred_fallthru
    _
  // Predicated region
  $region10: #{ocm_resnet_forward.26} parent=0 // pred_check
    _
  $region11: #{ocm_resnet_forward.26} parent=0 // pred_check_branch
    %13 = sbr.rel (0) target = $region13
  $region12: #{ocm_resnet_forward.26} parent=0 // pred_region
    _
  $region13: #{ocm_resnet_forward.26} parent=0 // pred_fallthru
    _
  %v15 = vld [vmem:[%s0] sm:$0xff]
  %v16 = vld [vmem:[%s0 + $0x8] sm:$0xff]
  %v17 = vld [vmem:[%s0 + $0x10] sm:$0xff]
  %v18 = vld [vmem:[%s0 + $0x18] sm:$0xff]
  %v19 = vld [vmem:[%s1] sm:$0xf]
  %v20 = vld [vmem:[%s1 + $0x4] sm:$0xf]
  %v21 = vld [vmem:[%s1 + $0x8] sm:$0xf]
  %v22 = vld [vmem:[%s1 + $0xc] sm:$0xf]
  %v23 = vld [vmem:[%s1 + $0x10] sm:$0xf]
  %v24 = vld [vmem:[%s1 + $0x14] sm:$0xf]
  %v25 = vld [vmem:[%s1 + $0x18] sm:$0xf]
  %v26 = vld [vmem:[%s1 + $0x1c] sm:$0xf]
  %v27 = vld [vmem:[%s1 + $0x20] sm:$0xf]
  %v28 = vld [vmem:[%s1 + $0x24] sm:$0xf]
  %v29 = vld [vmem:[%s1 + $0x28] sm:$0xf]
  %v30 = vld [vmem:[%s1 + $0x2c] sm:$0xf]
  %v31 = vld [vmem:[%s1 + $0x30] sm:$0xf]
  %v32 = vld [vmem:[%s1 + $0x34] sm:$0xf]
  %v33 = vld [vmem:[%s1 + $0x38] sm:$0xf]
  %v34 = vld [vmem:[%s1 + $0x3c] sm:$0xf]
  %v35 = vld [vmem:[%s1 + $0x40] sm:$0xf]
  %v36 = vld [vmem:[%s1 + $0x44] sm:$0xf]
  %v37 = vld [vmem:[%s2] sm:$0xff]
  %v38 = vld [vmem:[%s2 + $0x8] sm:$0xff]
  %v39 = vld [vmem:[%s2 + $0x10] sm:$0xff]
  %v40 = vld [vmem:[%s2 + $0x18] sm:$0xff]
  %42 = vset.pattern.permute.xlu0 0
  %43 = vperm.xlu0 %42, %v37
  %v44 = vpop.permute.xlu0 %43
  %47 = vset.pattern.permute.xlu0 0
  %48 = vperm.xlu0 %47, %v38
  %v49 = vpop.permute.xlu0 %48
  %52 = vset.pattern.permute.xlu0 0
  %53 = vperm.xlu0 %52, %v39
  %v54 = vpop.permute.xlu0 %53
  %57 = vset.pattern.permute.xlu0 0
  %58 = vperm.xlu0 %57, %v40
  %v59 = vpop.permute.xlu0 %58
  %v65 = vunpack.c.l.b16 %v15
  %v66 = vunpack.c.h.b16 %v15
  %v67 = vunpack.c.l.b16 %v16
  %v68 = vunpack.c.h.b16 %v16
  %v69 = vunpack.c.l.b16 %v17
  %v70 = vunpack.c.h.b16 %v17
  %v71 = vunpack.c.l.b16 %v18
  %v72 = vunpack.c.h.b16 %v18
  %v73 = vpack.c.b16 %v67, %v65
  %v74 = vpack.c.b16 %v68, %v66
  %v75 = vpack.c.b16 %v71, %v69
  %v76 = vpack.c.b16 %v72, %v70
  %v97 = vunpack.c.l.b16 %v19
  %v98 = vunpack.c.l.b16 %v20
  %v99 = vunpack.c.l.b16 %v21
  %v100 = vunpack.c.l.b16 %v22
  %v101 = vunpack.c.l.b16 %v23
  %v102 = vunpack.c.l.b16 %v24
  %v103 = vunpack.c.l.b16 %v25
  %v104 = vunpack.c.l.b16 %v26
  %v105 = vunpack.c.l.b16 %v27
  %v106 = vunpack.c.l.b16 %v28
  %v107 = vunpack.c.l.b16 %v29
  %v108 = vunpack.c.l.b16 %v30
  %v109 = vunpack.c.l.b16 %v31
  %v110 = vunpack.c.l.b16 %v32
  %v111 = vunpack.c.l.b16 %v33
  %v112 = vunpack.c.l.b16 %v34
  %v113 = vunpack.c.l.b16 %v35
  %v114 = vunpack.c.l.b16 %v36
  %v115 = vpack.c.b16 %v98, %v97
  %v116 = vpack.c.b16 %v100, %v99
  %v117 = vpack.c.b16 %v102, %v101
  %v118 = vpack.c.b16 %v104, %v103
  %v119 = vpack.c.b16 %v106, %v105
  %v120 = vpack.c.b16 %v108, %v107
  %v121 = vpack.c.b16 %v110, %v109
  %v122 = vpack.c.b16 %v112, %v111
  %v123 = vpack.c.b16 %v114, %v113
  %vm133 = vcmask 130048
  %v135 = vsel %vm133, %v74, 0
  %v138 = vsel %vm133, %v76, 0
  %140 = vmatprep.subr.bf16.mxu0 0
  %141 = vmatpush1.bf16.msra.mxu0 %v122
  %142 = vmatprep.subr.bf16.mxu0 0
  %143 = vmatpush1.bf16.msra.mxu0 %v121
  %144 = vmatprep.subr.bf16.mxu0 0
  %145 = vmatpush1.bf16.msra.mxu0 %v120
  %146 = vmatprep.subr.bf16.mxu0 0
  %147 = vmatpush1.bf16.msra.mxu0 %v119
  %148 = vmatprep.subr.bf16.mxu0 0
  %149 = vmatpush1.bf16.msra.mxu0 %v118
  %150 = vmatprep.subr.bf16.mxu0 0
  %151 = vmatpush1.bf16.msra.mxu0 %v117
  %152 = vmatprep.subr.bf16.mxu0 0
  %153 = vmatpush1.bf16.msra.mxu0 %v116
  %154 = vmatprep.subr.bf16.mxu0 0
  %155 = vmatpush1.bf16.msra.mxu0 %v115
  %156 = vmatprep.subr.bf16.mxu0 0
  %157 = vmatpush2.bf16.msra.mxu0 0
  %158 = vmatprep.subr.bf16.mxu0 0
  %159 = vmatpush2.bf16.msra.mxu0 0
  %160 = vmatprep.subr.bf16.mxu0 0
  %161 = vmatpush2.bf16.msra.mxu0 0
  %162 = vmatprep.subr.bf16.mxu0 0
  %163 = vmatpush2.bf16.msra.mxu0 0
  %164 = vmatprep.subr.bf16.mxu0 0
  %165 = vmatpush2.bf16.msra.mxu0 0
  %166 = vmatprep.subr.bf16.mxu0 0
  %167 = vmatpush2.bf16.msra.mxu0 0
  %168 = vmatprep.subr.bf16.mxu0 0
  %169 = vmatpush2.bf16.msra.mxu0 0
  %170 = vmatprep.subr.bf16.mxu0 0
  %171 = vmatpush2.bf16.msra.mxu0 %v123
  %172 = vmatprep.mubr.bf16.mxu0 %v135
  %173 = vmatmul.mubr.bf16.gmra.mxu0 %v73
  %v174 = vpop.f32.mrf.mxu0
  %v175 = vadd.f32 %v44, %v174
  %v176 = vpop.f32.mrf.mxu0
  %v177 = vpop.f32.mrf.mxu0
  %v178 = vadd.f32 %v49, %v177
  %v179 = vpop.f32.mrf.mxu0
  %180 = vmatprep.mubr.bf16.mxu0 %v138
  %181 = vmatmul.mubr.bf16.gmra.mxu0 %v75
  %v182 = vpop.f32.mrf.mxu0
  %v183 = vadd.f32 %v54, %v182
  %v184 = vpop.f32.mrf.mxu0
  %v185 = vpop.f32.mrf.mxu0
  %v186 = vadd.f32 %v59, %v185
  %v187 = vpop.f32.mrf.mxu0
  %188 = vdwg.mxu0
  %v189 = vmax.f32 %v175, 0.0
  %v190 = vmax.f32 %v178, 0.0
  %v191 = vmax.f32 %v183, 0.0
  %v192 = vmax.f32 %v186, 0.0
  %193 = vst [vmem:[%s3] sm:$0xff] %v189
  %194 = vst [vmem:[%s3 + $0x8] sm:$0xff] %v190
  %195 = vst [vmem:[%s3 + $0x10] sm:$0xff] %v191
  %196 = vst [vmem:[%s3 + $0x18] sm:$0xff] %v192
  // Predicated region
  $region14: #{ocm_resnet_forward.26} parent=0 // pred_check
    _
  $region15: #{ocm_resnet_forward.26} parent=0 // pred_check_branch
    %198 = sbr.rel (0) target = $region17
  $region16: #{ocm_resnet_forward.26} parent=0 // pred_region
    _
  $region17: #{ocm_resnet_forward.26} parent=0 // pred_fallthru
    _
  // Predicated region
  $region18: #{ocm_resnet_forward.26} parent=0 // pred_check
    _
  $region19: #{ocm_resnet_forward.26} parent=0 // pred_check_branch
    %200 = sbr.rel (0) target = $region21
  $region20: #{ocm_resnet_forward.26} parent=0 // pred_region
    _
  $region21: #{ocm_resnet_forward.26} parent=0 // pred_fallthru
    _

// kernel: ocm_resnet_forward.27
$region0: #{ocm_resnet_forward.27}
  #allocation0 [shape = 'u32[]', space=smem, size = 0x4, offset = 0x4, fixed_abs, tag = 'smem constant byte address 0x4 - core index']
  #allocation1 [shape = 'u32[144,128]{1,0:T(1,128)}', space=vmem, size = 0x12000, scoped, tag = 'internal scratch']
  %s0 = inlined_call_operand.vmem [shape: bf16[32,288], index: 0, kind: input, shape index: {}]
  %s1 = inlined_call_operand.vmem [shape: bf16[288,128], index: 1, kind: input, shape index: {}]
  %s2 = inlined_call_operand.vmem [shape: f32[32,1], index: 2, kind: input, shape index: {}]
  %s3 = inlined_call_operand.vmem [shape: bf16[32,16], index: 3, kind: input, shape index: {}]
  %s4 = inlined_call_operand.vmem [shape: bf16[16,128], index: 4, kind: input, shape index: {}]
  %s5 = inlined_call_operand.vmem [shape: f32[32,1], index: 5, kind: input, shape index: {}]
  %s6 = inlined_call_operand.vmem [shape: f32[32,128], index: 6, kind: output, shape index: {}]
  %s7 = sld [smem:[#allocation0]]
  $region34: #{ocm_resnet_forward.27} parent=0
    _
  %s9 = ssub.s32 1, %s7
  %s10 = scalar_select 0, %s9, %s7
  // Predicated region
  $region2: #{ocm_resnet_forward.27} parent=0 // pred_check
    _
  $region3: #{ocm_resnet_forward.27} parent=0 // pred_check_branch
    %12 = sbr.rel (0) target = $region5
  $region4: #{ocm_resnet_forward.27} parent=0 // pred_region
    _
  $region5: #{ocm_resnet_forward.27} parent=0 // pred_fallthru
    _
  // Predicated region
  $region6: #{ocm_resnet_forward.27} parent=0 // pred_check
    _
  $region7: #{ocm_resnet_forward.27} parent=0 // pred_check_branch
    %14 = sbr.rel (0) target = $region9
  $region8: #{ocm_resnet_forward.27} parent=0 // pred_region
    _
  $region9: #{ocm_resnet_forward.27} parent=0 // pred_fallthru
    _
  // Predicated region
  $region10: #{ocm_resnet_forward.27} parent=0 // pred_check
    _
  $region11: #{ocm_resnet_forward.27} parent=0 // pred_check_branch
    %16 = sbr.rel (0) target = $region13
  $region12: #{ocm_resnet_forward.27} parent=0 // pred_region
    _
  $region13: #{ocm_resnet_forward.27} parent=0 // pred_fallthru
    _
  // Predicated region
  $region14: #{ocm_resnet_forward.27} parent=0 // pred_check
    _
  $region15: #{ocm_resnet_forward.27} parent=0 // pred_check_branch
    %18 = sbr.rel (0) target = $region17
  $region16: #{ocm_resnet_forward.27} parent=0 // pred_region
    _
  $region17: #{ocm_resnet_forward.27} parent=0 // pred_fallthru
    _
  // Predicated region
  $region18: #{ocm_resnet_forward.27} parent=0 // pred_check
    _
  $region19: #{ocm_resnet_forward.27} parent=0 // pred_check_branch
    %20 = sbr.rel (0) target = $region21
  $region20: #{ocm_resnet_forward.27} parent=0 // pred_region
    _
  $region21: #{ocm_resnet_forward.27} parent=0 // pred_fallthru
    _
  // Predicated region
  $region22: #{ocm_resnet_forward.27} parent=0 // pred_check
    _
  $region23: #{ocm_resnet_forward.27} parent=0 // pred_check_branch
    %22 = sbr.rel (0) target = $region25
  $region24: #{ocm_resnet_forward.27} parent=0 // pred_region
    _
  $region25: #{ocm_resnet_forward.27} parent=0 // pred_fallthru
    _
  %v24 = vld [vmem:[%s0] sm:$0xff]
  %v25 = vld [vmem:[%s0 + $0x8] sm:$0xf]
  %v26 = vld [vmem:[%s0 + $0xc] sm:$0xff]
  %v27 = vld [vmem:[%s0 + $0x14] sm:$0xf]
  %v28 = vld [vmem:[%s0 + $0x18] sm:$0xff]
  %v29 = vld [vmem:[%s0 + $0x20] sm:$0xf]
  %v30 = vld [vmem:[%s0 + $0x24] sm:$0xff]
  %v31 = vld [vmem:[%s0 + $0x2c] sm:$0xf]
  %v32 = vld [vmem:[%s1] sm:$0xf]
  %v33 = vld [vmem:[%s1 + $0x4] sm:$0xf]
  %v34 = vld [vmem:[%s1 + $0x8] sm:$0xf]
  %v35 = vld [vmem:[%s1 + $0xc] sm:$0xf]
  %v36 = vld [vmem:[%s1 + $0x10] sm:$0xf]
  %v37 = vld [vmem:[%s1 + $0x14] sm:$0xf]
  %v38 = vld [vmem:[%s1 + $0x18] sm:$0xf]
  %v39 = vld [vmem:[%s1 + $0x1c] sm:$0xf]
  %v40 = vld [vmem:[%s1 + $0x20] sm:$0xf]
  %v41 = vld [vmem:[%s1 + $0x24] sm:$0xf]
  %v42 = vld [vmem:[%s1 + $0x28] sm:$0xf]
  %v43 = vld [vmem:[%s1 + $0x2c] sm:$0xf]
  %v44 = vld [vmem:[%s1 + $0x30] sm:$0xf]
  %v45 = vld [vmem:[%s1 + $0x34] sm:$0xf]
  %v46 = vld [vmem:[%s1 + $0x38] sm:$0xf]
  %v47 = vld [vmem:[%s1 + $0x3c] sm:$0xf]
  %v48 = vld [vmem:[%s1 + $0x40] sm:$0xf]
  %v49 = vld [vmem:[%s1 + $0x44] sm:$0xf]
  %v50 = vld [vmem:[%s1 + $0x48] sm:$0xf]
  %v51 = vld [vmem:[%s1 + $0x4c] sm:$0xf]
  %v52 = vld [vmem:[%s1 + $0x50] sm:$0xf]
  %v53 = vld [vmem:[%s1 + $0x54] sm:$0xf]
  %v54 = vld [vmem:[%s1 + $0x58] sm:$0xf]
  %v55 = vld [vmem:[%s1 + $0x5c] sm:$0xf]
  %v56 = vld [vmem:[%s1 + $0x60] sm:$0xf]
  %v57 = vld [vmem:[%s1 + $0x64] sm:$0xf]
  %v58 = vld [vmem:[%s1 + $0x68] sm:$0xf]
  %v59 = vld [vmem:[%s1 + $0x6c] sm:$0xf]
  %v60 = vld [vmem:[%s1 + $0x70] sm:$0xf]
  %v61 = vld [vmem:[%s1 + $0x74] sm:$0xf]
  %v62 = vld [vmem:[%s1 + $0x78] sm:$0xf]
  %v63 = vld [vmem:[%s1 + $0x7c] sm:$0xf]
  %v64 = vld [vmem:[%s1 + $0x80] sm:$0xf]
  %v65 = vld [vmem:[%s1 + $0x84] sm:$0xf]
  %v66 = vld [vmem:[%s1 + $0x88] sm:$0xf]
  %v67 = vld [vmem:[%s1 + $0x8c] sm:$0xf]
  %v68 = vld [vmem:[%s3] sm:$0xf]
  %v69 = vld [vmem:[%s3 + $0x4] sm:$0xf]
  %v70 = vld [vmem:[%s3 + $0x8] sm:$0xf]
  %v71 = vld [vmem:[%s3 + $0xc] sm:$0xf]
  %v72 = vld [vmem:[%s4] sm:$0xf]
  %v73 = vld [vmem:[%s4 + $0x4] sm:$0xf]
  %v78 = vunpack.c.l.b16 %v68
  %v79 = vunpack.c.l.b16 %v69
  %v80 = vunpack.c.l.b16 %v70
  %v81 = vunpack.c.l.b16 %v71
  %v82 = vpack.c.b16 %v79, %v78
  %v83 = vpack.c.b16 %v81, %v80
  %v86 = vunpack.c.l.b16 %v72
  %v87 = vunpack.c.l.b16 %v73
  %v88 = vpack.c.b16 %v87, %v86
  %vm90 = vcmask 130048
  %v92 = vsel %vm90, %v82, 0
  %v95 = vsel %vm90, %v83, 0
  %97 = vmatprep.subr.bf16.mxu0 0
  %98 = vmatpush1.bf16.msra.mxu0 0
  %99 = vmatprep.subr.bf16.mxu0 0
  %100 = vmatpush1.bf16.msra.mxu0 0
  %101 = vmatprep.subr.bf16.mxu0 0
  %102 = vmatpush1.bf16.msra.mxu0 0
  %103 = vmatprep.subr.bf16.mxu0 0
  %104 = vmatpush1.bf16.msra.mxu0 0
  %105 = vmatprep.subr.bf16.mxu0 0
  %106 = vmatpush1.bf16.msra.mxu0 0
  %107 = vmatprep.subr.bf16.mxu0 0
  %108 = vmatpush1.bf16.msra.mxu0 0
  %109 = vmatprep.subr.bf16.mxu0 0
  %110 = vmatpush1.bf16.msra.mxu0 0
  %111 = vmatprep.subr.bf16.mxu0 0
  %112 = vmatpush1.bf16.msra.mxu0 %v88
  %113 = vmatprep.subr.bf16.mxu0 0
  %114 = vmatpush2.bf16.msra.mxu0 0
  %115 = vmatprep.subr.bf16.mxu0 0
  %116 = vmatpush2.bf16.msra.mxu0 0
  %117 = vmatprep.subr.bf16.mxu0 0
  %118 = vmatpush2.bf16.msra.mxu0 0
  %119 = vmatprep.subr.bf16.mxu0 0
  %120 = vmatpush2.bf16.msra.mxu0 0
  %121 = vmatprep.subr.bf16.mxu0 0
  %122 = vmatpush2.bf16.msra.mxu0 0
  %123 = vmatprep.subr.bf16.mxu0 0
  %124 = vmatpush2.bf16.msra.mxu0 0
  %125 = vmatprep.subr.bf16.mxu0 0
  %126 = vmatpush2.bf16.msra.mxu0 0
  %127 = vmatprep.subr.bf16.mxu0 0
  %128 = vmatpush2.bf16.msra.mxu0 0
  %129 = vmatprep.mubr.bf16.mxu0 0
  %130 = vmatmul.mubr.bf16.gmra.mxu0 %v92
  %v131 = vpop.f32.mrf.mxu0
  %v132 = vadd.f32 0.0, %v131
  %v133 = vpop.f32.mrf.mxu0
  %v134 = vpop.f32.mrf.mxu0
  %v135 = vadd.f32 0.0, %v134
  %v136 = vpop.f32.mrf.mxu0
  %137 = vmatprep.mubr.bf16.mxu0 0
  %138 = vmatmul.mubr.bf16.gmra.mxu0 %v95
  %v139 = vpop.f32.mrf.mxu0
  %v140 = vadd.f32 0.0, %v139
  %v141 = vpop.f32.mrf.mxu0
  %v142 = vpop.f32.mrf.mxu0
  %v143 = vadd.f32 0.0, %v142
  %v144 = vpop.f32.mrf.mxu0
  %145 = vdwg.mxu0
  %v146 = vld [vmem:[%s2] sm:$0xff]
  %v147 = vld [vmem:[%s2 + $0x8] sm:$0xff]
  %v148 = vld [vmem:[%s2 + $0x10] sm:$0xff]
  %v149 = vld [vmem:[%s2 + $0x18] sm:$0xff]
  %151 = vset.pattern.permute.xlu0 0
  %152 = vperm.xlu0 %151, %v146
  %v153 = vpop.permute.xlu0 %152
  %156 = vset.pattern.permute.xlu0 0
  %157 = vperm.xlu0 %156, %v147
  %v158 = vpop.permute.xlu0 %157
  %161 = vset.pattern.permute.xlu0 0
  %162 = vperm.xlu0 %161, %v148
  %v163 = vpop.permute.xlu0 %162
  %166 = vset.pattern.permute.xlu0 0
  %167 = vperm.xlu0 %166, %v149
  %v168 = vpop.permute.xlu0 %167
  %v178 = vunpack.c.l.b16 %v24
  %v179 = vunpack.c.h.b16 %v24
  %v180 = vunpack.c.l.b16 %v25
  %v181 = vunpack.c.l.b16 %v26
  %v182 = vunpack.c.h.b16 %v26
  %v183 = vunpack.c.l.b16 %v27
  %v184 = vunpack.c.l.b16 %v28
  %v185 = vunpack.c.h.b16 %v28
  %v186 = vunpack.c.l.b16 %v29
  %v187 = vunpack.c.l.b16 %v30
  %v188 = vunpack.c.h.b16 %v30
  %v189 = vunpack.c.l.b16 %v31
  %v190 = vpack.c.b16 %v181, %v178
  %v191 = vpack.c.b16 %v182, %v179
  %v192 = vpack.c.b16 %v183, %v180
  %v193 = vpack.c.b16 %v187, %v184
  %v194 = vpack.c.b16 %v188, %v185
  %v195 = vpack.c.b16 %v189, %v186
  %v236 = vunpack.c.l.b16 %v32
  %v237 = vunpack.c.l.b16 %v33
  %v238 = vunpack.c.l.b16 %v34
  %v239 = vunpack.c.l.b16 %v35
  %v240 = vunpack.c.l.b16 %v36
  %v241 = vunpack.c.l.b16 %v37
  %v242 = vunpack.c.l.b16 %v38
  %v243 = vunpack.c.l.b16 %v39
  %v244 = vunpack.c.l.b16 %v40
  %v245 = vunpack.c.l.b16 %v41
  %v246 = vunpack.c.l.b16 %v42
  %v247 = vunpack.c.l.b16 %v43
  %v248 = vunpack.c.l.b16 %v44
  %v249 = vunpack.c.l.b16 %v45
  %v250 = vunpack.c.l.b16 %v46
  %v251 = vunpack.c.l.b16 %v47
  %v252 = vunpack.c.l.b16 %v48
  %v253 = vunpack.c.l.b16 %v49
  %v254 = vunpack.c.l.b16 %v50
  %v255 = vunpack.c.l.b16 %v51
  %v256 = vunpack.c.l.b16 %v52
  %v257 = vunpack.c.l.b16 %v53
  %v258 = vunpack.c.l.b16 %v54
  %v259 = vunpack.c.l.b16 %v55
  %v260 = vunpack.c.l.b16 %v56
  %v261 = vunpack.c.l.b16 %v57
  %v262 = vunpack.c.l.b16 %v58
  %v263 = vunpack.c.l.b16 %v59
  %v264 = vunpack.c.l.b16 %v60
  %v265 = vunpack.c.l.b16 %v61
  %v266 = vunpack.c.l.b16 %v62
  %v267 = vunpack.c.l.b16 %v63
  %v268 = vunpack.c.l.b16 %v64
  %v269 = vunpack.c.l.b16 %v65
  %v270 = vunpack.c.l.b16 %v66
  %v271 = vunpack.c.l.b16 %v67
  %v272 = vpack.c.b16 %v237, %v236
  %v273 = vpack.c.b16 %v239, %v238
  %v274 = vpack.c.b16 %v241, %v240
  %v275 = vpack.c.b16 %v243, %v242
  %v276 = vpack.c.b16 %v245, %v244
  %v277 = vpack.c.b16 %v247, %v246
  %v278 = vpack.c.b16 %v249, %v248
  %v279 = vpack.c.b16 %v251, %v250
  %v280 = vpack.c.b16 %v253, %v252
  %v281 = vpack.c.b16 %v255, %v254
  %v282 = vpack.c.b16 %v257, %v256
  %v283 = vpack.c.b16 %v259, %v258
  %v284 = vpack.c.b16 %v261, %v260
  %v285 = vpack.c.b16 %v263, %v262
  %v286 = vpack.c.b16 %v265, %v264
  %v287 = vpack.c.b16 %v267, %v266
  %v288 = vpack.c.b16 %v269, %v268
  %v289 = vpack.c.b16 %v271, %v270
  %vm308 = vcmask 261120
  %v310 = vsel %vm308, %v192, 0
  %v313 = vsel %vm308, %v195, 0
  %315 = vmatprep.subr.bf16.mxu0 0
  %316 = vmatpush1.bf16.msra.mxu0 %v279
  %317 = vmatprep.subr.bf16.mxu0 0
  %318 = vmatpush1.bf16.msra.mxu0 %v278
  %319 = vmatprep.subr.bf16.mxu0 0
  %320 = vmatpush1.bf16.msra.mxu0 %v277
  %321 = vmatprep.subr.bf16.mxu0 0
  %322 = vmatpush1.bf16.msra.mxu0 %v276
  %323 = vmatprep.subr.bf16.mxu0 0
  %324 = vmatpush1.bf16.msra.mxu0 %v275
  %325 = vmatprep.subr.bf16.mxu0 0
  %326 = vmatpush1.bf16.msra.mxu0 %v274
  %327 = vmatprep.subr.bf16.mxu0 0
  %328 = vmatpush1.bf16.msra.mxu0 %v273
  %329 = vmatprep.subr.bf16.mxu0 0
  %330 = vmatpush1.bf16.msra.mxu0 %v272
  %331 = vmatprep.subr.bf16.mxu0 0
  %332 = vmatpush2.bf16.msra.mxu0 %v287
  %333 = vmatprep.subr.bf16.mxu0 0
  %334 = vmatpush2.bf16.msra.mxu0 %v286
  %335 = vmatprep.subr.bf16.mxu0 0
  %336 = vmatpush2.bf16.msra.mxu0 %v285
  %337 = vmatprep.subr.bf16.mxu0 0
  %338 = vmatpush2.bf16.msra.mxu0 %v284
  %339 = vmatprep.subr.bf16.mxu0 0
  %340 = vmatpush2.bf16.msra.mxu0 %v283
  %341 = vmatprep.subr.bf16.mxu0 0
  %342 = vmatpush2.bf16.msra.mxu0 %v282
  %343 = vmatprep.subr.bf16.mxu0 0
  %344 = vmatpush2.bf16.msra.mxu0 %v281
  %345 = vmatprep.subr.bf16.mxu0 0
  %346 = vmatpush2.bf16.msra.mxu0 %v280
  %347 = vmatprep.mubr.bf16.mxu0 %v191
  %348 = vmatmul.mubr.bf16.gmra.mxu0 %v190
  %v349 = vpop.f32.mrf.mxu0
  %v350 = vadd.f32 %v153, %v349
  %v351 = vpop.f32.mrf.mxu0
  %v352 = vpop.f32.mrf.mxu0
  %v353 = vadd.f32 %v158, %v352
  %v354 = vpop.f32.mrf.mxu0
  %355 = vmatprep.mubr.bf16.mxu0 %v194
  %356 = vmatmul.mubr.bf16.gmra.mxu0 %v193
  %v357 = vpop.f32.mrf.mxu0
  %v358 = vadd.f32 %v163, %v357
  %v359 = vpop.f32.mrf.mxu0
  %v360 = vpop.f32.mrf.mxu0
  %v361 = vadd.f32 %v168, %v360
  %v362 = vpop.f32.mrf.mxu0
  %363 = vdwg.mxu0
  %364 = vmatprep.subr.bf16.mxu0 0
  %365 = vmatpush1.bf16.msra.mxu0 0
  %366 = vmatprep.subr.bf16.mxu0 0
  %367 = vmatpush1.bf16.msra.mxu0 0
  %368 = vmatprep.subr.bf16.mxu0 0
  %369 = vmatpush1.bf16.msra.mxu0 0
  %370 = vmatprep.subr.bf16.mxu0 0
  %371 = vmatpush1.bf16.msra.mxu0 0
  %372 = vmatprep.subr.bf16.mxu0 0
  %373 = vmatpush1.bf16.msra.mxu0 0
  %374 = vmatprep.subr.bf16.mxu0 0
  %375 = vmatpush1.bf16.msra.mxu0 0
  %376 = vmatprep.subr.bf16.mxu0 0
  %377 = vmatpush1.bf16.msra.mxu0 %v289
  %378 = vmatprep.subr.bf16.mxu0 0
  %379 = vmatpush1.bf16.msra.mxu0 %v288
  %380 = vmatprep.subr.bf16.mxu0 0
  %381 = vmatpush2.bf16.msra.mxu0 0
  %382 = vmatprep.subr.bf16.mxu0 0
  %383 = vmatpush2.bf16.msra.mxu0 0
  %384 = vmatprep.subr.bf16.mxu0 0
  %385 = vmatpush2.bf16.msra.mxu0 0
  %386 = vmatprep.subr.bf16.mxu0 0
  %387 = vmatpush2.bf16.msra.mxu0 0
  %388 = vmatprep.subr.bf16.mxu0 0
  %389 = vmatpush2.bf16.msra.mxu0 0
  %390 = vmatprep.subr.bf16.mxu0 0
  %391 = vmatpush2.bf16.msra.mxu0 0
  %392 = vmatprep.subr.bf16.mxu0 0
  %393 = vmatpush2.bf16.msra.mxu0 0
  %394 = vmatprep.subr.bf16.mxu0 0
  %395 = vmatpush2.bf16.msra.mxu0 0
  %396 = vmatprep.mubr.bf16.mxu0 0
  %397 = vmatmul.mubr.bf16.gmra.mxu0 %v310
  %v398 = vpop.f32.mrf.mxu0
  %v399 = vadd.f32 %v350, %v398
  %v400 = vpop.f32.mrf.mxu0
  %v401 = vpop.f32.mrf.mxu0
  %v402 = vadd.f32 %v353, %v401
  %v403 = vpop.f32.mrf.mxu0
  %404 = vmatprep.mubr.bf16.mxu0 0
  %405 = vmatmul.mubr.bf16.gmra.mxu0 %v313
  %v406 = vpop.f32.mrf.mxu0
  %v407 = vadd.f32 %v358, %v406
  %v408 = vpop.f32.mrf.mxu0
  %v409 = vpop.f32.mrf.mxu0
  %v410 = vadd.f32 %v361, %v409
  %v411 = vpop.f32.mrf.mxu0
  %412 = vdwg.mxu0
  %v413 = vadd.f32 %v399, %v132
  %v414 = vadd.f32 %v402, %v135
  %v415 = vadd.f32 %v407, %v140
  %v416 = vadd.f32 %v410, %v143
  %v417 = vld [vmem:[%s5] sm:$0xff]
  %v418 = vld [vmem:[%s5 + $0x8] sm:$0xff]
  %v419 = vld [vmem:[%s5 + $0x10] sm:$0xff]
  %v420 = vld [vmem:[%s5 + $0x18] sm:$0xff]
  %422 = vset.pattern.permute.xlu0 0
  %423 = vperm.xlu0 %422, %v417
  %v424 = vpop.permute.xlu0 %423
  %427 = vset.pattern.permute.xlu0 0
  %428 = vperm.xlu0 %427, %v418
  %v429 = vpop.permute.xlu0 %428
  %432 = vset.pattern.permute.xlu0 0
  %433 = vperm.xlu0 %432, %v419
  %v434 = vpop.permute.xlu0 %433
  %437 = vset.pattern.permute.xlu0 0
  %438 = vperm.xlu0 %437, %v420
  %v439 = vpop.permute.xlu0 %438
  %v441 = vadd.f32 %v413, %v424
  %v442 = vadd.f32 %v414, %v429
  %v443 = vadd.f32 %v415, %v434
  %v444 = vadd.f32 %v416, %v439
  %v445 = vmax.f32 %v441, 0.0
  %v446 = vmax.f32 %v442, 0.0
  %v447 = vmax.f32 %v443, 0.0
  %v448 = vmax.f32 %v444, 0.0
  %449 = vst [vmem:[%s6] sm:$0xff] %v445
  %450 = vst [vmem:[%s6 + $0x8] sm:$0xff] %v446
  %451 = vst [vmem:[%s6 + $0x10] sm:$0xff] %v447
  %452 = vst [vmem:[%s6 + $0x18] sm:$0xff] %v448
  // Predicated region
  $region26: #{ocm_resnet_forward.27} parent=0 // pred_check
    _
  $region27: #{ocm_resnet_forward.27} parent=0 // pred_check_branch
    %454 = sbr.rel (0) target = $region29
  $region28: #{ocm_resnet_forward.27} parent=0 // pred_region
    _
  $region29: #{ocm_resnet_forward.27} parent=0 // pred_fallthru
    _
  // Predicated region
  $region30: #{ocm_resnet_forward.27} parent=0 // pred_check
    _
  $region31: #{ocm_resnet_forward.27} parent=0 // pred_check_branch
    %456 = sbr.rel (0) target = $region33
  $region32: #{ocm_resnet_forward.27} parent=0 // pred_region
    _
  $region33: #{ocm_resnet_forward.27} parent=0 // pred_fallthru
    _

// kernel: ocm_resnet_forward.28
$region0: #{ocm_resnet_forward.28}
  #allocation0 [shape = 'u32[]', space=smem, size = 0x4, offset = 0x4, fixed_abs, tag = 'smem constant byte address 0x4 - core index']
  #allocation1 [shape = 'u32[144,128]{1,0:T(1,128)}', space=vmem, size = 0x12000, scoped, tag = 'internal scratch']
  %s0 = inlined_call_operand.vmem [shape: bf16[32,288], index: 0, kind: input, shape index: {}]
  %s1 = inlined_call_operand.vmem [shape: bf16[288,128], index: 1, kind: input, shape index: {}]
  %s2 = inlined_call_operand.vmem [shape: f32[32,1], index: 2, kind: input, shape index: {}]
  %s3 = inlined_call_operand.vmem [shape: f32[32,128], index: 3, kind: output, shape index: {}]
  %s4 = sld [smem:[#allocation0]]
  $region22: #{ocm_resnet_forward.28} parent=0
    _
  %s6 = ssub.s32 1, %s4
  %s7 = scalar_select 0, %s6, %s4
  // Predicated region
  $region2: #{ocm_resnet_forward.28} parent=0 // pred_check
    _
  $region3: #{ocm_resnet_forward.28} parent=0 // pred_check_branch
    %9 = sbr.rel (0) target = $region5
  $region4: #{ocm_resnet_forward.28} parent=0 // pred_region
    _
  $region5: #{ocm_resnet_forward.28} parent=0 // pred_fallthru
    _
  // Predicated region
  $region6: #{ocm_resnet_forward.28} parent=0 // pred_check
    _
  $region7: #{ocm_resnet_forward.28} parent=0 // pred_check_branch
    %11 = sbr.rel (0) target = $region9
  $region8: #{ocm_resnet_forward.28} parent=0 // pred_region
    _
  $region9: #{ocm_resnet_forward.28} parent=0 // pred_fallthru
    _
  // Predicated region
  $region10: #{ocm_resnet_forward.28} parent=0 // pred_check
    _
  $region11: #{ocm_resnet_forward.28} parent=0 // pred_check_branch
    %13 = sbr.rel (0) target = $region13
  $region12: #{ocm_resnet_forward.28} parent=0 // pred_region
    _
  $region13: #{ocm_resnet_forward.28} parent=0 // pred_fallthru
    _
  %v15 = vld [vmem:[%s0] sm:$0xff]
  %v16 = vld [vmem:[%s0 + $0x8] sm:$0xf]
  %v17 = vld [vmem:[%s0 + $0xc] sm:$0xff]
  %v18 = vld [vmem:[%s0 + $0x14] sm:$0xf]
  %v19 = vld [vmem:[%s0 + $0x18] sm:$0xff]
  %v20 = vld [vmem:[%s0 + $0x20] sm:$0xf]
  %v21 = vld [vmem:[%s0 + $0x24] sm:$0xff]
  %v22 = vld [vmem:[%s0 + $0x2c] sm:$0xf]
  %v23 = vld [vmem:[%s1] sm:$0xf]
  %v24 = vld [vmem:[%s1 + $0x4] sm:$0xf]
  %v25 = vld [vmem:[%s1 + $0x8] sm:$0xf]
  %v26 = vld [vmem:[%s1 + $0xc] sm:$0xf]
  %v27 = vld [vmem:[%s1 + $0x10] sm:$0xf]
  %v28 = vld [vmem:[%s1 + $0x14] sm:$0xf]
  %v29 = vld [vmem:[%s1 + $0x18] sm:$0xf]
  %v30 = vld [vmem:[%s1 + $0x1c] sm:$0xf]
  %v31 = vld [vmem:[%s1 + $0x20] sm:$0xf]
  %v32 = vld [vmem:[%s1 + $0x24] sm:$0xf]
  %v33 = vld [vmem:[%s1 + $0x28] sm:$0xf]
  %v34 = vld [vmem:[%s1 + $0x2c] sm:$0xf]
  %v35 = vld [vmem:[%s1 + $0x30] sm:$0xf]
  %v36 = vld [vmem:[%s1 + $0x34] sm:$0xf]
  %v37 = vld [vmem:[%s1 + $0x38] sm:$0xf]
  %v38 = vld [vmem:[%s1 + $0x3c] sm:$0xf]
  %v39 = vld [vmem:[%s1 + $0x40] sm:$0xf]
  %v40 = vld [vmem:[%s1 + $0x44] sm:$0xf]
  %v41 = vld [vmem:[%s1 + $0x48] sm:$0xf]
  %v42 = vld [vmem:[%s1 + $0x4c] sm:$0xf]
  %v43 = vld [vmem:[%s1 + $0x50] sm:$0xf]
  %v44 = vld [vmem:[%s1 + $0x54] sm:$0xf]
  %v45 = vld [vmem:[%s1 + $0x58] sm:$0xf]
  %v46 = vld [vmem:[%s1 + $0x5c] sm:$0xf]
  %v47 = vld [vmem:[%s1 + $0x60] sm:$0xf]
  %v48 = vld [vmem:[%s1 + $0x64] sm:$0xf]
  %v49 = vld [vmem:[%s1 + $0x68] sm:$0xf]
  %v50 = vld [vmem:[%s1 + $0x6c] sm:$0xf]
  %v51 = vld [vmem:[%s1 + $0x70] sm:$0xf]
  %v52 = vld [vmem:[%s1 + $0x74] sm:$0xf]
  %v53 = vld [vmem:[%s1 + $0x78] sm:$0xf]
  %v54 = vld [vmem:[%s1 + $0x7c] sm:$0xf]
  %v55 = vld [vmem:[%s1 + $0x80] sm:$0xf]
  %v56 = vld [vmem:[%s1 + $0x84] sm:$0xf]
  %v57 = vld [vmem:[%s1 + $0x88] sm:$0xf]
  %v58 = vld [vmem:[%s1 + $0x8c] sm:$0xf]
  %v59 = vld [vmem:[%s2] sm:$0xff]
  %v60 = vld [vmem:[%s2 + $0x8] sm:$0xff]
  %v61 = vld [vmem:[%s2 + $0x10] sm:$0xff]
  %v62 = vld [vmem:[%s2 + $0x18] sm:$0xff]
  %64 = vset.pattern.permute.xlu0 0
  %65 = vperm.xlu0 %64, %v59
  %v66 = vpop.permute.xlu0 %65
  %69 = vset.pattern.permute.xlu0 0
  %70 = vperm.xlu0 %69, %v60
  %v71 = vpop.permute.xlu0 %70
  %74 = vset.pattern.permute.xlu0 0
  %75 = vperm.xlu0 %74, %v61
  %v76 = vpop.permute.xlu0 %75
  %79 = vset.pattern.permute.xlu0 0
  %80 = vperm.xlu0 %79, %v62
  %v81 = vpop.permute.xlu0 %80
  %v91 = vunpack.c.l.b16 %v15
  %v92 = vunpack.c.h.b16 %v15
  %v93 = vunpack.c.l.b16 %v16
  %v94 = vunpack.c.l.b16 %v17
  %v95 = vunpack.c.h.b16 %v17
  %v96 = vunpack.c.l.b16 %v18
  %v97 = vunpack.c.l.b16 %v19
  %v98 = vunpack.c.h.b16 %v19
  %v99 = vunpack.c.l.b16 %v20
  %v100 = vunpack.c.l.b16 %v21
  %v101 = vunpack.c.h.b16 %v21
  %v102 = vunpack.c.l.b16 %v22
  %v103 = vpack.c.b16 %v94, %v91
  %v104 = vpack.c.b16 %v95, %v92
  %v105 = vpack.c.b16 %v96, %v93
  %v106 = vpack.c.b16 %v100, %v97
  %v107 = vpack.c.b16 %v101, %v98
  %v108 = vpack.c.b16 %v102, %v99
  %v149 = vunpack.c.l.b16 %v23
  %v150 = vunpack.c.l.b16 %v24
  %v151 = vunpack.c.l.b16 %v25
  %v152 = vunpack.c.l.b16 %v26
  %v153 = vunpack.c.l.b16 %v27
  %v154 = vunpack.c.l.b16 %v28
  %v155 = vunpack.c.l.b16 %v29
  %v156 = vunpack.c.l.b16 %v30
  %v157 = vunpack.c.l.b16 %v31
  %v158 = vunpack.c.l.b16 %v32
  %v159 = vunpack.c.l.b16 %v33
  %v160 = vunpack.c.l.b16 %v34
  %v161 = vunpack.c.l.b16 %v35
  %v162 = vunpack.c.l.b16 %v36
  %v163 = vunpack.c.l.b16 %v37
  %v164 = vunpack.c.l.b16 %v38
  %v165 = vunpack.c.l.b16 %v39
  %v166 = vunpack.c.l.b16 %v40
  %v167 = vunpack.c.l.b16 %v41
  %v168 = vunpack.c.l.b16 %v42
  %v169 = vunpack.c.l.b16 %v43
  %v170 = vunpack.c.l.b16 %v44
  %v171 = vunpack.c.l.b16 %v45
  %v172 = vunpack.c.l.b16 %v46
  %v173 = vunpack.c.l.b16 %v47
  %v174 = vunpack.c.l.b16 %v48
  %v175 = vunpack.c.l.b16 %v49
  %v176 = vunpack.c.l.b16 %v50
  %v177 = vunpack.c.l.b16 %v51
  %v178 = vunpack.c.l.b16 %v52
  %v179 = vunpack.c.l.b16 %v53
  %v180 = vunpack.c.l.b16 %v54
  %v181 = vunpack.c.l.b16 %v55
  %v182 = vunpack.c.l.b16 %v56
  %v183 = vunpack.c.l.b16 %v57
  %v184 = vunpack.c.l.b16 %v58
  %v185 = vpack.c.b16 %v150, %v149
  %v186 = vpack.c.b16 %v152, %v151
  %v187 = vpack.c.b16 %v154, %v153
  %v188 = vpack.c.b16 %v156, %v155
  %v189 = vpack.c.b16 %v158, %v157
  %v190 = vpack.c.b16 %v160, %v159
  %v191 = vpack.c.b16 %v162, %v161
  %v192 = vpack.c.b16 %v164, %v163
  %v193 = vpack.c.b16 %v166, %v165
  %v194 = vpack.c.b16 %v168, %v167
  %v195 = vpack.c.b16 %v170, %v169
  %v196 = vpack.c.b16 %v172, %v171
  %v197 = vpack.c.b16 %v174, %v173
  %v198 = vpack.c.b16 %v176, %v175
  %v199 = vpack.c.b16 %v178, %v177
  %v200 = vpack.c.b16 %v180, %v179
  %v201 = vpack.c.b16 %v182, %v181
  %v202 = vpack.c.b16 %v184, %v183
  %vm221 = vcmask 261120
  %v223 = vsel %vm221, %v105, 0
  %v226 = vsel %vm221, %v108, 0
  %228 = vmatprep.subr.bf16.mxu0 0
  %229 = vmatpush1.bf16.msra.mxu0 %v192
  %230 = vmatprep.subr.bf16.mxu0 0
  %231 = vmatpush1.bf16.msra.mxu0 %v191
  %232 = vmatprep.subr.bf16.mxu0 0
  %233 = vmatpush1.bf16.msra.mxu0 %v190
  %234 = vmatprep.subr.bf16.mxu0 0
  %235 = vmatpush1.bf16.msra.mxu0 %v189
  %236 = vmatprep.subr.bf16.mxu0 0
  %237 = vmatpush1.bf16.msra.mxu0 %v188
  %238 = vmatprep.subr.bf16.mxu0 0
  %239 = vmatpush1.bf16.msra.mxu0 %v187
  %240 = vmatprep.subr.bf16.mxu0 0
  %241 = vmatpush1.bf16.msra.mxu0 %v186
  %242 = vmatprep.subr.bf16.mxu0 0
  %243 = vmatpush1.bf16.msra.mxu0 %v185
  %244 = vmatprep.subr.bf16.mxu0 0
  %245 = vmatpush2.bf16.msra.mxu0 %v200
  %246 = vmatprep.subr.bf16.mxu0 0
  %247 = vmatpush2.bf16.msra.mxu0 %v199
  %248 = vmatprep.subr.bf16.mxu0 0
  %249 = vmatpush2.bf16.msra.mxu0 %v198
  %250 = vmatprep.subr.bf16.mxu0 0
  %251 = vmatpush2.bf16.msra.mxu0 %v197
  %252 = vmatprep.subr.bf16.mxu0 0
  %253 = vmatpush2.bf16.msra.mxu0 %v196
  %254 = vmatprep.subr.bf16.mxu0 0
  %255 = vmatpush2.bf16.msra.mxu0 %v195
  %256 = vmatprep.subr.bf16.mxu0 0
  %257 = vmatpush2.bf16.msra.mxu0 %v194
  %258 = vmatprep.subr.bf16.mxu0 0
  %259 = vmatpush2.bf16.msra.mxu0 %v193
  %260 = vmatprep.mubr.bf16.mxu0 %v104
  %261 = vmatmul.mubr.bf16.gmra.mxu0 %v103
  %v262 = vpop.f32.mrf.mxu0
  %v263 = vadd.f32 %v66, %v262
  %v264 = vpop.f32.mrf.mxu0
  %v265 = vpop.f32.mrf.mxu0
  %v266 = vadd.f32 %v71, %v265
  %v267 = vpop.f32.mrf.mxu0
  %268 = vmatprep.mubr.bf16.mxu0 %v107
  %269 = vmatmul.mubr.bf16.gmra.mxu0 %v106
  %v270 = vpop.f32.mrf.mxu0
  %v271 = vadd.f32 %v76, %v270
  %v272 = vpop.f32.mrf.mxu0
  %v273 = vpop.f32.mrf.mxu0
  %v274 = vadd.f32 %v81, %v273
  %v275 = vpop.f32.mrf.mxu0
  %276 = vdwg.mxu0
  %277 = vmatprep.subr.bf16.mxu0 0
  %278 = vmatpush1.bf16.msra.mxu0 0
  %279 = vmatprep.subr.bf16.mxu0 0
  %280 = vmatpush1.bf16.msra.mxu0 0
  %281 = vmatprep.subr.bf16.mxu0 0
  %282 = vmatpush1.bf16.msra.mxu0 0
  %283 = vmatprep.subr.bf16.mxu0 0
  %284 = vmatpush1.bf16.msra.mxu0 0
  %285 = vmatprep.subr.bf16.mxu0 0
  %286 = vmatpush1.bf16.msra.mxu0 0
  %287 = vmatprep.subr.bf16.mxu0 0
  %288 = vmatpush1.bf16.msra.mxu0 0
  %289 = vmatprep.subr.bf16.mxu0 0
  %290 = vmatpush1.bf16.msra.mxu0 %v202
  %291 = vmatprep.subr.bf16.mxu0 0
  %292 = vmatpush1.bf16.msra.mxu0 %v201
  %293 = vmatprep.subr.bf16.mxu0 0
  %294 = vmatpush2.bf16.msra.mxu0 0
  %295 = vmatprep.subr.bf16.mxu0 0
  %296 = vmatpush2.bf16.msra.mxu0 0
  %297 = vmatprep.subr.bf16.mxu0 0
  %298 = vmatpush2.bf16.msra.mxu0 0
  %299 = vmatprep.subr.bf16.mxu0 0
  %300 = vmatpush2.bf16.msra.mxu0 0
  %301 = vmatprep.subr.bf16.mxu0 0
  %302 = vmatpush2.bf16.msra.mxu0 0
  %303 = vmatprep.subr.bf16.mxu0 0
  %304 = vmatpush2.bf16.msra.mxu0 0
  %305 = vmatprep.subr.bf16.mxu0 0
  %306 = vmatpush2.bf16.msra.mxu0 0
  %307 = vmatprep.subr.bf16.mxu0 0
  %308 = vmatpush2.bf16.msra.mxu0 0
  %309 = vmatprep.mubr.bf16.mxu0 0
  %310 = vmatmul.mubr.bf16.gmra.mxu0 %v223
  %v311 = vpop.f32.mrf.mxu0
  %v312 = vadd.f32 %v263, %v311
  %v313 = vpop.f32.mrf.mxu0
  %v314 = vpop.f32.mrf.mxu0
  %v315 = vadd.f32 %v266, %v314
  %v316 = vpop.f32.mrf.mxu0
  %317 = vmatprep.mubr.bf16.mxu0 0
  %318 = vmatmul.mubr.bf16.gmra.mxu0 %v226
  %v319 = vpop.f32.mrf.mxu0
  %v320 = vadd.f32 %v271, %v319
  %v321 = vpop.f32.mrf.mxu0
  %v322 = vpop.f32.mrf.mxu0
  %v323 = vadd.f32 %v274, %v322
  %v324 = vpop.f32.mrf.mxu0
  %325 = vdwg.mxu0
  %v326 = vmax.f32 %v312, 0.0
  %v327 = vmax.f32 %v315, 0.0
  %v328 = vmax.f32 %v320, 0.0
  %v329 = vmax.f32 %v323, 0.0
  %330 = vst [vmem:[%s3] sm:$0xff] %v326
  %331 = vst [vmem:[%s3 + $0x8] sm:$0xff] %v327
  %332 = vst [vmem:[%s3 + $0x10] sm:$0xff] %v328
  %333 = vst [vmem:[%s3 + $0x18] sm:$0xff] %v329
  // Predicated region
  $region14: #{ocm_resnet_forward.28} parent=0 // pred_check
    _
  $region15: #{ocm_resnet_forward.28} parent=0 // pred_check_branch
    %335 = sbr.rel (0) target = $region17
  $region16: #{ocm_resnet_forward.28} parent=0 // pred_region
    _
  $region17: #{ocm_resnet_forward.28} parent=0 // pred_fallthru
    _
  // Predicated region
  $region18: #{ocm_resnet_forward.28} parent=0 // pred_check
    _
  $region19: #{ocm_resnet_forward.28} parent=0 // pred_check_branch
    %337 = sbr.rel (0) target = $region21
  $region20: #{ocm_resnet_forward.28} parent=0 // pred_region
    _
  $region21: #{ocm_resnet_forward.28} parent=0 // pred_fallthru
    _

// kernel: ocm_resnet_forward.29
$region0: #{ocm_resnet_forward.29}
  #allocation0 [shape = 'u32[]', space=smem, size = 0x4, offset = 0x4, fixed_abs, tag = 'smem constant byte address 0x4 - core index']
  #allocation1 [shape = 'u32[144,128]{1,0:T(1,128)}', space=vmem, size = 0x12000, scoped, tag = 'internal scratch']
  %s0 = inlined_call_operand.vmem [shape: bf16[32,288], index: 0, kind: input, shape index: {}]
  %s1 = inlined_call_operand.vmem [shape: bf16[288,128], index: 1, kind: input, shape index: {}]
  %s2 = inlined_call_operand.vmem [shape: f32[32,1], index: 2, kind: input, shape index: {}]
  %s3 = inlined_call_operand.vmem [shape: f32[32,128], index: 3, kind: input, shape index: {}]
  %s4 = inlined_call_operand.vmem [shape: f32[32,128], index: 4, kind: output, shape index: {}]
  %s5 = sld [smem:[#allocation0]]
  $region26: #{ocm_resnet_forward.29} parent=0
    _
  %s7 = ssub.s32 1, %s5
  %s8 = scalar_select 0, %s7, %s5
  // Predicated region
  $region2: #{ocm_resnet_forward.29} parent=0 // pred_check
    _
  $region3: #{ocm_resnet_forward.29} parent=0 // pred_check_branch
    %10 = sbr.rel (0) target = $region5
  $region4: #{ocm_resnet_forward.29} parent=0 // pred_region
    _
  $region5: #{ocm_resnet_forward.29} parent=0 // pred_fallthru
    _
  // Predicated region
  $region6: #{ocm_resnet_forward.29} parent=0 // pred_check
    _
  $region7: #{ocm_resnet_forward.29} parent=0 // pred_check_branch
    %12 = sbr.rel (0) target = $region9
  $region8: #{ocm_resnet_forward.29} parent=0 // pred_region
    _
  $region9: #{ocm_resnet_forward.29} parent=0 // pred_fallthru
    _
  // Predicated region
  $region10: #{ocm_resnet_forward.29} parent=0 // pred_check
    _
  $region11: #{ocm_resnet_forward.29} parent=0 // pred_check_branch
    %14 = sbr.rel (0) target = $region13
  $region12: #{ocm_resnet_forward.29} parent=0 // pred_region
    _
  $region13: #{ocm_resnet_forward.29} parent=0 // pred_fallthru
    _
  // Predicated region
  $region14: #{ocm_resnet_forward.29} parent=0 // pred_check
    _
  $region15: #{ocm_resnet_forward.29} parent=0 // pred_check_branch
    %16 = sbr.rel (0) target = $region17
  $region16: #{ocm_resnet_forward.29} parent=0 // pred_region
    _
  $region17: #{ocm_resnet_forward.29} parent=0 // pred_fallthru
    _
  %v18 = vld [vmem:[%s0] sm:$0xff]
  %v19 = vld [vmem:[%s0 + $0x8] sm:$0xf]
  %v20 = vld [vmem:[%s0 + $0xc] sm:$0xff]
  %v21 = vld [vmem:[%s0 + $0x14] sm:$0xf]
  %v22 = vld [vmem:[%s0 + $0x18] sm:$0xff]
  %v23 = vld [vmem:[%s0 + $0x20] sm:$0xf]
  %v24 = vld [vmem:[%s0 + $0x24] sm:$0xff]
  %v25 = vld [vmem:[%s0 + $0x2c] sm:$0xf]
  %v26 = vld [vmem:[%s1] sm:$0xf]
  %v27 = vld [vmem:[%s1 + $0x4] sm:$0xf]
  %v28 = vld [vmem:[%s1 + $0x8] sm:$0xf]
  %v29 = vld [vmem:[%s1 + $0xc] sm:$0xf]
  %v30 = vld [vmem:[%s1 + $0x10] sm:$0xf]
  %v31 = vld [vmem:[%s1 + $0x14] sm:$0xf]
  %v32 = vld [vmem:[%s1 + $0x18] sm:$0xf]
  %v33 = vld [vmem:[%s1 + $0x1c] sm:$0xf]
  %v34 = vld [vmem:[%s1 + $0x20] sm:$0xf]
  %v35 = vld [vmem:[%s1 + $0x24] sm:$0xf]
  %v36 = vld [vmem:[%s1 + $0x28] sm:$0xf]
  %v37 = vld [vmem:[%s1 + $0x2c] sm:$0xf]
  %v38 = vld [vmem:[%s1 + $0x30] sm:$0xf]
  %v39 = vld [vmem:[%s1 + $0x34] sm:$0xf]
  %v40 = vld [vmem:[%s1 + $0x38] sm:$0xf]
  %v41 = vld [vmem:[%s1 + $0x3c] sm:$0xf]
  %v42 = vld [vmem:[%s1 + $0x40] sm:$0xf]
  %v43 = vld [vmem:[%s1 + $0x44] sm:$0xf]
  %v44 = vld [vmem:[%s1 + $0x48] sm:$0xf]
  %v45 = vld [vmem:[%s1 + $0x4c] sm:$0xf]
  %v46 = vld [vmem:[%s1 + $0x50] sm:$0xf]
  %v47 = vld [vmem:[%s1 + $0x54] sm:$0xf]
  %v48 = vld [vmem:[%s1 + $0x58] sm:$0xf]
  %v49 = vld [vmem:[%s1 + $0x5c] sm:$0xf]
  %v50 = vld [vmem:[%s1 + $0x60] sm:$0xf]
  %v51 = vld [vmem:[%s1 + $0x64] sm:$0xf]
  %v52 = vld [vmem:[%s1 + $0x68] sm:$0xf]
  %v53 = vld [vmem:[%s1 + $0x6c] sm:$0xf]
  %v54 = vld [vmem:[%s1 + $0x70] sm:$0xf]
  %v55 = vld [vmem:[%s1 + $0x74] sm:$0xf]
  %v56 = vld [vmem:[%s1 + $0x78] sm:$0xf]
  %v57 = vld [vmem:[%s1 + $0x7c] sm:$0xf]
  %v58 = vld [vmem:[%s1 + $0x80] sm:$0xf]
  %v59 = vld [vmem:[%s1 + $0x84] sm:$0xf]
  %v60 = vld [vmem:[%s1 + $0x88] sm:$0xf]
  %v61 = vld [vmem:[%s1 + $0x8c] sm:$0xf]
  %v62 = vld [vmem:[%s2] sm:$0xff]
  %v63 = vld [vmem:[%s2 + $0x8] sm:$0xff]
  %v64 = vld [vmem:[%s2 + $0x10] sm:$0xff]
  %v65 = vld [vmem:[%s2 + $0x18] sm:$0xff]
  %67 = vset.pattern.permute.xlu0 0
  %68 = vperm.xlu0 %67, %v62
  %v69 = vpop.permute.xlu0 %68
  %72 = vset.pattern.permute.xlu0 0
  %73 = vperm.xlu0 %72, %v63
  %v74 = vpop.permute.xlu0 %73
  %77 = vset.pattern.permute.xlu0 0
  %78 = vperm.xlu0 %77, %v64
  %v79 = vpop.permute.xlu0 %78
  %82 = vset.pattern.permute.xlu0 0
  %83 = vperm.xlu0 %82, %v65
  %v84 = vpop.permute.xlu0 %83
  %v94 = vunpack.c.l.b16 %v18
  %v95 = vunpack.c.h.b16 %v18
  %v96 = vunpack.c.l.b16 %v19
  %v97 = vunpack.c.l.b16 %v20
  %v98 = vunpack.c.h.b16 %v20
  %v99 = vunpack.c.l.b16 %v21
  %v100 = vunpack.c.l.b16 %v22
  %v101 = vunpack.c.h.b16 %v22
  %v102 = vunpack.c.l.b16 %v23
  %v103 = vunpack.c.l.b16 %v24
  %v104 = vunpack.c.h.b16 %v24
  %v105 = vunpack.c.l.b16 %v25
  %v106 = vpack.c.b16 %v97, %v94
  %v107 = vpack.c.b16 %v98, %v95
  %v108 = vpack.c.b16 %v99, %v96
  %v109 = vpack.c.b16 %v103, %v100
  %v110 = vpack.c.b16 %v104, %v101
  %v111 = vpack.c.b16 %v105, %v102
  %v152 = vunpack.c.l.b16 %v26
  %v153 = vunpack.c.l.b16 %v27
  %v154 = vunpack.c.l.b16 %v28
  %v155 = vunpack.c.l.b16 %v29
  %v156 = vunpack.c.l.b16 %v30
  %v157 = vunpack.c.l.b16 %v31
  %v158 = vunpack.c.l.b16 %v32
  %v159 = vunpack.c.l.b16 %v33
  %v160 = vunpack.c.l.b16 %v34
  %v161 = vunpack.c.l.b16 %v35
  %v162 = vunpack.c.l.b16 %v36
  %v163 = vunpack.c.l.b16 %v37
  %v164 = vunpack.c.l.b16 %v38
  %v165 = vunpack.c.l.b16 %v39
  %v166 = vunpack.c.l.b16 %v40
  %v167 = vunpack.c.l.b16 %v41
  %v168 = vunpack.c.l.b16 %v42
  %v169 = vunpack.c.l.b16 %v43
  %v170 = vunpack.c.l.b16 %v44
  %v171 = vunpack.c.l.b16 %v45
  %v172 = vunpack.c.l.b16 %v46
  %v173 = vunpack.c.l.b16 %v47
  %v174 = vunpack.c.l.b16 %v48
  %v175 = vunpack.c.l.b16 %v49
  %v176 = vunpack.c.l.b16 %v50
  %v177 = vunpack.c.l.b16 %v51
  %v178 = vunpack.c.l.b16 %v52
  %v179 = vunpack.c.l.b16 %v53
  %v180 = vunpack.c.l.b16 %v54
  %v181 = vunpack.c.l.b16 %v55
  %v182 = vunpack.c.l.b16 %v56
  %v183 = vunpack.c.l.b16 %v57
  %v184 = vunpack.c.l.b16 %v58
  %v185 = vunpack.c.l.b16 %v59
  %v186 = vunpack.c.l.b16 %v60
  %v187 = vunpack.c.l.b16 %v61
  %v188 = vpack.c.b16 %v153, %v152
  %v189 = vpack.c.b16 %v155, %v154
  %v190 = vpack.c.b16 %v157, %v156
  %v191 = vpack.c.b16 %v159, %v158
  %v192 = vpack.c.b16 %v161, %v160
  %v193 = vpack.c.b16 %v163, %v162
  %v194 = vpack.c.b16 %v165, %v164
  %v195 = vpack.c.b16 %v167, %v166
  %v196 = vpack.c.b16 %v169, %v168
  %v197 = vpack.c.b16 %v171, %v170
  %v198 = vpack.c.b16 %v173, %v172
  %v199 = vpack.c.b16 %v175, %v174
  %v200 = vpack.c.b16 %v177, %v176
  %v201 = vpack.c.b16 %v179, %v178
  %v202 = vpack.c.b16 %v181, %v180
  %v203 = vpack.c.b16 %v183, %v182
  %v204 = vpack.c.b16 %v185, %v184
  %v205 = vpack.c.b16 %v187, %v186
  %vm224 = vcmask 261120
  %v226 = vsel %vm224, %v108, 0
  %v229 = vsel %vm224, %v111, 0
  %231 = vmatprep.subr.bf16.mxu0 0
  %232 = vmatpush1.bf16.msra.mxu0 %v195
  %233 = vmatprep.subr.bf16.mxu0 0
  %234 = vmatpush1.bf16.msra.mxu0 %v194
  %235 = vmatprep.subr.bf16.mxu0 0
  %236 = vmatpush1.bf16.msra.mxu0 %v193
  %237 = vmatprep.subr.bf16.mxu0 0
  %238 = vmatpush1.bf16.msra.mxu0 %v192
  %239 = vmatprep.subr.bf16.mxu0 0
  %240 = vmatpush1.bf16.msra.mxu0 %v191
  %241 = vmatprep.subr.bf16.mxu0 0
  %242 = vmatpush1.bf16.msra.mxu0 %v190
  %243 = vmatprep.subr.bf16.mxu0 0
  %244 = vmatpush1.bf16.msra.mxu0 %v189
  %245 = vmatprep.subr.bf16.mxu0 0
  %246 = vmatpush1.bf16.msra.mxu0 %v188
  %247 = vmatprep.subr.bf16.mxu0 0
  %248 = vmatpush2.bf16.msra.mxu0 %v203
  %249 = vmatprep.subr.bf16.mxu0 0
  %250 = vmatpush2.bf16.msra.mxu0 %v202
  %251 = vmatprep.subr.bf16.mxu0 0
  %252 = vmatpush2.bf16.msra.mxu0 %v201
  %253 = vmatprep.subr.bf16.mxu0 0
  %254 = vmatpush2.bf16.msra.mxu0 %v200
  %255 = vmatprep.subr.bf16.mxu0 0
  %256 = vmatpush2.bf16.msra.mxu0 %v199
  %257 = vmatprep.subr.bf16.mxu0 0
  %258 = vmatpush2.bf16.msra.mxu0 %v198
  %259 = vmatprep.subr.bf16.mxu0 0
  %260 = vmatpush2.bf16.msra.mxu0 %v197
  %261 = vmatprep.subr.bf16.mxu0 0
  %262 = vmatpush2.bf16.msra.mxu0 %v196
  %263 = vmatprep.mubr.bf16.mxu0 %v107
  %264 = vmatmul.mubr.bf16.gmra.mxu0 %v106
  %v265 = vpop.f32.mrf.mxu0
  %v266 = vadd.f32 %v69, %v265
  %v267 = vpop.f32.mrf.mxu0
  %v268 = vpop.f32.mrf.mxu0
  %v269 = vadd.f32 %v74, %v268
  %v270 = vpop.f32.mrf.mxu0
  %271 = vmatprep.mubr.bf16.mxu0 %v110
  %272 = vmatmul.mubr.bf16.gmra.mxu0 %v109
  %v273 = vpop.f32.mrf.mxu0
  %v274 = vadd.f32 %v79, %v273
  %v275 = vpop.f32.mrf.mxu0
  %v276 = vpop.f32.mrf.mxu0
  %v277 = vadd.f32 %v84, %v276
  %v278 = vpop.f32.mrf.mxu0
  %279 = vdwg.mxu0
  %280 = vmatprep.subr.bf16.mxu0 0
  %281 = vmatpush1.bf16.msra.mxu0 0
  %282 = vmatprep.subr.bf16.mxu0 0
  %283 = vmatpush1.bf16.msra.mxu0 0
  %284 = vmatprep.subr.bf16.mxu0 0
  %285 = vmatpush1.bf16.msra.mxu0 0
  %286 = vmatprep.subr.bf16.mxu0 0
  %287 = vmatpush1.bf16.msra.mxu0 0
  %288 = vmatprep.subr.bf16.mxu0 0
  %289 = vmatpush1.bf16.msra.mxu0 0
  %290 = vmatprep.subr.bf16.mxu0 0
  %291 = vmatpush1.bf16.msra.mxu0 0
  %292 = vmatprep.subr.bf16.mxu0 0
  %293 = vmatpush1.bf16.msra.mxu0 %v205
  %294 = vmatprep.subr.bf16.mxu0 0
  %295 = vmatpush1.bf16.msra.mxu0 %v204
  %296 = vmatprep.subr.bf16.mxu0 0
  %297 = vmatpush2.bf16.msra.mxu0 0
  %298 = vmatprep.subr.bf16.mxu0 0
  %299 = vmatpush2.bf16.msra.mxu0 0
  %300 = vmatprep.subr.bf16.mxu0 0
  %301 = vmatpush2.bf16.msra.mxu0 0
  %302 = vmatprep.subr.bf16.mxu0 0
  %303 = vmatpush2.bf16.msra.mxu0 0
  %304 = vmatprep.subr.bf16.mxu0 0
  %305 = vmatpush2.bf16.msra.mxu0 0
  %306 = vmatprep.subr.bf16.mxu0 0
  %307 = vmatpush2.bf16.msra.mxu0 0
  %308 = vmatprep.subr.bf16.mxu0 0
  %309 = vmatpush2.bf16.msra.mxu0 0
  %310 = vmatprep.subr.bf16.mxu0 0
  %311 = vmatpush2.bf16.msra.mxu0 0
  %312 = vmatprep.mubr.bf16.mxu0 0
  %313 = vmatmul.mubr.bf16.gmra.mxu0 %v226
  %v314 = vpop.f32.mrf.mxu0
  %v315 = vadd.f32 %v266, %v314
  %v316 = vpop.f32.mrf.mxu0
  %v317 = vpop.f32.mrf.mxu0
  %v318 = vadd.f32 %v269, %v317
  %v319 = vpop.f32.mrf.mxu0
  %320 = vmatprep.mubr.bf16.mxu0 0
  %321 = vmatmul.mubr.bf16.gmra.mxu0 %v229
  %v322 = vpop.f32.mrf.mxu0
  %v323 = vadd.f32 %v274, %v322
  %v324 = vpop.f32.mrf.mxu0
  %v325 = vpop.f32.mrf.mxu0
  %v326 = vadd.f32 %v277, %v325
  %v327 = vpop.f32.mrf.mxu0
  %328 = vdwg.mxu0
  %v329 = vld [vmem:[%s3] sm:$0xff]
  %v330 = vld [vmem:[%s3 + $0x8] sm:$0xff]
  %v331 = vld [vmem:[%s3 + $0x10] sm:$0xff]
  %v332 = vld [vmem:[%s3 + $0x18] sm:$0xff]
  %v333 = vadd.f32 %v315, %v329
  %v334 = vadd.f32 %v318, %v330
  %v335 = vadd.f32 %v323, %v331
  %v336 = vadd.f32 %v326, %v332
  %v337 = vmax.f32 %v333, 0.0
  %v338 = vmax.f32 %v334, 0.0
  %v339 = vmax.f32 %v335, 0.0
  %v340 = vmax.f32 %v336, 0.0
  %341 = vst [vmem:[%s4] sm:$0xff] %v337
  %342 = vst [vmem:[%s4 + $0x8] sm:$0xff] %v338
  %343 = vst [vmem:[%s4 + $0x10] sm:$0xff] %v339
  %344 = vst [vmem:[%s4 + $0x18] sm:$0xff] %v340
  // Predicated region
  $region18: #{ocm_resnet_forward.29} parent=0 // pred_check
    _
  $region19: #{ocm_resnet_forward.29} parent=0 // pred_check_branch
    %346 = sbr.rel (0) target = $region21
  $region20: #{ocm_resnet_forward.29} parent=0 // pred_region
    _
  $region21: #{ocm_resnet_forward.29} parent=0 // pred_fallthru
    _
  // Predicated region
  $region22: #{ocm_resnet_forward.29} parent=0 // pred_check
    _
  $region23: #{ocm_resnet_forward.29} parent=0 // pred_check_branch
    %348 = sbr.rel (0) target = $region25
  $region24: #{ocm_resnet_forward.29} parent=0 // pred_region
    _
  $region25: #{ocm_resnet_forward.29} parent=0 // pred_fallthru
    _

// kernel: ocm_resnet_forward.30
$region0: #{ocm_resnet_forward.30}
  #allocation0 [shape = 'u32[]', space=smem, size = 0x4, offset = 0x4, fixed_abs, tag = 'smem constant byte address 0x4 - core index']
  #allocation1 [shape = 'u32[144,128]{1,0:T(1,128)}', space=vmem, size = 0x12000, scoped, tag = 'internal scratch']
  %s0 = inlined_call_operand.vmem [shape: bf16[64,288], index: 0, kind: input, shape index: {}]
  %s1 = inlined_call_operand.vmem [shape: bf16[288,32], index: 1, kind: input, shape index: {}]
  %s2 = inlined_call_operand.vmem [shape: f32[64,1], index: 2, kind: input, shape index: {}]
  %s3 = inlined_call_operand.vmem [shape: f32[64,32], index: 3, kind: output, shape index: {}]
  %s4 = sld [smem:[#allocation0]]
  $region22: #{ocm_resnet_forward.30} parent=0
    _
  %s6 = ssub.s32 1, %s4
  %s7 = scalar_select 0, %s6, %s4
  // Predicated region
  $region2: #{ocm_resnet_forward.30} parent=0 // pred_check
    _
  $region3: #{ocm_resnet_forward.30} parent=0 // pred_check_branch
    %9 = sbr.rel (0) target = $region5
  $region4: #{ocm_resnet_forward.30} parent=0 // pred_region
    _
  $region5: #{ocm_resnet_forward.30} parent=0 // pred_fallthru
    _
  // Predicated region
  $region6: #{ocm_resnet_forward.30} parent=0 // pred_check
    _
  $region7: #{ocm_resnet_forward.30} parent=0 // pred_check_branch
    %11 = sbr.rel (0) target = $region9
  $region8: #{ocm_resnet_forward.30} parent=0 // pred_region
    _
  $region9: #{ocm_resnet_forward.30} parent=0 // pred_fallthru
    _
  // Predicated region
  $region10: #{ocm_resnet_forward.30} parent=0 // pred_check
    _
  $region11: #{ocm_resnet_forward.30} parent=0 // pred_check_branch
    %13 = sbr.rel (0) target = $region13
  $region12: #{ocm_resnet_forward.30} parent=0 // pred_region
    _
  $region13: #{ocm_resnet_forward.30} parent=0 // pred_fallthru
    _
  %v15 = vld [vmem:[%s0] sm:$0xff]
  %v16 = vld [vmem:[%s0 + $0x8] sm:$0xf]
  %v17 = vld [vmem:[%s0 + $0xc] sm:$0xff]
  %v18 = vld [vmem:[%s0 + $0x14] sm:$0xf]
  %v19 = vld [vmem:[%s0 + $0x18] sm:$0xff]
  %v20 = vld [vmem:[%s0 + $0x20] sm:$0xf]
  %v21 = vld [vmem:[%s0 + $0x24] sm:$0xff]
  %v22 = vld [vmem:[%s0 + $0x2c] sm:$0xf]
  %v23 = vld [vmem:[%s0 + $0x30] sm:$0xff]
  %v24 = vld [vmem:[%s0 + $0x38] sm:$0xf]
  %v25 = vld [vmem:[%s0 + $0x3c] sm:$0xff]
  %v26 = vld [vmem:[%s0 + $0x44] sm:$0xf]
  %v27 = vld [vmem:[%s0 + $0x48] sm:$0xff]
  %v28 = vld [vmem:[%s0 + $0x50] sm:$0xf]
  %v29 = vld [vmem:[%s0 + $0x54] sm:$0xff]
  %v30 = vld [vmem:[%s0 + $0x5c] sm:$0xf]
  %v31 = vld [vmem:[%s1] sm:$0xf]
  %v32 = vld [vmem:[%s1 + $0x4] sm:$0xf]
  %v33 = vld [vmem:[%s1 + $0x8] sm:$0xf]
  %v34 = vld [vmem:[%s1 + $0xc] sm:$0xf]
  %v35 = vld [vmem:[%s1 + $0x10] sm:$0xf]
  %v36 = vld [vmem:[%s1 + $0x14] sm:$0xf]
  %v37 = vld [vmem:[%s1 + $0x18] sm:$0xf]
  %v38 = vld [vmem:[%s1 + $0x1c] sm:$0xf]
  %v39 = vld [vmem:[%s1 + $0x20] sm:$0xf]
  %v40 = vld [vmem:[%s1 + $0x24] sm:$0xf]
  %v41 = vld [vmem:[%s1 + $0x28] sm:$0xf]
  %v42 = vld [vmem:[%s1 + $0x2c] sm:$0xf]
  %v43 = vld [vmem:[%s1 + $0x30] sm:$0xf]
  %v44 = vld [vmem:[%s1 + $0x34] sm:$0xf]
  %v45 = vld [vmem:[%s1 + $0x38] sm:$0xf]
  %v46 = vld [vmem:[%s1 + $0x3c] sm:$0xf]
  %v47 = vld [vmem:[%s1 + $0x40] sm:$0xf]
  %v48 = vld [vmem:[%s1 + $0x44] sm:$0xf]
  %v49 = vld [vmem:[%s1 + $0x48] sm:$0xf]
  %v50 = vld [vmem:[%s1 + $0x4c] sm:$0xf]
  %v51 = vld [vmem:[%s1 + $0x50] sm:$0xf]
  %v52 = vld [vmem:[%s1 + $0x54] sm:$0xf]
  %v53 = vld [vmem:[%s1 + $0x58] sm:$0xf]
  %v54 = vld [vmem:[%s1 + $0x5c] sm:$0xf]
  %v55 = vld [vmem:[%s1 + $0x60] sm:$0xf]
  %v56 = vld [vmem:[%s1 + $0x64] sm:$0xf]
  %v57 = vld [vmem:[%s1 + $0x68] sm:$0xf]
  %v58 = vld [vmem:[%s1 + $0x6c] sm:$0xf]
  %v59 = vld [vmem:[%s1 + $0x70] sm:$0xf]
  %v60 = vld [vmem:[%s1 + $0x74] sm:$0xf]
  %v61 = vld [vmem:[%s1 + $0x78] sm:$0xf]
  %v62 = vld [vmem:[%s1 + $0x7c] sm:$0xf]
  %v63 = vld [vmem:[%s1 + $0x80] sm:$0xf]
  %v64 = vld [vmem:[%s1 + $0x84] sm:$0xf]
  %v65 = vld [vmem:[%s1 + $0x88] sm:$0xf]
  %v66 = vld [vmem:[%s1 + $0x8c] sm:$0xf]
  %v67 = vld [vmem:[%s2] sm:$0xff]
  %v68 = vld [vmem:[%s2 + $0x8] sm:$0xff]
  %v69 = vld [vmem:[%s2 + $0x10] sm:$0xff]
  %v70 = vld [vmem:[%s2 + $0x18] sm:$0xff]
  %v71 = vld [vmem:[%s2 + $0x20] sm:$0xff]
  %v72 = vld [vmem:[%s2 + $0x28] sm:$0xff]
  %v73 = vld [vmem:[%s2 + $0x30] sm:$0xff]
  %v74 = vld [vmem:[%s2 + $0x38] sm:$0xff]
  %76 = vset.pattern.permute.xlu0 0
  %77 = vperm.xlu0 %76, %v67
  %v78 = vpop.permute.xlu0 %77
  %81 = vset.pattern.permute.xlu0 0
  %82 = vperm.xlu0 %81, %v68
  %v83 = vpop.permute.xlu0 %82
  %86 = vset.pattern.permute.xlu0 0
  %87 = vperm.xlu0 %86, %v69
  %v88 = vpop.permute.xlu0 %87
  %91 = vset.pattern.permute.xlu0 0
  %92 = vperm.xlu0 %91, %v70
  %v93 = vpop.permute.xlu0 %92
  %96 = vset.pattern.permute.xlu0 0
  %97 = vperm.xlu0 %96, %v71
  %v98 = vpop.permute.xlu0 %97
  %101 = vset.pattern.permute.xlu0 0
  %102 = vperm.xlu0 %101, %v72
  %v103 = vpop.permute.xlu0 %102
  %106 = vset.pattern.permute.xlu0 0
  %107 = vperm.xlu0 %106, %v73
  %v108 = vpop.permute.xlu0 %107
  %111 = vset.pattern.permute.xlu0 0
  %112 = vperm.xlu0 %111, %v74
  %v113 = vpop.permute.xlu0 %112
  %v131 = vunpack.c.l.b16 %v15
  %v132 = vunpack.c.h.b16 %v15
  %v133 = vunpack.c.l.b16 %v16
  %v134 = vunpack.c.l.b16 %v17
  %v135 = vunpack.c.h.b16 %v17
  %v136 = vunpack.c.l.b16 %v18
  %v137 = vunpack.c.l.b16 %v19
  %v138 = vunpack.c.h.b16 %v19
  %v139 = vunpack.c.l.b16 %v20
  %v140 = vunpack.c.l.b16 %v21
  %v141 = vunpack.c.h.b16 %v21
  %v142 = vunpack.c.l.b16 %v22
  %v143 = vunpack.c.l.b16 %v23
  %v144 = vunpack.c.h.b16 %v23
  %v145 = vunpack.c.l.b16 %v24
  %v146 = vunpack.c.l.b16 %v25
  %v147 = vunpack.c.h.b16 %v25
  %v148 = vunpack.c.l.b16 %v26
  %v149 = vunpack.c.l.b16 %v27
  %v150 = vunpack.c.h.b16 %v27
  %v151 = vunpack.c.l.b16 %v28
  %v152 = vunpack.c.l.b16 %v29
  %v153 = vunpack.c.h.b16 %v29
  %v154 = vunpack.c.l.b16 %v30
  %v155 = vpack.c.b16 %v134, %v131
  %v156 = vpack.c.b16 %v135, %v132
  %v157 = vpack.c.b16 %v136, %v133
  %v158 = vpack.c.b16 %v140, %v137
  %v159 = vpack.c.b16 %v141, %v138
  %v160 = vpack.c.b16 %v142, %v139
  %v161 = vpack.c.b16 %v146, %v143
  %v162 = vpack.c.b16 %v147, %v144
  %v163 = vpack.c.b16 %v148, %v145
  %v164 = vpack.c.b16 %v152, %v149
  %v165 = vpack.c.b16 %v153, %v150
  %v166 = vpack.c.b16 %v154, %v151
  %v211 = vunpack.c.l.b16 %v31
  %v212 = vunpack.c.l.b16 %v32
  %v213 = vunpack.c.l.b16 %v33
  %v214 = vunpack.c.l.b16 %v34
  %v215 = vunpack.c.l.b16 %v35
  %v216 = vunpack.c.l.b16 %v36
  %v217 = vunpack.c.l.b16 %v37
  %v218 = vunpack.c.l.b16 %v38
  %v219 = vunpack.c.l.b16 %v39
  %v220 = vunpack.c.l.b16 %v40
  %v221 = vunpack.c.l.b16 %v41
  %v222 = vunpack.c.l.b16 %v42
  %v223 = vunpack.c.l.b16 %v43
  %v224 = vunpack.c.l.b16 %v44
  %v225 = vunpack.c.l.b16 %v45
  %v226 = vunpack.c.l.b16 %v46
  %v227 = vunpack.c.l.b16 %v47
  %v228 = vunpack.c.l.b16 %v48
  %v229 = vunpack.c.l.b16 %v49
  %v230 = vunpack.c.l.b16 %v50
  %v231 = vunpack.c.l.b16 %v51
  %v232 = vunpack.c.l.b16 %v52
  %v233 = vunpack.c.l.b16 %v53
  %v234 = vunpack.c.l.b16 %v54
  %v235 = vunpack.c.l.b16 %v55
  %v236 = vunpack.c.l.b16 %v56
  %v237 = vunpack.c.l.b16 %v57
  %v238 = vunpack.c.l.b16 %v58
  %v239 = vunpack.c.l.b16 %v59
  %v240 = vunpack.c.l.b16 %v60
  %v241 = vunpack.c.l.b16 %v61
  %v242 = vunpack.c.l.b16 %v62
  %v243 = vunpack.c.l.b16 %v63
  %v244 = vunpack.c.l.b16 %v64
  %v245 = vunpack.c.l.b16 %v65
  %v246 = vunpack.c.l.b16 %v66
  %v247 = vpack.c.b16 %v212, %v211
  %v248 = vpack.c.b16 %v214, %v213
  %v249 = vpack.c.b16 %v216, %v215
  %v250 = vpack.c.b16 %v218, %v217
  %v251 = vpack.c.b16 %v220, %v219
  %v252 = vpack.c.b16 %v222, %v221
  %v253 = vpack.c.b16 %v224, %v223
  %v254 = vpack.c.b16 %v226, %v225
  %v255 = vpack.c.b16 %v228, %v227
  %v256 = vpack.c.b16 %v230, %v229
  %v257 = vpack.c.b16 %v232, %v231
  %v258 = vpack.c.b16 %v234, %v233
  %v259 = vpack.c.b16 %v236, %v235
  %v260 = vpack.c.b16 %v238, %v237
  %v261 = vpack.c.b16 %v240, %v239
  %v262 = vpack.c.b16 %v242, %v241
  %v263 = vpack.c.b16 %v244, %v243
  %v264 = vpack.c.b16 %v246, %v245
  %vm283 = vcmask 261120
  %v285 = vsel %vm283, %v157, 0
  %v288 = vsel %vm283, %v160, 0
  %v291 = vsel %vm283, %v163, 0
  %v294 = vsel %vm283, %v166, 0
  %296 = vmatprep.subr.bf16.mxu0 0
  %297 = vmatpush1.bf16.msra.mxu0 %v254
  %298 = vmatprep.subr.bf16.mxu0 0
  %299 = vmatpush1.bf16.msra.mxu0 %v253
  %300 = vmatprep.subr.bf16.mxu0 0
  %301 = vmatpush1.bf16.msra.mxu0 %v252
  %302 = vmatprep.subr.bf16.mxu0 0
  %303 = vmatpush1.bf16.msra.mxu0 %v251
  %304 = vmatprep.subr.bf16.mxu0 0
  %305 = vmatpush1.bf16.msra.mxu0 %v250
  %306 = vmatprep.subr.bf16.mxu0 0
  %307 = vmatpush1.bf16.msra.mxu0 %v249
  %308 = vmatprep.subr.bf16.mxu0 0
  %309 = vmatpush1.bf16.msra.mxu0 %v248
  %310 = vmatprep.subr.bf16.mxu0 0
  %311 = vmatpush1.bf16.msra.mxu0 %v247
  %312 = vmatprep.subr.bf16.mxu0 0
  %313 = vmatpush2.bf16.msra.mxu0 %v262
  %314 = vmatprep.subr.bf16.mxu0 0
  %315 = vmatpush2.bf16.msra.mxu0 %v261
  %316 = vmatprep.subr.bf16.mxu0 0
  %317 = vmatpush2.bf16.msra.mxu0 %v260
  %318 = vmatprep.subr.bf16.mxu0 0
  %319 = vmatpush2.bf16.msra.mxu0 %v259
  %320 = vmatprep.subr.bf16.mxu0 0
  %321 = vmatpush2.bf16.msra.mxu0 %v258
  %322 = vmatprep.subr.bf16.mxu0 0
  %323 = vmatpush2.bf16.msra.mxu0 %v257
  %324 = vmatprep.subr.bf16.mxu0 0
  %325 = vmatpush2.bf16.msra.mxu0 %v256
  %326 = vmatprep.subr.bf16.mxu0 0
  %327 = vmatpush2.bf16.msra.mxu0 %v255
  %328 = vmatprep.mubr.bf16.mxu0 %v156
  %329 = vmatmul.mubr.bf16.gmra.mxu0 %v155
  %v330 = vpop.f32.mrf.mxu0
  %v331 = vadd.f32 %v78, %v330
  %v332 = vpop.f32.mrf.mxu0
  %v333 = vpop.f32.mrf.mxu0
  %v334 = vadd.f32 %v83, %v333
  %v335 = vpop.f32.mrf.mxu0
  %336 = vmatprep.mubr.bf16.mxu0 %v159
  %337 = vmatmul.mubr.bf16.gmra.mxu0 %v158
  %v338 = vpop.f32.mrf.mxu0
  %v339 = vadd.f32 %v88, %v338
  %v340 = vpop.f32.mrf.mxu0
  %v341 = vpop.f32.mrf.mxu0
  %v342 = vadd.f32 %v93, %v341
  %v343 = vpop.f32.mrf.mxu0
  %344 = vmatprep.mubr.bf16.mxu0 %v162
  %345 = vmatmul.mubr.bf16.gmra.mxu0 %v161
  %v346 = vpop.f32.mrf.mxu0
  %v347 = vadd.f32 %v98, %v346
  %v348 = vpop.f32.mrf.mxu0
  %v349 = vpop.f32.mrf.mxu0
  %v350 = vadd.f32 %v103, %v349
  %v351 = vpop.f32.mrf.mxu0
  %352 = vmatprep.mubr.bf16.mxu0 %v165
  %353 = vmatmul.mubr.bf16.gmra.mxu0 %v164
  %v354 = vpop.f32.mrf.mxu0
  %v355 = vadd.f32 %v108, %v354
  %v356 = vpop.f32.mrf.mxu0
  %v357 = vpop.f32.mrf.mxu0
  %v358 = vadd.f32 %v113, %v357
  %v359 = vpop.f32.mrf.mxu0
  %360 = vdwg.mxu0
  %361 = vmatprep.subr.bf16.mxu0 0
  %362 = vmatpush1.bf16.msra.mxu0 0
  %363 = vmatprep.subr.bf16.mxu0 0
  %364 = vmatpush1.bf16.msra.mxu0 0
  %365 = vmatprep.subr.bf16.mxu0 0
  %366 = vmatpush1.bf16.msra.mxu0 0
  %367 = vmatprep.subr.bf16.mxu0 0
  %368 = vmatpush1.bf16.msra.mxu0 0
  %369 = vmatprep.subr.bf16.mxu0 0
  %370 = vmatpush1.bf16.msra.mxu0 0
  %371 = vmatprep.subr.bf16.mxu0 0
  %372 = vmatpush1.bf16.msra.mxu0 0
  %373 = vmatprep.subr.bf16.mxu0 0
  %374 = vmatpush1.bf16.msra.mxu0 %v264
  %375 = vmatprep.subr.bf16.mxu0 0
  %376 = vmatpush1.bf16.msra.mxu0 %v263
  %377 = vmatprep.subr.bf16.mxu0 0
  %378 = vmatpush2.bf16.msra.mxu0 0
  %379 = vmatprep.subr.bf16.mxu0 0
  %380 = vmatpush2.bf16.msra.mxu0 0
  %381 = vmatprep.subr.bf16.mxu0 0
  %382 = vmatpush2.bf16.msra.mxu0 0
  %383 = vmatprep.subr.bf16.mxu0 0
  %384 = vmatpush2.bf16.msra.mxu0 0
  %385 = vmatprep.subr.bf16.mxu0 0
  %386 = vmatpush2.bf16.msra.mxu0 0
  %387 = vmatprep.subr.bf16.mxu0 0
  %388 = vmatpush2.bf16.msra.mxu0 0
  %389 = vmatprep.subr.bf16.mxu0 0
  %390 = vmatpush2.bf16.msra.mxu0 0
  %391 = vmatprep.subr.bf16.mxu0 0
  %392 = vmatpush2.bf16.msra.mxu0 0
  %393 = vmatprep.mubr.bf16.mxu0 0
  %394 = vmatmul.mubr.bf16.gmra.mxu0 %v285
  %v395 = vpop.f32.mrf.mxu0
  %v396 = vadd.f32 %v331, %v395
  %v397 = vpop.f32.mrf.mxu0
  %v398 = vpop.f32.mrf.mxu0
  %v399 = vadd.f32 %v334, %v398
  %v400 = vpop.f32.mrf.mxu0
  %401 = vmatprep.mubr.bf16.mxu0 0
  %402 = vmatmul.mubr.bf16.gmra.mxu0 %v288
  %v403 = vpop.f32.mrf.mxu0
  %v404 = vadd.f32 %v339, %v403
  %v405 = vpop.f32.mrf.mxu0
  %v406 = vpop.f32.mrf.mxu0
  %v407 = vadd.f32 %v342, %v406
  %v408 = vpop.f32.mrf.mxu0
  %409 = vmatprep.mubr.bf16.mxu0 0
  %410 = vmatmul.mubr.bf16.gmra.mxu0 %v291
  %v411 = vpop.f32.mrf.mxu0
  %v412 = vadd.f32 %v347, %v411
  %v413 = vpop.f32.mrf.mxu0
  %v414 = vpop.f32.mrf.mxu0
  %v415 = vadd.f32 %v350, %v414
  %v416 = vpop.f32.mrf.mxu0
  %417 = vmatprep.mubr.bf16.mxu0 0
  %418 = vmatmul.mubr.bf16.gmra.mxu0 %v294
  %v419 = vpop.f32.mrf.mxu0
  %v420 = vadd.f32 %v355, %v419
  %v421 = vpop.f32.mrf.mxu0
  %v422 = vpop.f32.mrf.mxu0
  %v423 = vadd.f32 %v358, %v422
  %v424 = vpop.f32.mrf.mxu0
  %425 = vdwg.mxu0
  %v426 = vmax.f32 %v396, 0.0
  %v427 = vmax.f32 %v399, 0.0
  %v428 = vmax.f32 %v404, 0.0
  %v429 = vmax.f32 %v407, 0.0
  %v430 = vmax.f32 %v412, 0.0
  %v431 = vmax.f32 %v415, 0.0
  %v432 = vmax.f32 %v420, 0.0
  %v433 = vmax.f32 %v423, 0.0
  %434 = vst.msk [vmem:[%s3] sm:$0xff] %vm283, %v426
  %435 = vst.msk [vmem:[%s3 + $0x8] sm:$0xff] %vm283, %v427
  %436 = vst.msk [vmem:[%s3 + $0x10] sm:$0xff] %vm283, %v428
  %437 = vst.msk [vmem:[%s3 + $0x18] sm:$0xff] %vm283, %v429
  %438 = vst.msk [vmem:[%s3 + $0x20] sm:$0xff] %vm283, %v430
  %439 = vst.msk [vmem:[%s3 + $0x28] sm:$0xff] %vm283, %v431
  %440 = vst.msk [vmem:[%s3 + $0x30] sm:$0xff] %vm283, %v432
  %441 = vst.msk [vmem:[%s3 + $0x38] sm:$0xff] %vm283, %v433
  // Predicated region
  $region14: #{ocm_resnet_forward.30} parent=0 // pred_check
    _
  $region15: #{ocm_resnet_forward.30} parent=0 // pred_check_branch
    %443 = sbr.rel (0) target = $region17
  $region16: #{ocm_resnet_forward.30} parent=0 // pred_region
    _
  $region17: #{ocm_resnet_forward.30} parent=0 // pred_fallthru
    _
  // Predicated region
  $region18: #{ocm_resnet_forward.30} parent=0 // pred_check
    _
  $region19: #{ocm_resnet_forward.30} parent=0 // pred_check_branch
    %445 = sbr.rel (0) target = $region21
  $region20: #{ocm_resnet_forward.30} parent=0 // pred_region
    _
  $region21: #{ocm_resnet_forward.30} parent=0 // pred_fallthru
    _

// kernel: ocm_resnet_forward.31
$region0: #{ocm_resnet_forward.31}
  #allocation0 [shape = 'u32[]', space=smem, size = 0x4, offset = 0x4, fixed_abs, tag = 'smem constant byte address 0x4 - core index']
  #allocation1 [shape = 'u32[144,128]{1,0:T(1,128)}', space=vmem, size = 0x12000, scoped, tag = 'internal scratch']
  %s0 = inlined_call_operand.vmem [shape: bf16[64,576], index: 0, kind: input, shape index: {}]
  %s1 = inlined_call_operand.vmem [shape: bf16[576,32], index: 1, kind: input, shape index: {}]
  %s2 = inlined_call_operand.vmem [shape: f32[64,1], index: 2, kind: input, shape index: {}]
  %s3 = inlined_call_operand.vmem [shape: bf16[64,32], index: 3, kind: input, shape index: {}]
  %s4 = inlined_call_operand.vmem [shape: bf16[32,32], index: 4, kind: input, shape index: {}]
  %s5 = inlined_call_operand.vmem [shape: f32[64,1], index: 5, kind: input, shape index: {}]
  %s6 = inlined_call_operand.vmem [shape: f32[64,32], index: 6, kind: output, shape index: {}]
  %s7 = sld [smem:[#allocation0]]
  $region34: #{ocm_resnet_forward.31} parent=0
    _
  %s9 = ssub.s32 1, %s7
  %s10 = scalar_select 0, %s9, %s7
  // Predicated region
  $region2: #{ocm_resnet_forward.31} parent=0 // pred_check
    _
  $region3: #{ocm_resnet_forward.31} parent=0 // pred_check_branch
    %12 = sbr.rel (0) target = $region5
  $region4: #{ocm_resnet_forward.31} parent=0 // pred_region
    _
  $region5: #{ocm_resnet_forward.31} parent=0 // pred_fallthru
    _
  // Predicated region
  $region6: #{ocm_resnet_forward.31} parent=0 // pred_check
    _
  $region7: #{ocm_resnet_forward.31} parent=0 // pred_check_branch
    %14 = sbr.rel (0) target = $region9
  $region8: #{ocm_resnet_forward.31} parent=0 // pred_region
    _
  $region9: #{ocm_resnet_forward.31} parent=0 // pred_fallthru
    _
  // Predicated region
  $region10: #{ocm_resnet_forward.31} parent=0 // pred_check
    _
  $region11: #{ocm_resnet_forward.31} parent=0 // pred_check_branch
    %16 = sbr.rel (0) target = $region13
  $region12: #{ocm_resnet_forward.31} parent=0 // pred_region
    _
  $region13: #{ocm_resnet_forward.31} parent=0 // pred_fallthru
    _
  // Predicated region
  $region14: #{ocm_resnet_forward.31} parent=0 // pred_check
    _
  $region15: #{ocm_resnet_forward.31} parent=0 // pred_check_branch
    %18 = sbr.rel (0) target = $region17
  $region16: #{ocm_resnet_forward.31} parent=0 // pred_region
    _
  $region17: #{ocm_resnet_forward.31} parent=0 // pred_fallthru
    _
  // Predicated region
  $region18: #{ocm_resnet_forward.31} parent=0 // pred_check
    _
  $region19: #{ocm_resnet_forward.31} parent=0 // pred_check_branch
    %20 = sbr.rel (0) target = $region21
  $region20: #{ocm_resnet_forward.31} parent=0 // pred_region
    _
  $region21: #{ocm_resnet_forward.31} parent=0 // pred_fallthru
    _
  // Predicated region
  $region22: #{ocm_resnet_forward.31} parent=0 // pred_check
    _
  $region23: #{ocm_resnet_forward.31} parent=0 // pred_check_branch
    %22 = sbr.rel (0) target = $region25
  $region24: #{ocm_resnet_forward.31} parent=0 // pred_region
    _
  $region25: #{ocm_resnet_forward.31} parent=0 // pred_fallthru
    _
  %v24 = vld [vmem:[%s0] sm:$0xff]
  %v25 = vld [vmem:[%s0 + $0x8] sm:$0xff]
  %v26 = vld [vmem:[%s0 + $0x10] sm:$0xf]
  %v27 = vld [vmem:[%s0 + $0x14] sm:$0xff]
  %v28 = vld [vmem:[%s0 + $0x1c] sm:$0xff]
  %v29 = vld [vmem:[%s0 + $0x24] sm:$0xf]
  %v30 = vld [vmem:[%s0 + $0x28] sm:$0xff]
  %v31 = vld [vmem:[%s0 + $0x30] sm:$0xff]
  %v32 = vld [vmem:[%s0 + $0x38] sm:$0xf]
  %v33 = vld [vmem:[%s0 + $0x3c] sm:$0xff]
  %v34 = vld [vmem:[%s0 + $0x44] sm:$0xff]
  %v35 = vld [vmem:[%s0 + $0x4c] sm:$0xf]
  %v36 = vld [vmem:[%s0 + $0x50] sm:$0xff]
  %v37 = vld [vmem:[%s0 + $0x58] sm:$0xff]
  %v38 = vld [vmem:[%s0 + $0x60] sm:$0xf]
  %v39 = vld [vmem:[%s0 + $0x64] sm:$0xff]
  %v40 = vld [vmem:[%s0 + $0x6c] sm:$0xff]
  %v41 = vld [vmem:[%s0 + $0x74] sm:$0xf]
  %v42 = vld [vmem:[%s0 + $0x78] sm:$0xff]
  %v43 = vld [vmem:[%s0 + $0x80] sm:$0xff]
  %v44 = vld [vmem:[%s0 + $0x88] sm:$0xf]
  %v45 = vld [vmem:[%s0 + $0x8c] sm:$0xff]
  %v46 = vld [vmem:[%s0 + $0x94] sm:$0xff]
  %v47 = vld [vmem:[%s0 + $0x9c] sm:$0xf]
  %v48 = vld [vmem:[%s1] sm:$0xf]
  %v49 = vld [vmem:[%s1 + $0x4] sm:$0xf]
  %v50 = vld [vmem:[%s1 + $0x8] sm:$0xf]
  %v51 = vld [vmem:[%s1 + $0xc] sm:$0xf]
  %v52 = vld [vmem:[%s1 + $0x10] sm:$0xf]
  %v53 = vld [vmem:[%s1 + $0x14] sm:$0xf]
  %v54 = vld [vmem:[%s1 + $0x18] sm:$0xf]
  %v55 = vld [vmem:[%s1 + $0x1c] sm:$0xf]
  %v56 = vld [vmem:[%s1 + $0x20] sm:$0xf]
  %v57 = vld [vmem:[%s1 + $0x24] sm:$0xf]
  %v58 = vld [vmem:[%s1 + $0x28] sm:$0xf]
  %v59 = vld [vmem:[%s1 + $0x2c] sm:$0xf]
  %v60 = vld [vmem:[%s1 + $0x30] sm:$0xf]
  %v61 = vld [vmem:[%s1 + $0x34] sm:$0xf]
  %v62 = vld [vmem:[%s1 + $0x38] sm:$0xf]
  %v63 = vld [vmem:[%s1 + $0x3c] sm:$0xf]
  %v64 = vld [vmem:[%s1 + $0x40] sm:$0xf]
  %v65 = vld [vmem:[%s1 + $0x44] sm:$0xf]
  %v66 = vld [vmem:[%s1 + $0x48] sm:$0xf]
  %v67 = vld [vmem:[%s1 + $0x4c] sm:$0xf]
  %v68 = vld [vmem:[%s1 + $0x50] sm:$0xf]
  %v69 = vld [vmem:[%s1 + $0x54] sm:$0xf]
  %v70 = vld [vmem:[%s1 + $0x58] sm:$0xf]
  %v71 = vld [vmem:[%s1 + $0x5c] sm:$0xf]
  %v72 = vld [vmem:[%s1 + $0x60] sm:$0xf]
  %v73 = vld [vmem:[%s1 + $0x64] sm:$0xf]
  %v74 = vld [vmem:[%s1 + $0x68] sm:$0xf]
  %v75 = vld [vmem:[%s1 + $0x6c] sm:$0xf]
  %v76 = vld [vmem:[%s1 + $0x70] sm:$0xf]
  %v77 = vld [vmem:[%s1 + $0x74] sm:$0xf]
  %v78 = vld [vmem:[%s1 + $0x78] sm:$0xf]
  %v79 = vld [vmem:[%s1 + $0x7c] sm:$0xf]
  %v80 = vld [vmem:[%s1 + $0x80] sm:$0xf]
  %v81 = vld [vmem:[%s1 + $0x84] sm:$0xf]
  %v82 = vld [vmem:[%s1 + $0x88] sm:$0xf]
  %v83 = vld [vmem:[%s1 + $0x8c] sm:$0xf]
  %v84 = vld [vmem:[%s1 + $0x90] sm:$0xf]
  %v85 = vld [vmem:[%s1 + $0x94] sm:$0xf]
  %v86 = vld [vmem:[%s1 + $0x98] sm:$0xf]
  %v87 = vld [vmem:[%s1 + $0x9c] sm:$0xf]
  %v88 = vld [vmem:[%s1 + $0xa0] sm:$0xf]
  %v89 = vld [vmem:[%s1 + $0xa4] sm:$0xf]
  %v90 = vld [vmem:[%s1 + $0xa8] sm:$0xf]
  %v91 = vld [vmem:[%s1 + $0xac] sm:$0xf]
  %v92 = vld [vmem:[%s1 + $0xb0] sm:$0xf]
  %v93 = vld [vmem:[%s1 + $0xb4] sm:$0xf]
  %v94 = vld [vmem:[%s1 + $0xb8] sm:$0xf]
  %v95 = vld [vmem:[%s1 + $0xbc] sm:$0xf]
  %v96 = vld [vmem:[%s1 + $0xc0] sm:$0xf]
  %v97 = vld [vmem:[%s1 + $0xc4] sm:$0xf]
  %v98 = vld [vmem:[%s1 + $0xc8] sm:$0xf]
  %v99 = vld [vmem:[%s1 + $0xcc] sm:$0xf]
  %v100 = vld [vmem:[%s1 + $0xd0] sm:$0xf]
  %v101 = vld [vmem:[%s1 + $0xd4] sm:$0xf]
  %v102 = vld [vmem:[%s1 + $0xd8] sm:$0xf]
  %v103 = vld [vmem:[%s1 + $0xdc] sm:$0xf]
  %v104 = vld [vmem:[%s1 + $0xe0] sm:$0xf]
  %v105 = vld [vmem:[%s1 + $0xe4] sm:$0xf]
  %v106 = vld [vmem:[%s1 + $0xe8] sm:$0xf]
  %v107 = vld [vmem:[%s1 + $0xec] sm:$0xf]
  %v108 = vld [vmem:[%s1 + $0xf0] sm:$0xf]
  %v109 = vld [vmem:[%s1 + $0xf4] sm:$0xf]
  %v110 = vld [vmem:[%s1 + $0xf8] sm:$0xf]
  %v111 = vld [vmem:[%s1 + $0xfc] sm:$0xf]
  %v112 = vld [vmem:[%s1 + $0x100] sm:$0xf]
  %v113 = vld [vmem:[%s1 + $0x104] sm:$0xf]
  %v114 = vld [vmem:[%s1 + $0x108] sm:$0xf]
  %v115 = vld [vmem:[%s1 + $0x10c] sm:$0xf]
  %v116 = vld [vmem:[%s1 + $0x110] sm:$0xf]
  %v117 = vld [vmem:[%s1 + $0x114] sm:$0xf]
  %v118 = vld [vmem:[%s1 + $0x118] sm:$0xf]
  %v119 = vld [vmem:[%s1 + $0x11c] sm:$0xf]
  %v120 = vld [vmem:[%s3] sm:$0xf]
  %v121 = vld [vmem:[%s3 + $0x4] sm:$0xf]
  %v122 = vld [vmem:[%s3 + $0x8] sm:$0xf]
  %v123 = vld [vmem:[%s3 + $0xc] sm:$0xf]
  %v124 = vld [vmem:[%s3 + $0x10] sm:$0xf]
  %v125 = vld [vmem:[%s3 + $0x14] sm:$0xf]
  %v126 = vld [vmem:[%s3 + $0x18] sm:$0xf]
  %v127 = vld [vmem:[%s3 + $0x1c] sm:$0xf]
  %v128 = vld [vmem:[%s4] sm:$0xf]
  %v129 = vld [vmem:[%s4 + $0x4] sm:$0xf]
  %v130 = vld [vmem:[%s4 + $0x8] sm:$0xf]
  %v131 = vld [vmem:[%s4 + $0xc] sm:$0xf]
  %v140 = vunpack.c.l.b16 %v120
  %v141 = vunpack.c.l.b16 %v121
  %v142 = vunpack.c.l.b16 %v122
  %v143 = vunpack.c.l.b16 %v123
  %v144 = vunpack.c.l.b16 %v124
  %v145 = vunpack.c.l.b16 %v125
  %v146 = vunpack.c.l.b16 %v126
  %v147 = vunpack.c.l.b16 %v127
  %v148 = vpack.c.b16 %v141, %v140
  %v149 = vpack.c.b16 %v143, %v142
  %v150 = vpack.c.b16 %v145, %v144
  %v151 = vpack.c.b16 %v147, %v146
  %v156 = vunpack.c.l.b16 %v128
  %v157 = vunpack.c.l.b16 %v129
  %v158 = vunpack.c.l.b16 %v130
  %v159 = vunpack.c.l.b16 %v131
  %v160 = vpack.c.b16 %v157, %v156
  %v161 = vpack.c.b16 %v159, %v158
  %vm164 = vcmask 261120
  %v166 = vsel %vm164, %v148, 0
  %v169 = vsel %vm164, %v149, 0
  %v172 = vsel %vm164, %v150, 0
  %v175 = vsel %vm164, %v151, 0
  %177 = vmatprep.subr.bf16.mxu0 0
  %178 = vmatpush1.bf16.msra.mxu0 0
  %179 = vmatprep.subr.bf16.mxu0 0
  %180 = vmatpush1.bf16.msra.mxu0 0
  %181 = vmatprep.subr.bf16.mxu0 0
  %182 = vmatpush1.bf16.msra.mxu0 0
  %183 = vmatprep.subr.bf16.mxu0 0
  %184 = vmatpush1.bf16.msra.mxu0 0
  %185 = vmatprep.subr.bf16.mxu0 0
  %186 = vmatpush1.bf16.msra.mxu0 0
  %187 = vmatprep.subr.bf16.mxu0 0
  %188 = vmatpush1.bf16.msra.mxu0 0
  %189 = vmatprep.subr.bf16.mxu0 0
  %190 = vmatpush1.bf16.msra.mxu0 %v161
  %191 = vmatprep.subr.bf16.mxu0 0
  %192 = vmatpush1.bf16.msra.mxu0 %v160
  %193 = vmatprep.subr.bf16.mxu0 0
  %194 = vmatpush2.bf16.msra.mxu0 0
  %195 = vmatprep.subr.bf16.mxu0 0
  %196 = vmatpush2.bf16.msra.mxu0 0
  %197 = vmatprep.subr.bf16.mxu0 0
  %198 = vmatpush2.bf16.msra.mxu0 0
  %199 = vmatprep.subr.bf16.mxu0 0
  %200 = vmatpush2.bf16.msra.mxu0 0
  %201 = vmatprep.subr.bf16.mxu0 0
  %202 = vmatpush2.bf16.msra.mxu0 0
  %203 = vmatprep.subr.bf16.mxu0 0
  %204 = vmatpush2.bf16.msra.mxu0 0
  %205 = vmatprep.subr.bf16.mxu0 0
  %206 = vmatpush2.bf16.msra.mxu0 0
  %207 = vmatprep.subr.bf16.mxu0 0
  %208 = vmatpush2.bf16.msra.mxu0 0
  %209 = vmatprep.mubr.bf16.mxu0 0
  %210 = vmatmul.mubr.bf16.gmra.mxu0 %v166
  %v211 = vpop.f32.mrf.mxu0
  %v212 = vadd.f32 0.0, %v211
  %v213 = vpop.f32.mrf.mxu0
  %v214 = vpop.f32.mrf.mxu0
  %v215 = vadd.f32 0.0, %v214
  %v216 = vpop.f32.mrf.mxu0
  %217 = vmatprep.mubr.bf16.mxu0 0
  %218 = vmatmul.mubr.bf16.gmra.mxu0 %v169
  %v219 = vpop.f32.mrf.mxu0
  %v220 = vadd.f32 0.0, %v219
  %v221 = vpop.f32.mrf.mxu0
  %v222 = vpop.f32.mrf.mxu0
  %v223 = vadd.f32 0.0, %v222
  %v224 = vpop.f32.mrf.mxu0
  %225 = vmatprep.mubr.bf16.mxu0 0
  %226 = vmatmul.mubr.bf16.gmra.mxu0 %v172
  %v227 = vpop.f32.mrf.mxu0
  %v228 = vadd.f32 0.0, %v227
  %v229 = vpop.f32.mrf.mxu0
  %v230 = vpop.f32.mrf.mxu0
  %v231 = vadd.f32 0.0, %v230
  %v232 = vpop.f32.mrf.mxu0
  %233 = vmatprep.mubr.bf16.mxu0 0
  %234 = vmatmul.mubr.bf16.gmra.mxu0 %v175
  %v235 = vpop.f32.mrf.mxu0
  %v236 = vadd.f32 0.0, %v235
  %v237 = vpop.f32.mrf.mxu0
  %v238 = vpop.f32.mrf.mxu0
  %v239 = vadd.f32 0.0, %v238
  %v240 = vpop.f32.mrf.mxu0
  %241 = vdwg.mxu0
  %v242 = vld [vmem:[%s2] sm:$0xff]
  %v243 = vld [vmem:[%s2 + $0x8] sm:$0xff]
  %v244 = vld [vmem:[%s2 + $0x10] sm:$0xff]
  %v245 = vld [vmem:[%s2 + $0x18] sm:$0xff]
  %v246 = vld [vmem:[%s2 + $0x20] sm:$0xff]
  %v247 = vld [vmem:[%s2 + $0x28] sm:$0xff]
  %v248 = vld [vmem:[%s2 + $0x30] sm:$0xff]
  %v249 = vld [vmem:[%s2 + $0x38] sm:$0xff]
  %251 = vset.pattern.permute.xlu0 0
  %252 = vperm.xlu0 %251, %v242
  %v253 = vpop.permute.xlu0 %252
  %256 = vset.pattern.permute.xlu0 0
  %257 = vperm.xlu0 %256, %v243
  %v258 = vpop.permute.xlu0 %257
  %261 = vset.pattern.permute.xlu0 0
  %262 = vperm.xlu0 %261, %v244
  %v263 = vpop.permute.xlu0 %262
  %266 = vset.pattern.permute.xlu0 0
  %267 = vperm.xlu0 %266, %v245
  %v268 = vpop.permute.xlu0 %267
  %271 = vset.pattern.permute.xlu0 0
  %272 = vperm.xlu0 %271, %v246
  %v273 = vpop.permute.xlu0 %272
  %276 = vset.pattern.permute.xlu0 0
  %277 = vperm.xlu0 %276, %v247
  %v278 = vpop.permute.xlu0 %277
  %281 = vset.pattern.permute.xlu0 0
  %282 = vperm.xlu0 %281, %v248
  %v283 = vpop.permute.xlu0 %282
  %286 = vset.pattern.permute.xlu0 0
  %287 = vperm.xlu0 %286, %v249
  %v288 = vpop.permute.xlu0 %287
  %v314 = vunpack.c.l.b16 %v24
  %v315 = vunpack.c.h.b16 %v24
  %v316 = vunpack.c.l.b16 %v25
  %v317 = vunpack.c.h.b16 %v25
  %v318 = vunpack.c.l.b16 %v26
  %v319 = vunpack.c.l.b16 %v27
  %v320 = vunpack.c.h.b16 %v27
  %v321 = vunpack.c.l.b16 %v28
  %v322 = vunpack.c.h.b16 %v28
  %v323 = vunpack.c.l.b16 %v29
  %v324 = vunpack.c.l.b16 %v30
  %v325 = vunpack.c.h.b16 %v30
  %v326 = vunpack.c.l.b16 %v31
  %v327 = vunpack.c.h.b16 %v31
  %v328 = vunpack.c.l.b16 %v32
  %v329 = vunpack.c.l.b16 %v33
  %v330 = vunpack.c.h.b16 %v33
  %v331 = vunpack.c.l.b16 %v34
  %v332 = vunpack.c.h.b16 %v34
  %v333 = vunpack.c.l.b16 %v35
  %v334 = vunpack.c.l.b16 %v36
  %v335 = vunpack.c.h.b16 %v36
  %v336 = vunpack.c.l.b16 %v37
  %v337 = vunpack.c.h.b16 %v37
  %v338 = vunpack.c.l.b16 %v38
  %v339 = vunpack.c.l.b16 %v39
  %v340 = vunpack.c.h.b16 %v39
  %v341 = vunpack.c.l.b16 %v40
  %v342 = vunpack.c.h.b16 %v40
  %v343 = vunpack.c.l.b16 %v41
  %v344 = vunpack.c.l.b16 %v42
  %v345 = vunpack.c.h.b16 %v42
  %v346 = vunpack.c.l.b16 %v43
  %v347 = vunpack.c.h.b16 %v43
  %v348 = vunpack.c.l.b16 %v44
  %v349 = vunpack.c.l.b16 %v45
  %v350 = vunpack.c.h.b16 %v45
  %v351 = vunpack.c.l.b16 %v46
  %v352 = vunpack.c.h.b16 %v46
  %v353 = vunpack.c.l.b16 %v47
  %v354 = vpack.c.b16 %v319, %v314
  %v355 = vpack.c.b16 %v320, %v315
  %v356 = vpack.c.b16 %v321, %v316
  %v357 = vpack.c.b16 %v322, %v317
  %v358 = vpack.c.b16 %v323, %v318
  %v359 = vpack.c.b16 %v329, %v324
  %v360 = vpack.c.b16 %v330, %v325
  %v361 = vpack.c.b16 %v331, %v326
  %v362 = vpack.c.b16 %v332, %v327
  %v363 = vpack.c.b16 %v333, %v328
  %v364 = vpack.c.b16 %v339, %v334
  %v365 = vpack.c.b16 %v340, %v335
  %v366 = vpack.c.b16 %v341, %v336
  %v367 = vpack.c.b16 %v342, %v337
  %v368 = vpack.c.b16 %v343, %v338
  %v369 = vpack.c.b16 %v349, %v344
  %v370 = vpack.c.b16 %v350, %v345
  %v371 = vpack.c.b16 %v351, %v346
  %v372 = vpack.c.b16 %v352, %v347
  %v373 = vpack.c.b16 %v353, %v348
  %v462 = vunpack.c.l.b16 %v48
  %v463 = vunpack.c.l.b16 %v49
  %v464 = vunpack.c.l.b16 %v50
  %v465 = vunpack.c.l.b16 %v51
  %v466 = vunpack.c.l.b16 %v52
  %v467 = vunpack.c.l.b16 %v53
  %v468 = vunpack.c.l.b16 %v54
  %v469 = vunpack.c.l.b16 %v55
  %v470 = vunpack.c.l.b16 %v56
  %v471 = vunpack.c.l.b16 %v57
  %v472 = vunpack.c.l.b16 %v58
  %v473 = vunpack.c.l.b16 %v59
  %v474 = vunpack.c.l.b16 %v60
  %v475 = vunpack.c.l.b16 %v61
  %v476 = vunpack.c.l.b16 %v62
  %v477 = vunpack.c.l.b16 %v63
  %v478 = vunpack.c.l.b16 %v64
  %v479 = vunpack.c.l.b16 %v65
  %v480 = vunpack.c.l.b16 %v66
  %v481 = vunpack.c.l.b16 %v67
  %v482 = vunpack.c.l.b16 %v68
  %v483 = vunpack.c.l.b16 %v69
  %v484 = vunpack.c.l.b16 %v70
  %v485 = vunpack.c.l.b16 %v71
  %v486 = vunpack.c.l.b16 %v72
  %v487 = vunpack.c.l.b16 %v73
  %v488 = vunpack.c.l.b16 %v74
  %v489 = vunpack.c.l.b16 %v75
  %v490 = vunpack.c.l.b16 %v76
  %v491 = vunpack.c.l.b16 %v77
  %v492 = vunpack.c.l.b16 %v78
  %v493 = vunpack.c.l.b16 %v79
  %v494 = vunpack.c.l.b16 %v80
  %v495 = vunpack.c.l.b16 %v81
  %v496 = vunpack.c.l.b16 %v82
  %v497 = vunpack.c.l.b16 %v83
  %v498 = vunpack.c.l.b16 %v84
  %v499 = vunpack.c.l.b16 %v85
  %v500 = vunpack.c.l.b16 %v86
  %v501 = vunpack.c.l.b16 %v87
  %v502 = vunpack.c.l.b16 %v88
  %v503 = vunpack.c.l.b16 %v89
  %v504 = vunpack.c.l.b16 %v90
  %v505 = vunpack.c.l.b16 %v91
  %v506 = vunpack.c.l.b16 %v92
  %v507 = vunpack.c.l.b16 %v93
  %v508 = vunpack.c.l.b16 %v94
  %v509 = vunpack.c.l.b16 %v95
  %v510 = vunpack.c.l.b16 %v96
  %v511 = vunpack.c.l.b16 %v97
  %v512 = vunpack.c.l.b16 %v98
  %v513 = vunpack.c.l.b16 %v99
  %v514 = vunpack.c.l.b16 %v100
  %v515 = vunpack.c.l.b16 %v101
  %v516 = vunpack.c.l.b16 %v102
  %v517 = vunpack.c.l.b16 %v103
  %v518 = vunpack.c.l.b16 %v104
  %v519 = vunpack.c.l.b16 %v105
  %v520 = vunpack.c.l.b16 %v106
  %v521 = vunpack.c.l.b16 %v107
  %v522 = vunpack.c.l.b16 %v108
  %v523 = vunpack.c.l.b16 %v109
  %v524 = vunpack.c.l.b16 %v110
  %v525 = vunpack.c.l.b16 %v111
  %v526 = vunpack.c.l.b16 %v112
  %v527 = vunpack.c.l.b16 %v113
  %v528 = vunpack.c.l.b16 %v114
  %v529 = vunpack.c.l.b16 %v115
  %v530 = vunpack.c.l.b16 %v116
  %v531 = vunpack.c.l.b16 %v117
  %v532 = vunpack.c.l.b16 %v118
  %v533 = vunpack.c.l.b16 %v119
  %v534 = vpack.c.b16 %v463, %v462
  %v535 = vpack.c.b16 %v465, %v464
  %v536 = vpack.c.b16 %v467, %v466
  %v537 = vpack.c.b16 %v469, %v468
  %v538 = vpack.c.b16 %v471, %v470
  %v539 = vpack.c.b16 %v473, %v472
  %v540 = vpack.c.b16 %v475, %v474
  %v541 = vpack.c.b16 %v477, %v476
  %v542 = vpack.c.b16 %v479, %v478
  %v543 = vpack.c.b16 %v481, %v480
  %v544 = vpack.c.b16 %v483, %v482
  %v545 = vpack.c.b16 %v485, %v484
  %v546 = vpack.c.b16 %v487, %v486
  %v547 = vpack.c.b16 %v489, %v488
  %v548 = vpack.c.b16 %v491, %v490
  %v549 = vpack.c.b16 %v493, %v492
  %v550 = vpack.c.b16 %v495, %v494
  %v551 = vpack.c.b16 %v497, %v496
  %v552 = vpack.c.b16 %v499, %v498
  %v553 = vpack.c.b16 %v501, %v500
  %v554 = vpack.c.b16 %v503, %v502
  %v555 = vpack.c.b16 %v505, %v504
  %v556 = vpack.c.b16 %v507, %v506
  %v557 = vpack.c.b16 %v509, %v508
  %v558 = vpack.c.b16 %v511, %v510
  %v559 = vpack.c.b16 %v513, %v512
  %v560 = vpack.c.b16 %v515, %v514
  %v561 = vpack.c.b16 %v517, %v516
  %v562 = vpack.c.b16 %v519, %v518
  %v563 = vpack.c.b16 %v521, %v520
  %v564 = vpack.c.b16 %v523, %v522
  %v565 = vpack.c.b16 %v525, %v524
  %v566 = vpack.c.b16 %v527, %v526
  %v567 = vpack.c.b16 %v529, %v528
  %v568 = vpack.c.b16 %v531, %v530
  %v569 = vpack.c.b16 %v533, %v532
  %vm606 = vcmask 523264
  %v608 = vsel %vm606, %v358, 0
  %v611 = vsel %vm606, %v363, 0
  %v614 = vsel %vm606, %v368, 0
  %v617 = vsel %vm606, %v373, 0
  %619 = vmatprep.subr.bf16.mxu0 0
  %620 = vmatpush1.bf16.msra.mxu0 %v541
  %621 = vmatprep.subr.bf16.mxu0 0
  %622 = vmatpush1.bf16.msra.mxu0 %v540
  %623 = vmatprep.subr.bf16.mxu0 0
  %624 = vmatpush1.bf16.msra.mxu0 %v539
  %625 = vmatprep.subr.bf16.mxu0 0
  %626 = vmatpush1.bf16.msra.mxu0 %v538
  %627 = vmatprep.subr.bf16.mxu0 0
  %628 = vmatpush1.bf16.msra.mxu0 %v537
  %629 = vmatprep.subr.bf16.mxu0 0
  %630 = vmatpush1.bf16.msra.mxu0 %v536
  %631 = vmatprep.subr.bf16.mxu0 0
  %632 = vmatpush1.bf16.msra.mxu0 %v535
  %633 = vmatprep.subr.bf16.mxu0 0
  %634 = vmatpush1.bf16.msra.mxu0 %v534
  %635 = vmatprep.subr.bf16.mxu0 0
  %636 = vmatpush2.bf16.msra.mxu0 %v549
  %637 = vmatprep.subr.bf16.mxu0 0
  %638 = vmatpush2.bf16.msra.mxu0 %v548
  %639 = vmatprep.subr.bf16.mxu0 0
  %640 = vmatpush2.bf16.msra.mxu0 %v547
  %641 = vmatprep.subr.bf16.mxu0 0
  %642 = vmatpush2.bf16.msra.mxu0 %v546
  %643 = vmatprep.subr.bf16.mxu0 0
  %644 = vmatpush2.bf16.msra.mxu0 %v545
  %645 = vmatprep.subr.bf16.mxu0 0
  %646 = vmatpush2.bf16.msra.mxu0 %v544
  %647 = vmatprep.subr.bf16.mxu0 0
  %648 = vmatpush2.bf16.msra.mxu0 %v543
  %649 = vmatprep.subr.bf16.mxu0 0
  %650 = vmatpush2.bf16.msra.mxu0 %v542
  %651 = vmatprep.mubr.bf16.mxu0 %v355
  %652 = vmatmul.mubr.bf16.gmra.mxu0 %v354
  %v653 = vpop.f32.mrf.mxu0
  %v654 = vadd.f32 %v253, %v653
  %v655 = vpop.f32.mrf.mxu0
  %v656 = vpop.f32.mrf.mxu0
  %v657 = vadd.f32 %v258, %v656
  %v658 = vpop.f32.mrf.mxu0
  %659 = vmatprep.mubr.bf16.mxu0 %v360
  %660 = vmatmul.mubr.bf16.gmra.mxu0 %v359
  %v661 = vpop.f32.mrf.mxu0
  %v662 = vadd.f32 %v263, %v661
  %v663 = vpop.f32.mrf.mxu0
  %v664 = vpop.f32.mrf.mxu0
  %v665 = vadd.f32 %v268, %v664
  %v666 = vpop.f32.mrf.mxu0
  %667 = vmatprep.mubr.bf16.mxu0 %v365
  %668 = vmatmul.mubr.bf16.gmra.mxu0 %v364
  %v669 = vpop.f32.mrf.mxu0
  %v670 = vadd.f32 %v273, %v669
  %v671 = vpop.f32.mrf.mxu0
  %v672 = vpop.f32.mrf.mxu0
  %v673 = vadd.f32 %v278, %v672
  %v674 = vpop.f32.mrf.mxu0
  %675 = vmatprep.mubr.bf16.mxu0 %v370
  %676 = vmatmul.mubr.bf16.gmra.mxu0 %v369
  %v677 = vpop.f32.mrf.mxu0
  %v678 = vadd.f32 %v283, %v677
  %v679 = vpop.f32.mrf.mxu0
  %v680 = vpop.f32.mrf.mxu0
  %v681 = vadd.f32 %v288, %v680
  %v682 = vpop.f32.mrf.mxu0
  %683 = vdwg.mxu0
  %684 = vmatprep.subr.bf16.mxu0 0
  %685 = vmatpush1.bf16.msra.mxu0 %v557
  %686 = vmatprep.subr.bf16.mxu0 0
  %687 = vmatpush1.bf16.msra.mxu0 %v556
  %688 = vmatprep.subr.bf16.mxu0 0
  %689 = vmatpush1.bf16.msra.mxu0 %v555
  %690 = vmatprep.subr.bf16.mxu0 0
  %691 = vmatpush1.bf16.msra.mxu0 %v554
  %692 = vmatprep.subr.bf16.mxu0 0
  %693 = vmatpush1.bf16.msra.mxu0 %v553
  %694 = vmatprep.subr.bf16.mxu0 0
  %695 = vmatpush1.bf16.msra.mxu0 %v552
  %696 = vmatprep.subr.bf16.mxu0 0
  %697 = vmatpush1.bf16.msra.mxu0 %v551
  %698 = vmatprep.subr.bf16.mxu0 0
  %699 = vmatpush1.bf16.msra.mxu0 %v550
  %700 = vmatprep.subr.bf16.mxu0 0
  %701 = vmatpush2.bf16.msra.mxu0 %v565
  %702 = vmatprep.subr.bf16.mxu0 0
  %703 = vmatpush2.bf16.msra.mxu0 %v564
  %704 = vmatprep.subr.bf16.mxu0 0
  %705 = vmatpush2.bf16.msra.mxu0 %v563
  %706 = vmatprep.subr.bf16.mxu0 0
  %707 = vmatpush2.bf16.msra.mxu0 %v562
  %708 = vmatprep.subr.bf16.mxu0 0
  %709 = vmatpush2.bf16.msra.mxu0 %v561
  %710 = vmatprep.subr.bf16.mxu0 0
  %711 = vmatpush2.bf16.msra.mxu0 %v560
  %712 = vmatprep.subr.bf16.mxu0 0
  %713 = vmatpush2.bf16.msra.mxu0 %v559
  %714 = vmatprep.subr.bf16.mxu0 0
  %715 = vmatpush2.bf16.msra.mxu0 %v558
  %716 = vmatprep.mubr.bf16.mxu0 %v357
  %717 = vmatmul.mubr.bf16.gmra.mxu0 %v356
  %v718 = vpop.f32.mrf.mxu0
  %v719 = vadd.f32 %v654, %v718
  %v720 = vpop.f32.mrf.mxu0
  %v721 = vpop.f32.mrf.mxu0
  %v722 = vadd.f32 %v657, %v721
  %v723 = vpop.f32.mrf.mxu0
  %724 = vmatprep.mubr.bf16.mxu0 %v362
  %725 = vmatmul.mubr.bf16.gmra.mxu0 %v361
  %v726 = vpop.f32.mrf.mxu0
  %v727 = vadd.f32 %v662, %v726
  %v728 = vpop.f32.mrf.mxu0
  %v729 = vpop.f32.mrf.mxu0
  %v730 = vadd.f32 %v665, %v729
  %v731 = vpop.f32.mrf.mxu0
  %732 = vmatprep.mubr.bf16.mxu0 %v367
  %733 = vmatmul.mubr.bf16.gmra.mxu0 %v366
  %v734 = vpop.f32.mrf.mxu0
  %v735 = vadd.f32 %v670, %v734
  %v736 = vpop.f32.mrf.mxu0
  %v737 = vpop.f32.mrf.mxu0
  %v738 = vadd.f32 %v673, %v737
  %v739 = vpop.f32.mrf.mxu0
  %740 = vmatprep.mubr.bf16.mxu0 %v372
  %741 = vmatmul.mubr.bf16.gmra.mxu0 %v371
  %v742 = vpop.f32.mrf.mxu0
  %v743 = vadd.f32 %v678, %v742
  %v744 = vpop.f32.mrf.mxu0
  %v745 = vpop.f32.mrf.mxu0
  %v746 = vadd.f32 %v681, %v745
  %v747 = vpop.f32.mrf.mxu0
  %748 = vdwg.mxu0
  %749 = vmatprep.subr.bf16.mxu0 0
  %750 = vmatpush1.bf16.msra.mxu0 0
  %751 = vmatprep.subr.bf16.mxu0 0
  %752 = vmatpush1.bf16.msra.mxu0 0
  %753 = vmatprep.subr.bf16.mxu0 0
  %754 = vmatpush1.bf16.msra.mxu0 0
  %755 = vmatprep.subr.bf16.mxu0 0
  %756 = vmatpush1.bf16.msra.mxu0 0
  %757 = vmatprep.subr.bf16.mxu0 0
  %758 = vmatpush1.bf16.msra.mxu0 %v569
  %759 = vmatprep.subr.bf16.mxu0 0
  %760 = vmatpush1.bf16.msra.mxu0 %v568
  %761 = vmatprep.subr.bf16.mxu0 0
  %762 = vmatpush1.bf16.msra.mxu0 %v567
  %763 = vmatprep.subr.bf16.mxu0 0
  %764 = vmatpush1.bf16.msra.mxu0 %v566
  %765 = vmatprep.subr.bf16.mxu0 0
  %766 = vmatpush2.bf16.msra.mxu0 0
  %767 = vmatprep.subr.bf16.mxu0 0
  %768 = vmatpush2.bf16.msra.mxu0 0
  %769 = vmatprep.subr.bf16.mxu0 0
  %770 = vmatpush2.bf16.msra.mxu0 0
  %771 = vmatprep.subr.bf16.mxu0 0
  %772 = vmatpush2.bf16.msra.mxu0 0
  %773 = vmatprep.subr.bf16.mxu0 0
  %774 = vmatpush2.bf16.msra.mxu0 0
  %775 = vmatprep.subr.bf16.mxu0 0
  %776 = vmatpush2.bf16.msra.mxu0 0
  %777 = vmatprep.subr.bf16.mxu0 0
  %778 = vmatpush2.bf16.msra.mxu0 0
  %779 = vmatprep.subr.bf16.mxu0 0
  %780 = vmatpush2.bf16.msra.mxu0 0
  %781 = vmatprep.mubr.bf16.mxu0 0
  %782 = vmatmul.mubr.bf16.gmra.mxu0 %v608
  %v783 = vpop.f32.mrf.mxu0
  %v784 = vadd.f32 %v719, %v783
  %v785 = vpop.f32.mrf.mxu0
  %v786 = vpop.f32.mrf.mxu0
  %v787 = vadd.f32 %v722, %v786
  %v788 = vpop.f32.mrf.mxu0
  %789 = vmatprep.mubr.bf16.mxu0 0
  %790 = vmatmul.mubr.bf16.gmra.mxu0 %v611
  %v791 = vpop.f32.mrf.mxu0
  %v792 = vadd.f32 %v727, %v791
  %v793 = vpop.f32.mrf.mxu0
  %v794 = vpop.f32.mrf.mxu0
  %v795 = vadd.f32 %v730, %v794
  %v796 = vpop.f32.mrf.mxu0
  %797 = vmatprep.mubr.bf16.mxu0 0
  %798 = vmatmul.mubr.bf16.gmra.mxu0 %v614
  %v799 = vpop.f32.mrf.mxu0
  %v800 = vadd.f32 %v735, %v799
  %v801 = vpop.f32.mrf.mxu0
  %v802 = vpop.f32.mrf.mxu0
  %v803 = vadd.f32 %v738, %v802
  %v804 = vpop.f32.mrf.mxu0
  %805 = vmatprep.mubr.bf16.mxu0 0
  %806 = vmatmul.mubr.bf16.gmra.mxu0 %v617
  %v807 = vpop.f32.mrf.mxu0
  %v808 = vadd.f32 %v743, %v807
  %v809 = vpop.f32.mrf.mxu0
  %v810 = vpop.f32.mrf.mxu0
  %v811 = vadd.f32 %v746, %v810
  %v812 = vpop.f32.mrf.mxu0
  %813 = vdwg.mxu0
  %v814 = vadd.f32 %v784, %v212
  %v815 = vadd.f32 %v787, %v215
  %v816 = vadd.f32 %v792, %v220
  %v817 = vadd.f32 %v795, %v223
  %v818 = vadd.f32 %v800, %v228
  %v819 = vadd.f32 %v803, %v231
  %v820 = vadd.f32 %v808, %v236
  %v821 = vadd.f32 %v811, %v239
  %v822 = vld [vmem:[%s5] sm:$0xff]
  %v823 = vld [vmem:[%s5 + $0x8] sm:$0xff]
  %v824 = vld [vmem:[%s5 + $0x10] sm:$0xff]
  %v825 = vld [vmem:[%s5 + $0x18] sm:$0xff]
  %v826 = vld [vmem:[%s5 + $0x20] sm:$0xff]
  %v827 = vld [vmem:[%s5 + $0x28] sm:$0xff]
  %v828 = vld [vmem:[%s5 + $0x30] sm:$0xff]
  %v829 = vld [vmem:[%s5 + $0x38] sm:$0xff]
  %831 = vset.pattern.permute.xlu0 0
  %832 = vperm.xlu0 %831, %v822
  %v833 = vpop.permute.xlu0 %832
  %836 = vset.pattern.permute.xlu0 0
  %837 = vperm.xlu0 %836, %v823
  %v838 = vpop.permute.xlu0 %837
  %841 = vset.pattern.permute.xlu0 0
  %842 = vperm.xlu0 %841, %v824
  %v843 = vpop.permute.xlu0 %842
  %846 = vset.pattern.permute.xlu0 0
  %847 = vperm.xlu0 %846, %v825
  %v848 = vpop.permute.xlu0 %847
  %851 = vset.pattern.permute.xlu0 0
  %852 = vperm.xlu0 %851, %v826
  %v853 = vpop.permute.xlu0 %852
  %856 = vset.pattern.permute.xlu0 0
  %857 = vperm.xlu0 %856, %v827
  %v858 = vpop.permute.xlu0 %857
  %861 = vset.pattern.permute.xlu0 0
  %862 = vperm.xlu0 %861, %v828
  %v863 = vpop.permute.xlu0 %862
  %866 = vset.pattern.permute.xlu0 0
  %867 = vperm.xlu0 %866, %v829
  %v868 = vpop.permute.xlu0 %867
  %v870 = vadd.f32 %v814, %v833
  %v871 = vadd.f32 %v815, %v838
  %v872 = vadd.f32 %v816, %v843
  %v873 = vadd.f32 %v817, %v848
  %v874 = vadd.f32 %v818, %v853
  %v875 = vadd.f32 %v819, %v858
  %v876 = vadd.f32 %v820, %v863
  %v877 = vadd.f32 %v821, %v868
  %v878 = vmax.f32 %v870, 0.0
  %v879 = vmax.f32 %v871, 0.0
  %v880 = vmax.f32 %v872, 0.0
  %v881 = vmax.f32 %v873, 0.0
  %v882 = vmax.f32 %v874, 0.0
  %v883 = vmax.f32 %v875, 0.0
  %v884 = vmax.f32 %v876, 0.0
  %v885 = vmax.f32 %v877, 0.0
  %886 = vst.msk [vmem:[%s6] sm:$0xff] %vm164, %v878
  %887 = vst.msk [vmem:[%s6 + $0x8] sm:$0xff] %vm164, %v879
  %888 = vst.msk [vmem:[%s6 + $0x10] sm:$0xff] %vm164, %v880
  %889 = vst.msk [vmem:[%s6 + $0x18] sm:$0xff] %vm164, %v881
  %890 = vst.msk [vmem:[%s6 + $0x20] sm:$0xff] %vm164, %v882
  %891 = vst.msk [vmem:[%s6 + $0x28] sm:$0xff] %vm164, %v883
  %892 = vst.msk [vmem:[%s6 + $0x30] sm:$0xff] %vm164, %v884
  %893 = vst.msk [vmem:[%s6 + $0x38] sm:$0xff] %vm164, %v885
  // Predicated region
  $region26: #{ocm_resnet_forward.31} parent=0 // pred_check
    _
  $region27: #{ocm_resnet_forward.31} parent=0 // pred_check_branch
    %895 = sbr.rel (0) target = $region29
  $region28: #{ocm_resnet_forward.31} parent=0 // pred_region
    _
  $region29: #{ocm_resnet_forward.31} parent=0 // pred_fallthru
    _
  // Predicated region
  $region30: #{ocm_resnet_forward.31} parent=0 // pred_check
    _
  $region31: #{ocm_resnet_forward.31} parent=0 // pred_check_branch
    %897 = sbr.rel (0) target = $region33
  $region32: #{ocm_resnet_forward.31} parent=0 // pred_region
    _
  $region33: #{ocm_resnet_forward.31} parent=0 // pred_fallthru
    _

// kernel: ocm_resnet_forward.32
$region0: #{ocm_resnet_forward.32}
  #allocation0 [shape = 'u32[]', space=smem, size = 0x4, offset = 0x4, fixed_abs, tag = 'smem constant byte address 0x4 - core index']
  #allocation1 [shape = 'u32[144,128]{1,0:T(1,128)}', space=vmem, size = 0x12000, scoped, tag = 'internal scratch']
  %s0 = inlined_call_operand.vmem [shape: bf16[64,576], index: 0, kind: input, shape index: {}]
  %s1 = inlined_call_operand.vmem [shape: bf16[576,32], index: 1, kind: input, shape index: {}]
  %s2 = inlined_call_operand.vmem [shape: f32[64,1], index: 2, kind: input, shape index: {}]
  %s3 = inlined_call_operand.vmem [shape: f32[64,32], index: 3, kind: output, shape index: {}]
  %s4 = sld [smem:[#allocation0]]
  $region22: #{ocm_resnet_forward.32} parent=0
    _
  %s6 = ssub.s32 1, %s4
  %s7 = scalar_select 0, %s6, %s4
  // Predicated region
  $region2: #{ocm_resnet_forward.32} parent=0 // pred_check
    _
  $region3: #{ocm_resnet_forward.32} parent=0 // pred_check_branch
    %9 = sbr.rel (0) target = $region5
  $region4: #{ocm_resnet_forward.32} parent=0 // pred_region
    _
  $region5: #{ocm_resnet_forward.32} parent=0 // pred_fallthru
    _
  // Predicated region
  $region6: #{ocm_resnet_forward.32} parent=0 // pred_check
    _
  $region7: #{ocm_resnet_forward.32} parent=0 // pred_check_branch
    %11 = sbr.rel (0) target = $region9
  $region8: #{ocm_resnet_forward.32} parent=0 // pred_region
    _
  $region9: #{ocm_resnet_forward.32} parent=0 // pred_fallthru
    _
  // Predicated region
  $region10: #{ocm_resnet_forward.32} parent=0 // pred_check
    _
  $region11: #{ocm_resnet_forward.32} parent=0 // pred_check_branch
    %13 = sbr.rel (0) target = $region13
  $region12: #{ocm_resnet_forward.32} parent=0 // pred_region
    _
  $region13: #{ocm_resnet_forward.32} parent=0 // pred_fallthru
    _
  %v15 = vld [vmem:[%s0] sm:$0xff]
  %v16 = vld [vmem:[%s0 + $0x8] sm:$0xff]
  %v17 = vld [vmem:[%s0 + $0x10] sm:$0xf]
  %v18 = vld [vmem:[%s0 + $0x14] sm:$0xff]
  %v19 = vld [vmem:[%s0 + $0x1c] sm:$0xff]
  %v20 = vld [vmem:[%s0 + $0x24] sm:$0xf]
  %v21 = vld [vmem:[%s0 + $0x28] sm:$0xff]
  %v22 = vld [vmem:[%s0 + $0x30] sm:$0xff]
  %v23 = vld [vmem:[%s0 + $0x38] sm:$0xf]
  %v24 = vld [vmem:[%s0 + $0x3c] sm:$0xff]
  %v25 = vld [vmem:[%s0 + $0x44] sm:$0xff]
  %v26 = vld [vmem:[%s0 + $0x4c] sm:$0xf]
  %v27 = vld [vmem:[%s0 + $0x50] sm:$0xff]
  %v28 = vld [vmem:[%s0 + $0x58] sm:$0xff]
  %v29 = vld [vmem:[%s0 + $0x60] sm:$0xf]
  %v30 = vld [vmem:[%s0 + $0x64] sm:$0xff]
  %v31 = vld [vmem:[%s0 + $0x6c] sm:$0xff]
  %v32 = vld [vmem:[%s0 + $0x74] sm:$0xf]
  %v33 = vld [vmem:[%s0 + $0x78] sm:$0xff]
  %v34 = vld [vmem:[%s0 + $0x80] sm:$0xff]
  %v35 = vld [vmem:[%s0 + $0x88] sm:$0xf]
  %v36 = vld [vmem:[%s0 + $0x8c] sm:$0xff]
  %v37 = vld [vmem:[%s0 + $0x94] sm:$0xff]
  %v38 = vld [vmem:[%s0 + $0x9c] sm:$0xf]
  %v39 = vld [vmem:[%s1] sm:$0xf]
  %v40 = vld [vmem:[%s1 + $0x4] sm:$0xf]
  %v41 = vld [vmem:[%s1 + $0x8] sm:$0xf]
  %v42 = vld [vmem:[%s1 + $0xc] sm:$0xf]
  %v43 = vld [vmem:[%s1 + $0x10] sm:$0xf]
  %v44 = vld [vmem:[%s1 + $0x14] sm:$0xf]
  %v45 = vld [vmem:[%s1 + $0x18] sm:$0xf]
  %v46 = vld [vmem:[%s1 + $0x1c] sm:$0xf]
  %v47 = vld [vmem:[%s1 + $0x20] sm:$0xf]
  %v48 = vld [vmem:[%s1 + $0x24] sm:$0xf]
  %v49 = vld [vmem:[%s1 + $0x28] sm:$0xf]
  %v50 = vld [vmem:[%s1 + $0x2c] sm:$0xf]
  %v51 = vld [vmem:[%s1 + $0x30] sm:$0xf]
  %v52 = vld [vmem:[%s1 + $0x34] sm:$0xf]
  %v53 = vld [vmem:[%s1 + $0x38] sm:$0xf]
  %v54 = vld [vmem:[%s1 + $0x3c] sm:$0xf]
  %v55 = vld [vmem:[%s1 + $0x40] sm:$0xf]
  %v56 = vld [vmem:[%s1 + $0x44] sm:$0xf]
  %v57 = vld [vmem:[%s1 + $0x48] sm:$0xf]
  %v58 = vld [vmem:[%s1 + $0x4c] sm:$0xf]
  %v59 = vld [vmem:[%s1 + $0x50] sm:$0xf]
  %v60 = vld [vmem:[%s1 + $0x54] sm:$0xf]
  %v61 = vld [vmem:[%s1 + $0x58] sm:$0xf]
  %v62 = vld [vmem:[%s1 + $0x5c] sm:$0xf]
  %v63 = vld [vmem:[%s1 + $0x60] sm:$0xf]
  %v64 = vld [vmem:[%s1 + $0x64] sm:$0xf]
  %v65 = vld [vmem:[%s1 + $0x68] sm:$0xf]
  %v66 = vld [vmem:[%s1 + $0x6c] sm:$0xf]
  %v67 = vld [vmem:[%s1 + $0x70] sm:$0xf]
  %v68 = vld [vmem:[%s1 + $0x74] sm:$0xf]
  %v69 = vld [vmem:[%s1 + $0x78] sm:$0xf]
  %v70 = vld [vmem:[%s1 + $0x7c] sm:$0xf]
  %v71 = vld [vmem:[%s1 + $0x80] sm:$0xf]
  %v72 = vld [vmem:[%s1 + $0x84] sm:$0xf]
  %v73 = vld [vmem:[%s1 + $0x88] sm:$0xf]
  %v74 = vld [vmem:[%s1 + $0x8c] sm:$0xf]
  %v75 = vld [vmem:[%s1 + $0x90] sm:$0xf]
  %v76 = vld [vmem:[%s1 + $0x94] sm:$0xf]
  %v77 = vld [vmem:[%s1 + $0x98] sm:$0xf]
  %v78 = vld [vmem:[%s1 + $0x9c] sm:$0xf]
  %v79 = vld [vmem:[%s1 + $0xa0] sm:$0xf]
  %v80 = vld [vmem:[%s1 + $0xa4] sm:$0xf]
  %v81 = vld [vmem:[%s1 + $0xa8] sm:$0xf]
  %v82 = vld [vmem:[%s1 + $0xac] sm:$0xf]
  %v83 = vld [vmem:[%s1 + $0xb0] sm:$0xf]
  %v84 = vld [vmem:[%s1 + $0xb4] sm:$0xf]
  %v85 = vld [vmem:[%s1 + $0xb8] sm:$0xf]
  %v86 = vld [vmem:[%s1 + $0xbc] sm:$0xf]
  %v87 = vld [vmem:[%s1 + $0xc0] sm:$0xf]
  %v88 = vld [vmem:[%s1 + $0xc4] sm:$0xf]
  %v89 = vld [vmem:[%s1 + $0xc8] sm:$0xf]
  %v90 = vld [vmem:[%s1 + $0xcc] sm:$0xf]
  %v91 = vld [vmem:[%s1 + $0xd0] sm:$0xf]
  %v92 = vld [vmem:[%s1 + $0xd4] sm:$0xf]
  %v93 = vld [vmem:[%s1 + $0xd8] sm:$0xf]
  %v94 = vld [vmem:[%s1 + $0xdc] sm:$0xf]
  %v95 = vld [vmem:[%s1 + $0xe0] sm:$0xf]
  %v96 = vld [vmem:[%s1 + $0xe4] sm:$0xf]
  %v97 = vld [vmem:[%s1 + $0xe8] sm:$0xf]
  %v98 = vld [vmem:[%s1 + $0xec] sm:$0xf]
  %v99 = vld [vmem:[%s1 + $0xf0] sm:$0xf]
  %v100 = vld [vmem:[%s1 + $0xf4] sm:$0xf]
  %v101 = vld [vmem:[%s1 + $0xf8] sm:$0xf]
  %v102 = vld [vmem:[%s1 + $0xfc] sm:$0xf]
  %v103 = vld [vmem:[%s1 + $0x100] sm:$0xf]
  %v104 = vld [vmem:[%s1 + $0x104] sm:$0xf]
  %v105 = vld [vmem:[%s1 + $0x108] sm:$0xf]
  %v106 = vld [vmem:[%s1 + $0x10c] sm:$0xf]
  %v107 = vld [vmem:[%s1 + $0x110] sm:$0xf]
  %v108 = vld [vmem:[%s1 + $0x114] sm:$0xf]
  %v109 = vld [vmem:[%s1 + $0x118] sm:$0xf]
  %v110 = vld [vmem:[%s1 + $0x11c] sm:$0xf]
  %v111 = vld [vmem:[%s2] sm:$0xff]
  %v112 = vld [vmem:[%s2 + $0x8] sm:$0xff]
  %v113 = vld [vmem:[%s2 + $0x10] sm:$0xff]
  %v114 = vld [vmem:[%s2 + $0x18] sm:$0xff]
  %v115 = vld [vmem:[%s2 + $0x20] sm:$0xff]
  %v116 = vld [vmem:[%s2 + $0x28] sm:$0xff]
  %v117 = vld [vmem:[%s2 + $0x30] sm:$0xff]
  %v118 = vld [vmem:[%s2 + $0x38] sm:$0xff]
  %120 = vset.pattern.permute.xlu0 0
  %121 = vperm.xlu0 %120, %v111
  %v122 = vpop.permute.xlu0 %121
  %125 = vset.pattern.permute.xlu0 0
  %126 = vperm.xlu0 %125, %v112
  %v127 = vpop.permute.xlu0 %126
  %130 = vset.pattern.permute.xlu0 0
  %131 = vperm.xlu0 %130, %v113
  %v132 = vpop.permute.xlu0 %131
  %135 = vset.pattern.permute.xlu0 0
  %136 = vperm.xlu0 %135, %v114
  %v137 = vpop.permute.xlu0 %136
  %140 = vset.pattern.permute.xlu0 0
  %141 = vperm.xlu0 %140, %v115
  %v142 = vpop.permute.xlu0 %141
  %145 = vset.pattern.permute.xlu0 0
  %146 = vperm.xlu0 %145, %v116
  %v147 = vpop.permute.xlu0 %146
  %150 = vset.pattern.permute.xlu0 0
  %151 = vperm.xlu0 %150, %v117
  %v152 = vpop.permute.xlu0 %151
  %155 = vset.pattern.permute.xlu0 0
  %156 = vperm.xlu0 %155, %v118
  %v157 = vpop.permute.xlu0 %156
  %v183 = vunpack.c.l.b16 %v15
  %v184 = vunpack.c.h.b16 %v15
  %v185 = vunpack.c.l.b16 %v16
  %v186 = vunpack.c.h.b16 %v16
  %v187 = vunpack.c.l.b16 %v17
  %v188 = vunpack.c.l.b16 %v18
  %v189 = vunpack.c.h.b16 %v18
  %v190 = vunpack.c.l.b16 %v19
  %v191 = vunpack.c.h.b16 %v19
  %v192 = vunpack.c.l.b16 %v20
  %v193 = vunpack.c.l.b16 %v21
  %v194 = vunpack.c.h.b16 %v21
  %v195 = vunpack.c.l.b16 %v22
  %v196 = vunpack.c.h.b16 %v22
  %v197 = vunpack.c.l.b16 %v23
  %v198 = vunpack.c.l.b16 %v24
  %v199 = vunpack.c.h.b16 %v24
  %v200 = vunpack.c.l.b16 %v25
  %v201 = vunpack.c.h.b16 %v25
  %v202 = vunpack.c.l.b16 %v26
  %v203 = vunpack.c.l.b16 %v27
  %v204 = vunpack.c.h.b16 %v27
  %v205 = vunpack.c.l.b16 %v28
  %v206 = vunpack.c.h.b16 %v28
  %v207 = vunpack.c.l.b16 %v29
  %v208 = vunpack.c.l.b16 %v30
  %v209 = vunpack.c.h.b16 %v30
  %v210 = vunpack.c.l.b16 %v31
  %v211 = vunpack.c.h.b16 %v31
  %v212 = vunpack.c.l.b16 %v32
  %v213 = vunpack.c.l.b16 %v33
  %v214 = vunpack.c.h.b16 %v33
  %v215 = vunpack.c.l.b16 %v34
  %v216 = vunpack.c.h.b16 %v34
  %v217 = vunpack.c.l.b16 %v35
  %v218 = vunpack.c.l.b16 %v36
  %v219 = vunpack.c.h.b16 %v36
  %v220 = vunpack.c.l.b16 %v37
  %v221 = vunpack.c.h.b16 %v37
  %v222 = vunpack.c.l.b16 %v38
  %v223 = vpack.c.b16 %v188, %v183
  %v224 = vpack.c.b16 %v189, %v184
  %v225 = vpack.c.b16 %v190, %v185
  %v226 = vpack.c.b16 %v191, %v186
  %v227 = vpack.c.b16 %v192, %v187
  %v228 = vpack.c.b16 %v198, %v193
  %v229 = vpack.c.b16 %v199, %v194
  %v230 = vpack.c.b16 %v200, %v195
  %v231 = vpack.c.b16 %v201, %v196
  %v232 = vpack.c.b16 %v202, %v197
  %v233 = vpack.c.b16 %v208, %v203
  %v234 = vpack.c.b16 %v209, %v204
  %v235 = vpack.c.b16 %v210, %v205
  %v236 = vpack.c.b16 %v211, %v206
  %v237 = vpack.c.b16 %v212, %v207
  %v238 = vpack.c.b16 %v218, %v213
  %v239 = vpack.c.b16 %v219, %v214
  %v240 = vpack.c.b16 %v220, %v215
  %v241 = vpack.c.b16 %v221, %v216
  %v242 = vpack.c.b16 %v222, %v217
  %v331 = vunpack.c.l.b16 %v39
  %v332 = vunpack.c.l.b16 %v40
  %v333 = vunpack.c.l.b16 %v41
  %v334 = vunpack.c.l.b16 %v42
  %v335 = vunpack.c.l.b16 %v43
  %v336 = vunpack.c.l.b16 %v44
  %v337 = vunpack.c.l.b16 %v45
  %v338 = vunpack.c.l.b16 %v46
  %v339 = vunpack.c.l.b16 %v47
  %v340 = vunpack.c.l.b16 %v48
  %v341 = vunpack.c.l.b16 %v49
  %v342 = vunpack.c.l.b16 %v50
  %v343 = vunpack.c.l.b16 %v51
  %v344 = vunpack.c.l.b16 %v52
  %v345 = vunpack.c.l.b16 %v53
  %v346 = vunpack.c.l.b16 %v54
  %v347 = vunpack.c.l.b16 %v55
  %v348 = vunpack.c.l.b16 %v56
  %v349 = vunpack.c.l.b16 %v57
  %v350 = vunpack.c.l.b16 %v58
  %v351 = vunpack.c.l.b16 %v59
  %v352 = vunpack.c.l.b16 %v60
  %v353 = vunpack.c.l.b16 %v61
  %v354 = vunpack.c.l.b16 %v62
  %v355 = vunpack.c.l.b16 %v63
  %v356 = vunpack.c.l.b16 %v64
  %v357 = vunpack.c.l.b16 %v65
  %v358 = vunpack.c.l.b16 %v66
  %v359 = vunpack.c.l.b16 %v67
  %v360 = vunpack.c.l.b16 %v68
  %v361 = vunpack.c.l.b16 %v69
  %v362 = vunpack.c.l.b16 %v70
  %v363 = vunpack.c.l.b16 %v71
  %v364 = vunpack.c.l.b16 %v72
  %v365 = vunpack.c.l.b16 %v73
  %v366 = vunpack.c.l.b16 %v74
  %v367 = vunpack.c.l.b16 %v75
  %v368 = vunpack.c.l.b16 %v76
  %v369 = vunpack.c.l.b16 %v77
  %v370 = vunpack.c.l.b16 %v78
  %v371 = vunpack.c.l.b16 %v79
  %v372 = vunpack.c.l.b16 %v80
  %v373 = vunpack.c.l.b16 %v81
  %v374 = vunpack.c.l.b16 %v82
  %v375 = vunpack.c.l.b16 %v83
  %v376 = vunpack.c.l.b16 %v84
  %v377 = vunpack.c.l.b16 %v85
  %v378 = vunpack.c.l.b16 %v86
  %v379 = vunpack.c.l.b16 %v87
  %v380 = vunpack.c.l.b16 %v88
  %v381 = vunpack.c.l.b16 %v89
  %v382 = vunpack.c.l.b16 %v90
  %v383 = vunpack.c.l.b16 %v91
  %v384 = vunpack.c.l.b16 %v92
  %v385 = vunpack.c.l.b16 %v93
  %v386 = vunpack.c.l.b16 %v94
  %v387 = vunpack.c.l.b16 %v95
  %v388 = vunpack.c.l.b16 %v96
  %v389 = vunpack.c.l.b16 %v97
  %v390 = vunpack.c.l.b16 %v98
  %v391 = vunpack.c.l.b16 %v99
  %v392 = vunpack.c.l.b16 %v100
  %v393 = vunpack.c.l.b16 %v101
  %v394 = vunpack.c.l.b16 %v102
  %v395 = vunpack.c.l.b16 %v103
  %v396 = vunpack.c.l.b16 %v104
  %v397 = vunpack.c.l.b16 %v105
  %v398 = vunpack.c.l.b16 %v106
  %v399 = vunpack.c.l.b16 %v107
  %v400 = vunpack.c.l.b16 %v108
  %v401 = vunpack.c.l.b16 %v109
  %v402 = vunpack.c.l.b16 %v110
  %v403 = vpack.c.b16 %v332, %v331
  %v404 = vpack.c.b16 %v334, %v333
  %v405 = vpack.c.b16 %v336, %v335
  %v406 = vpack.c.b16 %v338, %v337
  %v407 = vpack.c.b16 %v340, %v339
  %v408 = vpack.c.b16 %v342, %v341
  %v409 = vpack.c.b16 %v344, %v343
  %v410 = vpack.c.b16 %v346, %v345
  %v411 = vpack.c.b16 %v348, %v347
  %v412 = vpack.c.b16 %v350, %v349
  %v413 = vpack.c.b16 %v352, %v351
  %v414 = vpack.c.b16 %v354, %v353
  %v415 = vpack.c.b16 %v356, %v355
  %v416 = vpack.c.b16 %v358, %v357
  %v417 = vpack.c.b16 %v360, %v359
  %v418 = vpack.c.b16 %v362, %v361
  %v419 = vpack.c.b16 %v364, %v363
  %v420 = vpack.c.b16 %v366, %v365
  %v421 = vpack.c.b16 %v368, %v367
  %v422 = vpack.c.b16 %v370, %v369
  %v423 = vpack.c.b16 %v372, %v371
  %v424 = vpack.c.b16 %v374, %v373
  %v425 = vpack.c.b16 %v376, %v375
  %v426 = vpack.c.b16 %v378, %v377
  %v427 = vpack.c.b16 %v380, %v379
  %v428 = vpack.c.b16 %v382, %v381
  %v429 = vpack.c.b16 %v384, %v383
  %v430 = vpack.c.b16 %v386, %v385
  %v431 = vpack.c.b16 %v388, %v387
  %v432 = vpack.c.b16 %v390, %v389
  %v433 = vpack.c.b16 %v392, %v391
  %v434 = vpack.c.b16 %v394, %v393
  %v435 = vpack.c.b16 %v396, %v395
  %v436 = vpack.c.b16 %v398, %v397
  %v437 = vpack.c.b16 %v400, %v399
  %v438 = vpack.c.b16 %v402, %v401
  %vm475 = vcmask 523264
  %v477 = vsel %vm475, %v227, 0
  %v480 = vsel %vm475, %v232, 0
  %v483 = vsel %vm475, %v237, 0
  %v486 = vsel %vm475, %v242, 0
  %488 = vmatprep.subr.bf16.mxu0 0
  %489 = vmatpush1.bf16.msra.mxu0 %v410
  %490 = vmatprep.subr.bf16.mxu0 0
  %491 = vmatpush1.bf16.msra.mxu0 %v409
  %492 = vmatprep.subr.bf16.mxu0 0
  %493 = vmatpush1.bf16.msra.mxu0 %v408
  %494 = vmatprep.subr.bf16.mxu0 0
  %495 = vmatpush1.bf16.msra.mxu0 %v407
  %496 = vmatprep.subr.bf16.mxu0 0
  %497 = vmatpush1.bf16.msra.mxu0 %v406
  %498 = vmatprep.subr.bf16.mxu0 0
  %499 = vmatpush1.bf16.msra.mxu0 %v405
  %500 = vmatprep.subr.bf16.mxu0 0
  %501 = vmatpush1.bf16.msra.mxu0 %v404
  %502 = vmatprep.subr.bf16.mxu0 0
  %503 = vmatpush1.bf16.msra.mxu0 %v403
  %504 = vmatprep.subr.bf16.mxu0 0
  %505 = vmatpush2.bf16.msra.mxu0 %v418
  %506 = vmatprep.subr.bf16.mxu0 0
  %507 = vmatpush2.bf16.msra.mxu0 %v417
  %508 = vmatprep.subr.bf16.mxu0 0
  %509 = vmatpush2.bf16.msra.mxu0 %v416
  %510 = vmatprep.subr.bf16.mxu0 0
  %511 = vmatpush2.bf16.msra.mxu0 %v415
  %512 = vmatprep.subr.bf16.mxu0 0
  %513 = vmatpush2.bf16.msra.mxu0 %v414
  %514 = vmatprep.subr.bf16.mxu0 0
  %515 = vmatpush2.bf16.msra.mxu0 %v413
  %516 = vmatprep.subr.bf16.mxu0 0
  %517 = vmatpush2.bf16.msra.mxu0 %v412
  %518 = vmatprep.subr.bf16.mxu0 0
  %519 = vmatpush2.bf16.msra.mxu0 %v411
  %520 = vmatprep.mubr.bf16.mxu0 %v224
  %521 = vmatmul.mubr.bf16.gmra.mxu0 %v223
  %v522 = vpop.f32.mrf.mxu0
  %v523 = vadd.f32 %v122, %v522
  %v524 = vpop.f32.mrf.mxu0
  %v525 = vpop.f32.mrf.mxu0
  %v526 = vadd.f32 %v127, %v525
  %v527 = vpop.f32.mrf.mxu0
  %528 = vmatprep.mubr.bf16.mxu0 %v229
  %529 = vmatmul.mubr.bf16.gmra.mxu0 %v228
  %v530 = vpop.f32.mrf.mxu0
  %v531 = vadd.f32 %v132, %v530
  %v532 = vpop.f32.mrf.mxu0
  %v533 = vpop.f32.mrf.mxu0
  %v534 = vadd.f32 %v137, %v533
  %v535 = vpop.f32.mrf.mxu0
  %536 = vmatprep.mubr.bf16.mxu0 %v234
  %537 = vmatmul.mubr.bf16.gmra.mxu0 %v233
  %v538 = vpop.f32.mrf.mxu0
  %v539 = vadd.f32 %v142, %v538
  %v540 = vpop.f32.mrf.mxu0
  %v541 = vpop.f32.mrf.mxu0
  %v542 = vadd.f32 %v147, %v541
  %v543 = vpop.f32.mrf.mxu0
  %544 = vmatprep.mubr.bf16.mxu0 %v239
  %545 = vmatmul.mubr.bf16.gmra.mxu0 %v238
  %v546 = vpop.f32.mrf.mxu0
  %v547 = vadd.f32 %v152, %v546
  %v548 = vpop.f32.mrf.mxu0
  %v549 = vpop.f32.mrf.mxu0
  %v550 = vadd.f32 %v157, %v549
  %v551 = vpop.f32.mrf.mxu0
  %552 = vdwg.mxu0
  %553 = vmatprep.subr.bf16.mxu0 0
  %554 = vmatpush1.bf16.msra.mxu0 %v426
  %555 = vmatprep.subr.bf16.mxu0 0
  %556 = vmatpush1.bf16.msra.mxu0 %v425
  %557 = vmatprep.subr.bf16.mxu0 0
  %558 = vmatpush1.bf16.msra.mxu0 %v424
  %559 = vmatprep.subr.bf16.mxu0 0
  %560 = vmatpush1.bf16.msra.mxu0 %v423
  %561 = vmatprep.subr.bf16.mxu0 0
  %562 = vmatpush1.bf16.msra.mxu0 %v422
  %563 = vmatprep.subr.bf16.mxu0 0
  %564 = vmatpush1.bf16.msra.mxu0 %v421
  %565 = vmatprep.subr.bf16.mxu0 0
  %566 = vmatpush1.bf16.msra.mxu0 %v420
  %567 = vmatprep.subr.bf16.mxu0 0
  %568 = vmatpush1.bf16.msra.mxu0 %v419
  %569 = vmatprep.subr.bf16.mxu0 0
  %570 = vmatpush2.bf16.msra.mxu0 %v434
  %571 = vmatprep.subr.bf16.mxu0 0
  %572 = vmatpush2.bf16.msra.mxu0 %v433
  %573 = vmatprep.subr.bf16.mxu0 0
  %574 = vmatpush2.bf16.msra.mxu0 %v432
  %575 = vmatprep.subr.bf16.mxu0 0
  %576 = vmatpush2.bf16.msra.mxu0 %v431
  %577 = vmatprep.subr.bf16.mxu0 0
  %578 = vmatpush2.bf16.msra.mxu0 %v430
  %579 = vmatprep.subr.bf16.mxu0 0
  %580 = vmatpush2.bf16.msra.mxu0 %v429
  %581 = vmatprep.subr.bf16.mxu0 0
  %582 = vmatpush2.bf16.msra.mxu0 %v428
  %583 = vmatprep.subr.bf16.mxu0 0
  %584 = vmatpush2.bf16.msra.mxu0 %v427
  %585 = vmatprep.mubr.bf16.mxu0 %v226
  %586 = vmatmul.mubr.bf16.gmra.mxu0 %v225
  %v587 = vpop.f32.mrf.mxu0
  %v588 = vadd.f32 %v523, %v587
  %v589 = vpop.f32.mrf.mxu0
  %v590 = vpop.f32.mrf.mxu0
  %v591 = vadd.f32 %v526, %v590
  %v592 = vpop.f32.mrf.mxu0
  %593 = vmatprep.mubr.bf16.mxu0 %v231
  %594 = vmatmul.mubr.bf16.gmra.mxu0 %v230
  %v595 = vpop.f32.mrf.mxu0
  %v596 = vadd.f32 %v531, %v595
  %v597 = vpop.f32.mrf.mxu0
  %v598 = vpop.f32.mrf.mxu0
  %v599 = vadd.f32 %v534, %v598
  %v600 = vpop.f32.mrf.mxu0
  %601 = vmatprep.mubr.bf16.mxu0 %v236
  %602 = vmatmul.mubr.bf16.gmra.mxu0 %v235
  %v603 = vpop.f32.mrf.mxu0
  %v604 = vadd.f32 %v539, %v603
  %v605 = vpop.f32.mrf.mxu0
  %v606 = vpop.f32.mrf.mxu0
  %v607 = vadd.f32 %v542, %v606
  %v608 = vpop.f32.mrf.mxu0
  %609 = vmatprep.mubr.bf16.mxu0 %v241
  %610 = vmatmul.mubr.bf16.gmra.mxu0 %v240
  %v611 = vpop.f32.mrf.mxu0
  %v612 = vadd.f32 %v547, %v611
  %v613 = vpop.f32.mrf.mxu0
  %v614 = vpop.f32.mrf.mxu0
  %v615 = vadd.f32 %v550, %v614
  %v616 = vpop.f32.mrf.mxu0
  %617 = vdwg.mxu0
  %618 = vmatprep.subr.bf16.mxu0 0
  %619 = vmatpush1.bf16.msra.mxu0 0
  %620 = vmatprep.subr.bf16.mxu0 0
  %621 = vmatpush1.bf16.msra.mxu0 0
  %622 = vmatprep.subr.bf16.mxu0 0
  %623 = vmatpush1.bf16.msra.mxu0 0
  %624 = vmatprep.subr.bf16.mxu0 0
  %625 = vmatpush1.bf16.msra.mxu0 0
  %626 = vmatprep.subr.bf16.mxu0 0
  %627 = vmatpush1.bf16.msra.mxu0 %v438
  %628 = vmatprep.subr.bf16.mxu0 0
  %629 = vmatpush1.bf16.msra.mxu0 %v437
  %630 = vmatprep.subr.bf16.mxu0 0
  %631 = vmatpush1.bf16.msra.mxu0 %v436
  %632 = vmatprep.subr.bf16.mxu0 0
  %633 = vmatpush1.bf16.msra.mxu0 %v435
  %634 = vmatprep.subr.bf16.mxu0 0
  %635 = vmatpush2.bf16.msra.mxu0 0
  %636 = vmatprep.subr.bf16.mxu0 0
  %637 = vmatpush2.bf16.msra.mxu0 0
  %638 = vmatprep.subr.bf16.mxu0 0
  %639 = vmatpush2.bf16.msra.mxu0 0
  %640 = vmatprep.subr.bf16.mxu0 0
  %641 = vmatpush2.bf16.msra.mxu0 0
  %642 = vmatprep.subr.bf16.mxu0 0
  %643 = vmatpush2.bf16.msra.mxu0 0
  %644 = vmatprep.subr.bf16.mxu0 0
  %645 = vmatpush2.bf16.msra.mxu0 0
  %646 = vmatprep.subr.bf16.mxu0 0
  %647 = vmatpush2.bf16.msra.mxu0 0
  %648 = vmatprep.subr.bf16.mxu0 0
  %649 = vmatpush2.bf16.msra.mxu0 0
  %650 = vmatprep.mubr.bf16.mxu0 0
  %651 = vmatmul.mubr.bf16.gmra.mxu0 %v477
  %v652 = vpop.f32.mrf.mxu0
  %v653 = vadd.f32 %v588, %v652
  %v654 = vpop.f32.mrf.mxu0
  %v655 = vpop.f32.mrf.mxu0
  %v656 = vadd.f32 %v591, %v655
  %v657 = vpop.f32.mrf.mxu0
  %658 = vmatprep.mubr.bf16.mxu0 0
  %659 = vmatmul.mubr.bf16.gmra.mxu0 %v480
  %v660 = vpop.f32.mrf.mxu0
  %v661 = vadd.f32 %v596, %v660
  %v662 = vpop.f32.mrf.mxu0
  %v663 = vpop.f32.mrf.mxu0
  %v664 = vadd.f32 %v599, %v663
  %v665 = vpop.f32.mrf.mxu0
  %666 = vmatprep.mubr.bf16.mxu0 0
  %667 = vmatmul.mubr.bf16.gmra.mxu0 %v483
  %v668 = vpop.f32.mrf.mxu0
  %v669 = vadd.f32 %v604, %v668
  %v670 = vpop.f32.mrf.mxu0
  %v671 = vpop.f32.mrf.mxu0
  %v672 = vadd.f32 %v607, %v671
  %v673 = vpop.f32.mrf.mxu0
  %674 = vmatprep.mubr.bf16.mxu0 0
  %675 = vmatmul.mubr.bf16.gmra.mxu0 %v486
  %v676 = vpop.f32.mrf.mxu0
  %v677 = vadd.f32 %v612, %v676
  %v678 = vpop.f32.mrf.mxu0
  %v679 = vpop.f32.mrf.mxu0
  %v680 = vadd.f32 %v615, %v679
  %v681 = vpop.f32.mrf.mxu0
  %682 = vdwg.mxu0
  %v683 = vmax.f32 %v653, 0.0
  %v684 = vmax.f32 %v656, 0.0
  %v685 = vmax.f32 %v661, 0.0
  %v686 = vmax.f32 %v664, 0.0
  %v687 = vmax.f32 %v669, 0.0
  %v688 = vmax.f32 %v672, 0.0
  %v689 = vmax.f32 %v677, 0.0
  %v690 = vmax.f32 %v680, 0.0
  %vm691 = vcmask 261120
  %692 = vst.msk [vmem:[%s3] sm:$0xff] %vm691, %v683
  %693 = vst.msk [vmem:[%s3 + $0x8] sm:$0xff] %vm691, %v684
  %694 = vst.msk [vmem:[%s3 + $0x10] sm:$0xff] %vm691, %v685
  %695 = vst.msk [vmem:[%s3 + $0x18] sm:$0xff] %vm691, %v686
  %696 = vst.msk [vmem:[%s3 + $0x20] sm:$0xff] %vm691, %v687
  %697 = vst.msk [vmem:[%s3 + $0x28] sm:$0xff] %vm691, %v688
  %698 = vst.msk [vmem:[%s3 + $0x30] sm:$0xff] %vm691, %v689
  %699 = vst.msk [vmem:[%s3 + $0x38] sm:$0xff] %vm691, %v690
  // Predicated region
  $region14: #{ocm_resnet_forward.32} parent=0 // pred_check
    _
  $region15: #{ocm_resnet_forward.32} parent=0 // pred_check_branch
    %701 = sbr.rel (0) target = $region17
  $region16: #{ocm_resnet_forward.32} parent=0 // pred_region
    _
  $region17: #{ocm_resnet_forward.32} parent=0 // pred_fallthru
    _
  // Predicated region
  $region18: #{ocm_resnet_forward.32} parent=0 // pred_check
    _
  $region19: #{ocm_resnet_forward.32} parent=0 // pred_check_branch
    %703 = sbr.rel (0) target = $region21
  $region20: #{ocm_resnet_forward.32} parent=0 // pred_region
    _
  $region21: #{ocm_resnet_forward.32} parent=0 // pred_fallthru
    _

// kernel: ocm_resnet_forward.33
$region0: #{ocm_resnet_forward.33}
  #allocation0 [shape = 'u32[]', space=smem, size = 0x4, offset = 0x4, fixed_abs, tag = 'smem constant byte address 0x4 - core index']
  #allocation1 [shape = 'u32[144,128]{1,0:T(1,128)}', space=vmem, size = 0x12000, scoped, tag = 'internal scratch']
  %s0 = inlined_call_operand.vmem [shape: bf16[64,576], index: 0, kind: input, shape index: {}]
  %s1 = inlined_call_operand.vmem [shape: bf16[576,32], index: 1, kind: input, shape index: {}]
  %s2 = inlined_call_operand.vmem [shape: f32[64,1], index: 2, kind: input, shape index: {}]
  %s3 = inlined_call_operand.vmem [shape: f32[64,32], index: 3, kind: input, shape index: {}]
  %s4 = inlined_call_operand.vmem [shape: f32[64,32], index: 4, kind: output, shape index: {}]
  %s5 = sld [smem:[#allocation0]]
  $region26: #{ocm_resnet_forward.33} parent=0
    _
  %s7 = ssub.s32 1, %s5
  %s8 = scalar_select 0, %s7, %s5
  // Predicated region
  $region2: #{ocm_resnet_forward.33} parent=0 // pred_check
    _
  $region3: #{ocm_resnet_forward.33} parent=0 // pred_check_branch
    %10 = sbr.rel (0) target = $region5
  $region4: #{ocm_resnet_forward.33} parent=0 // pred_region
    _
  $region5: #{ocm_resnet_forward.33} parent=0 // pred_fallthru
    _
  // Predicated region
  $region6: #{ocm_resnet_forward.33} parent=0 // pred_check
    _
  $region7: #{ocm_resnet_forward.33} parent=0 // pred_check_branch
    %12 = sbr.rel (0) target = $region9
  $region8: #{ocm_resnet_forward.33} parent=0 // pred_region
    _
  $region9: #{ocm_resnet_forward.33} parent=0 // pred_fallthru
    _
  // Predicated region
  $region10: #{ocm_resnet_forward.33} parent=0 // pred_check
    _
  $region11: #{ocm_resnet_forward.33} parent=0 // pred_check_branch
    %14 = sbr.rel (0) target = $region13
  $region12: #{ocm_resnet_forward.33} parent=0 // pred_region
    _
  $region13: #{ocm_resnet_forward.33} parent=0 // pred_fallthru
    _
  // Predicated region
  $region14: #{ocm_resnet_forward.33} parent=0 // pred_check
    _
  $region15: #{ocm_resnet_forward.33} parent=0 // pred_check_branch
    %16 = sbr.rel (0) target = $region17
  $region16: #{ocm_resnet_forward.33} parent=0 // pred_region
    _
  $region17: #{ocm_resnet_forward.33} parent=0 // pred_fallthru
    _
  %v18 = vld [vmem:[%s0] sm:$0xff]
  %v19 = vld [vmem:[%s0 + $0x8] sm:$0xff]
  %v20 = vld [vmem:[%s0 + $0x10] sm:$0xf]
  %v21 = vld [vmem:[%s0 + $0x14] sm:$0xff]
  %v22 = vld [vmem:[%s0 + $0x1c] sm:$0xff]
  %v23 = vld [vmem:[%s0 + $0x24] sm:$0xf]
  %v24 = vld [vmem:[%s0 + $0x28] sm:$0xff]
  %v25 = vld [vmem:[%s0 + $0x30] sm:$0xff]
  %v26 = vld [vmem:[%s0 + $0x38] sm:$0xf]
  %v27 = vld [vmem:[%s0 + $0x3c] sm:$0xff]
  %v28 = vld [vmem:[%s0 + $0x44] sm:$0xff]
  %v29 = vld [vmem:[%s0 + $0x4c] sm:$0xf]
  %v30 = vld [vmem:[%s0 + $0x50] sm:$0xff]
  %v31 = vld [vmem:[%s0 + $0x58] sm:$0xff]
  %v32 = vld [vmem:[%s0 + $0x60] sm:$0xf]
  %v33 = vld [vmem:[%s0 + $0x64] sm:$0xff]
  %v34 = vld [vmem:[%s0 + $0x6c] sm:$0xff]
  %v35 = vld [vmem:[%s0 + $0x74] sm:$0xf]
  %v36 = vld [vmem:[%s0 + $0x78] sm:$0xff]
  %v37 = vld [vmem:[%s0 + $0x80] sm:$0xff]
  %v38 = vld [vmem:[%s0 + $0x88] sm:$0xf]
  %v39 = vld [vmem:[%s0 + $0x8c] sm:$0xff]
  %v40 = vld [vmem:[%s0 + $0x94] sm:$0xff]
  %v41 = vld [vmem:[%s0 + $0x9c] sm:$0xf]
  %v42 = vld [vmem:[%s1] sm:$0xf]
  %v43 = vld [vmem:[%s1 + $0x4] sm:$0xf]
  %v44 = vld [vmem:[%s1 + $0x8] sm:$0xf]
  %v45 = vld [vmem:[%s1 + $0xc] sm:$0xf]
  %v46 = vld [vmem:[%s1 + $0x10] sm:$0xf]
  %v47 = vld [vmem:[%s1 + $0x14] sm:$0xf]
  %v48 = vld [vmem:[%s1 + $0x18] sm:$0xf]
  %v49 = vld [vmem:[%s1 + $0x1c] sm:$0xf]
  %v50 = vld [vmem:[%s1 + $0x20] sm:$0xf]
  %v51 = vld [vmem:[%s1 + $0x24] sm:$0xf]
  %v52 = vld [vmem:[%s1 + $0x28] sm:$0xf]
  %v53 = vld [vmem:[%s1 + $0x2c] sm:$0xf]
  %v54 = vld [vmem:[%s1 + $0x30] sm:$0xf]
  %v55 = vld [vmem:[%s1 + $0x34] sm:$0xf]
  %v56 = vld [vmem:[%s1 + $0x38] sm:$0xf]
  %v57 = vld [vmem:[%s1 + $0x3c] sm:$0xf]
  %v58 = vld [vmem:[%s1 + $0x40] sm:$0xf]
  %v59 = vld [vmem:[%s1 + $0x44] sm:$0xf]
  %v60 = vld [vmem:[%s1 + $0x48] sm:$0xf]
  %v61 = vld [vmem:[%s1 + $0x4c] sm:$0xf]
  %v62 = vld [vmem:[%s1 + $0x50] sm:$0xf]
  %v63 = vld [vmem:[%s1 + $0x54] sm:$0xf]
  %v64 = vld [vmem:[%s1 + $0x58] sm:$0xf]
  %v65 = vld [vmem:[%s1 + $0x5c] sm:$0xf]
  %v66 = vld [vmem:[%s1 + $0x60] sm:$0xf]
  %v67 = vld [vmem:[%s1 + $0x64] sm:$0xf]
  %v68 = vld [vmem:[%s1 + $0x68] sm:$0xf]
  %v69 = vld [vmem:[%s1 + $0x6c] sm:$0xf]
  %v70 = vld [vmem:[%s1 + $0x70] sm:$0xf]
  %v71 = vld [vmem:[%s1 + $0x74] sm:$0xf]
  %v72 = vld [vmem:[%s1 + $0x78] sm:$0xf]
  %v73 = vld [vmem:[%s1 + $0x7c] sm:$0xf]
  %v74 = vld [vmem:[%s1 + $0x80] sm:$0xf]
  %v75 = vld [vmem:[%s1 + $0x84] sm:$0xf]
  %v76 = vld [vmem:[%s1 + $0x88] sm:$0xf]
  %v77 = vld [vmem:[%s1 + $0x8c] sm:$0xf]
  %v78 = vld [vmem:[%s1 + $0x90] sm:$0xf]
  %v79 = vld [vmem:[%s1 + $0x94] sm:$0xf]
  %v80 = vld [vmem:[%s1 + $0x98] sm:$0xf]
  %v81 = vld [vmem:[%s1 + $0x9c] sm:$0xf]
  %v82 = vld [vmem:[%s1 + $0xa0] sm:$0xf]
  %v83 = vld [vmem:[%s1 + $0xa4] sm:$0xf]
  %v84 = vld [vmem:[%s1 + $0xa8] sm:$0xf]
  %v85 = vld [vmem:[%s1 + $0xac] sm:$0xf]
  %v86 = vld [vmem:[%s1 + $0xb0] sm:$0xf]
  %v87 = vld [vmem:[%s1 + $0xb4] sm:$0xf]
  %v88 = vld [vmem:[%s1 + $0xb8] sm:$0xf]
  %v89 = vld [vmem:[%s1 + $0xbc] sm:$0xf]
  %v90 = vld [vmem:[%s1 + $0xc0] sm:$0xf]
  %v91 = vld [vmem:[%s1 + $0xc4] sm:$0xf]
  %v92 = vld [vmem:[%s1 + $0xc8] sm:$0xf]
  %v93 = vld [vmem:[%s1 + $0xcc] sm:$0xf]
  %v94 = vld [vmem:[%s1 + $0xd0] sm:$0xf]
  %v95 = vld [vmem:[%s1 + $0xd4] sm:$0xf]
  %v96 = vld [vmem:[%s1 + $0xd8] sm:$0xf]
  %v97 = vld [vmem:[%s1 + $0xdc] sm:$0xf]
  %v98 = vld [vmem:[%s1 + $0xe0] sm:$0xf]
  %v99 = vld [vmem:[%s1 + $0xe4] sm:$0xf]
  %v100 = vld [vmem:[%s1 + $0xe8] sm:$0xf]
  %v101 = vld [vmem:[%s1 + $0xec] sm:$0xf]
  %v102 = vld [vmem:[%s1 + $0xf0] sm:$0xf]
  %v103 = vld [vmem:[%s1 + $0xf4] sm:$0xf]
  %v104 = vld [vmem:[%s1 + $0xf8] sm:$0xf]
  %v105 = vld [vmem:[%s1 + $0xfc] sm:$0xf]
  %v106 = vld [vmem:[%s1 + $0x100] sm:$0xf]
  %v107 = vld [vmem:[%s1 + $0x104] sm:$0xf]
  %v108 = vld [vmem:[%s1 + $0x108] sm:$0xf]
  %v109 = vld [vmem:[%s1 + $0x10c] sm:$0xf]
  %v110 = vld [vmem:[%s1 + $0x110] sm:$0xf]
  %v111 = vld [vmem:[%s1 + $0x114] sm:$0xf]
  %v112 = vld [vmem:[%s1 + $0x118] sm:$0xf]
  %v113 = vld [vmem:[%s1 + $0x11c] sm:$0xf]
  %v114 = vld [vmem:[%s2] sm:$0xff]
  %v115 = vld [vmem:[%s2 + $0x8] sm:$0xff]
  %v116 = vld [vmem:[%s2 + $0x10] sm:$0xff]
  %v117 = vld [vmem:[%s2 + $0x18] sm:$0xff]
  %v118 = vld [vmem:[%s2 + $0x20] sm:$0xff]
  %v119 = vld [vmem:[%s2 + $0x28] sm:$0xff]
  %v120 = vld [vmem:[%s2 + $0x30] sm:$0xff]
  %v121 = vld [vmem:[%s2 + $0x38] sm:$0xff]
  %123 = vset.pattern.permute.xlu0 0
  %124 = vperm.xlu0 %123, %v114
  %v125 = vpop.permute.xlu0 %124
  %128 = vset.pattern.permute.xlu0 0
  %129 = vperm.xlu0 %128, %v115
  %v130 = vpop.permute.xlu0 %129
  %133 = vset.pattern.permute.xlu0 0
  %134 = vperm.xlu0 %133, %v116
  %v135 = vpop.permute.xlu0 %134
  %138 = vset.pattern.permute.xlu0 0
  %139 = vperm.xlu0 %138, %v117
  %v140 = vpop.permute.xlu0 %139
  %143 = vset.pattern.permute.xlu0 0
  %144 = vperm.xlu0 %143, %v118
  %v145 = vpop.permute.xlu0 %144
  %148 = vset.pattern.permute.xlu0 0
  %149 = vperm.xlu0 %148, %v119
  %v150 = vpop.permute.xlu0 %149
  %153 = vset.pattern.permute.xlu0 0
  %154 = vperm.xlu0 %153, %v120
  %v155 = vpop.permute.xlu0 %154
  %158 = vset.pattern.permute.xlu0 0
  %159 = vperm.xlu0 %158, %v121
  %v160 = vpop.permute.xlu0 %159
  %v186 = vunpack.c.l.b16 %v18
  %v187 = vunpack.c.h.b16 %v18
  %v188 = vunpack.c.l.b16 %v19
  %v189 = vunpack.c.h.b16 %v19
  %v190 = vunpack.c.l.b16 %v20
  %v191 = vunpack.c.l.b16 %v21
  %v192 = vunpack.c.h.b16 %v21
  %v193 = vunpack.c.l.b16 %v22
  %v194 = vunpack.c.h.b16 %v22
  %v195 = vunpack.c.l.b16 %v23
  %v196 = vunpack.c.l.b16 %v24
  %v197 = vunpack.c.h.b16 %v24
  %v198 = vunpack.c.l.b16 %v25
  %v199 = vunpack.c.h.b16 %v25
  %v200 = vunpack.c.l.b16 %v26
  %v201 = vunpack.c.l.b16 %v27
  %v202 = vunpack.c.h.b16 %v27
  %v203 = vunpack.c.l.b16 %v28
  %v204 = vunpack.c.h.b16 %v28
  %v205 = vunpack.c.l.b16 %v29
  %v206 = vunpack.c.l.b16 %v30
  %v207 = vunpack.c.h.b16 %v30
  %v208 = vunpack.c.l.b16 %v31
  %v209 = vunpack.c.h.b16 %v31
  %v210 = vunpack.c.l.b16 %v32
  %v211 = vunpack.c.l.b16 %v33
  %v212 = vunpack.c.h.b16 %v33
  %v213 = vunpack.c.l.b16 %v34
  %v214 = vunpack.c.h.b16 %v34
  %v215 = vunpack.c.l.b16 %v35
  %v216 = vunpack.c.l.b16 %v36
  %v217 = vunpack.c.h.b16 %v36
  %v218 = vunpack.c.l.b16 %v37
  %v219 = vunpack.c.h.b16 %v37
  %v220 = vunpack.c.l.b16 %v38
  %v221 = vunpack.c.l.b16 %v39
  %v222 = vunpack.c.h.b16 %v39
  %v223 = vunpack.c.l.b16 %v40
  %v224 = vunpack.c.h.b16 %v40
  %v225 = vunpack.c.l.b16 %v41
  %v226 = vpack.c.b16 %v191, %v186
  %v227 = vpack.c.b16 %v192, %v187
  %v228 = vpack.c.b16 %v193, %v188
  %v229 = vpack.c.b16 %v194, %v189
  %v230 = vpack.c.b16 %v195, %v190
  %v231 = vpack.c.b16 %v201, %v196
  %v232 = vpack.c.b16 %v202, %v197
  %v233 = vpack.c.b16 %v203, %v198
  %v234 = vpack.c.b16 %v204, %v199
  %v235 = vpack.c.b16 %v205, %v200
  %v236 = vpack.c.b16 %v211, %v206
  %v237 = vpack.c.b16 %v212, %v207
  %v238 = vpack.c.b16 %v213, %v208
  %v239 = vpack.c.b16 %v214, %v209
  %v240 = vpack.c.b16 %v215, %v210
  %v241 = vpack.c.b16 %v221, %v216
  %v242 = vpack.c.b16 %v222, %v217
  %v243 = vpack.c.b16 %v223, %v218
  %v244 = vpack.c.b16 %v224, %v219
  %v245 = vpack.c.b16 %v225, %v220
  %v334 = vunpack.c.l.b16 %v42
  %v335 = vunpack.c.l.b16 %v43
  %v336 = vunpack.c.l.b16 %v44
  %v337 = vunpack.c.l.b16 %v45
  %v338 = vunpack.c.l.b16 %v46
  %v339 = vunpack.c.l.b16 %v47
  %v340 = vunpack.c.l.b16 %v48
  %v341 = vunpack.c.l.b16 %v49
  %v342 = vunpack.c.l.b16 %v50
  %v343 = vunpack.c.l.b16 %v51
  %v344 = vunpack.c.l.b16 %v52
  %v345 = vunpack.c.l.b16 %v53
  %v346 = vunpack.c.l.b16 %v54
  %v347 = vunpack.c.l.b16 %v55
  %v348 = vunpack.c.l.b16 %v56
  %v349 = vunpack.c.l.b16 %v57
  %v350 = vunpack.c.l.b16 %v58
  %v351 = vunpack.c.l.b16 %v59
  %v352 = vunpack.c.l.b16 %v60
  %v353 = vunpack.c.l.b16 %v61
  %v354 = vunpack.c.l.b16 %v62
  %v355 = vunpack.c.l.b16 %v63
  %v356 = vunpack.c.l.b16 %v64
  %v357 = vunpack.c.l.b16 %v65
  %v358 = vunpack.c.l.b16 %v66
  %v359 = vunpack.c.l.b16 %v67
  %v360 = vunpack.c.l.b16 %v68
  %v361 = vunpack.c.l.b16 %v69
  %v362 = vunpack.c.l.b16 %v70
  %v363 = vunpack.c.l.b16 %v71
  %v364 = vunpack.c.l.b16 %v72
  %v365 = vunpack.c.l.b16 %v73
  %v366 = vunpack.c.l.b16 %v74
  %v367 = vunpack.c.l.b16 %v75
  %v368 = vunpack.c.l.b16 %v76
  %v369 = vunpack.c.l.b16 %v77
  %v370 = vunpack.c.l.b16 %v78
  %v371 = vunpack.c.l.b16 %v79
  %v372 = vunpack.c.l.b16 %v80
  %v373 = vunpack.c.l.b16 %v81
  %v374 = vunpack.c.l.b16 %v82
  %v375 = vunpack.c.l.b16 %v83
  %v376 = vunpack.c.l.b16 %v84
  %v377 = vunpack.c.l.b16 %v85
  %v378 = vunpack.c.l.b16 %v86
  %v379 = vunpack.c.l.b16 %v87
  %v380 = vunpack.c.l.b16 %v88
  %v381 = vunpack.c.l.b16 %v89
  %v382 = vunpack.c.l.b16 %v90
  %v383 = vunpack.c.l.b16 %v91
  %v384 = vunpack.c.l.b16 %v92
  %v385 = vunpack.c.l.b16 %v93
  %v386 = vunpack.c.l.b16 %v94
  %v387 = vunpack.c.l.b16 %v95
  %v388 = vunpack.c.l.b16 %v96
  %v389 = vunpack.c.l.b16 %v97
  %v390 = vunpack.c.l.b16 %v98
  %v391 = vunpack.c.l.b16 %v99
  %v392 = vunpack.c.l.b16 %v100
  %v393 = vunpack.c.l.b16 %v101
  %v394 = vunpack.c.l.b16 %v102
  %v395 = vunpack.c.l.b16 %v103
  %v396 = vunpack.c.l.b16 %v104
  %v397 = vunpack.c.l.b16 %v105
  %v398 = vunpack.c.l.b16 %v106
  %v399 = vunpack.c.l.b16 %v107
  %v400 = vunpack.c.l.b16 %v108
  %v401 = vunpack.c.l.b16 %v109
  %v402 = vunpack.c.l.b16 %v110
  %v403 = vunpack.c.l.b16 %v111
  %v404 = vunpack.c.l.b16 %v112
  %v405 = vunpack.c.l.b16 %v113
  %v406 = vpack.c.b16 %v335, %v334
  %v407 = vpack.c.b16 %v337, %v336
  %v408 = vpack.c.b16 %v339, %v338
  %v409 = vpack.c.b16 %v341, %v340
  %v410 = vpack.c.b16 %v343, %v342
  %v411 = vpack.c.b16 %v345, %v344
  %v412 = vpack.c.b16 %v347, %v346
  %v413 = vpack.c.b16 %v349, %v348
  %v414 = vpack.c.b16 %v351, %v350
  %v415 = vpack.c.b16 %v353, %v352
  %v416 = vpack.c.b16 %v355, %v354
  %v417 = vpack.c.b16 %v357, %v356
  %v418 = vpack.c.b16 %v359, %v358
  %v419 = vpack.c.b16 %v361, %v360
  %v420 = vpack.c.b16 %v363, %v362
  %v421 = vpack.c.b16 %v365, %v364
  %v422 = vpack.c.b16 %v367, %v366
  %v423 = vpack.c.b16 %v369, %v368
  %v424 = vpack.c.b16 %v371, %v370
  %v425 = vpack.c.b16 %v373, %v372
  %v426 = vpack.c.b16 %v375, %v374
  %v427 = vpack.c.b16 %v377, %v376
  %v428 = vpack.c.b16 %v379, %v378
  %v429 = vpack.c.b16 %v381, %v380
  %v430 = vpack.c.b16 %v383, %v382
  %v431 = vpack.c.b16 %v385, %v384
  %v432 = vpack.c.b16 %v387, %v386
  %v433 = vpack.c.b16 %v389, %v388
  %v434 = vpack.c.b16 %v391, %v390
  %v435 = vpack.c.b16 %v393, %v392
  %v436 = vpack.c.b16 %v395, %v394
  %v437 = vpack.c.b16 %v397, %v396
  %v438 = vpack.c.b16 %v399, %v398
  %v439 = vpack.c.b16 %v401, %v400
  %v440 = vpack.c.b16 %v403, %v402
  %v441 = vpack.c.b16 %v405, %v404
  %vm478 = vcmask 523264
  %v480 = vsel %vm478, %v230, 0
  %v483 = vsel %vm478, %v235, 0
  %v486 = vsel %vm478, %v240, 0
  %v489 = vsel %vm478, %v245, 0
  %491 = vmatprep.subr.bf16.mxu0 0
  %492 = vmatpush1.bf16.msra.mxu0 %v413
  %493 = vmatprep.subr.bf16.mxu0 0
  %494 = vmatpush1.bf16.msra.mxu0 %v412
  %495 = vmatprep.subr.bf16.mxu0 0
  %496 = vmatpush1.bf16.msra.mxu0 %v411
  %497 = vmatprep.subr.bf16.mxu0 0
  %498 = vmatpush1.bf16.msra.mxu0 %v410
  %499 = vmatprep.subr.bf16.mxu0 0
  %500 = vmatpush1.bf16.msra.mxu0 %v409
  %501 = vmatprep.subr.bf16.mxu0 0
  %502 = vmatpush1.bf16.msra.mxu0 %v408
  %503 = vmatprep.subr.bf16.mxu0 0
  %504 = vmatpush1.bf16.msra.mxu0 %v407
  %505 = vmatprep.subr.bf16.mxu0 0
  %506 = vmatpush1.bf16.msra.mxu0 %v406
  %507 = vmatprep.subr.bf16.mxu0 0
  %508 = vmatpush2.bf16.msra.mxu0 %v421
  %509 = vmatprep.subr.bf16.mxu0 0
  %510 = vmatpush2.bf16.msra.mxu0 %v420
  %511 = vmatprep.subr.bf16.mxu0 0
  %512 = vmatpush2.bf16.msra.mxu0 %v419
  %513 = vmatprep.subr.bf16.mxu0 0
  %514 = vmatpush2.bf16.msra.mxu0 %v418
  %515 = vmatprep.subr.bf16.mxu0 0
  %516 = vmatpush2.bf16.msra.mxu0 %v417
  %517 = vmatprep.subr.bf16.mxu0 0
  %518 = vmatpush2.bf16.msra.mxu0 %v416
  %519 = vmatprep.subr.bf16.mxu0 0
  %520 = vmatpush2.bf16.msra.mxu0 %v415
  %521 = vmatprep.subr.bf16.mxu0 0
  %522 = vmatpush2.bf16.msra.mxu0 %v414
  %523 = vmatprep.mubr.bf16.mxu0 %v227
  %524 = vmatmul.mubr.bf16.gmra.mxu0 %v226
  %v525 = vpop.f32.mrf.mxu0
  %v526 = vadd.f32 %v125, %v525
  %v527 = vpop.f32.mrf.mxu0
  %v528 = vpop.f32.mrf.mxu0
  %v529 = vadd.f32 %v130, %v528
  %v530 = vpop.f32.mrf.mxu0
  %531 = vmatprep.mubr.bf16.mxu0 %v232
  %532 = vmatmul.mubr.bf16.gmra.mxu0 %v231
  %v533 = vpop.f32.mrf.mxu0
  %v534 = vadd.f32 %v135, %v533
  %v535 = vpop.f32.mrf.mxu0
  %v536 = vpop.f32.mrf.mxu0
  %v537 = vadd.f32 %v140, %v536
  %v538 = vpop.f32.mrf.mxu0
  %539 = vmatprep.mubr.bf16.mxu0 %v237
  %540 = vmatmul.mubr.bf16.gmra.mxu0 %v236
  %v541 = vpop.f32.mrf.mxu0
  %v542 = vadd.f32 %v145, %v541
  %v543 = vpop.f32.mrf.mxu0
  %v544 = vpop.f32.mrf.mxu0
  %v545 = vadd.f32 %v150, %v544
  %v546 = vpop.f32.mrf.mxu0
  %547 = vmatprep.mubr.bf16.mxu0 %v242
  %548 = vmatmul.mubr.bf16.gmra.mxu0 %v241
  %v549 = vpop.f32.mrf.mxu0
  %v550 = vadd.f32 %v155, %v549
  %v551 = vpop.f32.mrf.mxu0
  %v552 = vpop.f32.mrf.mxu0
  %v553 = vadd.f32 %v160, %v552
  %v554 = vpop.f32.mrf.mxu0
  %555 = vdwg.mxu0
  %556 = vmatprep.subr.bf16.mxu0 0
  %557 = vmatpush1.bf16.msra.mxu0 %v429
  %558 = vmatprep.subr.bf16.mxu0 0
  %559 = vmatpush1.bf16.msra.mxu0 %v428
  %560 = vmatprep.subr.bf16.mxu0 0
  %561 = vmatpush1.bf16.msra.mxu0 %v427
  %562 = vmatprep.subr.bf16.mxu0 0
  %563 = vmatpush1.bf16.msra.mxu0 %v426
  %564 = vmatprep.subr.bf16.mxu0 0
  %565 = vmatpush1.bf16.msra.mxu0 %v425
  %566 = vmatprep.subr.bf16.mxu0 0
  %567 = vmatpush1.bf16.msra.mxu0 %v424
  %568 = vmatprep.subr.bf16.mxu0 0
  %569 = vmatpush1.bf16.msra.mxu0 %v423
  %570 = vmatprep.subr.bf16.mxu0 0
  %571 = vmatpush1.bf16.msra.mxu0 %v422
  %572 = vmatprep.subr.bf16.mxu0 0
  %573 = vmatpush2.bf16.msra.mxu0 %v437
  %574 = vmatprep.subr.bf16.mxu0 0
  %575 = vmatpush2.bf16.msra.mxu0 %v436
  %576 = vmatprep.subr.bf16.mxu0 0
  %577 = vmatpush2.bf16.msra.mxu0 %v435
  %578 = vmatprep.subr.bf16.mxu0 0
  %579 = vmatpush2.bf16.msra.mxu0 %v434
  %580 = vmatprep.subr.bf16.mxu0 0
  %581 = vmatpush2.bf16.msra.mxu0 %v433
  %582 = vmatprep.subr.bf16.mxu0 0
  %583 = vmatpush2.bf16.msra.mxu0 %v432
  %584 = vmatprep.subr.bf16.mxu0 0
  %585 = vmatpush2.bf16.msra.mxu0 %v431
  %586 = vmatprep.subr.bf16.mxu0 0
  %587 = vmatpush2.bf16.msra.mxu0 %v430
  %588 = vmatprep.mubr.bf16.mxu0 %v229
  %589 = vmatmul.mubr.bf16.gmra.mxu0 %v228
  %v590 = vpop.f32.mrf.mxu0
  %v591 = vadd.f32 %v526, %v590
  %v592 = vpop.f32.mrf.mxu0
  %v593 = vpop.f32.mrf.mxu0
  %v594 = vadd.f32 %v529, %v593
  %v595 = vpop.f32.mrf.mxu0
  %596 = vmatprep.mubr.bf16.mxu0 %v234
  %597 = vmatmul.mubr.bf16.gmra.mxu0 %v233
  %v598 = vpop.f32.mrf.mxu0
  %v599 = vadd.f32 %v534, %v598
  %v600 = vpop.f32.mrf.mxu0
  %v601 = vpop.f32.mrf.mxu0
  %v602 = vadd.f32 %v537, %v601
  %v603 = vpop.f32.mrf.mxu0
  %604 = vmatprep.mubr.bf16.mxu0 %v239
  %605 = vmatmul.mubr.bf16.gmra.mxu0 %v238
  %v606 = vpop.f32.mrf.mxu0
  %v607 = vadd.f32 %v542, %v606
  %v608 = vpop.f32.mrf.mxu0
  %v609 = vpop.f32.mrf.mxu0
  %v610 = vadd.f32 %v545, %v609
  %v611 = vpop.f32.mrf.mxu0
  %612 = vmatprep.mubr.bf16.mxu0 %v244
  %613 = vmatmul.mubr.bf16.gmra.mxu0 %v243
  %v614 = vpop.f32.mrf.mxu0
  %v615 = vadd.f32 %v550, %v614
  %v616 = vpop.f32.mrf.mxu0
  %v617 = vpop.f32.mrf.mxu0
  %v618 = vadd.f32 %v553, %v617
  %v619 = vpop.f32.mrf.mxu0
  %620 = vdwg.mxu0
  %621 = vmatprep.subr.bf16.mxu0 0
  %622 = vmatpush1.bf16.msra.mxu0 0
  %623 = vmatprep.subr.bf16.mxu0 0
  %624 = vmatpush1.bf16.msra.mxu0 0
  %625 = vmatprep.subr.bf16.mxu0 0
  %626 = vmatpush1.bf16.msra.mxu0 0
  %627 = vmatprep.subr.bf16.mxu0 0
  %628 = vmatpush1.bf16.msra.mxu0 0
  %629 = vmatprep.subr.bf16.mxu0 0
  %630 = vmatpush1.bf16.msra.mxu0 %v441
  %631 = vmatprep.subr.bf16.mxu0 0
  %632 = vmatpush1.bf16.msra.mxu0 %v440
  %633 = vmatprep.subr.bf16.mxu0 0
  %634 = vmatpush1.bf16.msra.mxu0 %v439
  %635 = vmatprep.subr.bf16.mxu0 0
  %636 = vmatpush1.bf16.msra.mxu0 %v438
  %637 = vmatprep.subr.bf16.mxu0 0
  %638 = vmatpush2.bf16.msra.mxu0 0
  %639 = vmatprep.subr.bf16.mxu0 0
  %640 = vmatpush2.bf16.msra.mxu0 0
  %641 = vmatprep.subr.bf16.mxu0 0
  %642 = vmatpush2.bf16.msra.mxu0 0
  %643 = vmatprep.subr.bf16.mxu0 0
  %644 = vmatpush2.bf16.msra.mxu0 0
  %645 = vmatprep.subr.bf16.mxu0 0
  %646 = vmatpush2.bf16.msra.mxu0 0
  %647 = vmatprep.subr.bf16.mxu0 0
  %648 = vmatpush2.bf16.msra.mxu0 0
  %649 = vmatprep.subr.bf16.mxu0 0
  %650 = vmatpush2.bf16.msra.mxu0 0
  %651 = vmatprep.subr.bf16.mxu0 0
  %652 = vmatpush2.bf16.msra.mxu0 0
  %653 = vmatprep.mubr.bf16.mxu0 0
  %654 = vmatmul.mubr.bf16.gmra.mxu0 %v480
  %v655 = vpop.f32.mrf.mxu0
  %v656 = vadd.f32 %v591, %v655
  %v657 = vpop.f32.mrf.mxu0
  %v658 = vpop.f32.mrf.mxu0
  %v659 = vadd.f32 %v594, %v658
  %v660 = vpop.f32.mrf.mxu0
  %661 = vmatprep.mubr.bf16.mxu0 0
  %662 = vmatmul.mubr.bf16.gmra.mxu0 %v483
  %v663 = vpop.f32.mrf.mxu0
  %v664 = vadd.f32 %v599, %v663
  %v665 = vpop.f32.mrf.mxu0
  %v666 = vpop.f32.mrf.mxu0
  %v667 = vadd.f32 %v602, %v666
  %v668 = vpop.f32.mrf.mxu0
  %669 = vmatprep.mubr.bf16.mxu0 0
  %670 = vmatmul.mubr.bf16.gmra.mxu0 %v486
  %v671 = vpop.f32.mrf.mxu0
  %v672 = vadd.f32 %v607, %v671
  %v673 = vpop.f32.mrf.mxu0
  %v674 = vpop.f32.mrf.mxu0
  %v675 = vadd.f32 %v610, %v674
  %v676 = vpop.f32.mrf.mxu0
  %677 = vmatprep.mubr.bf16.mxu0 0
  %678 = vmatmul.mubr.bf16.gmra.mxu0 %v489
  %v679 = vpop.f32.mrf.mxu0
  %v680 = vadd.f32 %v615, %v679
  %v681 = vpop.f32.mrf.mxu0
  %v682 = vpop.f32.mrf.mxu0
  %v683 = vadd.f32 %v618, %v682
  %v684 = vpop.f32.mrf.mxu0
  %685 = vdwg.mxu0
  %v686 = vld [vmem:[%s3] sm:$0xff]
  %v687 = vld [vmem:[%s3 + $0x8] sm:$0xff]
  %v688 = vld [vmem:[%s3 + $0x10] sm:$0xff]
  %v689 = vld [vmem:[%s3 + $0x18] sm:$0xff]
  %v690 = vld [vmem:[%s3 + $0x20] sm:$0xff]
  %v691 = vld [vmem:[%s3 + $0x28] sm:$0xff]
  %v692 = vld [vmem:[%s3 + $0x30] sm:$0xff]
  %v693 = vld [vmem:[%s3 + $0x38] sm:$0xff]
  %v694 = vadd.f32 %v656, %v686
  %v695 = vadd.f32 %v659, %v687
  %v696 = vadd.f32 %v664, %v688
  %v697 = vadd.f32 %v667, %v689
  %v698 = vadd.f32 %v672, %v690
  %v699 = vadd.f32 %v675, %v691
  %v700 = vadd.f32 %v680, %v692
  %v701 = vadd.f32 %v683, %v693
  %v702 = vmax.f32 %v694, 0.0
  %v703 = vmax.f32 %v695, 0.0
  %v704 = vmax.f32 %v696, 0.0
  %v705 = vmax.f32 %v697, 0.0
  %v706 = vmax.f32 %v698, 0.0
  %v707 = vmax.f32 %v699, 0.0
  %v708 = vmax.f32 %v700, 0.0
  %v709 = vmax.f32 %v701, 0.0
  %vm710 = vcmask 261120
  %711 = vst.msk [vmem:[%s4] sm:$0xff] %vm710, %v702
  %712 = vst.msk [vmem:[%s4 + $0x8] sm:$0xff] %vm710, %v703
  %713 = vst.msk [vmem:[%s4 + $0x10] sm:$0xff] %vm710, %v704
  %714 = vst.msk [vmem:[%s4 + $0x18] sm:$0xff] %vm710, %v705
  %715 = vst.msk [vmem:[%s4 + $0x20] sm:$0xff] %vm710, %v706
  %716 = vst.msk [vmem:[%s4 + $0x28] sm:$0xff] %vm710, %v707
  %717 = vst.msk [vmem:[%s4 + $0x30] sm:$0xff] %vm710, %v708
  %718 = vst.msk [vmem:[%s4 + $0x38] sm:$0xff] %vm710, %v709
  // Predicated region
  $region18: #{ocm_resnet_forward.33} parent=0 // pred_check
    _
  $region19: #{ocm_resnet_forward.33} parent=0 // pred_check_branch
    %720 = sbr.rel (0) target = $region21
  $region20: #{ocm_resnet_forward.33} parent=0 // pred_region
    _
  $region21: #{ocm_resnet_forward.33} parent=0 // pred_fallthru
    _
  // Predicated region
  $region22: #{ocm_resnet_forward.33} parent=0 // pred_check
    _
  $region23: #{ocm_resnet_forward.33} parent=0 // pred_check_branch
    %722 = sbr.rel (0) target = $region25
  $region24: #{ocm_resnet_forward.33} parent=0 // pred_region
    _
  $region25: #{ocm_resnet_forward.33} parent=0 // pred_fallthru
    _

</llo_original>
